<compile_context>
chip_gen: v7x
topology: tpu7x:2x2x1
jax: 0.10.0
libtpu: 0.0.40
codegen_flags: <defaults>
</compile_context>

<pallas_src>
import functools

import jax
import jax.numpy as jnp
import numpy as np
from jax import lax
from jax.experimental import pallas as pl
from jax.experimental.pallas import tpu as pltpu

# Explicit, generation-safe scoped-VMEM budget (well under 64 MiB physical on v7x).
VMEM_LIMIT = 32 * 1024 * 1024

# Small here so the N=256 test exercises the multi-tile online softmax; raise toward
# 512 (v7x) / 1024 (v5e/v6e) for production feature-map sizes.
PAM_TILE_TARGET = 128


def _pick_tile(n, target):
    if n % 128 != 0:
        return n
    t = min(target, n)
    t -= t % 128
    t = max(t, 128)
    while n % t:
        t -= 128
    return t


# --------------------------------------------------------------------------
# CAM module kernel:  energy = x @ x^T, softmax(max - energy), out = attn @ x
# Single (C, N) input layout; output is (C, N) (lane dim = N).
# --------------------------------------------------------------------------
def cam_kernel(x_ref, g_ref, out_ref):
    x = x_ref[0]                                                    # (C, N)
    # Gram matrix over channels; contraction over N on the lane axis of both operands
    # (A @ A^T) -- no transposed copy of x is ever read from HBM.  Kept f32/HIGHEST:
    # |energy| grows with N and feeds a max-shifted softmax.
    energy = lax.dot_general(
        x, x, dimension_numbers=(((1,), (1,)), ((), ())),
        precision=lax.Precision.HIGHEST,
        preferred_element_type=jnp.float32)                         # (C, C)
    energy_new = jnp.max(energy, axis=-1, keepdims=True) - energy
    e = jnp.exp(energy_new - jnp.max(energy_new, axis=-1, keepdims=True))
    attn = e * pl.reciprocal(jnp.sum(e, axis=-1, keepdims=True), approx=True)
    out = jnp.dot(attn.astype(jnp.bfloat16), x.astype(jnp.bfloat16),
                  preferred_element_type=jnp.float32)               # (C, N)
    out_ref[0] = g_ref[0] * out + x


def cam_module(x, gamma):
    B, C, H, W = x.shape
    N = H * W
    xcn = x.reshape(B, C, N)                                        # free reshape, no transpose
    # NOTE: for very large C*N this block could additionally be tiled over N (two-pass
    # energy accumulation); at typical channel counts the (C, N) block is small.
    out = pl.pallas_call(
        cam_kernel,
        out_shape=jax.ShapeDtypeStruct((B, C, N), jnp.float32),
        grid=(B,),
        in_specs=[
            pl.BlockSpec((1, C, N), lambda b: (b, 0, 0)),
            pl.BlockSpec(memory_space=pltpu.MemorySpace.SMEM),
        ],
        out_specs=pl.BlockSpec((1, C, N), lambda b: (b, 0, 0)),
        compiler_params=pltpu.CompilerParams(
            dimension_semantics=("parallel",),
            vmem_limit_bytes=VMEM_LIMIT),
    )(xcn, gamma)
    return out.reshape(B, C, H, W)


# --------------------------------------------------------------------------
# PAM module kernel (flash-style): 1x1 convs as matmuls, online softmax over
# kv tiles, accumulator held directly in the lane-dense (C, TQ) output layout.
# --------------------------------------------------------------------------
def pam_kernel(xq_ref, xk_ref, wq_ref, wk_ref, wv_ref, bq_ref, bk_ref, bv_ref,
               g_ref, out_ref, m_scr, l_scr, acc_scr):
    kj = pl.program_id(2)

    @pl.when(kj == 0)
    def _():
        m_scr[...] = jnp.full_like(m_scr, -jnp.inf)
        l_scr[...] = jnp.zeros_like(l_scr)
        acc_scr[...] = jnp.zeros_like(acc_scr)

    xq = xq_ref[0]                                                  # (C, TQ)
    xk = xk_ref[0]                                                  # (C, TK)
    # 1x1 convs as (C, C) matmuls; tiny contraction dim -> keep f32.
    q = jnp.dot(wq_ref[...], xq, precision="highest",
                preferred_element_type=jnp.float32) + bq_ref[...]   # (C, TQ)
    k = jnp.dot(wk_ref[...], xk, precision="highest",
                preferred_element_type=jnp.float32) + bk_ref[...]   # (C, TK)
    v = jnp.dot(wv_ref[...], xk, precision="highest",
                preferred_element_type=jnp.float32) + bv_ref[...]   # (C, TK)

    # s_t[j, i] = energy[i, j] = sum_c q[c, i] k[c, j].  Transposed orientation keeps the
    # softmax reductions on the sublane axis so m/l stay (1, TQ) row vectors (no in-kernel
    # transposes) and the accumulator stays lane-dense (C, TQ).
    s_t = lax.dot_general(
        k.astype(jnp.bfloat16), q.astype(jnp.bfloat16),
        dimension_numbers=(((0,), (0,)), ((), ())),
        preferred_element_type=jnp.float32)                         # (TK, TQ)

    m_prev = m_scr[...]
    m_new = jnp.maximum(m_prev, jnp.max(s_t, axis=0, keepdims=True))   # (1, TQ)
    alpha = jnp.exp(m_prev - m_new)                                    # (1, TQ)
    p_t = jnp.exp(s_t - m_new)                                         # (TK, TQ)
    l_scr[...] = alpha * l_scr[...] + jnp.sum(p_t, axis=0, keepdims=True)
    acc_scr[...] = alpha * acc_scr[...] + jnp.dot(
        v.astype(jnp.bfloat16), p_t.astype(jnp.bfloat16),
        preferred_element_type=jnp.float32)                            # (C, TQ)
    m_scr[...] = m_new

    @pl.when(kj == pl.num_programs(2) - 1)
    def _():
        inv_l = pl.reciprocal(l_scr[...], approx=True)                 # (1, TQ)
        out_ref[0] = g_ref[0] * (acc_scr[...] * inv_l) + xq


def pam_module(x, wq, bq, wk, bk, wv, bv, gamma):
    B, C, H, W = x.shape
    N = H * W
    xcn = x.reshape(B, C, N)                                        # free reshape, no transpose
    TQ = _pick_tile(N, PAM_TILE_TARGET)
    TK = TQ
    nq, nk = N // TQ, N // TK
    out = pl.pallas_call(
        pam_kernel,
        out_shape=jax.ShapeDtypeStruct((B, C, N), jnp.float32),
        grid=(B, nq, nk),
        in_specs=[
            pl.BlockSpec((1, C, TQ), lambda b, qi, kj: (b, 0, qi)),   # query/residual tile
            pl.BlockSpec((1, C, TK), lambda b, qi, kj: (b, 0, kj)),   # key/value tile
            pl.BlockSpec((C, C), lambda b, qi, kj: (0, 0)),           # wq
            pl.BlockSpec((C, C), lambda b, qi, kj: (0, 0)),           # wk
            pl.BlockSpec((C, C), lambda b, qi, kj: (0, 0)),           # wv
            pl.BlockSpec((C, 1), lambda b, qi, kj: (0, 0)),           # bq
            pl.BlockSpec((C, 1), lambda b, qi, kj: (0, 0)),           # bk
            pl.BlockSpec((C, 1), lambda b, qi, kj: (0, 0)),           # bv
            pl.BlockSpec(memory_space=pltpu.MemorySpace.SMEM),        # gamma
        ],
        out_specs=pl.BlockSpec((1, C, TQ), lambda b, qi, kj: (b, 0, qi)),
        scratch_shapes=[
            pltpu.VMEM((1, TQ), jnp.float32),                         # running max m
            pltpu.VMEM((1, TQ), jnp.float32),                         # running sum l
            pltpu.VMEM((C, TQ), jnp.float32),                         # output accumulator
        ],
        compiler_params=pltpu.CompilerParams(
            dimension_semantics=("parallel", "parallel", "arbitrary"),
            vmem_limit_bytes=VMEM_LIMIT),
    )(xcn, xcn, wq, wk, wv,
      bq.reshape(C, 1), bk.reshape(C, 1), bv.reshape(C, 1), gamma)
    return out.reshape(B, C, H, W)


# --------------------------------------------------------------------------
# SpatialGate (channel gate) kernel: works directly on the NCHW block.
#   pool over `pool_axis` (H or W) -> 2 pooled maps of shape (C, S)
#   7x7 conv (BasicConv 2->1, pad 3) as 14 small MXU matmuls with precomputed
#   operators A[dx] (row offsets + weights) and T[dx] (column shift), then
#   folded eval-mode BatchNorm, sigmoid, and broadcast-multiply onto x.
# --------------------------------------------------------------------------
def spatial_gate_kernel(pool_axis, x_ref, a_ref, t_ref, sc_ref, out_ref):
    x = x_ref[0]                                                    # (C, H, W)
    p_max = jnp.max(x, axis=pool_axis)                              # (C, S)
    p_mean = jnp.mean(x, axis=pool_axis)                            # (C, S)
    p2 = jnp.concatenate([p_max, p_mean], axis=0)                   # (2C, S)
    R, S = p_max.shape
    acc = jnp.zeros((R, S), jnp.float32)
    for dx in range(7):                                             # static unroll, MXU work
        m = jnp.dot(a_ref[dx], p2, precision="highest",
                    preferred_element_type=jnp.float32)             # (R, S)
        acc = acc + jnp.dot(m, t_ref[dx], precision="highest",
                            preferred_element_type=jnp.float32)     # shifted by dx-3
    y = acc * sc_ref[0] + sc_ref[1]                                 # folded BatchNorm (eval)
    scale = 1.0 / (1.0 + jnp.exp(-y))                               # sigmoid
    if pool_axis == 1:                                              # gate over (C, W)
        out_ref[0] = x * scale[:, None, :]
    else:                                                           # gate over (C, H)
        out_ref[0] = x * scale[:, :, None]


def _build_conv_operators(conv_w, R, S):
    """Precompute A[dx] (R, 2R) and T[dx] (S, S) so the 7x7 2->1 conv over a pooled
    (R, S) plane becomes sum_dx (A[dx] @ pooled) @ T[dx]."""
    w = conv_w[0].astype(jnp.float32)                               # (2, 7, 7)
    rr = jnp.arange(R)[:, None]
    rp = jnp.arange(R)[None, :]
    dy = rp - rr + 3                                                # (R, R)
    valid = ((dy >= 0) & (dy <= 6)).astype(jnp.float32)
    dyc = jnp.clip(dy, 0, 6)
    wc = w[:, dyc, :] * valid[None, :, :, None]                     # (2, R, R, 7)
    A = jnp.transpose(wc, (3, 1, 0, 2)).reshape(7, R, 2 * R)        # A[dx, r, c*R + r']
    a_idx = np.arange(S)[:, None]
    s_idx = np.arange(S)[None, :]
    T = jnp.asarray(
        np.stack([(a_idx == (s_idx + dx - 3)).astype(np.float32) for dx in range(7)]))
    return A, T                                                     # (7,R,2R), (7,S,S)


def spatial_gate_module(x, conv_w, bn_scale, bn_bias, pool_axis):
    # pool_axis: 1 -> pool over H, gate the (C, W) plane  (torch permute(0,2,1,3) branch)
    #            2 -> pool over W, gate the (C, H) plane  (torch permute(0,3,2,1) branch)
    B, C, H, W = x.shape
    S = W if pool_axis == 1 else H
    if pool_axis == 2:
        # In the (C, H) plane the conv's ky/kx roles swap relative to the torch weights.
        conv_w = jnp.swapaxes(conv_w, 2, 3)
    A, T = _build_conv_operators(conv_w, C, S)
    sc = jnp.array([bn_scale, bn_bias], dtype=jnp.float32)
    kernel = functools.partial(spatial_gate_kernel, pool_axis)
    return pl.pallas_call(
        kernel,
        out_shape=jax.ShapeDtypeStruct((B, C, H, W), jnp.float32),
        grid=(B,),
        in_specs=[
            pl.BlockSpec((1, C, H, W), lambda b: (b, 0, 0, 0)),
            pl.BlockSpec((7, C, 2 * C), lambda b: (0, 0, 0)),
            pl.BlockSpec((7, S, S), lambda b: (0, 0, 0)),
            pl.BlockSpec(memory_space=pltpu.MemorySpace.SMEM),
        ],
        out_specs=pl.BlockSpec((1, C, H, W), lambda b: (b, 0, 0, 0)),
        compiler_params=pltpu.CompilerParams(
            dimension_semantics=("parallel",),
            vmem_limit_bytes=VMEM_LIMIT),
    )(x, A, T, sc)


# --------------------------------------------------------------------------
# QuartetAttention forward (no external pads / permutes / transposes)
# --------------------------------------------------------------------------
def quartet_attention(x, p):
    # ChannelGateH (torch: permute(0,2,1,3) -> SpatialGate -> permute back)
    x_out11 = spatial_gate_module(x, p["convH_w"], p["bnH_scale"], p["bnH_bias"], pool_axis=1)
    # ChannelGateW (torch: permute(0,3,2,1) -> SpatialGate -> permute back)
    x_out21 = spatial_gate_module(x, p["convW_w"], p["bnW_scale"], p["bnW_bias"], pool_axis=2)
    # CAM module
    x_perm3 = cam_module(x, p["cam_gamma"])
    # PAM module (called "SpatialGate" attention in the torch file)
    x_out4 = pam_module(x, p["wq"], p["bq"], p["wk"], p["bk"],
                        p["wv"], p["bv"], p["pam_gamma"])
    return 0.25 * (x_out4 + x_out11 + x_out21 + x_perm3)


# --------------------------------------------------------------------------
# Pure-JAX reference (kept in the original permute-based formulation)
# --------------------------------------------------------------------------
def ref_spatial_gate(xp, conv_w, bn_scale, bn_bias):
    mx = jnp.max(xp, axis=1, keepdims=True)
    mn = jnp.mean(xp, axis=1, keepdims=True)
    pooled = jnp.concatenate([mx, mn], axis=1)
    y = jax.lax.conv_general_dilated(
        pooled, conv_w, window_strides=(1, 1), padding=((3, 3), (3, 3)),
        dimension_numbers=("NCHW", "OIHW", "NCHW"),
        precision=jax.lax.Precision.HIGHEST)
    y = y * bn_scale + bn_bias
    return xp * (1.0 / (1.0 + jnp.exp(-y)))


def ref_cam(x, gamma):
    B, C, H, W = x.shape
    xf = x.reshape(B, C, H * W)
    energy = jnp.einsum("bcn,bdn->bcd", xf, xf, precision="highest")
    en = jnp.max(energy, axis=-1, keepdims=True) - energy
    attn = jax.nn.softmax(en, axis=-1)
    out = jnp.einsum("bcd,bdn->bcn", attn, xf, precision="highest").reshape(B, C, H, W)
    return gamma * out + x


def ref_pam(x, wq, bq, wk, bk, wv, bv, gamma):
    B, C, H, W = x.shape
    xf = x.reshape(B, C, H * W)
    q = jnp.einsum("oc,bcn->bon", wq, xf, precision="highest") + bq[None, :, None]
    k = jnp.einsum("oc,bcn->bon", wk, xf, precision="highest") + bk[None, :, None]
    v = jnp.einsum("oc,bcn->bon", wv, xf, precision="highest") + bv[None, :, None]
    energy = jnp.einsum("bci,bcj->bij", q, k, precision="highest")
    attn = jax.nn.softmax(energy, axis=-1)
    out = jnp.einsum("bcj,bij->bci", v, attn, precision="highest").reshape(B, C, H, W)
    return gamma * out + x


def ref_quartet(x, p):
    xp1 = jnp.transpose(x, (0, 2, 1, 3))
    o1 = jnp.transpose(
        ref_spatial_gate(xp1, p["convH_w"], p["bnH_scale"], p["bnH_bias"]), (0, 2, 1, 3))
    xp2 = jnp.transpose(x, (0, 3, 2, 1))
    o2 = jnp.transpose(
        ref_spatial_gate(xp2, p["convW_w"], p["bnW_scale"], p["bnW_bias"]), (0, 3, 2, 1))
    o3 = ref_cam(x, p["cam_gamma"])
    o4 = ref_pam(x, p["wq"], p["bq"], p["wk"], p["bk"], p["wv"], p["bv"], p["pam_gamma"])
    return 0.25 * (o4 + o1 + o2 + o3)


if __name__ == "__main__":
    B, C, H, W = 2, 4, 16, 16
    key = jax.random.PRNGKey(0)
    ks = jax.random.split(key, 10)
    x = jax.random.normal(ks[0], (B, C, H, W), dtype=jnp.float32)

    # Deterministic parameter init (PyTorch inits gamma to 0, which would make the
    # attention branches identity; use nonzero values here so the kernels are exercised).
    params = dict(
        wq=0.3 * jax.random.normal(ks[1], (C, C), dtype=jnp.float32),
        bq=0.1 * jax.random.normal(ks[2], (C,), dtype=jnp.float32),
        wk=0.3 * jax.random.normal(ks[3], (C, C), dtype=jnp.float32),
        bk=0.1 * jax.random.normal(ks[4], (C,), dtype=jnp.float32),
        wv=0.3 * jax.random.normal(ks[5], (C, C), dtype=jnp.float32),
        bv=0.1 * jax.random.normal(ks[6], (C,), dtype=jnp.float32),
        pam_gamma=jnp.array([0.7], dtype=jnp.float32),
        cam_gamma=jnp.array([0.5], dtype=jnp.float32),
        convH_w=0.2 * jax.random.normal(ks[7], (1, 2, 7, 7), dtype=jnp.float32),
        convW_w=0.2 * jax.random.normal(ks[8], (1, 2, 7, 7), dtype=jnp.float32),
        # BatchNorm2d(1) eval mode, default stats (mean=0, var=1, weight=1, bias=0) folded:
        bnH_scale=float(1.0 / np.sqrt(1.0 + 1e-5)),
        bnH_bias=0.0,
        bnW_scale=float(1.0 / np.sqrt(1.0 + 1e-5)),
        bnW_bias=0.0,
    )

    out = quartet_attention(x, params)
    out = jax.block_until_ready(out)

    ref = ref_quartet(x, params)
    np.testing.assert_allclose(np.asarray(out), np.asarray(ref), rtol=1e-2, atol=1e-2)
    print("KERNEL_OK")
</pallas_src>

<mosaic_0001>
module attributes {stable_mosaic.version = 11 : i64} {
  func.func @spatial_gate_kernel(%arg0: i32, %arg1: memref<1x4x16x16xf32, #tpu.memory_space<vmem>>, %arg2: memref<7x4x8xf32, #tpu.memory_space<vmem>>, %arg3: memref<7x16x16xf32, #tpu.memory_space<vmem>>, %arg4: memref<2xf32, #tpu.memory_space<smem>>, %arg5: memref<1x4x16x16xf32, #tpu.memory_space<vmem>>) attributes {dimension_semantics = [#tpu.dimension_semantics<parallel>], iteration_bounds = array<i64: 2>, scalar_prefetch = 0 : i64, scratch_operands = 0 : i64, tpu.core_type = #tpu.core_type<tc>, window_params = [{transform_indices = @transform_0, window_bounds = array<i64: 1, 4, 16, 16>}, {pipeline_mode = #tpu.pipeline_mode<synchronous>, transform_indices = @transform_1, window_bounds = array<i64: 7, 4, 8>}, {pipeline_mode = #tpu.pipeline_mode<synchronous>, transform_indices = @transform_2, window_bounds = array<i64: 7, 16, 16>}, {transform_indices = @transform_3, window_bounds = array<i64: 2>}, {transform_indices = @transform_4, window_bounds = array<i64: 1, 4, 16, 16>}]} {
    %c0 = arith.constant 0 : index
    %c0_0 = arith.constant 0 : index
    %c0_1 = arith.constant 0 : index
    %c0_2 = arith.constant 0 : index
    %0 = vector.load %arg1[%c0, %c0_0, %c0_1, %c0_2] : memref<1x4x16x16xf32, #tpu.memory_space<vmem>>, vector<1x4x16x16xf32>
    %1 = vector.shape_cast %0 : vector<1x4x16x16xf32> to vector<4x16x16xf32>
    %cst = arith.constant dense<0xFF800000> : vector<4x16xf32>
    %2 = vector.multi_reduction <maximumf>, %1, %cst [1] : vector<4x16x16xf32> to vector<4x16xf32>
    %cst_3 = arith.constant dense<0.000000e+00> : vector<4x16xf32>
    %3 = vector.multi_reduction <add>, %1, %cst_3 [1] : vector<4x16x16xf32> to vector<4x16xf32>
    %cst_4 = arith.constant 1.600000e+01 : f32
    %4 = vector.broadcast %cst_4 : f32 to vector<4x16xf32>
    %5 = arith.divf %3, %4 : vector<4x16xf32>
    %6 = tpu.concatenate %2, %5 in 0 : vector<4x16xf32>, vector<4x16xf32> -> vector<8x16xf32>
    %cst_5 = arith.constant 0.000000e+00 : f32
    %7 = vector.broadcast %cst_5 : f32 to vector<4x16xf32>
    %c0_6 = arith.constant 0 : index
    %c0_7 = arith.constant 0 : index
    %c0_8 = arith.constant 0 : index
    %8 = vector.load %arg2[%c0_6, %c0_7, %c0_8] : memref<7x4x8xf32, #tpu.memory_space<vmem>>, vector<1x4x8xf32>
    %9 = vector.shape_cast %8 : vector<1x4x8xf32> to vector<4x8xf32>
    %cst_9 = arith.constant dense<0.000000e+00> : vector<4x16xf32>
    %10 = tpu.matmul %9, %6, %cst_9 {dimension_numbers = #tpu.dot_dimension_numbers<[1], [0], [0], [1], [0, 0, 1, 1], [], []>, precision = #tpu.contract_precision<fp32>} : vector<4x8xf32>, vector<8x16xf32>, vector<4x16xf32> -> vector<4x16xf32>
    %c0_10 = arith.constant 0 : index
    %c0_11 = arith.constant 0 : index
    %c0_12 = arith.constant 0 : index
    %11 = vector.load %arg3[%c0_10, %c0_11, %c0_12] : memref<7x16x16xf32, #tpu.memory_space<vmem>>, vector<1x16x16xf32>
    %12 = vector.shape_cast %11 : vector<1x16x16xf32> to vector<16x16xf32>
    %cst_13 = arith.constant dense<0.000000e+00> : vector<4x16xf32>
    %13 = tpu.matmul %10, %12, %cst_13 {dimension_numbers = #tpu.dot_dimension_numbers<[1], [0], [0], [1], [0, 0, 1, 1], [], []>, precision = #tpu.contract_precision<fp32>} : vector<4x16xf32>, vector<16x16xf32>, vector<4x16xf32> -> vector<4x16xf32>
    %14 = arith.addf %7, %13 : vector<4x16xf32>
    %c1 = arith.constant 1 : index
    %c0_14 = arith.constant 0 : index
    %c0_15 = arith.constant 0 : index
    %15 = vector.load %arg2[%c1, %c0_14, %c0_15] : memref<7x4x8xf32, #tpu.memory_space<vmem>>, vector<1x4x8xf32>
    %16 = vector.shape_cast %15 : vector<1x4x8xf32> to vector<4x8xf32>
    %cst_16 = arith.constant dense<0.000000e+00> : vector<4x16xf32>
    %17 = tpu.matmul %16, %6, %cst_16 {dimension_numbers = #tpu.dot_dimension_numbers<[1], [0], [0], [1], [0, 0, 1, 1], [], []>, precision = #tpu.contract_precision<fp32>} : vector<4x8xf32>, vector<8x16xf32>, vector<4x16xf32> -> vector<4x16xf32>
    %c1_17 = arith.constant 1 : index
    %c0_18 = arith.constant 0 : index
    %c0_19 = arith.constant 0 : index
    %18 = vector.load %arg3[%c1_17, %c0_18, %c0_19] : memref<7x16x16xf32, #tpu.memory_space<vmem>>, vector<1x16x16xf32>
    %19 = vector.shape_cast %18 : vector<1x16x16xf32> to vector<16x16xf32>
    %cst_20 = arith.constant dense<0.000000e+00> : vector<4x16xf32>
    %20 = tpu.matmul %17, %19, %cst_20 {dimension_numbers = #tpu.dot_dimension_numbers<[1], [0], [0], [1], [0, 0, 1, 1], [], []>, precision = #tpu.contract_precision<fp32>} : vector<4x16xf32>, vector<16x16xf32>, vector<4x16xf32> -> vector<4x16xf32>
    %21 = arith.addf %14, %20 : vector<4x16xf32>
    %c2 = arith.constant 2 : index
    %c0_21 = arith.constant 0 : index
    %c0_22 = arith.constant 0 : index
    %22 = vector.load %arg2[%c2, %c0_21, %c0_22] : memref<7x4x8xf32, #tpu.memory_space<vmem>>, vector<1x4x8xf32>
    %23 = vector.shape_cast %22 : vector<1x4x8xf32> to vector<4x8xf32>
    %cst_23 = arith.constant dense<0.000000e+00> : vector<4x16xf32>
    %24 = tpu.matmul %23, %6, %cst_23 {dimension_numbers = #tpu.dot_dimension_numbers<[1], [0], [0], [1], [0, 0, 1, 1], [], []>, precision = #tpu.contract_precision<fp32>} : vector<4x8xf32>, vector<8x16xf32>, vector<4x16xf32> -> vector<4x16xf32>
    %c2_24 = arith.constant 2 : index
    %c0_25 = arith.constant 0 : index
    %c0_26 = arith.constant 0 : index
    %25 = vector.load %arg3[%c2_24, %c0_25, %c0_26] : memref<7x16x16xf32, #tpu.memory_space<vmem>>, vector<1x16x16xf32>
    %26 = vector.shape_cast %25 : vector<1x16x16xf32> to vector<16x16xf32>
    %cst_27 = arith.constant dense<0.000000e+00> : vector<4x16xf32>
    %27 = tpu.matmul %24, %26, %cst_27 {dimension_numbers = #tpu.dot_dimension_numbers<[1], [0], [0], [1], [0, 0, 1, 1], [], []>, precision = #tpu.contract_precision<fp32>} : vector<4x16xf32>, vector<16x16xf32>, vector<4x16xf32> -> vector<4x16xf32>
    %28 = arith.addf %21, %27 : vector<4x16xf32>
    %c3 = arith.constant 3 : index
    %c0_28 = arith.constant 0 : index
    %c0_29 = arith.constant 0 : index
    %29 = vector.load %arg2[%c3, %c0_28, %c0_29] : memref<7x4x8xf32, #tpu.memory_space<vmem>>, vector<1x4x8xf32>
    %30 = vector.shape_cast %29 : vector<1x4x8xf32> to vector<4x8xf32>
    %cst_30 = arith.constant dense<0.000000e+00> : vector<4x16xf32>
    %31 = tpu.matmul %30, %6, %cst_30 {dimension_numbers = #tpu.dot_dimension_numbers<[1], [0], [0], [1], [0, 0, 1, 1], [], []>, precision = #tpu.contract_precision<fp32>} : vector<4x8xf32>, vector<8x16xf32>, vector<4x16xf32> -> vector<4x16xf32>
    %c3_31 = arith.constant 3 : index
    %c0_32 = arith.constant 0 : index
    %c0_33 = arith.constant 0 : index
    %32 = vector.load %arg3[%c3_31, %c0_32, %c0_33] : memref<7x16x16xf32, #tpu.memory_space<vmem>>, vector<1x16x16xf32>
    %33 = vector.shape_cast %32 : vector<1x16x16xf32> to vector<16x16xf32>
    %cst_34 = arith.constant dense<0.000000e+00> : vector<4x16xf32>
    %34 = tpu.matmul %31, %33, %cst_34 {dimension_numbers = #tpu.dot_dimension_numbers<[1], [0], [0], [1], [0, 0, 1, 1], [], []>, precision = #tpu.contract_precision<fp32>} : vector<4x16xf32>, vector<16x16xf32>, vector<4x16xf32> -> vector<4x16xf32>
    %35 = arith.addf %28, %34 : vector<4x16xf32>
    %c4 = arith.constant 4 : index
    %c0_35 = arith.constant 0 : index
    %c0_36 = arith.constant 0 : index
    %36 = vector.load %arg2[%c4, %c0_35, %c0_36] : memref<7x4x8xf32, #tpu.memory_space<vmem>>, vector<1x4x8xf32>
    %37 = vector.shape_cast %36 : vector<1x4x8xf32> to vector<4x8xf32>
    %cst_37 = arith.constant dense<0.000000e+00> : vector<4x16xf32>
    %38 = tpu.matmul %37, %6, %cst_37 {dimension_numbers = #tpu.dot_dimension_numbers<[1], [0], [0], [1], [0, 0, 1, 1], [], []>, precision = #tpu.contract_precision<fp32>} : vector<4x8xf32>, vector<8x16xf32>, vector<4x16xf32> -> vector<4x16xf32>
    %c4_38 = arith.constant 4 : index
    %c0_39 = arith.constant 0 : index
    %c0_40 = arith.constant 0 : index
    %39 = vector.load %arg3[%c4_38, %c0_39, %c0_40] : memref<7x16x16xf32, #tpu.memory_space<vmem>>, vector<1x16x16xf32>
    %40 = vector.shape_cast %39 : vector<1x16x16xf32> to vector<16x16xf32>
    %cst_41 = arith.constant dense<0.000000e+00> : vector<4x16xf32>
    %41 = tpu.matmul %38, %40, %cst_41 {dimension_numbers = #tpu.dot_dimension_numbers<[1], [0], [0], [1], [0, 0, 1, 1], [], []>, precision = #tpu.contract_precision<fp32>} : vector<4x16xf32>, vector<16x16xf32>, vector<4x16xf32> -> vector<4x16xf32>
    %42 = arith.addf %35, %41 : vector<4x16xf32>
    %c5 = arith.constant 5 : index
    %c0_42 = arith.constant 0 : index
    %c0_43 = arith.constant 0 : index
    %43 = vector.load %arg2[%c5, %c0_42, %c0_43] : memref<7x4x8xf32, #tpu.memory_space<vmem>>, vector<1x4x8xf32>
    %44 = vector.shape_cast %43 : vector<1x4x8xf32> to vector<4x8xf32>
    %cst_44 = arith.constant dense<0.000000e+00> : vector<4x16xf32>
    %45 = tpu.matmul %44, %6, %cst_44 {dimension_numbers = #tpu.dot_dimension_numbers<[1], [0], [0], [1], [0, 0, 1, 1], [], []>, precision = #tpu.contract_precision<fp32>} : vector<4x8xf32>, vector<8x16xf32>, vector<4x16xf32> -> vector<4x16xf32>
    %c5_45 = arith.constant 5 : index
    %c0_46 = arith.constant 0 : index
    %c0_47 = arith.constant 0 : index
    %46 = vector.load %arg3[%c5_45, %c0_46, %c0_47] : memref<7x16x16xf32, #tpu.memory_space<vmem>>, vector<1x16x16xf32>
    %47 = vector.shape_cast %46 : vector<1x16x16xf32> to vector<16x16xf32>
    %cst_48 = arith.constant dense<0.000000e+00> : vector<4x16xf32>
    %48 = tpu.matmul %45, %47, %cst_48 {dimension_numbers = #tpu.dot_dimension_numbers<[1], [0], [0], [1], [0, 0, 1, 1], [], []>, precision = #tpu.contract_precision<fp32>} : vector<4x16xf32>, vector<16x16xf32>, vector<4x16xf32> -> vector<4x16xf32>
    %49 = arith.addf %42, %48 : vector<4x16xf32>
    %c6 = arith.constant 6 : index
    %c0_49 = arith.constant 0 : index
    %c0_50 = arith.constant 0 : index
    %50 = vector.load %arg2[%c6, %c0_49, %c0_50] : memref<7x4x8xf32, #tpu.memory_space<vmem>>, vector<1x4x8xf32>
    %51 = vector.shape_cast %50 : vector<1x4x8xf32> to vector<4x8xf32>
    %cst_51 = arith.constant dense<0.000000e+00> : vector<4x16xf32>
    %52 = tpu.matmul %51, %6, %cst_51 {dimension_numbers = #tpu.dot_dimension_numbers<[1], [0], [0], [1], [0, 0, 1, 1], [], []>, precision = #tpu.contract_precision<fp32>} : vector<4x8xf32>, vector<8x16xf32>, vector<4x16xf32> -> vector<4x16xf32>
    %c6_52 = arith.constant 6 : index
    %c0_53 = arith.constant 0 : index
    %c0_54 = arith.constant 0 : index
    %53 = vector.load %arg3[%c6_52, %c0_53, %c0_54] : memref<7x16x16xf32, #tpu.memory_space<vmem>>, vector<1x16x16xf32>
    %54 = vector.shape_cast %53 : vector<1x16x16xf32> to vector<16x16xf32>
    %cst_55 = arith.constant dense<0.000000e+00> : vector<4x16xf32>
    %55 = tpu.matmul %52, %54, %cst_55 {dimension_numbers = #tpu.dot_dimension_numbers<[1], [0], [0], [1], [0, 0, 1, 1], [], []>, precision = #tpu.contract_precision<fp32>} : vector<4x16xf32>, vector<16x16xf32>, vector<4x16xf32> -> vector<4x16xf32>
    %56 = arith.addf %49, %55 : vector<4x16xf32>
    %c0_56 = arith.constant 0 : index
    %57 = memref.load %arg4[%c0_56] : memref<2xf32, #tpu.memory_space<smem>>
    %58 = vector.broadcast %57 : f32 to vector<4x16xf32>
    %59 = arith.mulf %56, %58 : vector<4x16xf32>
    %c1_57 = arith.constant 1 : index
    %60 = memref.load %arg4[%c1_57] : memref<2xf32, #tpu.memory_space<smem>>
    %61 = vector.broadcast %60 : f32 to vector<4x16xf32>
    %62 = arith.addf %59, %61 : vector<4x16xf32>
    %cst_58 = arith.constant 0.000000e+00 : f32
    %63 = vector.broadcast %cst_58 : f32 to vector<4x16xf32>
    %64 = arith.subf %63, %62 : vector<4x16xf32>
    %65 = math.exp %64 : vector<4x16xf32>
    %cst_59 = arith.constant 1.000000e+00 : f32
    %66 = vector.broadcast %cst_59 : f32 to vector<4x16xf32>
    %67 = arith.addf %66, %65 : vector<4x16xf32>
    %cst_60 = arith.constant 1.000000e+00 : f32
    %68 = vector.broadcast %cst_60 : f32 to vector<4x16xf32>
    %69 = arith.divf %68, %67 : vector<4x16xf32>
    %70 = vector.shape_cast %69 : vector<4x16xf32> to vector<4x1x16xf32>
    %71 = vector.broadcast %70 : vector<4x1x16xf32> to vector<4x16x16xf32>
    %72 = arith.mulf %1, %71 : vector<4x16x16xf32>
    %c0_61 = arith.constant 0 : index
    %c0_62 = arith.constant 0 : index
    %c0_63 = arith.constant 0 : index
    %c0_64 = arith.constant 0 : index
    %73 = vector.load %arg5[%c0_61, %c0_62, %c0_63, %c0_64] : memref<1x4x16x16xf32, #tpu.memory_space<vmem>>, vector<1x4x16x16xf32>
    %74 = vector.shape_cast %73 : vector<1x4x16x16xf32> to vector<4x16x16xf32>
    %75 = vector.shape_cast %72 : vector<4x16x16xf32> to vector<1x4x16x16xf32>
    tpu.vector_store %arg5[%c0_61, %c0_62, %c0_63, %c0_64], %75 {strides = array<i32>} : memref<1x4x16x16xf32, #tpu.memory_space<vmem>>, vector<1x4x16x16xf32>,
    return
  }
  func.func @transform_0(%arg0: i32) -> (i32, i32, i32, i32) {
    %c0_i32 = arith.constant 0 : i32
    %c0_i32_0 = arith.constant 0 : i32
    %c0_i32_1 = arith.constant 0 : i32
    %c0_i32_2 = arith.constant 0 : i32
    return %arg0, %c0_i32, %c0_i32_0, %c0_i32_1 : i32, i32, i32, i32
  }
  func.func @transform_1(%arg0: i32) -> (i32, i32, i32) {
    %c0_i32 = arith.constant 0 : i32
    %c0_i32_0 = arith.constant 0 : i32
    %c0_i32_1 = arith.constant 0 : i32
    %c0_i32_2 = arith.constant 0 : i32
    return %c0_i32, %c0_i32_0, %c0_i32_1 : i32, i32, i32
  }
  func.func @transform_2(%arg0: i32) -> (i32, i32, i32) {
    %c0_i32 = arith.constant 0 : i32
    %c0_i32_0 = arith.constant 0 : i32
    %c0_i32_1 = arith.constant 0 : i32
    %c0_i32_2 = arith.constant 0 : i32
    return %c0_i32, %c0_i32_0, %c0_i32_1 : i32, i32, i32
  }
  func.func @transform_3(%arg0: i32) -> i32 {
    %c0_i32 = arith.constant 0 : i32
    %c0_i32_0 = arith.constant 0 : i32
    return %c0_i32 : i32
  }
  func.func @transform_4(%arg0: i32) -> (i32, i32, i32, i32) {
    %c0_i32 = arith.constant 0 : i32
    %c0_i32_0 = arith.constant 0 : i32
    %c0_i32_1 = arith.constant 0 : i32
    %c0_i32_2 = arith.constant 0 : i32
    return %arg0, %c0_i32, %c0_i32_0, %c0_i32_1 : i32, i32, i32, i32
  }
}

</mosaic_0001>

<llo_original>
// kernel: tpu_custom_call.1
$region0: #{tpu_custom_call.1}
  #allocation0 [shape = 'u32[]', space=smem, size = 0x4, offset = 0x4, fixed_abs, tag = 'smem constant byte address 0x4 - core index']
  #allocation1 [shape = 'u32[144,128]{1,0:T(1,128)}', space=vmem, size = 0x12000, scoped, tag = 'internal scratch']
  %s0 = inlined_call_operand.hbm [shape: f32[2,4,16,16], index: 0, kind: input, shape index: {}]
  %s1 = inlined_call_operand.hbm [shape: f32[7,4,8], index: 1, kind: input, shape index: {}]
  %s2 = inlined_call_operand.hbm [shape: f32[7,16,16], index: 2, kind: input, shape index: {}]
  %s3 = inlined_call_operand.vmem [shape: f32[2], index: 3, kind: input, shape index: {}]
  %s4 = inlined_call_operand.hbm [shape: f32[2,4,16,16], index: 4, kind: output, shape index: {}]
  %s5 = sld [smem:[#allocation0]]
  $region65: #{tpu_custom_call.1} parent=0
    _
  %s7 = ssub.s32 1, %s5
  %s8 = scalar_select 0, %s7, %s5
  $region1: #{tpu_custom_call.1} parent=0
    #allocation2 [shape = 'u8[65536]{0}', space=vmem, size = 0x10000, scoped, tag = 'input window, operand 0']
    #allocation3 [shape = 's32[2]{0}', space=sflag, size = 0x8, scoped, tag = 'scoped memory for tpu_custom_call.1']
    #allocation4 [shape = 's32[2]{0}', space=sflag, size = 0x8, scoped, tag = 'scoped memory for tpu_custom_call.1']
    #allocation5 [shape = 's32[2]{0}', space=sflag, size = 0x8, scoped, tag = 'scoped memory for tpu_custom_call.1']
    #allocation6 [shape = 'u8[14336]{0}', space=vmem, size = 0x3800, scoped, tag = 'input window, operand 1, single buffered']
    #allocation7 [shape = 's32[1]{0}', space=sflag, size = 0x4, scoped, tag = 'scoped memory for tpu_custom_call.1']
    #allocation8 [shape = 'u8[57344]{0}', space=vmem, size = 0xe000, scoped, tag = 'input window, operand 2, single buffered']
    #allocation9 [shape = 'u8[512]{0}', space=smem, size = 0x200, scoped, tag = 'input window, operand 3, single buffered']
    #allocation10 [shape = 'u8[65536]{0}', space=vmem, size = 0x10000, scoped, tag = 'output window, operand 0']
    %9 = vsyncpa [#allocation3], 0
    %s10 = scalar_lea.sflag [#allocation3], 1
    %11 = vsyncpa %s10, 0
    %12 = vsyncpa [#allocation7], 0
    %13 = vsyncpa [#allocation5], 0
    %14 = vsyncpa [#allocation4], 0
    %s15 = scalar_lea.sflag [#allocation4], 1
    %16 = vsyncpa %s15, 0
    loop: start=0, step=1, limit=4
    $region2: #{tpu_custom_call.1} parent=1 // loop_pre_header
      _
    $region3: #{tpu_custom_call.1} parent=1 // loop_header
      %s18 = sphi 0, %s22
      %p19 = scmp.ge.s32.totalorder %s18, 4
      %s28 = sphi 0, %s30
      %s31 = sphi 0, %s28
      %s32 = sphi 0, %s31
      %s48 = sphi 0, %s32
      %s52 = sphi 0, %s52
      %s54 = sphi 0, %s52
      %s55 = sphi 0, %s54
      %s69 = sphi 0, %s55
      %s73 = sphi 0, %s73
      %s75 = sphi 0, %s73
      %s76 = sphi 0, %s75
      %s90 = sphi 0, %s76
      %s94 = sphi 0, %s94
      %s96 = sphi 0, %s94
      %s97 = sphi 0, %s96
      %s111 = sphi 0, %s97
      %s117 = sphi 0, %s119
      %s120 = sphi 0, %s117
      %s121 = sphi 0, %s120
      %s137 = sphi 0, %s121
    $region4: #{tpu_custom_call.1} parent=1 // loop_header_branch
      %21 = sbr.rel (%p19) target = $region8
    $region5: #{tpu_custom_call.1} parent=1 // loop_body
      %s23 = ssub.s32 %s18, 1
      %s24 = ssub.s32 %s18, 2
      %s25 = sadd.s32 %s18, 1
      %s26 = ssub.s32 %s18, %s25
      %p27 = scmp.eq.s32.totalorder %s26, 0
      %s29 = sadd.s32 %s28, 1
      %s30 = scalar_select %p27, %s28, %s29
      %p33 = pneg %p27
      %p34 = scmp.eq.s32.totalorder %s18, 1
      %p35 = por %p33, %p34
      %p36 = scmp.ne.s32.totalorder %s28, %s31
      %p37 = scmp.eq.s32.totalorder %s18, 0
      %p38 = por %p36, %p37
      %p39 = scmp.ne.s32.totalorder %s28, %s31
      %p40 = scmp.eq.s32.totalorder %s23, 1
      %p41 = por %p39, %p40
      %p42 = scmp.ne.s32.totalorder %s31, %s32
      %p43 = scmp.eq.s32.totalorder %s23, 0
      %p44 = por %p42, %p43
      %p45 = scmp.ne.s32.totalorder %s31, %s32
      %p46 = scmp.eq.s32.totalorder %s24, 1
      %p47 = por %p45, %p46
      %p49 = scmp.ne.s32.totalorder %s32, %s48
      %p50 = scmp.eq.s32.totalorder %s24, 0
      %p51 = por %p49, %p50
      %s53 = sadd.s32 %s52, 1
      %p56 = scmp.eq.s32.totalorder %s18, 1
      %p57 = scmp.ne.s32.totalorder %s52, %s54
      %p58 = scmp.eq.s32.totalorder %s18, 0
      %p59 = por %p57, %p58
      %p60 = scmp.ne.s32.totalorder %s52, %s54
      %p61 = scmp.eq.s32.totalorder %s23, 1
      %p62 = por %p60, %p61
      %p63 = scmp.ne.s32.totalorder %s54, %s55
      %p64 = scmp.eq.s32.totalorder %s23, 0
      %p65 = por %p63, %p64
      %p66 = scmp.ne.s32.totalorder %s54, %s55
      %p67 = scmp.eq.s32.totalorder %s24, 1
      %p68 = por %p66, %p67
      %p70 = scmp.ne.s32.totalorder %s55, %s69
      %p71 = scmp.eq.s32.totalorder %s24, 0
      %p72 = por %p70, %p71
      %s74 = sadd.s32 %s73, 1
      %p77 = scmp.eq.s32.totalorder %s18, 1
      %p78 = scmp.ne.s32.totalorder %s73, %s75
      %p79 = scmp.eq.s32.totalorder %s18, 0
      %p80 = por %p78, %p79
      %p81 = scmp.ne.s32.totalorder %s73, %s75
      %p82 = scmp.eq.s32.totalorder %s23, 1
      %p83 = por %p81, %p82
      %p84 = scmp.ne.s32.totalorder %s75, %s76
      %p85 = scmp.eq.s32.totalorder %s23, 0
      %p86 = por %p84, %p85
      %p87 = scmp.ne.s32.totalorder %s75, %s76
      %p88 = scmp.eq.s32.totalorder %s24, 1
      %p89 = por %p87, %p88
      %p91 = scmp.ne.s32.totalorder %s76, %s90
      %p92 = scmp.eq.s32.totalorder %s24, 0
      %p93 = por %p91, %p92
      %s95 = sadd.s32 %s94, 1
      %p98 = scmp.eq.s32.totalorder %s18, 1
      %p99 = scmp.ne.s32.totalorder %s94, %s96
      %p100 = scmp.eq.s32.totalorder %s18, 0
      %p101 = por %p99, %p100
      %p102 = scmp.ne.s32.totalorder %s94, %s96
      %p103 = scmp.eq.s32.totalorder %s23, 1
      %p104 = por %p102, %p103
      %p105 = scmp.ne.s32.totalorder %s96, %s97
      %p106 = scmp.eq.s32.totalorder %s23, 0
      %p107 = por %p105, %p106
      %p108 = scmp.ne.s32.totalorder %s96, %s97
      %p109 = scmp.eq.s32.totalorder %s24, 1
      %p110 = por %p108, %p109
      %p112 = scmp.ne.s32.totalorder %s97, %s111
      %p113 = scmp.eq.s32.totalorder %s24, 0
      %p114 = por %p112, %p113
      %s115 = ssub.s32 %s18, %s25
      %p116 = scmp.eq.s32.totalorder %s115, 0
      %s118 = sadd.s32 %s117, 1
      %s119 = scalar_select %p116, %s117, %s118
      %p122 = pneg %p116
      %p123 = scmp.eq.s32.totalorder %s18, 1
      %p124 = por %p122, %p123
      %p125 = scmp.ne.s32.totalorder %s117, %s120
      %p126 = scmp.eq.s32.totalorder %s18, 0
      %p127 = por %p125, %p126
      %p128 = scmp.ne.s32.totalorder %s117, %s120
      %p129 = scmp.eq.s32.totalorder %s23, 1
      %p130 = por %p128, %p129
      %p131 = scmp.ne.s32.totalorder %s120, %s121
      %p132 = scmp.eq.s32.totalorder %s23, 0
      %p133 = por %p131, %p132
      %p134 = scmp.ne.s32.totalorder %s120, %s121
      %p135 = scmp.eq.s32.totalorder %s24, 1
      %p136 = por %p134, %p135
      %p138 = scmp.ne.s32.totalorder %s121, %s137
      %p139 = scmp.eq.s32.totalorder %s24, 0
      %p140 = por %p138, %p139
      %p141 = scmp.le.s32.totalorder 1, %s18
      %p142 = scmp.lt.s32.totalorder %s18, 3
      %p143 = pnand %p141, %p142
      %p144 = pneg %p143
      // Predicated region
      $region9: #{tpu_custom_call.1} parent=5 // pred_check
        _
      $region10: #{tpu_custom_call.1} parent=5 // pred_check_branch
        %146 = sbr.rel (%p143) target = $region12
      $region11: #{tpu_custom_call.1} parent=5 // pred_region
        %s147 = ssub.s32 %s18, 1
        // Predicated region
        $region13: #{tpu_custom_call.1} parent=11 // pred_check
          %p148 = pneg %p65
        $region14: #{tpu_custom_call.1} parent=11 // pred_check_branch
          %150 = sbr.rel (%p148) target = $region16
        $region15: #{tpu_custom_call.1} parent=11 // pred_region
          %s152 = ssub.s32 448, 448
          %153 = vsyncadd [#allocation7], %s152
          %s154 = sshll.u32 [#allocation6], 4
          %s155 = int_to_ptr.vmem [resolvable:$true] %s154
          %160 = dma.hbm_to_vmem [thread:$0]  %s1, 448, %s155, [#allocation7], 64, 64, 4
        $region16: #{tpu_custom_call.1} parent=11 // pred_fallthru
          _
        // Predicated region
        $region17: #{tpu_custom_call.1} parent=11 // pred_check
          %p161 = pneg %p86
        $region18: #{tpu_custom_call.1} parent=11 // pred_check_branch
          %163 = sbr.rel (%p161) target = $region20
        $region19: #{tpu_custom_call.1} parent=11 // pred_region
          %s165 = ssub.s32 1792, 1792
          %166 = vsyncadd [#allocation7], %s165
          %s167 = sshll.u32 [#allocation8], 4
          %s168 = int_to_ptr.vmem [resolvable:$true] %s167
          %173 = dma.hbm_to_vmem [thread:$0]  %s2, 1792, %s168, [#allocation7], 128, 128, 8
        $region20: #{tpu_custom_call.1} parent=11 // pred_fallthru
          _
        // Predicated region
        $region21: #{tpu_custom_call.1} parent=11 // pred_check
          %p174 = pneg %p107
        $region22: #{tpu_custom_call.1} parent=11 // pred_check_branch
          %176 = sbr.rel (%p174) target = $region24
        $region23: #{tpu_custom_call.1} parent=11 // pred_region
          %s178 = ssub.s32 16, 16
          %179 = vsyncadd [#allocation5], %s178
          %s181 = sshll.u32 %s3, 4
          %s182 = int_to_ptr.vmem [resolvable:$true] %s181
          %184 = dma.vmem_to_smem %s182, 16, [#allocation9], [#allocation5]
        $region24: #{tpu_custom_call.1} parent=11 // pred_fallthru
          _
      $region12: #{tpu_custom_call.1} parent=5 // pred_fallthru
        _
      %p185 = scmp.lt.s32.totalorder %s18, 2
      // Predicated region
      $region25: #{tpu_custom_call.1} parent=5 // pred_check
        %p186 = pneg %p185
      $region26: #{tpu_custom_call.1} parent=5 // pred_check_branch
        %188 = sbr.rel (%p186) target = $region28
      $region27: #{tpu_custom_call.1} parent=5 // pred_region
        // Predicated region
        $region29: #{tpu_custom_call.1} parent=27 // pred_check
          %p189 = pneg %p38
        $region30: #{tpu_custom_call.1} parent=27 // pred_check_branch
          %191 = sbr.rel (%p189) target = $region32
        $region31: #{tpu_custom_call.1} parent=27 // pred_region
          %s192 = sand.u32 %s28, 1
          %s193 = scalar_lea.sflag [#allocation3], %s192
          %s194 = sand.u32 %s28, 1
          %s195 = smul.addr %s194, 64
          %s196 = scalar_lea.vmem [#allocation2], %s195
          %s198 = ssub.s32 1024, 1024
          %199 = vsyncadd %s193, %s198
          %s200 = smul.addr %s18, 8
          %s201 = smul.addr %s200, 128
          %s202 = scalar_lea.hbm %s0, %s201
          %s203 = sshll.u32 %s196, 4
          %s204 = int_to_ptr.vmem [resolvable:$true] %s203
          %209 = dma.hbm_to_vmem [thread:$0]  %s202, 1024, %s204, %s193, 128, 128, 8
        $region32: #{tpu_custom_call.1} parent=27 // pred_fallthru
          _
      $region28: #{tpu_custom_call.1} parent=5 // pred_fallthru
        _
      %p210 = scmp.le.s32.totalorder 1, %s18
      %p211 = scmp.lt.s32.totalorder %s18, 3
      %p212 = pnand %p210, %p211
      %p213 = pneg %p212
      // Predicated region
      $region33: #{tpu_custom_call.1} parent=5 // pred_check
        _
      $region34: #{tpu_custom_call.1} parent=5 // pred_check_branch
        %215 = sbr.rel (%p212) target = $region36
      $region35: #{tpu_custom_call.1} parent=5 // pred_region
        %s216 = ssub.s32 %s18, 1
        %s217 = sand.u32 %s31, 1
        %s218 = scalar_lea.sflag [#allocation3], %s217
        %s219 = sand.u32 %s31, 1
        %s220 = smul.addr %s219, 64
        %s221 = scalar_lea.vmem [#allocation2], %s220
        // Predicated region
        $region37: #{tpu_custom_call.1} parent=35 // pred_check
          %p222 = pneg %p44
        $region38: #{tpu_custom_call.1} parent=35 // pred_check_branch
          %224 = sbr.rel (%p222) target = $region40
        $region39: #{tpu_custom_call.1} parent=35 // pred_region
          %225 = dma.done %s218, 1024
        $region40: #{tpu_custom_call.1} parent=35 // pred_fallthru
          _
        // Predicated region
        $region41: #{tpu_custom_call.1} parent=35 // pred_check
          %p226 = pneg %p65
        $region42: #{tpu_custom_call.1} parent=35 // pred_check_branch
          %228 = sbr.rel (%p226) target = $region44
        $region43: #{tpu_custom_call.1} parent=35 // pred_region
          %229 = dma.done [#allocation7], 448
        $region44: #{tpu_custom_call.1} parent=35 // pred_fallthru
          _
        // Predicated region
        $region45: #{tpu_custom_call.1} parent=35 // pred_check
          %p230 = pneg %p86
        $region46: #{tpu_custom_call.1} parent=35 // pred_check_branch
          %232 = sbr.rel (%p230) target = $region48
        $region47: #{tpu_custom_call.1} parent=35 // pred_region
          %233 = dma.done [#allocation7], 1792
        $region48: #{tpu_custom_call.1} parent=35 // pred_fallthru
          _
        // Predicated region
        $region49: #{tpu_custom_call.1} parent=35 // pred_check
          %p234 = pneg %p107
        $region50: #{tpu_custom_call.1} parent=35 // pred_check_branch
          %236 = sbr.rel (%p234) target = $region52
        $region51: #{tpu_custom_call.1} parent=35 // pred_region
          %237 = dma.done [#allocation5], 16
        $region52: #{tpu_custom_call.1} parent=35 // pred_fallthru
          _
        %238 = sfence
        %s239 = sand.u32 %s31, 1
        %s240 = scalar_lea.sflag [#allocation3], %s239
        %s241 = sand.u32 %s31, 1
        %s242 = smul.addr %s241, 64
        %s243 = scalar_lea.vmem [#allocation2], %s242
        %p244 = pneg %p44
        %p245 = pneg %p41
        %p246 = pneg %p65
        %p247 = pneg %p62
        %p248 = pneg %p86
        %p249 = pneg %p83
        %p250 = pneg %p107
        %p251 = pneg %p104
        %p252 = pneg %p133
        %p253 = pneg %p130
        %s254 = sand.u32 %s120, 1
        %s255 = scalar_lea.sflag [#allocation4], %s254
        %s256 = sand.u32 %s120, 1
        %s257 = smul.addr %s256, 64
        %s258 = scalar_lea.vmem [#allocation10], %s257
        %v259 = vld [vmem:[%s221] sm:$0xff]
        %v260 = vld [vmem:[%s221 + $0x8] sm:$0xff]
        %v261 = vld [vmem:[%s221 + $0x10] sm:$0xff]
        %v262 = vld [vmem:[%s221 + $0x18] sm:$0xff]
        %v263 = vld [vmem:[%s221 + $0x20] sm:$0xff]
        %v264 = vld [vmem:[%s221 + $0x28] sm:$0xff]
        %v265 = vld [vmem:[%s221 + $0x30] sm:$0xff]
        %v266 = vld [vmem:[%s221 + $0x38] sm:$0xff]
        %vm267 = vcmask 130048
        %v268 = vsel %vm267, %v259, -inf
        %v269 = vsel %vm267, %v260, -inf
        %v270 = vmax.f32 %v268, %v269
        %v271 = vrot.slane %v270, 4
        %v272 = vmax.f32 %v270, %v271
        %v273 = vrot.slane %v272, 2
        %v274 = vmax.f32 %v272, %v273
        %v275 = vrot.slane %v274, 1
        %v276 = vmax.f32 %v274, %v275
        %v277 = vsel %vm267, %v261, -inf
        %v278 = vsel %vm267, %v262, -inf
        %v279 = vmax.f32 %v277, %v278
        %v280 = vrot.slane %v279, 4
        %v281 = vmax.f32 %v279, %v280
        %v282 = vrot.slane %v281, 2
        %v283 = vmax.f32 %v281, %v282
        %v284 = vrot.slane %v283, 1
        %v285 = vmax.f32 %v283, %v284
        %v286 = vsel %vm267, %v263, -inf
        %v287 = vsel %vm267, %v264, -inf
        %v288 = vmax.f32 %v286, %v287
        %v289 = vrot.slane %v288, 4
        %v290 = vmax.f32 %v288, %v289
        %v291 = vrot.slane %v290, 2
        %v292 = vmax.f32 %v290, %v291
        %v293 = vrot.slane %v292, 1
        %v294 = vmax.f32 %v292, %v293
        %v295 = vsel %vm267, %v265, -inf
        %v296 = vsel %vm267, %v266, -inf
        %v297 = vmax.f32 %v295, %v296
        %v298 = vrot.slane %v297, 4
        %v299 = vmax.f32 %v297, %v298
        %v300 = vrot.slane %v299, 2
        %v301 = vmax.f32 %v299, %v300
        %v302 = vrot.slane %v301, 1
        %v303 = vmax.f32 %v301, %v302
        %v304 = vsel %vm267, %v259, 0.0
        %v305 = vsel %vm267, %v260, 0.0
        %v306 = vadd.f32 %v304, %v305
        %v307 = vrot.slane %v306, 4
        %v308 = vadd.f32 %v306, %v307
        %v309 = vrot.slane %v308, 2
        %v310 = vadd.f32 %v308, %v309
        %v311 = vrot.slane %v310, 1
        %v312 = vadd.f32 %v310, %v311
        %v313 = vsel %vm267, %v261, 0.0
        %v314 = vsel %vm267, %v262, 0.0
        %v315 = vadd.f32 %v313, %v314
        %v316 = vrot.slane %v315, 4
        %v317 = vadd.f32 %v315, %v316
        %v318 = vrot.slane %v317, 2
        %v319 = vadd.f32 %v317, %v318
        %v320 = vrot.slane %v319, 1
        %v321 = vadd.f32 %v319, %v320
        %v322 = vsel %vm267, %v263, 0.0
        %v323 = vsel %vm267, %v264, 0.0
        %v324 = vadd.f32 %v322, %v323
        %v325 = vrot.slane %v324, 4
        %v326 = vadd.f32 %v324, %v325
        %v327 = vrot.slane %v326, 2
        %v328 = vadd.f32 %v326, %v327
        %v329 = vrot.slane %v328, 1
        %v330 = vadd.f32 %v328, %v329
        %v331 = vsel %vm267, %v265, 0.0
        %v332 = vsel %vm267, %v266, 0.0
        %v333 = vadd.f32 %v331, %v332
        %v334 = vrot.slane %v333, 4
        %v335 = vadd.f32 %v333, %v334
        %v336 = vrot.slane %v335, 2
        %v337 = vadd.f32 %v335, %v336
        %v338 = vrot.slane %v337, 1
        %v339 = vadd.f32 %v337, %v338
        %v340 = vrcp.pop 16.0
        %v341 = vmul.f32 %v312, %v340
        %v342 = vmul.f32 %v321, %v340
        %v343 = vmul.f32 %v330, %v340
        %v344 = vmul.f32 %v339, %v340
        %vm349 = vcmask 1041409
        %v350 = vsel %vm349, %v285, %v276
        %vm351 = vcmask 1042434
        %v352 = vsel %vm351, %v294, %v350
        %vm353 = vcmask 1043459
        %v354 = vsel %vm353, %v303, %v352
        %vm360 = vcmask 1045509
        %v361 = vsel %vm360, %v342, %v341
        %vm362 = vcmask 1046534
        %v363 = vsel %vm362, %v343, %v361
        %vm364 = vcmask 1047559
        %v365 = vsel %vm364, %v344, %v363
        %vm367 = vcmask 1043456
        %v368 = vsel %vm367, %v354, %v365
        %v369 = vld [vmem:[#allocation6] sm:$0xf]
        %vm370 = vcmask 64512
        %v372 = vsel %vm370, %v369, 0
        %374 = vmatprep.subr.mxu0 0.0
        %v375 = vand.u32 %v368, 4294901760
        %376 = vmatpush1.msra.mxu0 %v375
        %377 = vmatprep.subr.mxu0 0.0
        %378 = vmatpush1.msra.mxu0 0.0
        %379 = vmatprep.subr.mxu0 0.0
        %380 = vmatpush1.msra.mxu0 0.0
        %381 = vmatprep.subr.mxu0 0.0
        %382 = vmatpush1.msra.mxu0 0.0
        %383 = vmatprep.subr.mxu0 0.0
        %384 = vmatpush1.msra.mxu0 0.0
        %385 = vmatprep.subr.mxu0 0.0
        %386 = vmatpush1.msra.mxu0 0.0
        %387 = vmatprep.subr.mxu0 0.0
        %388 = vmatpush1.msra.mxu0 0.0
        %389 = vmatprep.subr.mxu0 0.0
        %390 = vmatpush1.msra.mxu0 0.0
        %391 = vmatprep.subr.mxu0 0.0
        %392 = vmatpush1.msra.mxu0 0.0
        %393 = vmatprep.subr.mxu0 0.0
        %394 = vmatpush1.msra.mxu0 0.0
        %395 = vmatprep.subr.mxu0 0.0
        %396 = vmatpush1.msra.mxu0 0.0
        %397 = vmatprep.subr.mxu0 0.0
        %398 = vmatpush1.msra.mxu0 0.0
        %399 = vmatprep.subr.mxu0 0.0
        %400 = vmatpush1.msra.mxu0 0.0
        %401 = vmatprep.subr.mxu0 0.0
        %402 = vmatpush1.msra.mxu0 0.0
        %403 = vmatprep.subr.mxu0 0.0
        %404 = vmatpush1.msra.mxu0 0.0
        %405 = vmatprep.subr.mxu0 0.0
        %406 = vmatpush1.msra.mxu0 0.0
        %407 = vmatprep.subr.mxu0 0.0
        %408 = vmatpush1.msra.mxu0 0.0
        %409 = vmatprep.subr.mxu0 0.0
        %410 = vmatpush1.msra.mxu0 0.0
        %411 = vmatprep.subr.mxu0 0.0
        %412 = vmatpush1.msra.mxu0 0.0
        %413 = vmatprep.subr.mxu0 0.0
        %414 = vmatpush1.msra.mxu0 0.0
        %415 = vmatprep.subr.mxu0 0.0
        %416 = vmatpush1.msra.mxu0 0.0
        %417 = vmatprep.subr.mxu0 0.0
        %418 = vmatpush1.msra.mxu0 0.0
        %419 = vmatprep.subr.mxu0 0.0
        %420 = vmatpush1.msra.mxu0 0.0
        %421 = vmatprep.subr.mxu0 0.0
        %422 = vmatpush1.msra.mxu0 0.0
        %423 = vmatprep.subr.mxu0 0.0
        %424 = vmatpush1.msra.mxu0 0.0
        %425 = vmatprep.subr.mxu0 0.0
        %426 = vmatpush1.msra.mxu0 0.0
        %427 = vmatprep.subr.mxu0 0.0
        %428 = vmatpush1.msra.mxu0 0.0
        %429 = vmatprep.subr.mxu0 0.0
        %430 = vmatpush1.msra.mxu0 0.0
        %431 = vmatprep.subr.mxu0 0.0
        %432 = vmatpush1.msra.mxu0 0.0
        %433 = vmatprep.subr.mxu0 0.0
        %434 = vmatpush1.msra.mxu0 0.0
        %435 = vmatprep.subr.mxu0 0.0
        %436 = vmatpush1.msra.mxu0 0.0
        %437 = vmatprep.subr.mxu0 0.0
        %438 = vmatpush1.msra.mxu0 0.0
        %439 = vmatprep.mubr.f32.mxu0 0.0
        %v440 = vand.u32 %v372, 4294901760
        %v441 = vsub.f32 %v372, %v440
        %v442 = vand.u32 %v441, 4294901760
        %v443 = vsub.f32 %v441, %v442
        %v444 = vand.u32 %v443, 4294901760
        %445 = vmatmul.mubr.f32.gmra.mrb[0].mxu0 %v444
        %v446 = vpop.f32.mrb[0].mxu0
        %v447 = vadd.f32 0.0, %v446
        %v448 = vpop.f32.mrb[0].mxu0
        %449 = vdwg.mxu0
        %450 = vmatprep.subr.mxu0 0.0
        %v451 = vand.u32 %v368, 4294901760
        %v452 = vsub.f32 %v368, %v451
        %v453 = vand.u32 %v452, 4294901760
        %v454 = vsub.f32 %v452, %v453
        %v455 = vand.u32 %v454, 4294901760
        %456 = vmatpush1.msra.mxu0 %v455
        %457 = vmatprep.subr.mxu0 0.0
        %458 = vmatpush1.msra.mxu0 0.0
        %459 = vmatprep.subr.mxu0 0.0
        %460 = vmatpush1.msra.mxu0 0.0
        %461 = vmatprep.subr.mxu0 0.0
        %462 = vmatpush1.msra.mxu0 0.0
        %463 = vmatprep.subr.mxu0 0.0
        %464 = vmatpush1.msra.mxu0 0.0
        %465 = vmatprep.subr.mxu0 0.0
        %466 = vmatpush1.msra.mxu0 0.0
        %467 = vmatprep.subr.mxu0 0.0
        %468 = vmatpush1.msra.mxu0 0.0
        %469 = vmatprep.subr.mxu0 0.0
        %470 = vmatpush1.msra.mxu0 0.0
        %471 = vmatprep.subr.mxu0 0.0
        %472 = vmatpush1.msra.mxu0 0.0
        %473 = vmatprep.subr.mxu0 0.0
        %474 = vmatpush1.msra.mxu0 0.0
        %475 = vmatprep.subr.mxu0 0.0
        %476 = vmatpush1.msra.mxu0 0.0
        %477 = vmatprep.subr.mxu0 0.0
        %478 = vmatpush1.msra.mxu0 0.0
        %479 = vmatprep.subr.mxu0 0.0
        %480 = vmatpush1.msra.mxu0 0.0
        %481 = vmatprep.subr.mxu0 0.0
        %482 = vmatpush1.msra.mxu0 0.0
        %483 = vmatprep.subr.mxu0 0.0
        %484 = vmatpush1.msra.mxu0 0.0
        %485 = vmatprep.subr.mxu0 0.0
        %486 = vmatpush1.msra.mxu0 0.0
        %487 = vmatprep.subr.mxu0 0.0
        %488 = vmatpush1.msra.mxu0 0.0
        %489 = vmatprep.subr.mxu0 0.0
        %490 = vmatpush1.msra.mxu0 0.0
        %491 = vmatprep.subr.mxu0 0.0
        %492 = vmatpush1.msra.mxu0 0.0
        %493 = vmatprep.subr.mxu0 0.0
        %494 = vmatpush1.msra.mxu0 0.0
        %495 = vmatprep.subr.mxu0 0.0
        %496 = vmatpush1.msra.mxu0 0.0
        %497 = vmatprep.subr.mxu0 0.0
        %498 = vmatpush1.msra.mxu0 0.0
        %499 = vmatprep.subr.mxu0 0.0
        %500 = vmatpush1.msra.mxu0 0.0
        %501 = vmatprep.subr.mxu0 0.0
        %502 = vmatpush1.msra.mxu0 0.0
        %503 = vmatprep.subr.mxu0 0.0
        %504 = vmatpush1.msra.mxu0 0.0
        %505 = vmatprep.subr.mxu0 0.0
        %506 = vmatpush1.msra.mxu0 0.0
        %507 = vmatprep.subr.mxu0 0.0
        %508 = vmatpush1.msra.mxu0 0.0
        %509 = vmatprep.subr.mxu0 0.0
        %510 = vmatpush1.msra.mxu0 0.0
        %511 = vmatprep.subr.mxu0 0.0
        %512 = vmatpush1.msra.mxu0 0.0
        %513 = vmatprep.subr.mxu0 0.0
        %514 = vmatpush1.msra.mxu0 0.0
        %515 = vmatprep.subr.mxu0 0.0
        %516 = vmatpush1.msra.mxu0 0.0
        %517 = vmatprep.subr.mxu0 0.0
        %518 = vmatpush1.msra.mxu0 0.0
        %519 = vmatprep.mubr.f32.mxu0 0.0
        %v520 = vand.u32 %v372, 4294901760
        %521 = vmatmul.mubr.f32.gmra.mrb[0].mxu0 %v520
        %v522 = vpop.f32.mrb[0].mxu0
        %v523 = vadd.f32 %v447, %v522
        %v524 = vpop.f32.mrb[0].mxu0
        %525 = vdwg.mxu0
        %526 = vmatprep.subr.mxu0 0.0
        %v527 = vand.u32 %v368, 4294901760
        %v528 = vsub.f32 %v368, %v527
        %529 = vmatpush1.msra.mxu0 %v528
        %530 = vmatprep.subr.mxu0 0.0
        %531 = vmatpush1.msra.mxu0 0.0
        %532 = vmatprep.subr.mxu0 0.0
        %533 = vmatpush1.msra.mxu0 0.0
        %534 = vmatprep.subr.mxu0 0.0
        %535 = vmatpush1.msra.mxu0 0.0
        %536 = vmatprep.subr.mxu0 0.0
        %537 = vmatpush1.msra.mxu0 0.0
        %538 = vmatprep.subr.mxu0 0.0
        %539 = vmatpush1.msra.mxu0 0.0
        %540 = vmatprep.subr.mxu0 0.0
        %541 = vmatpush1.msra.mxu0 0.0
        %542 = vmatprep.subr.mxu0 0.0
        %543 = vmatpush1.msra.mxu0 0.0
        %544 = vmatprep.subr.mxu0 0.0
        %545 = vmatpush1.msra.mxu0 0.0
        %546 = vmatprep.subr.mxu0 0.0
        %547 = vmatpush1.msra.mxu0 0.0
        %548 = vmatprep.subr.mxu0 0.0
        %549 = vmatpush1.msra.mxu0 0.0
        %550 = vmatprep.subr.mxu0 0.0
        %551 = vmatpush1.msra.mxu0 0.0
        %552 = vmatprep.subr.mxu0 0.0
        %553 = vmatpush1.msra.mxu0 0.0
        %554 = vmatprep.subr.mxu0 0.0
        %555 = vmatpush1.msra.mxu0 0.0
        %556 = vmatprep.subr.mxu0 0.0
        %557 = vmatpush1.msra.mxu0 0.0
        %558 = vmatprep.subr.mxu0 0.0
        %559 = vmatpush1.msra.mxu0 0.0
        %560 = vmatprep.subr.mxu0 0.0
        %561 = vmatpush1.msra.mxu0 0.0
        %562 = vmatprep.subr.mxu0 0.0
        %563 = vmatpush1.msra.mxu0 0.0
        %564 = vmatprep.subr.mxu0 0.0
        %565 = vmatpush1.msra.mxu0 0.0
        %566 = vmatprep.subr.mxu0 0.0
        %567 = vmatpush1.msra.mxu0 0.0
        %568 = vmatprep.subr.mxu0 0.0
        %569 = vmatpush1.msra.mxu0 0.0
        %570 = vmatprep.subr.mxu0 0.0
        %571 = vmatpush1.msra.mxu0 0.0
        %572 = vmatprep.subr.mxu0 0.0
        %573 = vmatpush1.msra.mxu0 0.0
        %574 = vmatprep.subr.mxu0 0.0
        %575 = vmatpush1.msra.mxu0 0.0
        %576 = vmatprep.subr.mxu0 0.0
        %577 = vmatpush1.msra.mxu0 0.0
        %578 = vmatprep.subr.mxu0 0.0
        %579 = vmatpush1.msra.mxu0 0.0
        %580 = vmatprep.subr.mxu0 0.0
        %581 = vmatpush1.msra.mxu0 0.0
        %582 = vmatprep.subr.mxu0 0.0
        %583 = vmatpush1.msra.mxu0 0.0
        %584 = vmatprep.subr.mxu0 0.0
        %585 = vmatpush1.msra.mxu0 0.0
        %586 = vmatprep.subr.mxu0 0.0
        %587 = vmatpush1.msra.mxu0 0.0
        %588 = vmatprep.subr.mxu0 0.0
        %589 = vmatpush1.msra.mxu0 0.0
        %590 = vmatprep.subr.mxu0 0.0
        %591 = vmatpush1.msra.mxu0 0.0
        %592 = vmatprep.mubr.f32.mxu0 0.0
        %v593 = vand.u32 %v372, 4294901760
        %v594 = vsub.f32 %v372, %v593
        %595 = vmatmul.mubr.f32.gmra.mrb[0].mxu0 %v594
        %v596 = vpop.f32.mrb[0].mxu0
        %v597 = vadd.f32 %v523, %v596
        %v598 = vpop.f32.mrb[0].mxu0
        %599 = vdwg.mxu0
        %600 = vmatprep.subr.mxu0 0.0
        %v601 = vand.u32 %v368, 4294901760
        %602 = vmatpush1.msra.mxu0 %v601
        %603 = vmatprep.subr.mxu0 0.0
        %604 = vmatpush1.msra.mxu0 0.0
        %605 = vmatprep.subr.mxu0 0.0
        %606 = vmatpush1.msra.mxu0 0.0
        %607 = vmatprep.subr.mxu0 0.0
        %608 = vmatpush1.msra.mxu0 0.0
        %609 = vmatprep.subr.mxu0 0.0
        %610 = vmatpush1.msra.mxu0 0.0
        %611 = vmatprep.subr.mxu0 0.0
        %612 = vmatpush1.msra.mxu0 0.0
        %613 = vmatprep.subr.mxu0 0.0
        %614 = vmatpush1.msra.mxu0 0.0
        %615 = vmatprep.subr.mxu0 0.0
        %616 = vmatpush1.msra.mxu0 0.0
        %617 = vmatprep.subr.mxu0 0.0
        %618 = vmatpush1.msra.mxu0 0.0
        %619 = vmatprep.subr.mxu0 0.0
        %620 = vmatpush1.msra.mxu0 0.0
        %621 = vmatprep.subr.mxu0 0.0
        %622 = vmatpush1.msra.mxu0 0.0
        %623 = vmatprep.subr.mxu0 0.0
        %624 = vmatpush1.msra.mxu0 0.0
        %625 = vmatprep.subr.mxu0 0.0
        %626 = vmatpush1.msra.mxu0 0.0
        %627 = vmatprep.subr.mxu0 0.0
        %628 = vmatpush1.msra.mxu0 0.0
        %629 = vmatprep.subr.mxu0 0.0
        %630 = vmatpush1.msra.mxu0 0.0
        %631 = vmatprep.subr.mxu0 0.0
        %632 = vmatpush1.msra.mxu0 0.0
        %633 = vmatprep.subr.mxu0 0.0
        %634 = vmatpush1.msra.mxu0 0.0
        %635 = vmatprep.subr.mxu0 0.0
        %636 = vmatpush1.msra.mxu0 0.0
        %637 = vmatprep.subr.mxu0 0.0
        %638 = vmatpush1.msra.mxu0 0.0
        %639 = vmatprep.subr.mxu0 0.0
        %640 = vmatpush1.msra.mxu0 0.0
        %641 = vmatprep.subr.mxu0 0.0
        %642 = vmatpush1.msra.mxu0 0.0
        %643 = vmatprep.subr.mxu0 0.0
        %644 = vmatpush1.msra.mxu0 0.0
        %645 = vmatprep.subr.mxu0 0.0
        %646 = vmatpush1.msra.mxu0 0.0
        %647 = vmatprep.subr.mxu0 0.0
        %648 = vmatpush1.msra.mxu0 0.0
        %649 = vmatprep.subr.mxu0 0.0
        %650 = vmatpush1.msra.mxu0 0.0
        %651 = vmatprep.subr.mxu0 0.0
        %652 = vmatpush1.msra.mxu0 0.0
        %653 = vmatprep.subr.mxu0 0.0
        %654 = vmatpush1.msra.mxu0 0.0
        %655 = vmatprep.subr.mxu0 0.0
        %656 = vmatpush1.msra.mxu0 0.0
        %657 = vmatprep.subr.mxu0 0.0
        %658 = vmatpush1.msra.mxu0 0.0
        %659 = vmatprep.subr.mxu0 0.0
        %660 = vmatpush1.msra.mxu0 0.0
        %661 = vmatprep.subr.mxu0 0.0
        %662 = vmatpush1.msra.mxu0 0.0
        %663 = vmatprep.subr.mxu0 0.0
        %664 = vmatpush1.msra.mxu0 0.0
        %665 = vmatprep.mubr.f32.mxu0 0.0
        %v666 = vand.u32 %v372, 4294901760
        %v667 = vsub.f32 %v372, %v666
        %v668 = vand.u32 %v667, 4294901760
        %669 = vmatmul.mubr.f32.gmra.mrb[0].mxu0 %v668
        %v670 = vpop.f32.mrb[0].mxu0
        %v671 = vadd.f32 %v597, %v670
        %v672 = vpop.f32.mrb[0].mxu0
        %673 = vdwg.mxu0
        %674 = vmatprep.subr.mxu0 0.0
        %v675 = vand.u32 %v368, 4294901760
        %v676 = vsub.f32 %v368, %v675
        %v677 = vand.u32 %v676, 4294901760
        %678 = vmatpush1.msra.mxu0 %v677
        %679 = vmatprep.subr.mxu0 0.0
        %680 = vmatpush1.msra.mxu0 0.0
        %681 = vmatprep.subr.mxu0 0.0
        %682 = vmatpush1.msra.mxu0 0.0
        %683 = vmatprep.subr.mxu0 0.0
        %684 = vmatpush1.msra.mxu0 0.0
        %685 = vmatprep.subr.mxu0 0.0
        %686 = vmatpush1.msra.mxu0 0.0
        %687 = vmatprep.subr.mxu0 0.0
        %688 = vmatpush1.msra.mxu0 0.0
        %689 = vmatprep.subr.mxu0 0.0
        %690 = vmatpush1.msra.mxu0 0.0
        %691 = vmatprep.subr.mxu0 0.0
        %692 = vmatpush1.msra.mxu0 0.0
        %693 = vmatprep.subr.mxu0 0.0
        %694 = vmatpush1.msra.mxu0 0.0
        %695 = vmatprep.subr.mxu0 0.0
        %696 = vmatpush1.msra.mxu0 0.0
        %697 = vmatprep.subr.mxu0 0.0
        %698 = vmatpush1.msra.mxu0 0.0
        %699 = vmatprep.subr.mxu0 0.0
        %700 = vmatpush1.msra.mxu0 0.0
        %701 = vmatprep.subr.mxu0 0.0
        %702 = vmatpush1.msra.mxu0 0.0
        %703 = vmatprep.subr.mxu0 0.0
        %704 = vmatpush1.msra.mxu0 0.0
        %705 = vmatprep.subr.mxu0 0.0
        %706 = vmatpush1.msra.mxu0 0.0
        %707 = vmatprep.subr.mxu0 0.0
        %708 = vmatpush1.msra.mxu0 0.0
        %709 = vmatprep.subr.mxu0 0.0
        %710 = vmatpush1.msra.mxu0 0.0
        %711 = vmatprep.subr.mxu0 0.0
        %712 = vmatpush1.msra.mxu0 0.0
        %713 = vmatprep.subr.mxu0 0.0
        %714 = vmatpush1.msra.mxu0 0.0
        %715 = vmatprep.subr.mxu0 0.0
        %716 = vmatpush1.msra.mxu0 0.0
        %717 = vmatprep.subr.mxu0 0.0
        %718 = vmatpush1.msra.mxu0 0.0
        %719 = vmatprep.subr.mxu0 0.0
        %720 = vmatpush1.msra.mxu0 0.0
        %721 = vmatprep.subr.mxu0 0.0
        %722 = vmatpush1.msra.mxu0 0.0
        %723 = vmatprep.subr.mxu0 0.0
        %724 = vmatpush1.msra.mxu0 0.0
        %725 = vmatprep.subr.mxu0 0.0
        %726 = vmatpush1.msra.mxu0 0.0
        %727 = vmatprep.subr.mxu0 0.0
        %728 = vmatpush1.msra.mxu0 0.0
        %729 = vmatprep.subr.mxu0 0.0
        %730 = vmatpush1.msra.mxu0 0.0
        %731 = vmatprep.subr.mxu0 0.0
        %732 = vmatpush1.msra.mxu0 0.0
        %733 = vmatprep.subr.mxu0 0.0
        %734 = vmatpush1.msra.mxu0 0.0
        %735 = vmatprep.subr.mxu0 0.0
        %736 = vmatpush1.msra.mxu0 0.0
        %737 = vmatprep.subr.mxu0 0.0
        %738 = vmatpush1.msra.mxu0 0.0
        %739 = vmatprep.subr.mxu0 0.0
        %740 = vmatpush1.msra.mxu0 0.0
        %741 = vmatprep.mubr.f32.mxu0 0.0
        %v742 = vand.u32 %v372, 4294901760
        %743 = vmatmul.mubr.f32.gmra.mrb[0].mxu0 %v742
        %v744 = vpop.f32.mrb[0].mxu0
        %v745 = vadd.f32 %v671, %v744
        %v746 = vpop.f32.mrb[0].mxu0
        %747 = vdwg.mxu0
        %748 = vmatprep.subr.mxu0 0.0
        %v749 = vand.u32 %v368, 4294901760
        %750 = vmatpush1.msra.mxu0 %v749
        %751 = vmatprep.subr.mxu0 0.0
        %752 = vmatpush1.msra.mxu0 0.0
        %753 = vmatprep.subr.mxu0 0.0
        %754 = vmatpush1.msra.mxu0 0.0
        %755 = vmatprep.subr.mxu0 0.0
        %756 = vmatpush1.msra.mxu0 0.0
        %757 = vmatprep.subr.mxu0 0.0
        %758 = vmatpush1.msra.mxu0 0.0
        %759 = vmatprep.subr.mxu0 0.0
        %760 = vmatpush1.msra.mxu0 0.0
        %761 = vmatprep.subr.mxu0 0.0
        %762 = vmatpush1.msra.mxu0 0.0
        %763 = vmatprep.subr.mxu0 0.0
        %764 = vmatpush1.msra.mxu0 0.0
        %765 = vmatprep.subr.mxu0 0.0
        %766 = vmatpush1.msra.mxu0 0.0
        %767 = vmatprep.subr.mxu0 0.0
        %768 = vmatpush1.msra.mxu0 0.0
        %769 = vmatprep.subr.mxu0 0.0
        %770 = vmatpush1.msra.mxu0 0.0
        %771 = vmatprep.subr.mxu0 0.0
        %772 = vmatpush1.msra.mxu0 0.0
        %773 = vmatprep.subr.mxu0 0.0
        %774 = vmatpush1.msra.mxu0 0.0
        %775 = vmatprep.subr.mxu0 0.0
        %776 = vmatpush1.msra.mxu0 0.0
        %777 = vmatprep.subr.mxu0 0.0
        %778 = vmatpush1.msra.mxu0 0.0
        %779 = vmatprep.subr.mxu0 0.0
        %780 = vmatpush1.msra.mxu0 0.0
        %781 = vmatprep.subr.mxu0 0.0
        %782 = vmatpush1.msra.mxu0 0.0
        %783 = vmatprep.subr.mxu0 0.0
        %784 = vmatpush1.msra.mxu0 0.0
        %785 = vmatprep.subr.mxu0 0.0
        %786 = vmatpush1.msra.mxu0 0.0
        %787 = vmatprep.subr.mxu0 0.0
        %788 = vmatpush1.msra.mxu0 0.0
        %789 = vmatprep.subr.mxu0 0.0
        %790 = vmatpush1.msra.mxu0 0.0
        %791 = vmatprep.subr.mxu0 0.0
        %792 = vmatpush1.msra.mxu0 0.0
        %793 = vmatprep.subr.mxu0 0.0
        %794 = vmatpush1.msra.mxu0 0.0
        %795 = vmatprep.subr.mxu0 0.0
        %796 = vmatpush1.msra.mxu0 0.0
        %797 = vmatprep.subr.mxu0 0.0
        %798 = vmatpush1.msra.mxu0 0.0
        %799 = vmatprep.subr.mxu0 0.0
        %800 = vmatpush1.msra.mxu0 0.0
        %801 = vmatprep.subr.mxu0 0.0
        %802 = vmatpush1.msra.mxu0 0.0
        %803 = vmatprep.subr.mxu0 0.0
        %804 = vmatpush1.msra.mxu0 0.0
        %805 = vmatprep.subr.mxu0 0.0
        %806 = vmatpush1.msra.mxu0 0.0
        %807 = vmatprep.subr.mxu0 0.0
        %808 = vmatpush1.msra.mxu0 0.0
        %809 = vmatprep.subr.mxu0 0.0
        %810 = vmatpush1.msra.mxu0 0.0
        %811 = vmatprep.subr.mxu0 0.0
        %812 = vmatpush1.msra.mxu0 0.0
        %813 = vmatprep.mubr.f32.mxu0 0.0
        %v814 = vand.u32 %v372, 4294901760
        %815 = vmatmul.mubr.f32.gmra.mrb[0].mxu0 %v814
        %v816 = vpop.f32.mrb[0].mxu0
        %v817 = vadd.f32 %v745, %v816
        %v818 = vpop.f32.mrb[0].mxu0
        %819 = vdwg.mxu0
        %v820 = vld [vmem:[#allocation8] sm:$0xff]
        %v821 = vld [vmem:[#allocation8 + $0x8] sm:$0xff]
        %s822 = scalar_lea.vmem [#allocation6], 4
        %v823 = vld [vmem:[%s822] sm:$0xf]
        %v825 = vsel %vm370, %v823, 0
        %827 = vmatprep.subr.mxu0 0.0
        %v828 = vand.u32 %v368, 4294901760
        %829 = vmatpush1.msra.mxu0 %v828
        %830 = vmatprep.subr.mxu0 0.0
        %831 = vmatpush1.msra.mxu0 0.0
        %832 = vmatprep.subr.mxu0 0.0
        %833 = vmatpush1.msra.mxu0 0.0
        %834 = vmatprep.subr.mxu0 0.0
        %835 = vmatpush1.msra.mxu0 0.0
        %836 = vmatprep.subr.mxu0 0.0
        %837 = vmatpush1.msra.mxu0 0.0
        %838 = vmatprep.subr.mxu0 0.0
        %839 = vmatpush1.msra.mxu0 0.0
        %840 = vmatprep.subr.mxu0 0.0
        %841 = vmatpush1.msra.mxu0 0.0
        %842 = vmatprep.subr.mxu0 0.0
        %843 = vmatpush1.msra.mxu0 0.0
        %844 = vmatprep.subr.mxu0 0.0
        %845 = vmatpush1.msra.mxu0 0.0
        %846 = vmatprep.subr.mxu0 0.0
        %847 = vmatpush1.msra.mxu0 0.0
        %848 = vmatprep.subr.mxu0 0.0
        %849 = vmatpush1.msra.mxu0 0.0
        %850 = vmatprep.subr.mxu0 0.0
        %851 = vmatpush1.msra.mxu0 0.0
        %852 = vmatprep.subr.mxu0 0.0
        %853 = vmatpush1.msra.mxu0 0.0
        %854 = vmatprep.subr.mxu0 0.0
        %855 = vmatpush1.msra.mxu0 0.0
        %856 = vmatprep.subr.mxu0 0.0
        %857 = vmatpush1.msra.mxu0 0.0
        %858 = vmatprep.subr.mxu0 0.0
        %859 = vmatpush1.msra.mxu0 0.0
        %860 = vmatprep.subr.mxu0 0.0
        %861 = vmatpush1.msra.mxu0 0.0
        %862 = vmatprep.subr.mxu0 0.0
        %863 = vmatpush1.msra.mxu0 0.0
        %864 = vmatprep.subr.mxu0 0.0
        %865 = vmatpush1.msra.mxu0 0.0
        %866 = vmatprep.subr.mxu0 0.0
        %867 = vmatpush1.msra.mxu0 0.0
        %868 = vmatprep.subr.mxu0 0.0
        %869 = vmatpush1.msra.mxu0 0.0
        %870 = vmatprep.subr.mxu0 0.0
        %871 = vmatpush1.msra.mxu0 0.0
        %872 = vmatprep.subr.mxu0 0.0
        %873 = vmatpush1.msra.mxu0 0.0
        %874 = vmatprep.subr.mxu0 0.0
        %875 = vmatpush1.msra.mxu0 0.0
        %876 = vmatprep.subr.mxu0 0.0
        %877 = vmatpush1.msra.mxu0 0.0
        %878 = vmatprep.subr.mxu0 0.0
        %879 = vmatpush1.msra.mxu0 0.0
        %880 = vmatprep.subr.mxu0 0.0
        %881 = vmatpush1.msra.mxu0 0.0
        %882 = vmatprep.subr.mxu0 0.0
        %883 = vmatpush1.msra.mxu0 0.0
        %884 = vmatprep.subr.mxu0 0.0
        %885 = vmatpush1.msra.mxu0 0.0
        %886 = vmatprep.subr.mxu0 0.0
        %887 = vmatpush1.msra.mxu0 0.0
        %888 = vmatprep.subr.mxu0 0.0
        %889 = vmatpush1.msra.mxu0 0.0
        %890 = vmatprep.subr.mxu0 0.0
        %891 = vmatpush1.msra.mxu0 0.0
        %892 = vmatprep.mubr.f32.mxu0 0.0
        %v893 = vand.u32 %v825, 4294901760
        %v894 = vsub.f32 %v825, %v893
        %v895 = vand.u32 %v894, 4294901760
        %v896 = vsub.f32 %v894, %v895
        %v897 = vand.u32 %v896, 4294901760
        %898 = vmatmul.mubr.f32.gmra.mrb[0].mxu0 %v897
        %v899 = vpop.f32.mrb[0].mxu0
        %v900 = vadd.f32 0.0, %v899
        %v901 = vpop.f32.mrb[0].mxu0
        %902 = vdwg.mxu0
        %903 = vmatprep.subr.mxu0 0.0
        %v904 = vand.u32 %v368, 4294901760
        %v905 = vsub.f32 %v368, %v904
        %v906 = vand.u32 %v905, 4294901760
        %v907 = vsub.f32 %v905, %v906
        %v908 = vand.u32 %v907, 4294901760
        %909 = vmatpush1.msra.mxu0 %v908
        %910 = vmatprep.subr.mxu0 0.0
        %911 = vmatpush1.msra.mxu0 0.0
        %912 = vmatprep.subr.mxu0 0.0
        %913 = vmatpush1.msra.mxu0 0.0
        %914 = vmatprep.subr.mxu0 0.0
        %915 = vmatpush1.msra.mxu0 0.0
        %916 = vmatprep.subr.mxu0 0.0
        %917 = vmatpush1.msra.mxu0 0.0
        %918 = vmatprep.subr.mxu0 0.0
        %919 = vmatpush1.msra.mxu0 0.0
        %920 = vmatprep.subr.mxu0 0.0
        %921 = vmatpush1.msra.mxu0 0.0
        %922 = vmatprep.subr.mxu0 0.0
        %923 = vmatpush1.msra.mxu0 0.0
        %924 = vmatprep.subr.mxu0 0.0
        %925 = vmatpush1.msra.mxu0 0.0
        %926 = vmatprep.subr.mxu0 0.0
        %927 = vmatpush1.msra.mxu0 0.0
        %928 = vmatprep.subr.mxu0 0.0
        %929 = vmatpush1.msra.mxu0 0.0
        %930 = vmatprep.subr.mxu0 0.0
        %931 = vmatpush1.msra.mxu0 0.0
        %932 = vmatprep.subr.mxu0 0.0
        %933 = vmatpush1.msra.mxu0 0.0
        %934 = vmatprep.subr.mxu0 0.0
        %935 = vmatpush1.msra.mxu0 0.0
        %936 = vmatprep.subr.mxu0 0.0
        %937 = vmatpush1.msra.mxu0 0.0
        %938 = vmatprep.subr.mxu0 0.0
        %939 = vmatpush1.msra.mxu0 0.0
        %940 = vmatprep.subr.mxu0 0.0
        %941 = vmatpush1.msra.mxu0 0.0
        %942 = vmatprep.subr.mxu0 0.0
        %943 = vmatpush1.msra.mxu0 0.0
        %944 = vmatprep.subr.mxu0 0.0
        %945 = vmatpush1.msra.mxu0 0.0
        %946 = vmatprep.subr.mxu0 0.0
        %947 = vmatpush1.msra.mxu0 0.0
        %948 = vmatprep.subr.mxu0 0.0
        %949 = vmatpush1.msra.mxu0 0.0
        %950 = vmatprep.subr.mxu0 0.0
        %951 = vmatpush1.msra.mxu0 0.0
        %952 = vmatprep.subr.mxu0 0.0
        %953 = vmatpush1.msra.mxu0 0.0
        %954 = vmatprep.subr.mxu0 0.0
        %955 = vmatpush1.msra.mxu0 0.0
        %956 = vmatprep.subr.mxu0 0.0
        %957 = vmatpush1.msra.mxu0 0.0
        %958 = vmatprep.subr.mxu0 0.0
        %959 = vmatpush1.msra.mxu0 0.0
        %960 = vmatprep.subr.mxu0 0.0
        %961 = vmatpush1.msra.mxu0 0.0
        %962 = vmatprep.subr.mxu0 0.0
        %963 = vmatpush1.msra.mxu0 0.0
        %964 = vmatprep.subr.mxu0 0.0
        %965 = vmatpush1.msra.mxu0 0.0
        %966 = vmatprep.subr.mxu0 0.0
        %967 = vmatpush1.msra.mxu0 0.0
        %968 = vmatprep.subr.mxu0 0.0
        %969 = vmatpush1.msra.mxu0 0.0
        %970 = vmatprep.subr.mxu0 0.0
        %971 = vmatpush1.msra.mxu0 0.0
        %972 = vmatprep.mubr.f32.mxu0 0.0
        %v973 = vand.u32 %v825, 4294901760
        %974 = vmatmul.mubr.f32.gmra.mrb[0].mxu0 %v973
        %v975 = vpop.f32.mrb[0].mxu0
        %v976 = vadd.f32 %v900, %v975
        %v977 = vpop.f32.mrb[0].mxu0
        %978 = vdwg.mxu0
        %979 = vmatprep.subr.mxu0 0.0
        %v980 = vand.u32 %v368, 4294901760
        %v981 = vsub.f32 %v368, %v980
        %982 = vmatpush1.msra.mxu0 %v981
        %983 = vmatprep.subr.mxu0 0.0
        %984 = vmatpush1.msra.mxu0 0.0
        %985 = vmatprep.subr.mxu0 0.0
        %986 = vmatpush1.msra.mxu0 0.0
        %987 = vmatprep.subr.mxu0 0.0
        %988 = vmatpush1.msra.mxu0 0.0
        %989 = vmatprep.subr.mxu0 0.0
        %990 = vmatpush1.msra.mxu0 0.0
        %991 = vmatprep.subr.mxu0 0.0
        %992 = vmatpush1.msra.mxu0 0.0
        %993 = vmatprep.subr.mxu0 0.0
        %994 = vmatpush1.msra.mxu0 0.0
        %995 = vmatprep.subr.mxu0 0.0
        %996 = vmatpush1.msra.mxu0 0.0
        %997 = vmatprep.subr.mxu0 0.0
        %998 = vmatpush1.msra.mxu0 0.0
        %999 = vmatprep.subr.mxu0 0.0
        %1000 = vmatpush1.msra.mxu0 0.0
        %1001 = vmatprep.subr.mxu0 0.0
        %1002 = vmatpush1.msra.mxu0 0.0
        %1003 = vmatprep.subr.mxu0 0.0
        %1004 = vmatpush1.msra.mxu0 0.0
        %1005 = vmatprep.subr.mxu0 0.0
        %1006 = vmatpush1.msra.mxu0 0.0
        %1007 = vmatprep.subr.mxu0 0.0
        %1008 = vmatpush1.msra.mxu0 0.0
        %1009 = vmatprep.subr.mxu0 0.0
        %1010 = vmatpush1.msra.mxu0 0.0
        %1011 = vmatprep.subr.mxu0 0.0
        %1012 = vmatpush1.msra.mxu0 0.0
        %1013 = vmatprep.subr.mxu0 0.0
        %1014 = vmatpush1.msra.mxu0 0.0
        %1015 = vmatprep.subr.mxu0 0.0
        %1016 = vmatpush1.msra.mxu0 0.0
        %1017 = vmatprep.subr.mxu0 0.0
        %1018 = vmatpush1.msra.mxu0 0.0
        %1019 = vmatprep.subr.mxu0 0.0
        %1020 = vmatpush1.msra.mxu0 0.0
        %1021 = vmatprep.subr.mxu0 0.0
        %1022 = vmatpush1.msra.mxu0 0.0
        %1023 = vmatprep.subr.mxu0 0.0
        %1024 = vmatpush1.msra.mxu0 0.0
        %1025 = vmatprep.subr.mxu0 0.0
        %1026 = vmatpush1.msra.mxu0 0.0
        %1027 = vmatprep.subr.mxu0 0.0
        %1028 = vmatpush1.msra.mxu0 0.0
        %1029 = vmatprep.subr.mxu0 0.0
        %1030 = vmatpush1.msra.mxu0 0.0
        %1031 = vmatprep.subr.mxu0 0.0
        %1032 = vmatpush1.msra.mxu0 0.0
        %1033 = vmatprep.subr.mxu0 0.0
        %1034 = vmatpush1.msra.mxu0 0.0
        %1035 = vmatprep.subr.mxu0 0.0
        %1036 = vmatpush1.msra.mxu0 0.0
        %1037 = vmatprep.subr.mxu0 0.0
        %1038 = vmatpush1.msra.mxu0 0.0
        %1039 = vmatprep.subr.mxu0 0.0
        %1040 = vmatpush1.msra.mxu0 0.0
        %1041 = vmatprep.subr.mxu0 0.0
        %1042 = vmatpush1.msra.mxu0 0.0
        %1043 = vmatprep.subr.mxu0 0.0
        %1044 = vmatpush1.msra.mxu0 0.0
        %1045 = vmatprep.mubr.f32.mxu0 0.0
        %v1046 = vand.u32 %v825, 4294901760
        %v1047 = vsub.f32 %v825, %v1046
        %1048 = vmatmul.mubr.f32.gmra.mrb[0].mxu0 %v1047
        %v1049 = vpop.f32.mrb[0].mxu0
        %v1050 = vadd.f32 %v976, %v1049
        %v1051 = vpop.f32.mrb[0].mxu0
        %1052 = vdwg.mxu0
        %1053 = vmatprep.subr.mxu0 0.0
        %v1054 = vand.u32 %v368, 4294901760
        %1055 = vmatpush1.msra.mxu0 %v1054
        %1056 = vmatprep.subr.mxu0 0.0
        %1057 = vmatpush1.msra.mxu0 0.0
        %1058 = vmatprep.subr.mxu0 0.0
        %1059 = vmatpush1.msra.mxu0 0.0
        %1060 = vmatprep.subr.mxu0 0.0
        %1061 = vmatpush1.msra.mxu0 0.0
        %1062 = vmatprep.subr.mxu0 0.0
        %1063 = vmatpush1.msra.mxu0 0.0
        %1064 = vmatprep.subr.mxu0 0.0
        %1065 = vmatpush1.msra.mxu0 0.0
        %1066 = vmatprep.subr.mxu0 0.0
        %1067 = vmatpush1.msra.mxu0 0.0
        %1068 = vmatprep.subr.mxu0 0.0
        %1069 = vmatpush1.msra.mxu0 0.0
        %1070 = vmatprep.subr.mxu0 0.0
        %1071 = vmatpush1.msra.mxu0 0.0
        %1072 = vmatprep.subr.mxu0 0.0
        %1073 = vmatpush1.msra.mxu0 0.0
        %1074 = vmatprep.subr.mxu0 0.0
        %1075 = vmatpush1.msra.mxu0 0.0
        %1076 = vmatprep.subr.mxu0 0.0
        %1077 = vmatpush1.msra.mxu0 0.0
        %1078 = vmatprep.subr.mxu0 0.0
        %1079 = vmatpush1.msra.mxu0 0.0
        %1080 = vmatprep.subr.mxu0 0.0
        %1081 = vmatpush1.msra.mxu0 0.0
        %1082 = vmatprep.subr.mxu0 0.0
        %1083 = vmatpush1.msra.mxu0 0.0
        %1084 = vmatprep.subr.mxu0 0.0
        %1085 = vmatpush1.msra.mxu0 0.0
        %1086 = vmatprep.subr.mxu0 0.0
        %1087 = vmatpush1.msra.mxu0 0.0
        %1088 = vmatprep.subr.mxu0 0.0
        %1089 = vmatpush1.msra.mxu0 0.0
        %1090 = vmatprep.subr.mxu0 0.0
        %1091 = vmatpush1.msra.mxu0 0.0
        %1092 = vmatprep.subr.mxu0 0.0
        %1093 = vmatpush1.msra.mxu0 0.0
        %1094 = vmatprep.subr.mxu0 0.0
        %1095 = vmatpush1.msra.mxu0 0.0
        %1096 = vmatprep.subr.mxu0 0.0
        %1097 = vmatpush1.msra.mxu0 0.0
        %1098 = vmatprep.subr.mxu0 0.0
        %1099 = vmatpush1.msra.mxu0 0.0
        %1100 = vmatprep.subr.mxu0 0.0
        %1101 = vmatpush1.msra.mxu0 0.0
        %1102 = vmatprep.subr.mxu0 0.0
        %1103 = vmatpush1.msra.mxu0 0.0
        %1104 = vmatprep.subr.mxu0 0.0
        %1105 = vmatpush1.msra.mxu0 0.0
        %1106 = vmatprep.subr.mxu0 0.0
        %1107 = vmatpush1.msra.mxu0 0.0
        %1108 = vmatprep.subr.mxu0 0.0
        %1109 = vmatpush1.msra.mxu0 0.0
        %1110 = vmatprep.subr.mxu0 0.0
        %1111 = vmatpush1.msra.mxu0 0.0
        %1112 = vmatprep.subr.mxu0 0.0
        %1113 = vmatpush1.msra.mxu0 0.0
        %1114 = vmatprep.subr.mxu0 0.0
        %1115 = vmatpush1.msra.mxu0 0.0
        %1116 = vmatprep.subr.mxu0 0.0
        %1117 = vmatpush1.msra.mxu0 0.0
        %1118 = vmatprep.mubr.f32.mxu0 0.0
        %v1119 = vand.u32 %v825, 4294901760
        %v1120 = vsub.f32 %v825, %v1119
        %v1121 = vand.u32 %v1120, 4294901760
        %1122 = vmatmul.mubr.f32.gmra.mrb[0].mxu0 %v1121
        %v1123 = vpop.f32.mrb[0].mxu0
        %v1124 = vadd.f32 %v1050, %v1123
        %v1125 = vpop.f32.mrb[0].mxu0
        %1126 = vdwg.mxu0
        %1127 = vmatprep.subr.mxu0 0.0
        %v1128 = vand.u32 %v368, 4294901760
        %v1129 = vsub.f32 %v368, %v1128
        %v1130 = vand.u32 %v1129, 4294901760
        %1131 = vmatpush1.msra.mxu0 %v1130
        %1132 = vmatprep.subr.mxu0 0.0
        %1133 = vmatpush1.msra.mxu0 0.0
        %1134 = vmatprep.subr.mxu0 0.0
        %1135 = vmatpush1.msra.mxu0 0.0
        %1136 = vmatprep.subr.mxu0 0.0
        %1137 = vmatpush1.msra.mxu0 0.0
        %1138 = vmatprep.subr.mxu0 0.0
        %1139 = vmatpush1.msra.mxu0 0.0
        %1140 = vmatprep.subr.mxu0 0.0
        %1141 = vmatpush1.msra.mxu0 0.0
        %1142 = vmatprep.subr.mxu0 0.0
        %1143 = vmatpush1.msra.mxu0 0.0
        %1144 = vmatprep.subr.mxu0 0.0
        %1145 = vmatpush1.msra.mxu0 0.0
        %1146 = vmatprep.subr.mxu0 0.0
        %1147 = vmatpush1.msra.mxu0 0.0
        %1148 = vmatprep.subr.mxu0 0.0
        %1149 = vmatpush1.msra.mxu0 0.0
        %1150 = vmatprep.subr.mxu0 0.0
        %1151 = vmatpush1.msra.mxu0 0.0
        %1152 = vmatprep.subr.mxu0 0.0
        %1153 = vmatpush1.msra.mxu0 0.0
        %1154 = vmatprep.subr.mxu0 0.0
        %1155 = vmatpush1.msra.mxu0 0.0
        %1156 = vmatprep.subr.mxu0 0.0
        %1157 = vmatpush1.msra.mxu0 0.0
        %1158 = vmatprep.subr.mxu0 0.0
        %1159 = vmatpush1.msra.mxu0 0.0
        %1160 = vmatprep.subr.mxu0 0.0
        %1161 = vmatpush1.msra.mxu0 0.0
        %1162 = vmatprep.subr.mxu0 0.0
        %1163 = vmatpush1.msra.mxu0 0.0
        %1164 = vmatprep.subr.mxu0 0.0
        %1165 = vmatpush1.msra.mxu0 0.0
        %1166 = vmatprep.subr.mxu0 0.0
        %1167 = vmatpush1.msra.mxu0 0.0
        %1168 = vmatprep.subr.mxu0 0.0
        %1169 = vmatpush1.msra.mxu0 0.0
        %1170 = vmatprep.subr.mxu0 0.0
        %1171 = vmatpush1.msra.mxu0 0.0
        %1172 = vmatprep.subr.mxu0 0.0
        %1173 = vmatpush1.msra.mxu0 0.0
        %1174 = vmatprep.subr.mxu0 0.0
        %1175 = vmatpush1.msra.mxu0 0.0
        %1176 = vmatprep.subr.mxu0 0.0
        %1177 = vmatpush1.msra.mxu0 0.0
        %1178 = vmatprep.subr.mxu0 0.0
        %1179 = vmatpush1.msra.mxu0 0.0
        %1180 = vmatprep.subr.mxu0 0.0
        %1181 = vmatpush1.msra.mxu0 0.0
        %1182 = vmatprep.subr.mxu0 0.0
        %1183 = vmatpush1.msra.mxu0 0.0
        %1184 = vmatprep.subr.mxu0 0.0
        %1185 = vmatpush1.msra.mxu0 0.0
        %1186 = vmatprep.subr.mxu0 0.0
        %1187 = vmatpush1.msra.mxu0 0.0
        %1188 = vmatprep.subr.mxu0 0.0
        %1189 = vmatpush1.msra.mxu0 0.0
        %1190 = vmatprep.subr.mxu0 0.0
        %1191 = vmatpush1.msra.mxu0 0.0
        %1192 = vmatprep.subr.mxu0 0.0
        %1193 = vmatpush1.msra.mxu0 0.0
        %1194 = vmatprep.mubr.f32.mxu0 0.0
        %v1195 = vand.u32 %v825, 4294901760
        %1196 = vmatmul.mubr.f32.gmra.mrb[0].mxu0 %v1195
        %v1197 = vpop.f32.mrb[0].mxu0
        %v1198 = vadd.f32 %v1124, %v1197
        %v1199 = vpop.f32.mrb[0].mxu0
        %1200 = vdwg.mxu0
        %1201 = vmatprep.subr.mxu0 0.0
        %v1202 = vand.u32 %v368, 4294901760
        %1203 = vmatpush1.msra.mxu0 %v1202
        %1204 = vmatprep.subr.mxu0 0.0
        %1205 = vmatpush1.msra.mxu0 0.0
        %1206 = vmatprep.subr.mxu0 0.0
        %1207 = vmatpush1.msra.mxu0 0.0
        %1208 = vmatprep.subr.mxu0 0.0
        %1209 = vmatpush1.msra.mxu0 0.0
        %1210 = vmatprep.subr.mxu0 0.0
        %1211 = vmatpush1.msra.mxu0 0.0
        %1212 = vmatprep.subr.mxu0 0.0
        %1213 = vmatpush1.msra.mxu0 0.0
        %1214 = vmatprep.subr.mxu0 0.0
        %1215 = vmatpush1.msra.mxu0 0.0
        %1216 = vmatprep.subr.mxu0 0.0
        %1217 = vmatpush1.msra.mxu0 0.0
        %1218 = vmatprep.subr.mxu0 0.0
        %1219 = vmatpush1.msra.mxu0 0.0
        %1220 = vmatprep.subr.mxu0 0.0
        %1221 = vmatpush1.msra.mxu0 0.0
        %1222 = vmatprep.subr.mxu0 0.0
        %1223 = vmatpush1.msra.mxu0 0.0
        %1224 = vmatprep.subr.mxu0 0.0
        %1225 = vmatpush1.msra.mxu0 0.0
        %1226 = vmatprep.subr.mxu0 0.0
        %1227 = vmatpush1.msra.mxu0 0.0
        %1228 = vmatprep.subr.mxu0 0.0
        %1229 = vmatpush1.msra.mxu0 0.0
        %1230 = vmatprep.subr.mxu0 0.0
        %1231 = vmatpush1.msra.mxu0 0.0
        %1232 = vmatprep.subr.mxu0 0.0
        %1233 = vmatpush1.msra.mxu0 0.0
        %1234 = vmatprep.subr.mxu0 0.0
        %1235 = vmatpush1.msra.mxu0 0.0
        %1236 = vmatprep.subr.mxu0 0.0
        %1237 = vmatpush1.msra.mxu0 0.0
        %1238 = vmatprep.subr.mxu0 0.0
        %1239 = vmatpush1.msra.mxu0 0.0
        %1240 = vmatprep.subr.mxu0 0.0
        %1241 = vmatpush1.msra.mxu0 0.0
        %1242 = vmatprep.subr.mxu0 0.0
        %1243 = vmatpush1.msra.mxu0 0.0
        %1244 = vmatprep.subr.mxu0 0.0
        %1245 = vmatpush1.msra.mxu0 0.0
        %1246 = vmatprep.subr.mxu0 0.0
        %1247 = vmatpush1.msra.mxu0 0.0
        %1248 = vmatprep.subr.mxu0 0.0
        %1249 = vmatpush1.msra.mxu0 0.0
        %1250 = vmatprep.subr.mxu0 0.0
        %1251 = vmatpush1.msra.mxu0 0.0
        %1252 = vmatprep.subr.mxu0 0.0
        %1253 = vmatpush1.msra.mxu0 0.0
        %1254 = vmatprep.subr.mxu0 0.0
        %1255 = vmatpush1.msra.mxu0 0.0
        %1256 = vmatprep.subr.mxu0 0.0
        %1257 = vmatpush1.msra.mxu0 0.0
        %1258 = vmatprep.subr.mxu0 0.0
        %1259 = vmatpush1.msra.mxu0 0.0
        %1260 = vmatprep.subr.mxu0 0.0
        %1261 = vmatpush1.msra.mxu0 0.0
        %1262 = vmatprep.subr.mxu0 0.0
        %1263 = vmatpush1.msra.mxu0 0.0
        %1264 = vmatprep.subr.mxu0 0.0
        %1265 = vmatpush1.msra.mxu0 0.0
        %1266 = vmatprep.mubr.f32.mxu0 0.0
        %v1267 = vand.u32 %v825, 4294901760
        %1268 = vmatmul.mubr.f32.gmra.mrb[0].mxu0 %v1267
        %v1269 = vpop.f32.mrb[0].mxu0
        %v1270 = vadd.f32 %v1198, %v1269
        %v1271 = vpop.f32.mrb[0].mxu0
        %1272 = vdwg.mxu0
        %s1273 = scalar_lea.vmem [#allocation8], 16
        %v1274 = vld [vmem:[%s1273] sm:$0xff]
        %v1275 = vld [vmem:[%s1273 + $0x8] sm:$0xff]
        %v1277 = vsel %vm267, %v1270, 0
        %1279 = vmatprep.subr.mxu0 0.0
        %v1280 = vand.u32 %v1274, 4294901760
        %1281 = vmatpush1.msra.mxu0 %v1280
        %1282 = vmatprep.subr.mxu0 0.0
        %v1283 = vand.u32 %v1275, 4294901760
        %1284 = vmatpush1.msra.mxu0 %v1283
        %1285 = vmatprep.subr.mxu0 0.0
        %1286 = vmatpush1.msra.mxu0 0.0
        %1287 = vmatprep.subr.mxu0 0.0
        %1288 = vmatpush1.msra.mxu0 0.0
        %1289 = vmatprep.subr.mxu0 0.0
        %1290 = vmatpush1.msra.mxu0 0.0
        %1291 = vmatprep.subr.mxu0 0.0
        %1292 = vmatpush1.msra.mxu0 0.0
        %1293 = vmatprep.subr.mxu0 0.0
        %1294 = vmatpush1.msra.mxu0 0.0
        %1295 = vmatprep.subr.mxu0 0.0
        %1296 = vmatpush1.msra.mxu0 0.0
        %1297 = vmatprep.subr.mxu0 0.0
        %1298 = vmatpush1.msra.mxu0 0.0
        %1299 = vmatprep.subr.mxu0 0.0
        %1300 = vmatpush1.msra.mxu0 0.0
        %1301 = vmatprep.subr.mxu0 0.0
        %1302 = vmatpush1.msra.mxu0 0.0
        %1303 = vmatprep.subr.mxu0 0.0
        %1304 = vmatpush1.msra.mxu0 0.0
        %1305 = vmatprep.subr.mxu0 0.0
        %1306 = vmatpush1.msra.mxu0 0.0
        %1307 = vmatprep.subr.mxu0 0.0
        %1308 = vmatpush1.msra.mxu0 0.0
        %1309 = vmatprep.subr.mxu0 0.0
        %1310 = vmatpush1.msra.mxu0 0.0
        %1311 = vmatprep.subr.mxu0 0.0
        %1312 = vmatpush1.msra.mxu0 0.0
        %1313 = vmatprep.subr.mxu0 0.0
        %1314 = vmatpush1.msra.mxu0 0.0
        %1315 = vmatprep.subr.mxu0 0.0
        %1316 = vmatpush1.msra.mxu0 0.0
        %1317 = vmatprep.subr.mxu0 0.0
        %1318 = vmatpush1.msra.mxu0 0.0
        %1319 = vmatprep.subr.mxu0 0.0
        %1320 = vmatpush1.msra.mxu0 0.0
        %1321 = vmatprep.subr.mxu0 0.0
        %1322 = vmatpush1.msra.mxu0 0.0
        %1323 = vmatprep.subr.mxu0 0.0
        %1324 = vmatpush1.msra.mxu0 0.0
        %1325 = vmatprep.subr.mxu0 0.0
        %1326 = vmatpush1.msra.mxu0 0.0
        %1327 = vmatprep.subr.mxu0 0.0
        %1328 = vmatpush1.msra.mxu0 0.0
        %1329 = vmatprep.subr.mxu0 0.0
        %1330 = vmatpush1.msra.mxu0 0.0
        %1331 = vmatprep.subr.mxu0 0.0
        %1332 = vmatpush1.msra.mxu0 0.0
        %1333 = vmatprep.subr.mxu0 0.0
        %1334 = vmatpush1.msra.mxu0 0.0
        %1335 = vmatprep.subr.mxu0 0.0
        %1336 = vmatpush1.msra.mxu0 0.0
        %1337 = vmatprep.subr.mxu0 0.0
        %1338 = vmatpush1.msra.mxu0 0.0
        %1339 = vmatprep.subr.mxu0 0.0
        %1340 = vmatpush1.msra.mxu0 0.0
        %1341 = vmatprep.subr.mxu0 0.0
        %1342 = vmatpush1.msra.mxu0 0.0
        %1343 = vmatprep.subr.mxu0 0.0
        %1344 = vmatpush1.msra.mxu0 0.0
        %1345 = vmatprep.mubr.f32.mxu0 0.0
        %v1346 = vand.u32 %v1277, 4294901760
        %v1347 = vsub.f32 %v1277, %v1346
        %v1348 = vand.u32 %v1347, 4294901760
        %v1349 = vsub.f32 %v1347, %v1348
        %v1350 = vand.u32 %v1349, 4294901760
        %1351 = vmatmul.mubr.f32.gmra.mrb[0].mxu0 %v1350
        %v1352 = vpop.f32.mrb[0].mxu0
        %v1353 = vadd.f32 0.0, %v1352
        %v1354 = vpop.f32.mrb[0].mxu0
        %1355 = vdwg.mxu0
        %1356 = vmatprep.subr.mxu0 0.0
        %v1357 = vand.u32 %v1274, 4294901760
        %v1358 = vsub.f32 %v1274, %v1357
        %v1359 = vand.u32 %v1358, 4294901760
        %v1360 = vsub.f32 %v1358, %v1359
        %v1361 = vand.u32 %v1360, 4294901760
        %1362 = vmatpush1.msra.mxu0 %v1361
        %1363 = vmatprep.subr.mxu0 0.0
        %v1364 = vand.u32 %v1275, 4294901760
        %v1365 = vsub.f32 %v1275, %v1364
        %v1366 = vand.u32 %v1365, 4294901760
        %v1367 = vsub.f32 %v1365, %v1366
        %v1368 = vand.u32 %v1367, 4294901760
        %1369 = vmatpush1.msra.mxu0 %v1368
        %1370 = vmatprep.subr.mxu0 0.0
        %1371 = vmatpush1.msra.mxu0 0.0
        %1372 = vmatprep.subr.mxu0 0.0
        %1373 = vmatpush1.msra.mxu0 0.0
        %1374 = vmatprep.subr.mxu0 0.0
        %1375 = vmatpush1.msra.mxu0 0.0
        %1376 = vmatprep.subr.mxu0 0.0
        %1377 = vmatpush1.msra.mxu0 0.0
        %1378 = vmatprep.subr.mxu0 0.0
        %1379 = vmatpush1.msra.mxu0 0.0
        %1380 = vmatprep.subr.mxu0 0.0
        %1381 = vmatpush1.msra.mxu0 0.0
        %1382 = vmatprep.subr.mxu0 0.0
        %1383 = vmatpush1.msra.mxu0 0.0
        %1384 = vmatprep.subr.mxu0 0.0
        %1385 = vmatpush1.msra.mxu0 0.0
        %1386 = vmatprep.subr.mxu0 0.0
        %1387 = vmatpush1.msra.mxu0 0.0
        %1388 = vmatprep.subr.mxu0 0.0
        %1389 = vmatpush1.msra.mxu0 0.0
        %1390 = vmatprep.subr.mxu0 0.0
        %1391 = vmatpush1.msra.mxu0 0.0
        %1392 = vmatprep.subr.mxu0 0.0
        %1393 = vmatpush1.msra.mxu0 0.0
        %1394 = vmatprep.subr.mxu0 0.0
        %1395 = vmatpush1.msra.mxu0 0.0
        %1396 = vmatprep.subr.mxu0 0.0
        %1397 = vmatpush1.msra.mxu0 0.0
        %1398 = vmatprep.subr.mxu0 0.0
        %1399 = vmatpush1.msra.mxu0 0.0
        %1400 = vmatprep.subr.mxu0 0.0
        %1401 = vmatpush1.msra.mxu0 0.0
        %1402 = vmatprep.subr.mxu0 0.0
        %1403 = vmatpush1.msra.mxu0 0.0
        %1404 = vmatprep.subr.mxu0 0.0
        %1405 = vmatpush1.msra.mxu0 0.0
        %1406 = vmatprep.subr.mxu0 0.0
        %1407 = vmatpush1.msra.mxu0 0.0
        %1408 = vmatprep.subr.mxu0 0.0
        %1409 = vmatpush1.msra.mxu0 0.0
        %1410 = vmatprep.subr.mxu0 0.0
        %1411 = vmatpush1.msra.mxu0 0.0
        %1412 = vmatprep.subr.mxu0 0.0
        %1413 = vmatpush1.msra.mxu0 0.0
        %1414 = vmatprep.subr.mxu0 0.0
        %1415 = vmatpush1.msra.mxu0 0.0
        %1416 = vmatprep.subr.mxu0 0.0
        %1417 = vmatpush1.msra.mxu0 0.0
        %1418 = vmatprep.subr.mxu0 0.0
        %1419 = vmatpush1.msra.mxu0 0.0
        %1420 = vmatprep.subr.mxu0 0.0
        %1421 = vmatpush1.msra.mxu0 0.0
        %1422 = vmatprep.subr.mxu0 0.0
        %1423 = vmatpush1.msra.mxu0 0.0
        %1424 = vmatprep.subr.mxu0 0.0
        %1425 = vmatpush1.msra.mxu0 0.0
        %1426 = vmatprep.subr.mxu0 0.0
        %1427 = vmatpush1.msra.mxu0 0.0
        %1428 = vmatprep.subr.mxu0 0.0
        %1429 = vmatpush1.msra.mxu0 0.0
        %1430 = vmatprep.mubr.f32.mxu0 0.0
        %v1431 = vand.u32 %v1277, 4294901760
        %1432 = vmatmul.mubr.f32.gmra.mrb[0].mxu0 %v1431
        %v1433 = vpop.f32.mrb[0].mxu0
        %v1434 = vadd.f32 %v1353, %v1433
        %v1435 = vpop.f32.mrb[0].mxu0
        %1436 = vdwg.mxu0
        %1437 = vmatprep.subr.mxu0 0.0
        %v1438 = vand.u32 %v1274, 4294901760
        %v1439 = vsub.f32 %v1274, %v1438
        %1440 = vmatpush1.msra.mxu0 %v1439
        %1441 = vmatprep.subr.mxu0 0.0
        %v1442 = vand.u32 %v1275, 4294901760
        %v1443 = vsub.f32 %v1275, %v1442
        %1444 = vmatpush1.msra.mxu0 %v1443
        %1445 = vmatprep.subr.mxu0 0.0
        %1446 = vmatpush1.msra.mxu0 0.0
        %1447 = vmatprep.subr.mxu0 0.0
        %1448 = vmatpush1.msra.mxu0 0.0
        %1449 = vmatprep.subr.mxu0 0.0
        %1450 = vmatpush1.msra.mxu0 0.0
        %1451 = vmatprep.subr.mxu0 0.0
        %1452 = vmatpush1.msra.mxu0 0.0
        %1453 = vmatprep.subr.mxu0 0.0
        %1454 = vmatpush1.msra.mxu0 0.0
        %1455 = vmatprep.subr.mxu0 0.0
        %1456 = vmatpush1.msra.mxu0 0.0
        %1457 = vmatprep.subr.mxu0 0.0
        %1458 = vmatpush1.msra.mxu0 0.0
        %1459 = vmatprep.subr.mxu0 0.0
        %1460 = vmatpush1.msra.mxu0 0.0
        %1461 = vmatprep.subr.mxu0 0.0
        %1462 = vmatpush1.msra.mxu0 0.0
        %1463 = vmatprep.subr.mxu0 0.0
        %1464 = vmatpush1.msra.mxu0 0.0
        %1465 = vmatprep.subr.mxu0 0.0
        %1466 = vmatpush1.msra.mxu0 0.0
        %1467 = vmatprep.subr.mxu0 0.0
        %1468 = vmatpush1.msra.mxu0 0.0
        %1469 = vmatprep.subr.mxu0 0.0
        %1470 = vmatpush1.msra.mxu0 0.0
        %1471 = vmatprep.subr.mxu0 0.0
        %1472 = vmatpush1.msra.mxu0 0.0
        %1473 = vmatprep.subr.mxu0 0.0
        %1474 = vmatpush1.msra.mxu0 0.0
        %1475 = vmatprep.subr.mxu0 0.0
        %1476 = vmatpush1.msra.mxu0 0.0
        %1477 = vmatprep.subr.mxu0 0.0
        %1478 = vmatpush1.msra.mxu0 0.0
        %1479 = vmatprep.subr.mxu0 0.0
        %1480 = vmatpush1.msra.mxu0 0.0
        %1481 = vmatprep.subr.mxu0 0.0
        %1482 = vmatpush1.msra.mxu0 0.0
        %1483 = vmatprep.subr.mxu0 0.0
        %1484 = vmatpush1.msra.mxu0 0.0
        %1485 = vmatprep.subr.mxu0 0.0
        %1486 = vmatpush1.msra.mxu0 0.0
        %1487 = vmatprep.subr.mxu0 0.0
        %1488 = vmatpush1.msra.mxu0 0.0
        %1489 = vmatprep.subr.mxu0 0.0
        %1490 = vmatpush1.msra.mxu0 0.0
        %1491 = vmatprep.subr.mxu0 0.0
        %1492 = vmatpush1.msra.mxu0 0.0
        %1493 = vmatprep.subr.mxu0 0.0
        %1494 = vmatpush1.msra.mxu0 0.0
        %1495 = vmatprep.subr.mxu0 0.0
        %1496 = vmatpush1.msra.mxu0 0.0
        %1497 = vmatprep.subr.mxu0 0.0
        %1498 = vmatpush1.msra.mxu0 0.0
        %1499 = vmatprep.subr.mxu0 0.0
        %1500 = vmatpush1.msra.mxu0 0.0
        %1501 = vmatprep.subr.mxu0 0.0
        %1502 = vmatpush1.msra.mxu0 0.0
        %1503 = vmatprep.subr.mxu0 0.0
        %1504 = vmatpush1.msra.mxu0 0.0
        %1505 = vmatprep.mubr.f32.mxu0 0.0
        %v1506 = vand.u32 %v1277, 4294901760
        %v1507 = vsub.f32 %v1277, %v1506
        %1508 = vmatmul.mubr.f32.gmra.mrb[0].mxu0 %v1507
        %v1509 = vpop.f32.mrb[0].mxu0
        %v1510 = vadd.f32 %v1434, %v1509
        %v1511 = vpop.f32.mrb[0].mxu0
        %1512 = vdwg.mxu0
        %1513 = vmatprep.subr.mxu0 0.0
        %v1514 = vand.u32 %v1274, 4294901760
        %1515 = vmatpush1.msra.mxu0 %v1514
        %1516 = vmatprep.subr.mxu0 0.0
        %v1517 = vand.u32 %v1275, 4294901760
        %1518 = vmatpush1.msra.mxu0 %v1517
        %1519 = vmatprep.subr.mxu0 0.0
        %1520 = vmatpush1.msra.mxu0 0.0
        %1521 = vmatprep.subr.mxu0 0.0
        %1522 = vmatpush1.msra.mxu0 0.0
        %1523 = vmatprep.subr.mxu0 0.0
        %1524 = vmatpush1.msra.mxu0 0.0
        %1525 = vmatprep.subr.mxu0 0.0
        %1526 = vmatpush1.msra.mxu0 0.0
        %1527 = vmatprep.subr.mxu0 0.0
        %1528 = vmatpush1.msra.mxu0 0.0
        %1529 = vmatprep.subr.mxu0 0.0
        %1530 = vmatpush1.msra.mxu0 0.0
        %1531 = vmatprep.subr.mxu0 0.0
        %1532 = vmatpush1.msra.mxu0 0.0
        %1533 = vmatprep.subr.mxu0 0.0
        %1534 = vmatpush1.msra.mxu0 0.0
        %1535 = vmatprep.subr.mxu0 0.0
        %1536 = vmatpush1.msra.mxu0 0.0
        %1537 = vmatprep.subr.mxu0 0.0
        %1538 = vmatpush1.msra.mxu0 0.0
        %1539 = vmatprep.subr.mxu0 0.0
        %1540 = vmatpush1.msra.mxu0 0.0
        %1541 = vmatprep.subr.mxu0 0.0
        %1542 = vmatpush1.msra.mxu0 0.0
        %1543 = vmatprep.subr.mxu0 0.0
        %1544 = vmatpush1.msra.mxu0 0.0
        %1545 = vmatprep.subr.mxu0 0.0
        %1546 = vmatpush1.msra.mxu0 0.0
        %1547 = vmatprep.subr.mxu0 0.0
        %1548 = vmatpush1.msra.mxu0 0.0
        %1549 = vmatprep.subr.mxu0 0.0
        %1550 = vmatpush1.msra.mxu0 0.0
        %1551 = vmatprep.subr.mxu0 0.0
        %1552 = vmatpush1.msra.mxu0 0.0
        %1553 = vmatprep.subr.mxu0 0.0
        %1554 = vmatpush1.msra.mxu0 0.0
        %1555 = vmatprep.subr.mxu0 0.0
        %1556 = vmatpush1.msra.mxu0 0.0
        %1557 = vmatprep.subr.mxu0 0.0
        %1558 = vmatpush1.msra.mxu0 0.0
        %1559 = vmatprep.subr.mxu0 0.0
        %1560 = vmatpush1.msra.mxu0 0.0
        %1561 = vmatprep.subr.mxu0 0.0
        %1562 = vmatpush1.msra.mxu0 0.0
        %1563 = vmatprep.subr.mxu0 0.0
        %1564 = vmatpush1.msra.mxu0 0.0
        %1565 = vmatprep.subr.mxu0 0.0
        %1566 = vmatpush1.msra.mxu0 0.0
        %1567 = vmatprep.subr.mxu0 0.0
        %1568 = vmatpush1.msra.mxu0 0.0
        %1569 = vmatprep.subr.mxu0 0.0
        %1570 = vmatpush1.msra.mxu0 0.0
        %1571 = vmatprep.subr.mxu0 0.0
        %1572 = vmatpush1.msra.mxu0 0.0
        %1573 = vmatprep.subr.mxu0 0.0
        %1574 = vmatpush1.msra.mxu0 0.0
        %1575 = vmatprep.subr.mxu0 0.0
        %1576 = vmatpush1.msra.mxu0 0.0
        %1577 = vmatprep.subr.mxu0 0.0
        %1578 = vmatpush1.msra.mxu0 0.0
        %1579 = vmatprep.mubr.f32.mxu0 0.0
        %v1580 = vand.u32 %v1277, 4294901760
        %v1581 = vsub.f32 %v1277, %v1580
        %v1582 = vand.u32 %v1581, 4294901760
        %1583 = vmatmul.mubr.f32.gmra.mrb[0].mxu0 %v1582
        %v1584 = vpop.f32.mrb[0].mxu0
        %v1585 = vadd.f32 %v1510, %v1584
        %v1586 = vpop.f32.mrb[0].mxu0
        %1587 = vdwg.mxu0
        %1588 = vmatprep.subr.mxu0 0.0
        %v1589 = vand.u32 %v1274, 4294901760
        %v1590 = vsub.f32 %v1274, %v1589
        %v1591 = vand.u32 %v1590, 4294901760
        %1592 = vmatpush1.msra.mxu0 %v1591
        %1593 = vmatprep.subr.mxu0 0.0
        %v1594 = vand.u32 %v1275, 4294901760
        %v1595 = vsub.f32 %v1275, %v1594
        %v1596 = vand.u32 %v1595, 4294901760
        %1597 = vmatpush1.msra.mxu0 %v1596
        %1598 = vmatprep.subr.mxu0 0.0
        %1599 = vmatpush1.msra.mxu0 0.0
        %1600 = vmatprep.subr.mxu0 0.0
        %1601 = vmatpush1.msra.mxu0 0.0
        %1602 = vmatprep.subr.mxu0 0.0
        %1603 = vmatpush1.msra.mxu0 0.0
        %1604 = vmatprep.subr.mxu0 0.0
        %1605 = vmatpush1.msra.mxu0 0.0
        %1606 = vmatprep.subr.mxu0 0.0
        %1607 = vmatpush1.msra.mxu0 0.0
        %1608 = vmatprep.subr.mxu0 0.0
        %1609 = vmatpush1.msra.mxu0 0.0
        %1610 = vmatprep.subr.mxu0 0.0
        %1611 = vmatpush1.msra.mxu0 0.0
        %1612 = vmatprep.subr.mxu0 0.0
        %1613 = vmatpush1.msra.mxu0 0.0
        %1614 = vmatprep.subr.mxu0 0.0
        %1615 = vmatpush1.msra.mxu0 0.0
        %1616 = vmatprep.subr.mxu0 0.0
        %1617 = vmatpush1.msra.mxu0 0.0
        %1618 = vmatprep.subr.mxu0 0.0
        %1619 = vmatpush1.msra.mxu0 0.0
        %1620 = vmatprep.subr.mxu0 0.0
        %1621 = vmatpush1.msra.mxu0 0.0
        %1622 = vmatprep.subr.mxu0 0.0
        %1623 = vmatpush1.msra.mxu0 0.0
        %1624 = vmatprep.subr.mxu0 0.0
        %1625 = vmatpush1.msra.mxu0 0.0
        %1626 = vmatprep.subr.mxu0 0.0
        %1627 = vmatpush1.msra.mxu0 0.0
        %1628 = vmatprep.subr.mxu0 0.0
        %1629 = vmatpush1.msra.mxu0 0.0
        %1630 = vmatprep.subr.mxu0 0.0
        %1631 = vmatpush1.msra.mxu0 0.0
        %1632 = vmatprep.subr.mxu0 0.0
        %1633 = vmatpush1.msra.mxu0 0.0
        %1634 = vmatprep.subr.mxu0 0.0
        %1635 = vmatpush1.msra.mxu0 0.0
        %1636 = vmatprep.subr.mxu0 0.0
        %1637 = vmatpush1.msra.mxu0 0.0
        %1638 = vmatprep.subr.mxu0 0.0
        %1639 = vmatpush1.msra.mxu0 0.0
        %1640 = vmatprep.subr.mxu0 0.0
        %1641 = vmatpush1.msra.mxu0 0.0
        %1642 = vmatprep.subr.mxu0 0.0
        %1643 = vmatpush1.msra.mxu0 0.0
        %1644 = vmatprep.subr.mxu0 0.0
        %1645 = vmatpush1.msra.mxu0 0.0
        %1646 = vmatprep.subr.mxu0 0.0
        %1647 = vmatpush1.msra.mxu0 0.0
        %1648 = vmatprep.subr.mxu0 0.0
        %1649 = vmatpush1.msra.mxu0 0.0
        %1650 = vmatprep.subr.mxu0 0.0
        %1651 = vmatpush1.msra.mxu0 0.0
        %1652 = vmatprep.subr.mxu0 0.0
        %1653 = vmatpush1.msra.mxu0 0.0
        %1654 = vmatprep.subr.mxu0 0.0
        %1655 = vmatpush1.msra.mxu0 0.0
        %1656 = vmatprep.subr.mxu0 0.0
        %1657 = vmatpush1.msra.mxu0 0.0
        %1658 = vmatprep.mubr.f32.mxu0 0.0
        %v1659 = vand.u32 %v1277, 4294901760
        %1660 = vmatmul.mubr.f32.gmra.mrb[0].mxu0 %v1659
        %v1661 = vpop.f32.mrb[0].mxu0
        %v1662 = vadd.f32 %v1585, %v1661
        %v1663 = vpop.f32.mrb[0].mxu0
        %1664 = vdwg.mxu0
        %1665 = vmatprep.subr.mxu0 0.0
        %v1666 = vand.u32 %v1274, 4294901760
        %1667 = vmatpush1.msra.mxu0 %v1666
        %1668 = vmatprep.subr.mxu0 0.0
        %v1669 = vand.u32 %v1275, 4294901760
        %1670 = vmatpush1.msra.mxu0 %v1669
        %1671 = vmatprep.subr.mxu0 0.0
        %1672 = vmatpush1.msra.mxu0 0.0
        %1673 = vmatprep.subr.mxu0 0.0
        %1674 = vmatpush1.msra.mxu0 0.0
        %1675 = vmatprep.subr.mxu0 0.0
        %1676 = vmatpush1.msra.mxu0 0.0
        %1677 = vmatprep.subr.mxu0 0.0
        %1678 = vmatpush1.msra.mxu0 0.0
        %1679 = vmatprep.subr.mxu0 0.0
        %1680 = vmatpush1.msra.mxu0 0.0
        %1681 = vmatprep.subr.mxu0 0.0
        %1682 = vmatpush1.msra.mxu0 0.0
        %1683 = vmatprep.subr.mxu0 0.0
        %1684 = vmatpush1.msra.mxu0 0.0
        %1685 = vmatprep.subr.mxu0 0.0
        %1686 = vmatpush1.msra.mxu0 0.0
        %1687 = vmatprep.subr.mxu0 0.0
        %1688 = vmatpush1.msra.mxu0 0.0
        %1689 = vmatprep.subr.mxu0 0.0
        %1690 = vmatpush1.msra.mxu0 0.0
        %1691 = vmatprep.subr.mxu0 0.0
        %1692 = vmatpush1.msra.mxu0 0.0
        %1693 = vmatprep.subr.mxu0 0.0
        %1694 = vmatpush1.msra.mxu0 0.0
        %1695 = vmatprep.subr.mxu0 0.0
        %1696 = vmatpush1.msra.mxu0 0.0
        %1697 = vmatprep.subr.mxu0 0.0
        %1698 = vmatpush1.msra.mxu0 0.0
        %1699 = vmatprep.subr.mxu0 0.0
        %1700 = vmatpush1.msra.mxu0 0.0
        %1701 = vmatprep.subr.mxu0 0.0
        %1702 = vmatpush1.msra.mxu0 0.0
        %1703 = vmatprep.subr.mxu0 0.0
        %1704 = vmatpush1.msra.mxu0 0.0
        %1705 = vmatprep.subr.mxu0 0.0
        %1706 = vmatpush1.msra.mxu0 0.0
        %1707 = vmatprep.subr.mxu0 0.0
        %1708 = vmatpush1.msra.mxu0 0.0
        %1709 = vmatprep.subr.mxu0 0.0
        %1710 = vmatpush1.msra.mxu0 0.0
        %1711 = vmatprep.subr.mxu0 0.0
        %1712 = vmatpush1.msra.mxu0 0.0
        %1713 = vmatprep.subr.mxu0 0.0
        %1714 = vmatpush1.msra.mxu0 0.0
        %1715 = vmatprep.subr.mxu0 0.0
        %1716 = vmatpush1.msra.mxu0 0.0
        %1717 = vmatprep.subr.mxu0 0.0
        %1718 = vmatpush1.msra.mxu0 0.0
        %1719 = vmatprep.subr.mxu0 0.0
        %1720 = vmatpush1.msra.mxu0 0.0
        %1721 = vmatprep.subr.mxu0 0.0
        %1722 = vmatpush1.msra.mxu0 0.0
        %1723 = vmatprep.subr.mxu0 0.0
        %1724 = vmatpush1.msra.mxu0 0.0
        %1725 = vmatprep.subr.mxu0 0.0
        %1726 = vmatpush1.msra.mxu0 0.0
        %1727 = vmatprep.subr.mxu0 0.0
        %1728 = vmatpush1.msra.mxu0 0.0
        %1729 = vmatprep.subr.mxu0 0.0
        %1730 = vmatpush1.msra.mxu0 0.0
        %1731 = vmatprep.mubr.f32.mxu0 0.0
        %v1732 = vand.u32 %v1277, 4294901760
        %1733 = vmatmul.mubr.f32.gmra.mrb[0].mxu0 %v1732
        %v1734 = vpop.f32.mrb[0].mxu0
        %v1735 = vadd.f32 %v1662, %v1734
        %v1736 = vpop.f32.mrb[0].mxu0
        %1737 = vdwg.mxu0
        %v1739 = vsel %vm267, %v817, 0
        %1741 = vmatprep.subr.mxu0 0.0
        %v1742 = vand.u32 %v820, 4294901760
        %1743 = vmatpush1.msra.mxu0 %v1742
        %1744 = vmatprep.subr.mxu0 0.0
        %v1745 = vand.u32 %v821, 4294901760
        %1746 = vmatpush1.msra.mxu0 %v1745
        %1747 = vmatprep.subr.mxu0 0.0
        %1748 = vmatpush1.msra.mxu0 0.0
        %1749 = vmatprep.subr.mxu0 0.0
        %1750 = vmatpush1.msra.mxu0 0.0
        %1751 = vmatprep.subr.mxu0 0.0
        %1752 = vmatpush1.msra.mxu0 0.0
        %1753 = vmatprep.subr.mxu0 0.0
        %1754 = vmatpush1.msra.mxu0 0.0
        %1755 = vmatprep.subr.mxu0 0.0
        %1756 = vmatpush1.msra.mxu0 0.0
        %1757 = vmatprep.subr.mxu0 0.0
        %1758 = vmatpush1.msra.mxu0 0.0
        %1759 = vmatprep.subr.mxu0 0.0
        %1760 = vmatpush1.msra.mxu0 0.0
        %1761 = vmatprep.subr.mxu0 0.0
        %1762 = vmatpush1.msra.mxu0 0.0
        %1763 = vmatprep.subr.mxu0 0.0
        %1764 = vmatpush1.msra.mxu0 0.0
        %1765 = vmatprep.subr.mxu0 0.0
        %1766 = vmatpush1.msra.mxu0 0.0
        %1767 = vmatprep.subr.mxu0 0.0
        %1768 = vmatpush1.msra.mxu0 0.0
        %1769 = vmatprep.subr.mxu0 0.0
        %1770 = vmatpush1.msra.mxu0 0.0
        %1771 = vmatprep.subr.mxu0 0.0
        %1772 = vmatpush1.msra.mxu0 0.0
        %1773 = vmatprep.subr.mxu0 0.0
        %1774 = vmatpush1.msra.mxu0 0.0
        %1775 = vmatprep.subr.mxu0 0.0
        %1776 = vmatpush1.msra.mxu0 0.0
        %1777 = vmatprep.subr.mxu0 0.0
        %1778 = vmatpush1.msra.mxu0 0.0
        %1779 = vmatprep.subr.mxu0 0.0
        %1780 = vmatpush1.msra.mxu0 0.0
        %1781 = vmatprep.subr.mxu0 0.0
        %1782 = vmatpush1.msra.mxu0 0.0
        %1783 = vmatprep.subr.mxu0 0.0
        %1784 = vmatpush1.msra.mxu0 0.0
        %1785 = vmatprep.subr.mxu0 0.0
        %1786 = vmatpush1.msra.mxu0 0.0
        %1787 = vmatprep.subr.mxu0 0.0
        %1788 = vmatpush1.msra.mxu0 0.0
        %1789 = vmatprep.subr.mxu0 0.0
        %1790 = vmatpush1.msra.mxu0 0.0
        %1791 = vmatprep.subr.mxu0 0.0
        %1792 = vmatpush1.msra.mxu0 0.0
        %1793 = vmatprep.subr.mxu0 0.0
        %1794 = vmatpush1.msra.mxu0 0.0
        %1795 = vmatprep.subr.mxu0 0.0
        %1796 = vmatpush1.msra.mxu0 0.0
        %1797 = vmatprep.subr.mxu0 0.0
        %1798 = vmatpush1.msra.mxu0 0.0
        %1799 = vmatprep.subr.mxu0 0.0
        %1800 = vmatpush1.msra.mxu0 0.0
        %1801 = vmatprep.subr.mxu0 0.0
        %1802 = vmatpush1.msra.mxu0 0.0
        %1803 = vmatprep.subr.mxu0 0.0
        %1804 = vmatpush1.msra.mxu0 0.0
        %1805 = vmatprep.subr.mxu0 0.0
        %1806 = vmatpush1.msra.mxu0 0.0
        %1807 = vmatprep.mubr.f32.mxu0 0.0
        %v1808 = vand.u32 %v1739, 4294901760
        %v1809 = vsub.f32 %v1739, %v1808
        %v1810 = vand.u32 %v1809, 4294901760
        %v1811 = vsub.f32 %v1809, %v1810
        %v1812 = vand.u32 %v1811, 4294901760
        %1813 = vmatmul.mubr.f32.gmra.mrb[0].mxu0 %v1812
        %v1814 = vpop.f32.mrb[0].mxu0
        %v1815 = vadd.f32 %v1735, %v1814
        %v1816 = vpop.f32.mrb[0].mxu0
        %1817 = vdwg.mxu0
        %1818 = vmatprep.subr.mxu0 0.0
        %v1819 = vand.u32 %v820, 4294901760
        %v1820 = vsub.f32 %v820, %v1819
        %v1821 = vand.u32 %v1820, 4294901760
        %v1822 = vsub.f32 %v1820, %v1821
        %v1823 = vand.u32 %v1822, 4294901760
        %1824 = vmatpush1.msra.mxu0 %v1823
        %1825 = vmatprep.subr.mxu0 0.0
        %v1826 = vand.u32 %v821, 4294901760
        %v1827 = vsub.f32 %v821, %v1826
        %v1828 = vand.u32 %v1827, 4294901760
        %v1829 = vsub.f32 %v1827, %v1828
        %v1830 = vand.u32 %v1829, 4294901760
        %1831 = vmatpush1.msra.mxu0 %v1830
        %1832 = vmatprep.subr.mxu0 0.0
        %1833 = vmatpush1.msra.mxu0 0.0
        %1834 = vmatprep.subr.mxu0 0.0
        %1835 = vmatpush1.msra.mxu0 0.0
        %1836 = vmatprep.subr.mxu0 0.0
        %1837 = vmatpush1.msra.mxu0 0.0
        %1838 = vmatprep.subr.mxu0 0.0
        %1839 = vmatpush1.msra.mxu0 0.0
        %1840 = vmatprep.subr.mxu0 0.0
        %1841 = vmatpush1.msra.mxu0 0.0
        %1842 = vmatprep.subr.mxu0 0.0
        %1843 = vmatpush1.msra.mxu0 0.0
        %1844 = vmatprep.subr.mxu0 0.0
        %1845 = vmatpush1.msra.mxu0 0.0
        %1846 = vmatprep.subr.mxu0 0.0
        %1847 = vmatpush1.msra.mxu0 0.0
        %1848 = vmatprep.subr.mxu0 0.0
        %1849 = vmatpush1.msra.mxu0 0.0
        %1850 = vmatprep.subr.mxu0 0.0
        %1851 = vmatpush1.msra.mxu0 0.0
        %1852 = vmatprep.subr.mxu0 0.0
        %1853 = vmatpush1.msra.mxu0 0.0
        %1854 = vmatprep.subr.mxu0 0.0
        %1855 = vmatpush1.msra.mxu0 0.0
        %1856 = vmatprep.subr.mxu0 0.0
        %1857 = vmatpush1.msra.mxu0 0.0
        %1858 = vmatprep.subr.mxu0 0.0
        %1859 = vmatpush1.msra.mxu0 0.0
        %1860 = vmatprep.subr.mxu0 0.0
        %1861 = vmatpush1.msra.mxu0 0.0
        %1862 = vmatprep.subr.mxu0 0.0
        %1863 = vmatpush1.msra.mxu0 0.0
        %1864 = vmatprep.subr.mxu0 0.0
        %1865 = vmatpush1.msra.mxu0 0.0
        %1866 = vmatprep.subr.mxu0 0.0
        %1867 = vmatpush1.msra.mxu0 0.0
        %1868 = vmatprep.subr.mxu0 0.0
        %1869 = vmatpush1.msra.mxu0 0.0
        %1870 = vmatprep.subr.mxu0 0.0
        %1871 = vmatpush1.msra.mxu0 0.0
        %1872 = vmatprep.subr.mxu0 0.0
        %1873 = vmatpush1.msra.mxu0 0.0
        %1874 = vmatprep.subr.mxu0 0.0
        %1875 = vmatpush1.msra.mxu0 0.0
        %1876 = vmatprep.subr.mxu0 0.0
        %1877 = vmatpush1.msra.mxu0 0.0
        %1878 = vmatprep.subr.mxu0 0.0
        %1879 = vmatpush1.msra.mxu0 0.0
        %1880 = vmatprep.subr.mxu0 0.0
        %1881 = vmatpush1.msra.mxu0 0.0
        %1882 = vmatprep.subr.mxu0 0.0
        %1883 = vmatpush1.msra.mxu0 0.0
        %1884 = vmatprep.subr.mxu0 0.0
        %1885 = vmatpush1.msra.mxu0 0.0
        %1886 = vmatprep.subr.mxu0 0.0
        %1887 = vmatpush1.msra.mxu0 0.0
        %1888 = vmatprep.subr.mxu0 0.0
        %1889 = vmatpush1.msra.mxu0 0.0
        %1890 = vmatprep.subr.mxu0 0.0
        %1891 = vmatpush1.msra.mxu0 0.0
        %1892 = vmatprep.mubr.f32.mxu0 0.0
        %v1893 = vand.u32 %v1739, 4294901760
        %1894 = vmatmul.mubr.f32.gmra.mrb[0].mxu0 %v1893
        %v1895 = vpop.f32.mrb[0].mxu0
        %v1896 = vadd.f32 %v1815, %v1895
        %v1897 = vpop.f32.mrb[0].mxu0
        %1898 = vdwg.mxu0
        %1899 = vmatprep.subr.mxu0 0.0
        %v1900 = vand.u32 %v820, 4294901760
        %v1901 = vsub.f32 %v820, %v1900
        %1902 = vmatpush1.msra.mxu0 %v1901
        %1903 = vmatprep.subr.mxu0 0.0
        %v1904 = vand.u32 %v821, 4294901760
        %v1905 = vsub.f32 %v821, %v1904
        %1906 = vmatpush1.msra.mxu0 %v1905
        %1907 = vmatprep.subr.mxu0 0.0
        %1908 = vmatpush1.msra.mxu0 0.0
        %1909 = vmatprep.subr.mxu0 0.0
        %1910 = vmatpush1.msra.mxu0 0.0
        %1911 = vmatprep.subr.mxu0 0.0
        %1912 = vmatpush1.msra.mxu0 0.0
        %1913 = vmatprep.subr.mxu0 0.0
        %1914 = vmatpush1.msra.mxu0 0.0
        %1915 = vmatprep.subr.mxu0 0.0
        %1916 = vmatpush1.msra.mxu0 0.0
        %1917 = vmatprep.subr.mxu0 0.0
        %1918 = vmatpush1.msra.mxu0 0.0
        %1919 = vmatprep.subr.mxu0 0.0
        %1920 = vmatpush1.msra.mxu0 0.0
        %1921 = vmatprep.subr.mxu0 0.0
        %1922 = vmatpush1.msra.mxu0 0.0
        %1923 = vmatprep.subr.mxu0 0.0
        %1924 = vmatpush1.msra.mxu0 0.0
        %1925 = vmatprep.subr.mxu0 0.0
        %1926 = vmatpush1.msra.mxu0 0.0
        %1927 = vmatprep.subr.mxu0 0.0
        %1928 = vmatpush1.msra.mxu0 0.0
        %1929 = vmatprep.subr.mxu0 0.0
        %1930 = vmatpush1.msra.mxu0 0.0
        %1931 = vmatprep.subr.mxu0 0.0
        %1932 = vmatpush1.msra.mxu0 0.0
        %1933 = vmatprep.subr.mxu0 0.0
        %1934 = vmatpush1.msra.mxu0 0.0
        %1935 = vmatprep.subr.mxu0 0.0
        %1936 = vmatpush1.msra.mxu0 0.0
        %1937 = vmatprep.subr.mxu0 0.0
        %1938 = vmatpush1.msra.mxu0 0.0
        %1939 = vmatprep.subr.mxu0 0.0
        %1940 = vmatpush1.msra.mxu0 0.0
        %1941 = vmatprep.subr.mxu0 0.0
        %1942 = vmatpush1.msra.mxu0 0.0
        %1943 = vmatprep.subr.mxu0 0.0
        %1944 = vmatpush1.msra.mxu0 0.0
        %1945 = vmatprep.subr.mxu0 0.0
        %1946 = vmatpush1.msra.mxu0 0.0
        %1947 = vmatprep.subr.mxu0 0.0
        %1948 = vmatpush1.msra.mxu0 0.0
        %1949 = vmatprep.subr.mxu0 0.0
        %1950 = vmatpush1.msra.mxu0 0.0
        %1951 = vmatprep.subr.mxu0 0.0
        %1952 = vmatpush1.msra.mxu0 0.0
        %1953 = vmatprep.subr.mxu0 0.0
        %1954 = vmatpush1.msra.mxu0 0.0
        %1955 = vmatprep.subr.mxu0 0.0
        %1956 = vmatpush1.msra.mxu0 0.0
        %1957 = vmatprep.subr.mxu0 0.0
        %1958 = vmatpush1.msra.mxu0 0.0
        %1959 = vmatprep.subr.mxu0 0.0
        %1960 = vmatpush1.msra.mxu0 0.0
        %1961 = vmatprep.subr.mxu0 0.0
        %1962 = vmatpush1.msra.mxu0 0.0
        %1963 = vmatprep.subr.mxu0 0.0
        %1964 = vmatpush1.msra.mxu0 0.0
        %1965 = vmatprep.subr.mxu0 0.0
        %1966 = vmatpush1.msra.mxu0 0.0
        %1967 = vmatprep.mubr.f32.mxu0 0.0
        %v1968 = vand.u32 %v1739, 4294901760
        %v1969 = vsub.f32 %v1739, %v1968
        %1970 = vmatmul.mubr.f32.gmra.mrb[0].mxu0 %v1969
        %v1971 = vpop.f32.mrb[0].mxu0
        %v1972 = vadd.f32 %v1896, %v1971
        %v1973 = vpop.f32.mrb[0].mxu0
        %1974 = vdwg.mxu0
        %1975 = vmatprep.subr.mxu0 0.0
        %v1976 = vand.u32 %v820, 4294901760
        %1977 = vmatpush1.msra.mxu0 %v1976
        %1978 = vmatprep.subr.mxu0 0.0
        %v1979 = vand.u32 %v821, 4294901760
        %1980 = vmatpush1.msra.mxu0 %v1979
        %1981 = vmatprep.subr.mxu0 0.0
        %1982 = vmatpush1.msra.mxu0 0.0
        %1983 = vmatprep.subr.mxu0 0.0
        %1984 = vmatpush1.msra.mxu0 0.0
        %1985 = vmatprep.subr.mxu0 0.0
        %1986 = vmatpush1.msra.mxu0 0.0
        %1987 = vmatprep.subr.mxu0 0.0
        %1988 = vmatpush1.msra.mxu0 0.0
        %1989 = vmatprep.subr.mxu0 0.0
        %1990 = vmatpush1.msra.mxu0 0.0
        %1991 = vmatprep.subr.mxu0 0.0
        %1992 = vmatpush1.msra.mxu0 0.0
        %1993 = vmatprep.subr.mxu0 0.0
        %1994 = vmatpush1.msra.mxu0 0.0
        %1995 = vmatprep.subr.mxu0 0.0
        %1996 = vmatpush1.msra.mxu0 0.0
        %1997 = vmatprep.subr.mxu0 0.0
        %1998 = vmatpush1.msra.mxu0 0.0
        %1999 = vmatprep.subr.mxu0 0.0
        %2000 = vmatpush1.msra.mxu0 0.0
        %2001 = vmatprep.subr.mxu0 0.0
        %2002 = vmatpush1.msra.mxu0 0.0
        %2003 = vmatprep.subr.mxu0 0.0
        %2004 = vmatpush1.msra.mxu0 0.0
        %2005 = vmatprep.subr.mxu0 0.0
        %2006 = vmatpush1.msra.mxu0 0.0
        %2007 = vmatprep.subr.mxu0 0.0
        %2008 = vmatpush1.msra.mxu0 0.0
        %2009 = vmatprep.subr.mxu0 0.0
        %2010 = vmatpush1.msra.mxu0 0.0
        %2011 = vmatprep.subr.mxu0 0.0
        %2012 = vmatpush1.msra.mxu0 0.0
        %2013 = vmatprep.subr.mxu0 0.0
        %2014 = vmatpush1.msra.mxu0 0.0
        %2015 = vmatprep.subr.mxu0 0.0
        %2016 = vmatpush1.msra.mxu0 0.0
        %2017 = vmatprep.subr.mxu0 0.0
        %2018 = vmatpush1.msra.mxu0 0.0
        %2019 = vmatprep.subr.mxu0 0.0
        %2020 = vmatpush1.msra.mxu0 0.0
        %2021 = vmatprep.subr.mxu0 0.0
        %2022 = vmatpush1.msra.mxu0 0.0
        %2023 = vmatprep.subr.mxu0 0.0
        %2024 = vmatpush1.msra.mxu0 0.0
        %2025 = vmatprep.subr.mxu0 0.0
        %2026 = vmatpush1.msra.mxu0 0.0
        %2027 = vmatprep.subr.mxu0 0.0
        %2028 = vmatpush1.msra.mxu0 0.0
        %2029 = vmatprep.subr.mxu0 0.0
        %2030 = vmatpush1.msra.mxu0 0.0
        %2031 = vmatprep.subr.mxu0 0.0
        %2032 = vmatpush1.msra.mxu0 0.0
        %2033 = vmatprep.subr.mxu0 0.0
        %2034 = vmatpush1.msra.mxu0 0.0
        %2035 = vmatprep.subr.mxu0 0.0
        %2036 = vmatpush1.msra.mxu0 0.0
        %2037 = vmatprep.subr.mxu0 0.0
        %2038 = vmatpush1.msra.mxu0 0.0
        %2039 = vmatprep.subr.mxu0 0.0
        %2040 = vmatpush1.msra.mxu0 0.0
        %2041 = vmatprep.mubr.f32.mxu0 0.0
        %v2042 = vand.u32 %v1739, 4294901760
        %v2043 = vsub.f32 %v1739, %v2042
        %v2044 = vand.u32 %v2043, 4294901760
        %2045 = vmatmul.mubr.f32.gmra.mrb[0].mxu0 %v2044
        %v2046 = vpop.f32.mrb[0].mxu0
        %v2047 = vadd.f32 %v1972, %v2046
        %v2048 = vpop.f32.mrb[0].mxu0
        %2049 = vdwg.mxu0
        %2050 = vmatprep.subr.mxu0 0.0
        %v2051 = vand.u32 %v820, 4294901760
        %v2052 = vsub.f32 %v820, %v2051
        %v2053 = vand.u32 %v2052, 4294901760
        %2054 = vmatpush1.msra.mxu0 %v2053
        %2055 = vmatprep.subr.mxu0 0.0
        %v2056 = vand.u32 %v821, 4294901760
        %v2057 = vsub.f32 %v821, %v2056
        %v2058 = vand.u32 %v2057, 4294901760
        %2059 = vmatpush1.msra.mxu0 %v2058
        %2060 = vmatprep.subr.mxu0 0.0
        %2061 = vmatpush1.msra.mxu0 0.0
        %2062 = vmatprep.subr.mxu0 0.0
        %2063 = vmatpush1.msra.mxu0 0.0
        %2064 = vmatprep.subr.mxu0 0.0
        %2065 = vmatpush1.msra.mxu0 0.0
        %2066 = vmatprep.subr.mxu0 0.0
        %2067 = vmatpush1.msra.mxu0 0.0
        %2068 = vmatprep.subr.mxu0 0.0
        %2069 = vmatpush1.msra.mxu0 0.0
        %2070 = vmatprep.subr.mxu0 0.0
        %2071 = vmatpush1.msra.mxu0 0.0
        %2072 = vmatprep.subr.mxu0 0.0
        %2073 = vmatpush1.msra.mxu0 0.0
        %2074 = vmatprep.subr.mxu0 0.0
        %2075 = vmatpush1.msra.mxu0 0.0
        %2076 = vmatprep.subr.mxu0 0.0
        %2077 = vmatpush1.msra.mxu0 0.0
        %2078 = vmatprep.subr.mxu0 0.0
        %2079 = vmatpush1.msra.mxu0 0.0
        %2080 = vmatprep.subr.mxu0 0.0
        %2081 = vmatpush1.msra.mxu0 0.0
        %2082 = vmatprep.subr.mxu0 0.0
        %2083 = vmatpush1.msra.mxu0 0.0
        %2084 = vmatprep.subr.mxu0 0.0
        %2085 = vmatpush1.msra.mxu0 0.0
        %2086 = vmatprep.subr.mxu0 0.0
        %2087 = vmatpush1.msra.mxu0 0.0
        %2088 = vmatprep.subr.mxu0 0.0
        %2089 = vmatpush1.msra.mxu0 0.0
        %2090 = vmatprep.subr.mxu0 0.0
        %2091 = vmatpush1.msra.mxu0 0.0
        %2092 = vmatprep.subr.mxu0 0.0
        %2093 = vmatpush1.msra.mxu0 0.0
        %2094 = vmatprep.subr.mxu0 0.0
        %2095 = vmatpush1.msra.mxu0 0.0
        %2096 = vmatprep.subr.mxu0 0.0
        %2097 = vmatpush1.msra.mxu0 0.0
        %2098 = vmatprep.subr.mxu0 0.0
        %2099 = vmatpush1.msra.mxu0 0.0
        %2100 = vmatprep.subr.mxu0 0.0
        %2101 = vmatpush1.msra.mxu0 0.0
        %2102 = vmatprep.subr.mxu0 0.0
        %2103 = vmatpush1.msra.mxu0 0.0
        %2104 = vmatprep.subr.mxu0 0.0
        %2105 = vmatpush1.msra.mxu0 0.0
        %2106 = vmatprep.subr.mxu0 0.0
        %2107 = vmatpush1.msra.mxu0 0.0
        %2108 = vmatprep.subr.mxu0 0.0
        %2109 = vmatpush1.msra.mxu0 0.0
        %2110 = vmatprep.subr.mxu0 0.0
        %2111 = vmatpush1.msra.mxu0 0.0
        %2112 = vmatprep.subr.mxu0 0.0
        %2113 = vmatpush1.msra.mxu0 0.0
        %2114 = vmatprep.subr.mxu0 0.0
        %2115 = vmatpush1.msra.mxu0 0.0
        %2116 = vmatprep.subr.mxu0 0.0
        %2117 = vmatpush1.msra.mxu0 0.0
        %2118 = vmatprep.subr.mxu0 0.0
        %2119 = vmatpush1.msra.mxu0 0.0
        %2120 = vmatprep.mubr.f32.mxu0 0.0
        %v2121 = vand.u32 %v1739, 4294901760
        %2122 = vmatmul.mubr.f32.gmra.mrb[0].mxu0 %v2121
        %v2123 = vpop.f32.mrb[0].mxu0
        %v2124 = vadd.f32 %v2047, %v2123
        %v2125 = vpop.f32.mrb[0].mxu0
        %2126 = vdwg.mxu0
        %2127 = vmatprep.subr.mxu0 0.0
        %v2128 = vand.u32 %v820, 4294901760
        %2129 = vmatpush1.msra.mxu0 %v2128
        %2130 = vmatprep.subr.mxu0 0.0
        %v2131 = vand.u32 %v821, 4294901760
        %2132 = vmatpush1.msra.mxu0 %v2131
        %2133 = vmatprep.subr.mxu0 0.0
        %2134 = vmatpush1.msra.mxu0 0.0
        %2135 = vmatprep.subr.mxu0 0.0
        %2136 = vmatpush1.msra.mxu0 0.0
        %2137 = vmatprep.subr.mxu0 0.0
        %2138 = vmatpush1.msra.mxu0 0.0
        %2139 = vmatprep.subr.mxu0 0.0
        %2140 = vmatpush1.msra.mxu0 0.0
        %2141 = vmatprep.subr.mxu0 0.0
        %2142 = vmatpush1.msra.mxu0 0.0
        %2143 = vmatprep.subr.mxu0 0.0
        %2144 = vmatpush1.msra.mxu0 0.0
        %2145 = vmatprep.subr.mxu0 0.0
        %2146 = vmatpush1.msra.mxu0 0.0
        %2147 = vmatprep.subr.mxu0 0.0
        %2148 = vmatpush1.msra.mxu0 0.0
        %2149 = vmatprep.subr.mxu0 0.0
        %2150 = vmatpush1.msra.mxu0 0.0
        %2151 = vmatprep.subr.mxu0 0.0
        %2152 = vmatpush1.msra.mxu0 0.0
        %2153 = vmatprep.subr.mxu0 0.0
        %2154 = vmatpush1.msra.mxu0 0.0
        %2155 = vmatprep.subr.mxu0 0.0
        %2156 = vmatpush1.msra.mxu0 0.0
        %2157 = vmatprep.subr.mxu0 0.0
        %2158 = vmatpush1.msra.mxu0 0.0
        %2159 = vmatprep.subr.mxu0 0.0
        %2160 = vmatpush1.msra.mxu0 0.0
        %2161 = vmatprep.subr.mxu0 0.0
        %2162 = vmatpush1.msra.mxu0 0.0
        %2163 = vmatprep.subr.mxu0 0.0
        %2164 = vmatpush1.msra.mxu0 0.0
        %2165 = vmatprep.subr.mxu0 0.0
        %2166 = vmatpush1.msra.mxu0 0.0
        %2167 = vmatprep.subr.mxu0 0.0
        %2168 = vmatpush1.msra.mxu0 0.0
        %2169 = vmatprep.subr.mxu0 0.0
        %2170 = vmatpush1.msra.mxu0 0.0
        %2171 = vmatprep.subr.mxu0 0.0
        %2172 = vmatpush1.msra.mxu0 0.0
        %2173 = vmatprep.subr.mxu0 0.0
        %2174 = vmatpush1.msra.mxu0 0.0
        %2175 = vmatprep.subr.mxu0 0.0
        %2176 = vmatpush1.msra.mxu0 0.0
        %2177 = vmatprep.subr.mxu0 0.0
        %2178 = vmatpush1.msra.mxu0 0.0
        %2179 = vmatprep.subr.mxu0 0.0
        %2180 = vmatpush1.msra.mxu0 0.0
        %2181 = vmatprep.subr.mxu0 0.0
        %2182 = vmatpush1.msra.mxu0 0.0
        %2183 = vmatprep.subr.mxu0 0.0
        %2184 = vmatpush1.msra.mxu0 0.0
        %2185 = vmatprep.subr.mxu0 0.0
        %2186 = vmatpush1.msra.mxu0 0.0
        %2187 = vmatprep.subr.mxu0 0.0
        %2188 = vmatpush1.msra.mxu0 0.0
        %2189 = vmatprep.subr.mxu0 0.0
        %2190 = vmatpush1.msra.mxu0 0.0
        %2191 = vmatprep.subr.mxu0 0.0
        %2192 = vmatpush1.msra.mxu0 0.0
        %2193 = vmatprep.mubr.f32.mxu0 0.0
        %v2194 = vand.u32 %v1739, 4294901760
        %2195 = vmatmul.mubr.f32.gmra.mrb[0].mxu0 %v2194
        %v2196 = vpop.f32.mrb[0].mxu0
        %v2197 = vadd.f32 %v2124, %v2196
        %v2198 = vpop.f32.mrb[0].mxu0
        %2199 = vdwg.mxu0
        %s2200 = scalar_lea.vmem [#allocation6], 8
        %v2201 = vld [vmem:[%s2200] sm:$0xf]
        %v2203 = vsel %vm370, %v2201, 0
        %2205 = vmatprep.subr.mxu0 0.0
        %v2206 = vand.u32 %v368, 4294901760
        %2207 = vmatpush1.msra.mxu0 %v2206
        %2208 = vmatprep.subr.mxu0 0.0
        %2209 = vmatpush1.msra.mxu0 0.0
        %2210 = vmatprep.subr.mxu0 0.0
        %2211 = vmatpush1.msra.mxu0 0.0
        %2212 = vmatprep.subr.mxu0 0.0
        %2213 = vmatpush1.msra.mxu0 0.0
        %2214 = vmatprep.subr.mxu0 0.0
        %2215 = vmatpush1.msra.mxu0 0.0
        %2216 = vmatprep.subr.mxu0 0.0
        %2217 = vmatpush1.msra.mxu0 0.0
        %2218 = vmatprep.subr.mxu0 0.0
        %2219 = vmatpush1.msra.mxu0 0.0
        %2220 = vmatprep.subr.mxu0 0.0
        %2221 = vmatpush1.msra.mxu0 0.0
        %2222 = vmatprep.subr.mxu0 0.0
        %2223 = vmatpush1.msra.mxu0 0.0
        %2224 = vmatprep.subr.mxu0 0.0
        %2225 = vmatpush1.msra.mxu0 0.0
        %2226 = vmatprep.subr.mxu0 0.0
        %2227 = vmatpush1.msra.mxu0 0.0
        %2228 = vmatprep.subr.mxu0 0.0
        %2229 = vmatpush1.msra.mxu0 0.0
        %2230 = vmatprep.subr.mxu0 0.0
        %2231 = vmatpush1.msra.mxu0 0.0
        %2232 = vmatprep.subr.mxu0 0.0
        %2233 = vmatpush1.msra.mxu0 0.0
        %2234 = vmatprep.subr.mxu0 0.0
        %2235 = vmatpush1.msra.mxu0 0.0
        %2236 = vmatprep.subr.mxu0 0.0
        %2237 = vmatpush1.msra.mxu0 0.0
        %2238 = vmatprep.subr.mxu0 0.0
        %2239 = vmatpush1.msra.mxu0 0.0
        %2240 = vmatprep.subr.mxu0 0.0
        %2241 = vmatpush1.msra.mxu0 0.0
        %2242 = vmatprep.subr.mxu0 0.0
        %2243 = vmatpush1.msra.mxu0 0.0
        %2244 = vmatprep.subr.mxu0 0.0
        %2245 = vmatpush1.msra.mxu0 0.0
        %2246 = vmatprep.subr.mxu0 0.0
        %2247 = vmatpush1.msra.mxu0 0.0
        %2248 = vmatprep.subr.mxu0 0.0
        %2249 = vmatpush1.msra.mxu0 0.0
        %2250 = vmatprep.subr.mxu0 0.0
        %2251 = vmatpush1.msra.mxu0 0.0
        %2252 = vmatprep.subr.mxu0 0.0
        %2253 = vmatpush1.msra.mxu0 0.0
        %2254 = vmatprep.subr.mxu0 0.0
        %2255 = vmatpush1.msra.mxu0 0.0
        %2256 = vmatprep.subr.mxu0 0.0
        %2257 = vmatpush1.msra.mxu0 0.0
        %2258 = vmatprep.subr.mxu0 0.0
        %2259 = vmatpush1.msra.mxu0 0.0
        %2260 = vmatprep.subr.mxu0 0.0
        %2261 = vmatpush1.msra.mxu0 0.0
        %2262 = vmatprep.subr.mxu0 0.0
        %2263 = vmatpush1.msra.mxu0 0.0
        %2264 = vmatprep.subr.mxu0 0.0
        %2265 = vmatpush1.msra.mxu0 0.0
        %2266 = vmatprep.subr.mxu0 0.0
        %2267 = vmatpush1.msra.mxu0 0.0
        %2268 = vmatprep.subr.mxu0 0.0
        %2269 = vmatpush1.msra.mxu0 0.0
        %2270 = vmatprep.mubr.f32.mxu0 0.0
        %v2271 = vand.u32 %v2203, 4294901760
        %v2272 = vsub.f32 %v2203, %v2271
        %v2273 = vand.u32 %v2272, 4294901760
        %v2274 = vsub.f32 %v2272, %v2273
        %v2275 = vand.u32 %v2274, 4294901760
        %2276 = vmatmul.mubr.f32.gmra.mrb[0].mxu0 %v2275
        %v2277 = vpop.f32.mrb[0].mxu0
        %v2278 = vadd.f32 0.0, %v2277
        %v2279 = vpop.f32.mrb[0].mxu0
        %2280 = vdwg.mxu0
        %2281 = vmatprep.subr.mxu0 0.0
        %v2282 = vand.u32 %v368, 4294901760
        %v2283 = vsub.f32 %v368, %v2282
        %v2284 = vand.u32 %v2283, 4294901760
        %v2285 = vsub.f32 %v2283, %v2284
        %v2286 = vand.u32 %v2285, 4294901760
        %2287 = vmatpush1.msra.mxu0 %v2286
        %2288 = vmatprep.subr.mxu0 0.0
        %2289 = vmatpush1.msra.mxu0 0.0
        %2290 = vmatprep.subr.mxu0 0.0
        %2291 = vmatpush1.msra.mxu0 0.0
        %2292 = vmatprep.subr.mxu0 0.0
        %2293 = vmatpush1.msra.mxu0 0.0
        %2294 = vmatprep.subr.mxu0 0.0
        %2295 = vmatpush1.msra.mxu0 0.0
        %2296 = vmatprep.subr.mxu0 0.0
        %2297 = vmatpush1.msra.mxu0 0.0
        %2298 = vmatprep.subr.mxu0 0.0
        %2299 = vmatpush1.msra.mxu0 0.0
        %2300 = vmatprep.subr.mxu0 0.0
        %2301 = vmatpush1.msra.mxu0 0.0
        %2302 = vmatprep.subr.mxu0 0.0
        %2303 = vmatpush1.msra.mxu0 0.0
        %2304 = vmatprep.subr.mxu0 0.0
        %2305 = vmatpush1.msra.mxu0 0.0
        %2306 = vmatprep.subr.mxu0 0.0
        %2307 = vmatpush1.msra.mxu0 0.0
        %2308 = vmatprep.subr.mxu0 0.0
        %2309 = vmatpush1.msra.mxu0 0.0
        %2310 = vmatprep.subr.mxu0 0.0
        %2311 = vmatpush1.msra.mxu0 0.0
        %2312 = vmatprep.subr.mxu0 0.0
        %2313 = vmatpush1.msra.mxu0 0.0
        %2314 = vmatprep.subr.mxu0 0.0
        %2315 = vmatpush1.msra.mxu0 0.0
        %2316 = vmatprep.subr.mxu0 0.0
        %2317 = vmatpush1.msra.mxu0 0.0
        %2318 = vmatprep.subr.mxu0 0.0
        %2319 = vmatpush1.msra.mxu0 0.0
        %2320 = vmatprep.subr.mxu0 0.0
        %2321 = vmatpush1.msra.mxu0 0.0
        %2322 = vmatprep.subr.mxu0 0.0
        %2323 = vmatpush1.msra.mxu0 0.0
        %2324 = vmatprep.subr.mxu0 0.0
        %2325 = vmatpush1.msra.mxu0 0.0
        %2326 = vmatprep.subr.mxu0 0.0
        %2327 = vmatpush1.msra.mxu0 0.0
        %2328 = vmatprep.subr.mxu0 0.0
        %2329 = vmatpush1.msra.mxu0 0.0
        %2330 = vmatprep.subr.mxu0 0.0
        %2331 = vmatpush1.msra.mxu0 0.0
        %2332 = vmatprep.subr.mxu0 0.0
        %2333 = vmatpush1.msra.mxu0 0.0
        %2334 = vmatprep.subr.mxu0 0.0
        %2335 = vmatpush1.msra.mxu0 0.0
        %2336 = vmatprep.subr.mxu0 0.0
        %2337 = vmatpush1.msra.mxu0 0.0
        %2338 = vmatprep.subr.mxu0 0.0
        %2339 = vmatpush1.msra.mxu0 0.0
        %2340 = vmatprep.subr.mxu0 0.0
        %2341 = vmatpush1.msra.mxu0 0.0
        %2342 = vmatprep.subr.mxu0 0.0
        %2343 = vmatpush1.msra.mxu0 0.0
        %2344 = vmatprep.subr.mxu0 0.0
        %2345 = vmatpush1.msra.mxu0 0.0
        %2346 = vmatprep.subr.mxu0 0.0
        %2347 = vmatpush1.msra.mxu0 0.0
        %2348 = vmatprep.subr.mxu0 0.0
        %2349 = vmatpush1.msra.mxu0 0.0
        %2350 = vmatprep.mubr.f32.mxu0 0.0
        %v2351 = vand.u32 %v2203, 4294901760
        %2352 = vmatmul.mubr.f32.gmra.mrb[0].mxu0 %v2351
        %v2353 = vpop.f32.mrb[0].mxu0
        %v2354 = vadd.f32 %v2278, %v2353
        %v2355 = vpop.f32.mrb[0].mxu0
        %2356 = vdwg.mxu0
        %2357 = vmatprep.subr.mxu0 0.0
        %v2358 = vand.u32 %v368, 4294901760
        %v2359 = vsub.f32 %v368, %v2358
        %2360 = vmatpush1.msra.mxu0 %v2359
        %2361 = vmatprep.subr.mxu0 0.0
        %2362 = vmatpush1.msra.mxu0 0.0
        %2363 = vmatprep.subr.mxu0 0.0
        %2364 = vmatpush1.msra.mxu0 0.0
        %2365 = vmatprep.subr.mxu0 0.0
        %2366 = vmatpush1.msra.mxu0 0.0
        %2367 = vmatprep.subr.mxu0 0.0
        %2368 = vmatpush1.msra.mxu0 0.0
        %2369 = vmatprep.subr.mxu0 0.0
        %2370 = vmatpush1.msra.mxu0 0.0
        %2371 = vmatprep.subr.mxu0 0.0
        %2372 = vmatpush1.msra.mxu0 0.0
        %2373 = vmatprep.subr.mxu0 0.0
        %2374 = vmatpush1.msra.mxu0 0.0
        %2375 = vmatprep.subr.mxu0 0.0
        %2376 = vmatpush1.msra.mxu0 0.0
        %2377 = vmatprep.subr.mxu0 0.0
        %2378 = vmatpush1.msra.mxu0 0.0
        %2379 = vmatprep.subr.mxu0 0.0
        %2380 = vmatpush1.msra.mxu0 0.0
        %2381 = vmatprep.subr.mxu0 0.0
        %2382 = vmatpush1.msra.mxu0 0.0
        %2383 = vmatprep.subr.mxu0 0.0
        %2384 = vmatpush1.msra.mxu0 0.0
        %2385 = vmatprep.subr.mxu0 0.0
        %2386 = vmatpush1.msra.mxu0 0.0
        %2387 = vmatprep.subr.mxu0 0.0
        %2388 = vmatpush1.msra.mxu0 0.0
        %2389 = vmatprep.subr.mxu0 0.0
        %2390 = vmatpush1.msra.mxu0 0.0
        %2391 = vmatprep.subr.mxu0 0.0
        %2392 = vmatpush1.msra.mxu0 0.0
        %2393 = vmatprep.subr.mxu0 0.0
        %2394 = vmatpush1.msra.mxu0 0.0
        %2395 = vmatprep.subr.mxu0 0.0
        %2396 = vmatpush1.msra.mxu0 0.0
        %2397 = vmatprep.subr.mxu0 0.0
        %2398 = vmatpush1.msra.mxu0 0.0
        %2399 = vmatprep.subr.mxu0 0.0
        %2400 = vmatpush1.msra.mxu0 0.0
        %2401 = vmatprep.subr.mxu0 0.0
        %2402 = vmatpush1.msra.mxu0 0.0
        %2403 = vmatprep.subr.mxu0 0.0
        %2404 = vmatpush1.msra.mxu0 0.0
        %2405 = vmatprep.subr.mxu0 0.0
        %2406 = vmatpush1.msra.mxu0 0.0
        %2407 = vmatprep.subr.mxu0 0.0
        %2408 = vmatpush1.msra.mxu0 0.0
        %2409 = vmatprep.subr.mxu0 0.0
        %2410 = vmatpush1.msra.mxu0 0.0
        %2411 = vmatprep.subr.mxu0 0.0
        %2412 = vmatpush1.msra.mxu0 0.0
        %2413 = vmatprep.subr.mxu0 0.0
        %2414 = vmatpush1.msra.mxu0 0.0
        %2415 = vmatprep.subr.mxu0 0.0
        %2416 = vmatpush1.msra.mxu0 0.0
        %2417 = vmatprep.subr.mxu0 0.0
        %2418 = vmatpush1.msra.mxu0 0.0
        %2419 = vmatprep.subr.mxu0 0.0
        %2420 = vmatpush1.msra.mxu0 0.0
        %2421 = vmatprep.subr.mxu0 0.0
        %2422 = vmatpush1.msra.mxu0 0.0
        %2423 = vmatprep.mubr.f32.mxu0 0.0
        %v2424 = vand.u32 %v2203, 4294901760
        %v2425 = vsub.f32 %v2203, %v2424
        %2426 = vmatmul.mubr.f32.gmra.mrb[0].mxu0 %v2425
        %v2427 = vpop.f32.mrb[0].mxu0
        %v2428 = vadd.f32 %v2354, %v2427
        %v2429 = vpop.f32.mrb[0].mxu0
        %2430 = vdwg.mxu0
        %2431 = vmatprep.subr.mxu0 0.0
        %v2432 = vand.u32 %v368, 4294901760
        %2433 = vmatpush1.msra.mxu0 %v2432
        %2434 = vmatprep.subr.mxu0 0.0
        %2435 = vmatpush1.msra.mxu0 0.0
        %2436 = vmatprep.subr.mxu0 0.0
        %2437 = vmatpush1.msra.mxu0 0.0
        %2438 = vmatprep.subr.mxu0 0.0
        %2439 = vmatpush1.msra.mxu0 0.0
        %2440 = vmatprep.subr.mxu0 0.0
        %2441 = vmatpush1.msra.mxu0 0.0
        %2442 = vmatprep.subr.mxu0 0.0
        %2443 = vmatpush1.msra.mxu0 0.0
        %2444 = vmatprep.subr.mxu0 0.0
        %2445 = vmatpush1.msra.mxu0 0.0
        %2446 = vmatprep.subr.mxu0 0.0
        %2447 = vmatpush1.msra.mxu0 0.0
        %2448 = vmatprep.subr.mxu0 0.0
        %2449 = vmatpush1.msra.mxu0 0.0
        %2450 = vmatprep.subr.mxu0 0.0
        %2451 = vmatpush1.msra.mxu0 0.0
        %2452 = vmatprep.subr.mxu0 0.0
        %2453 = vmatpush1.msra.mxu0 0.0
        %2454 = vmatprep.subr.mxu0 0.0
        %2455 = vmatpush1.msra.mxu0 0.0
        %2456 = vmatprep.subr.mxu0 0.0
        %2457 = vmatpush1.msra.mxu0 0.0
        %2458 = vmatprep.subr.mxu0 0.0
        %2459 = vmatpush1.msra.mxu0 0.0
        %2460 = vmatprep.subr.mxu0 0.0
        %2461 = vmatpush1.msra.mxu0 0.0
        %2462 = vmatprep.subr.mxu0 0.0
        %2463 = vmatpush1.msra.mxu0 0.0
        %2464 = vmatprep.subr.mxu0 0.0
        %2465 = vmatpush1.msra.mxu0 0.0
        %2466 = vmatprep.subr.mxu0 0.0
        %2467 = vmatpush1.msra.mxu0 0.0
        %2468 = vmatprep.subr.mxu0 0.0
        %2469 = vmatpush1.msra.mxu0 0.0
        %2470 = vmatprep.subr.mxu0 0.0
        %2471 = vmatpush1.msra.mxu0 0.0
        %2472 = vmatprep.subr.mxu0 0.0
        %2473 = vmatpush1.msra.mxu0 0.0
        %2474 = vmatprep.subr.mxu0 0.0
        %2475 = vmatpush1.msra.mxu0 0.0
        %2476 = vmatprep.subr.mxu0 0.0
        %2477 = vmatpush1.msra.mxu0 0.0
        %2478 = vmatprep.subr.mxu0 0.0
        %2479 = vmatpush1.msra.mxu0 0.0
        %2480 = vmatprep.subr.mxu0 0.0
        %2481 = vmatpush1.msra.mxu0 0.0
        %2482 = vmatprep.subr.mxu0 0.0
        %2483 = vmatpush1.msra.mxu0 0.0
        %2484 = vmatprep.subr.mxu0 0.0
        %2485 = vmatpush1.msra.mxu0 0.0
        %2486 = vmatprep.subr.mxu0 0.0
        %2487 = vmatpush1.msra.mxu0 0.0
        %2488 = vmatprep.subr.mxu0 0.0
        %2489 = vmatpush1.msra.mxu0 0.0
        %2490 = vmatprep.subr.mxu0 0.0
        %2491 = vmatpush1.msra.mxu0 0.0
        %2492 = vmatprep.subr.mxu0 0.0
        %2493 = vmatpush1.msra.mxu0 0.0
        %2494 = vmatprep.subr.mxu0 0.0
        %2495 = vmatpush1.msra.mxu0 0.0
        %2496 = vmatprep.mubr.f32.mxu0 0.0
        %v2497 = vand.u32 %v2203, 4294901760
        %v2498 = vsub.f32 %v2203, %v2497
        %v2499 = vand.u32 %v2498, 4294901760
        %2500 = vmatmul.mubr.f32.gmra.mrb[0].mxu0 %v2499
        %v2501 = vpop.f32.mrb[0].mxu0
        %v2502 = vadd.f32 %v2428, %v2501
        %v2503 = vpop.f32.mrb[0].mxu0
        %2504 = vdwg.mxu0
        %2505 = vmatprep.subr.mxu0 0.0
        %v2506 = vand.u32 %v368, 4294901760
        %v2507 = vsub.f32 %v368, %v2506
        %v2508 = vand.u32 %v2507, 4294901760
        %2509 = vmatpush1.msra.mxu0 %v2508
        %2510 = vmatprep.subr.mxu0 0.0
        %2511 = vmatpush1.msra.mxu0 0.0
        %2512 = vmatprep.subr.mxu0 0.0
        %2513 = vmatpush1.msra.mxu0 0.0
        %2514 = vmatprep.subr.mxu0 0.0
        %2515 = vmatpush1.msra.mxu0 0.0
        %2516 = vmatprep.subr.mxu0 0.0
        %2517 = vmatpush1.msra.mxu0 0.0
        %2518 = vmatprep.subr.mxu0 0.0
        %2519 = vmatpush1.msra.mxu0 0.0
        %2520 = vmatprep.subr.mxu0 0.0
        %2521 = vmatpush1.msra.mxu0 0.0
        %2522 = vmatprep.subr.mxu0 0.0
        %2523 = vmatpush1.msra.mxu0 0.0
        %2524 = vmatprep.subr.mxu0 0.0
        %2525 = vmatpush1.msra.mxu0 0.0
        %2526 = vmatprep.subr.mxu0 0.0
        %2527 = vmatpush1.msra.mxu0 0.0
        %2528 = vmatprep.subr.mxu0 0.0
        %2529 = vmatpush1.msra.mxu0 0.0
        %2530 = vmatprep.subr.mxu0 0.0
        %2531 = vmatpush1.msra.mxu0 0.0
        %2532 = vmatprep.subr.mxu0 0.0
        %2533 = vmatpush1.msra.mxu0 0.0
        %2534 = vmatprep.subr.mxu0 0.0
        %2535 = vmatpush1.msra.mxu0 0.0
        %2536 = vmatprep.subr.mxu0 0.0
        %2537 = vmatpush1.msra.mxu0 0.0
        %2538 = vmatprep.subr.mxu0 0.0
        %2539 = vmatpush1.msra.mxu0 0.0
        %2540 = vmatprep.subr.mxu0 0.0
        %2541 = vmatpush1.msra.mxu0 0.0
        %2542 = vmatprep.subr.mxu0 0.0
        %2543 = vmatpush1.msra.mxu0 0.0
        %2544 = vmatprep.subr.mxu0 0.0
        %2545 = vmatpush1.msra.mxu0 0.0
        %2546 = vmatprep.subr.mxu0 0.0
        %2547 = vmatpush1.msra.mxu0 0.0
        %2548 = vmatprep.subr.mxu0 0.0
        %2549 = vmatpush1.msra.mxu0 0.0
        %2550 = vmatprep.subr.mxu0 0.0
        %2551 = vmatpush1.msra.mxu0 0.0
        %2552 = vmatprep.subr.mxu0 0.0
        %2553 = vmatpush1.msra.mxu0 0.0
        %2554 = vmatprep.subr.mxu0 0.0
        %2555 = vmatpush1.msra.mxu0 0.0
        %2556 = vmatprep.subr.mxu0 0.0
        %2557 = vmatpush1.msra.mxu0 0.0
        %2558 = vmatprep.subr.mxu0 0.0
        %2559 = vmatpush1.msra.mxu0 0.0
        %2560 = vmatprep.subr.mxu0 0.0
        %2561 = vmatpush1.msra.mxu0 0.0
        %2562 = vmatprep.subr.mxu0 0.0
        %2563 = vmatpush1.msra.mxu0 0.0
        %2564 = vmatprep.subr.mxu0 0.0
        %2565 = vmatpush1.msra.mxu0 0.0
        %2566 = vmatprep.subr.mxu0 0.0
        %2567 = vmatpush1.msra.mxu0 0.0
        %2568 = vmatprep.subr.mxu0 0.0
        %2569 = vmatpush1.msra.mxu0 0.0
        %2570 = vmatprep.subr.mxu0 0.0
        %2571 = vmatpush1.msra.mxu0 0.0
        %2572 = vmatprep.mubr.f32.mxu0 0.0
        %v2573 = vand.u32 %v2203, 4294901760
        %2574 = vmatmul.mubr.f32.gmra.mrb[0].mxu0 %v2573
        %v2575 = vpop.f32.mrb[0].mxu0
        %v2576 = vadd.f32 %v2502, %v2575
        %v2577 = vpop.f32.mrb[0].mxu0
        %2578 = vdwg.mxu0
        %2579 = vmatprep.subr.mxu0 0.0
        %v2580 = vand.u32 %v368, 4294901760
        %2581 = vmatpush1.msra.mxu0 %v2580
        %2582 = vmatprep.subr.mxu0 0.0
        %2583 = vmatpush1.msra.mxu0 0.0
        %2584 = vmatprep.subr.mxu0 0.0
        %2585 = vmatpush1.msra.mxu0 0.0
        %2586 = vmatprep.subr.mxu0 0.0
        %2587 = vmatpush1.msra.mxu0 0.0
        %2588 = vmatprep.subr.mxu0 0.0
        %2589 = vmatpush1.msra.mxu0 0.0
        %2590 = vmatprep.subr.mxu0 0.0
        %2591 = vmatpush1.msra.mxu0 0.0
        %2592 = vmatprep.subr.mxu0 0.0
        %2593 = vmatpush1.msra.mxu0 0.0
        %2594 = vmatprep.subr.mxu0 0.0
        %2595 = vmatpush1.msra.mxu0 0.0
        %2596 = vmatprep.subr.mxu0 0.0
        %2597 = vmatpush1.msra.mxu0 0.0
        %2598 = vmatprep.subr.mxu0 0.0
        %2599 = vmatpush1.msra.mxu0 0.0
        %2600 = vmatprep.subr.mxu0 0.0
        %2601 = vmatpush1.msra.mxu0 0.0
        %2602 = vmatprep.subr.mxu0 0.0
        %2603 = vmatpush1.msra.mxu0 0.0
        %2604 = vmatprep.subr.mxu0 0.0
        %2605 = vmatpush1.msra.mxu0 0.0
        %2606 = vmatprep.subr.mxu0 0.0
        %2607 = vmatpush1.msra.mxu0 0.0
        %2608 = vmatprep.subr.mxu0 0.0
        %2609 = vmatpush1.msra.mxu0 0.0
        %2610 = vmatprep.subr.mxu0 0.0
        %2611 = vmatpush1.msra.mxu0 0.0
        %2612 = vmatprep.subr.mxu0 0.0
        %2613 = vmatpush1.msra.mxu0 0.0
        %2614 = vmatprep.subr.mxu0 0.0
        %2615 = vmatpush1.msra.mxu0 0.0
        %2616 = vmatprep.subr.mxu0 0.0
        %2617 = vmatpush1.msra.mxu0 0.0
        %2618 = vmatprep.subr.mxu0 0.0
        %2619 = vmatpush1.msra.mxu0 0.0
        %2620 = vmatprep.subr.mxu0 0.0
        %2621 = vmatpush1.msra.mxu0 0.0
        %2622 = vmatprep.subr.mxu0 0.0
        %2623 = vmatpush1.msra.mxu0 0.0
        %2624 = vmatprep.subr.mxu0 0.0
        %2625 = vmatpush1.msra.mxu0 0.0
        %2626 = vmatprep.subr.mxu0 0.0
        %2627 = vmatpush1.msra.mxu0 0.0
        %2628 = vmatprep.subr.mxu0 0.0
        %2629 = vmatpush1.msra.mxu0 0.0
        %2630 = vmatprep.subr.mxu0 0.0
        %2631 = vmatpush1.msra.mxu0 0.0
        %2632 = vmatprep.subr.mxu0 0.0
        %2633 = vmatpush1.msra.mxu0 0.0
        %2634 = vmatprep.subr.mxu0 0.0
        %2635 = vmatpush1.msra.mxu0 0.0
        %2636 = vmatprep.subr.mxu0 0.0
        %2637 = vmatpush1.msra.mxu0 0.0
        %2638 = vmatprep.subr.mxu0 0.0
        %2639 = vmatpush1.msra.mxu0 0.0
        %2640 = vmatprep.subr.mxu0 0.0
        %2641 = vmatpush1.msra.mxu0 0.0
        %2642 = vmatprep.subr.mxu0 0.0
        %2643 = vmatpush1.msra.mxu0 0.0
        %2644 = vmatprep.mubr.f32.mxu0 0.0
        %v2645 = vand.u32 %v2203, 4294901760
        %2646 = vmatmul.mubr.f32.gmra.mrb[0].mxu0 %v2645
        %v2647 = vpop.f32.mrb[0].mxu0
        %v2648 = vadd.f32 %v2576, %v2647
        %v2649 = vpop.f32.mrb[0].mxu0
        %2650 = vdwg.mxu0
        %s2651 = scalar_lea.vmem [#allocation8], 32
        %v2652 = vld [vmem:[%s2651] sm:$0xff]
        %v2653 = vld [vmem:[%s2651 + $0x8] sm:$0xff]
        %v2655 = vsel %vm267, %v2648, 0
        %2657 = vmatprep.subr.mxu0 0.0
        %v2658 = vand.u32 %v2652, 4294901760
        %2659 = vmatpush1.msra.mxu0 %v2658
        %2660 = vmatprep.subr.mxu0 0.0
        %v2661 = vand.u32 %v2653, 4294901760
        %2662 = vmatpush1.msra.mxu0 %v2661
        %2663 = vmatprep.subr.mxu0 0.0
        %2664 = vmatpush1.msra.mxu0 0.0
        %2665 = vmatprep.subr.mxu0 0.0
        %2666 = vmatpush1.msra.mxu0 0.0
        %2667 = vmatprep.subr.mxu0 0.0
        %2668 = vmatpush1.msra.mxu0 0.0
        %2669 = vmatprep.subr.mxu0 0.0
        %2670 = vmatpush1.msra.mxu0 0.0
        %2671 = vmatprep.subr.mxu0 0.0
        %2672 = vmatpush1.msra.mxu0 0.0
        %2673 = vmatprep.subr.mxu0 0.0
        %2674 = vmatpush1.msra.mxu0 0.0
        %2675 = vmatprep.subr.mxu0 0.0
        %2676 = vmatpush1.msra.mxu0 0.0
        %2677 = vmatprep.subr.mxu0 0.0
        %2678 = vmatpush1.msra.mxu0 0.0
        %2679 = vmatprep.subr.mxu0 0.0
        %2680 = vmatpush1.msra.mxu0 0.0
        %2681 = vmatprep.subr.mxu0 0.0
        %2682 = vmatpush1.msra.mxu0 0.0
        %2683 = vmatprep.subr.mxu0 0.0
        %2684 = vmatpush1.msra.mxu0 0.0
        %2685 = vmatprep.subr.mxu0 0.0
        %2686 = vmatpush1.msra.mxu0 0.0
        %2687 = vmatprep.subr.mxu0 0.0
        %2688 = vmatpush1.msra.mxu0 0.0
        %2689 = vmatprep.subr.mxu0 0.0
        %2690 = vmatpush1.msra.mxu0 0.0
        %2691 = vmatprep.subr.mxu0 0.0
        %2692 = vmatpush1.msra.mxu0 0.0
        %2693 = vmatprep.subr.mxu0 0.0
        %2694 = vmatpush1.msra.mxu0 0.0
        %2695 = vmatprep.subr.mxu0 0.0
        %2696 = vmatpush1.msra.mxu0 0.0
        %2697 = vmatprep.subr.mxu0 0.0
        %2698 = vmatpush1.msra.mxu0 0.0
        %2699 = vmatprep.subr.mxu0 0.0
        %2700 = vmatpush1.msra.mxu0 0.0
        %2701 = vmatprep.subr.mxu0 0.0
        %2702 = vmatpush1.msra.mxu0 0.0
        %2703 = vmatprep.subr.mxu0 0.0
        %2704 = vmatpush1.msra.mxu0 0.0
        %2705 = vmatprep.subr.mxu0 0.0
        %2706 = vmatpush1.msra.mxu0 0.0
        %2707 = vmatprep.subr.mxu0 0.0
        %2708 = vmatpush1.msra.mxu0 0.0
        %2709 = vmatprep.subr.mxu0 0.0
        %2710 = vmatpush1.msra.mxu0 0.0
        %2711 = vmatprep.subr.mxu0 0.0
        %2712 = vmatpush1.msra.mxu0 0.0
        %2713 = vmatprep.subr.mxu0 0.0
        %2714 = vmatpush1.msra.mxu0 0.0
        %2715 = vmatprep.subr.mxu0 0.0
        %2716 = vmatpush1.msra.mxu0 0.0
        %2717 = vmatprep.subr.mxu0 0.0
        %2718 = vmatpush1.msra.mxu0 0.0
        %2719 = vmatprep.subr.mxu0 0.0
        %2720 = vmatpush1.msra.mxu0 0.0
        %2721 = vmatprep.subr.mxu0 0.0
        %2722 = vmatpush1.msra.mxu0 0.0
        %2723 = vmatprep.mubr.f32.mxu0 0.0
        %v2724 = vand.u32 %v2655, 4294901760
        %v2725 = vsub.f32 %v2655, %v2724
        %v2726 = vand.u32 %v2725, 4294901760
        %v2727 = vsub.f32 %v2725, %v2726
        %v2728 = vand.u32 %v2727, 4294901760
        %2729 = vmatmul.mubr.f32.gmra.mrb[0].mxu0 %v2728
        %v2730 = vpop.f32.mrb[0].mxu0
        %v2731 = vadd.f32 0.0, %v2730
        %v2732 = vpop.f32.mrb[0].mxu0
        %2733 = vdwg.mxu0
        %2734 = vmatprep.subr.mxu0 0.0
        %v2735 = vand.u32 %v2652, 4294901760
        %v2736 = vsub.f32 %v2652, %v2735
        %v2737 = vand.u32 %v2736, 4294901760
        %v2738 = vsub.f32 %v2736, %v2737
        %v2739 = vand.u32 %v2738, 4294901760
        %2740 = vmatpush1.msra.mxu0 %v2739
        %2741 = vmatprep.subr.mxu0 0.0
        %v2742 = vand.u32 %v2653, 4294901760
        %v2743 = vsub.f32 %v2653, %v2742
        %v2744 = vand.u32 %v2743, 4294901760
        %v2745 = vsub.f32 %v2743, %v2744
        %v2746 = vand.u32 %v2745, 4294901760
        %2747 = vmatpush1.msra.mxu0 %v2746
        %2748 = vmatprep.subr.mxu0 0.0
        %2749 = vmatpush1.msra.mxu0 0.0
        %2750 = vmatprep.subr.mxu0 0.0
        %2751 = vmatpush1.msra.mxu0 0.0
        %2752 = vmatprep.subr.mxu0 0.0
        %2753 = vmatpush1.msra.mxu0 0.0
        %2754 = vmatprep.subr.mxu0 0.0
        %2755 = vmatpush1.msra.mxu0 0.0
        %2756 = vmatprep.subr.mxu0 0.0
        %2757 = vmatpush1.msra.mxu0 0.0
        %2758 = vmatprep.subr.mxu0 0.0
        %2759 = vmatpush1.msra.mxu0 0.0
        %2760 = vmatprep.subr.mxu0 0.0
        %2761 = vmatpush1.msra.mxu0 0.0
        %2762 = vmatprep.subr.mxu0 0.0
        %2763 = vmatpush1.msra.mxu0 0.0
        %2764 = vmatprep.subr.mxu0 0.0
        %2765 = vmatpush1.msra.mxu0 0.0
        %2766 = vmatprep.subr.mxu0 0.0
        %2767 = vmatpush1.msra.mxu0 0.0
        %2768 = vmatprep.subr.mxu0 0.0
        %2769 = vmatpush1.msra.mxu0 0.0
        %2770 = vmatprep.subr.mxu0 0.0
        %2771 = vmatpush1.msra.mxu0 0.0
        %2772 = vmatprep.subr.mxu0 0.0
        %2773 = vmatpush1.msra.mxu0 0.0
        %2774 = vmatprep.subr.mxu0 0.0
        %2775 = vmatpush1.msra.mxu0 0.0
        %2776 = vmatprep.subr.mxu0 0.0
        %2777 = vmatpush1.msra.mxu0 0.0
        %2778 = vmatprep.subr.mxu0 0.0
        %2779 = vmatpush1.msra.mxu0 0.0
        %2780 = vmatprep.subr.mxu0 0.0
        %2781 = vmatpush1.msra.mxu0 0.0
        %2782 = vmatprep.subr.mxu0 0.0
        %2783 = vmatpush1.msra.mxu0 0.0
        %2784 = vmatprep.subr.mxu0 0.0
        %2785 = vmatpush1.msra.mxu0 0.0
        %2786 = vmatprep.subr.mxu0 0.0
        %2787 = vmatpush1.msra.mxu0 0.0
        %2788 = vmatprep.subr.mxu0 0.0
        %2789 = vmatpush1.msra.mxu0 0.0
        %2790 = vmatprep.subr.mxu0 0.0
        %2791 = vmatpush1.msra.mxu0 0.0
        %2792 = vmatprep.subr.mxu0 0.0
        %2793 = vmatpush1.msra.mxu0 0.0
        %2794 = vmatprep.subr.mxu0 0.0
        %2795 = vmatpush1.msra.mxu0 0.0
        %2796 = vmatprep.subr.mxu0 0.0
        %2797 = vmatpush1.msra.mxu0 0.0
        %2798 = vmatprep.subr.mxu0 0.0
        %2799 = vmatpush1.msra.mxu0 0.0
        %2800 = vmatprep.subr.mxu0 0.0
        %2801 = vmatpush1.msra.mxu0 0.0
        %2802 = vmatprep.subr.mxu0 0.0
        %2803 = vmatpush1.msra.mxu0 0.0
        %2804 = vmatprep.subr.mxu0 0.0
        %2805 = vmatpush1.msra.mxu0 0.0
        %2806 = vmatprep.subr.mxu0 0.0
        %2807 = vmatpush1.msra.mxu0 0.0
        %2808 = vmatprep.mubr.f32.mxu0 0.0
        %v2809 = vand.u32 %v2655, 4294901760
        %2810 = vmatmul.mubr.f32.gmra.mrb[0].mxu0 %v2809
        %v2811 = vpop.f32.mrb[0].mxu0
        %v2812 = vadd.f32 %v2731, %v2811
        %v2813 = vpop.f32.mrb[0].mxu0
        %2814 = vdwg.mxu0
        %2815 = vmatprep.subr.mxu0 0.0
        %v2816 = vand.u32 %v2652, 4294901760
        %v2817 = vsub.f32 %v2652, %v2816
        %2818 = vmatpush1.msra.mxu0 %v2817
        %2819 = vmatprep.subr.mxu0 0.0
        %v2820 = vand.u32 %v2653, 4294901760
        %v2821 = vsub.f32 %v2653, %v2820
        %2822 = vmatpush1.msra.mxu0 %v2821
        %2823 = vmatprep.subr.mxu0 0.0
        %2824 = vmatpush1.msra.mxu0 0.0
        %2825 = vmatprep.subr.mxu0 0.0
        %2826 = vmatpush1.msra.mxu0 0.0
        %2827 = vmatprep.subr.mxu0 0.0
        %2828 = vmatpush1.msra.mxu0 0.0
        %2829 = vmatprep.subr.mxu0 0.0
        %2830 = vmatpush1.msra.mxu0 0.0
        %2831 = vmatprep.subr.mxu0 0.0
        %2832 = vmatpush1.msra.mxu0 0.0
        %2833 = vmatprep.subr.mxu0 0.0
        %2834 = vmatpush1.msra.mxu0 0.0
        %2835 = vmatprep.subr.mxu0 0.0
        %2836 = vmatpush1.msra.mxu0 0.0
        %2837 = vmatprep.subr.mxu0 0.0
        %2838 = vmatpush1.msra.mxu0 0.0
        %2839 = vmatprep.subr.mxu0 0.0
        %2840 = vmatpush1.msra.mxu0 0.0
        %2841 = vmatprep.subr.mxu0 0.0
        %2842 = vmatpush1.msra.mxu0 0.0
        %2843 = vmatprep.subr.mxu0 0.0
        %2844 = vmatpush1.msra.mxu0 0.0
        %2845 = vmatprep.subr.mxu0 0.0
        %2846 = vmatpush1.msra.mxu0 0.0
        %2847 = vmatprep.subr.mxu0 0.0
        %2848 = vmatpush1.msra.mxu0 0.0
        %2849 = vmatprep.subr.mxu0 0.0
        %2850 = vmatpush1.msra.mxu0 0.0
        %2851 = vmatprep.subr.mxu0 0.0
        %2852 = vmatpush1.msra.mxu0 0.0
        %2853 = vmatprep.subr.mxu0 0.0
        %2854 = vmatpush1.msra.mxu0 0.0
        %2855 = vmatprep.subr.mxu0 0.0
        %2856 = vmatpush1.msra.mxu0 0.0
        %2857 = vmatprep.subr.mxu0 0.0
        %2858 = vmatpush1.msra.mxu0 0.0
        %2859 = vmatprep.subr.mxu0 0.0
        %2860 = vmatpush1.msra.mxu0 0.0
        %2861 = vmatprep.subr.mxu0 0.0
        %2862 = vmatpush1.msra.mxu0 0.0
        %2863 = vmatprep.subr.mxu0 0.0
        %2864 = vmatpush1.msra.mxu0 0.0
        %2865 = vmatprep.subr.mxu0 0.0
        %2866 = vmatpush1.msra.mxu0 0.0
        %2867 = vmatprep.subr.mxu0 0.0
        %2868 = vmatpush1.msra.mxu0 0.0
        %2869 = vmatprep.subr.mxu0 0.0
        %2870 = vmatpush1.msra.mxu0 0.0
        %2871 = vmatprep.subr.mxu0 0.0
        %2872 = vmatpush1.msra.mxu0 0.0
        %2873 = vmatprep.subr.mxu0 0.0
        %2874 = vmatpush1.msra.mxu0 0.0
        %2875 = vmatprep.subr.mxu0 0.0
        %2876 = vmatpush1.msra.mxu0 0.0
        %2877 = vmatprep.subr.mxu0 0.0
        %2878 = vmatpush1.msra.mxu0 0.0
        %2879 = vmatprep.subr.mxu0 0.0
        %2880 = vmatpush1.msra.mxu0 0.0
        %2881 = vmatprep.subr.mxu0 0.0
        %2882 = vmatpush1.msra.mxu0 0.0
        %2883 = vmatprep.mubr.f32.mxu0 0.0
        %v2884 = vand.u32 %v2655, 4294901760
        %v2885 = vsub.f32 %v2655, %v2884
        %2886 = vmatmul.mubr.f32.gmra.mrb[0].mxu0 %v2885
        %v2887 = vpop.f32.mrb[0].mxu0
        %v2888 = vadd.f32 %v2812, %v2887
        %v2889 = vpop.f32.mrb[0].mxu0
        %2890 = vdwg.mxu0
        %2891 = vmatprep.subr.mxu0 0.0
        %v2892 = vand.u32 %v2652, 4294901760
        %2893 = vmatpush1.msra.mxu0 %v2892
        %2894 = vmatprep.subr.mxu0 0.0
        %v2895 = vand.u32 %v2653, 4294901760
        %2896 = vmatpush1.msra.mxu0 %v2895
        %2897 = vmatprep.subr.mxu0 0.0
        %2898 = vmatpush1.msra.mxu0 0.0
        %2899 = vmatprep.subr.mxu0 0.0
        %2900 = vmatpush1.msra.mxu0 0.0
        %2901 = vmatprep.subr.mxu0 0.0
        %2902 = vmatpush1.msra.mxu0 0.0
        %2903 = vmatprep.subr.mxu0 0.0
        %2904 = vmatpush1.msra.mxu0 0.0
        %2905 = vmatprep.subr.mxu0 0.0
        %2906 = vmatpush1.msra.mxu0 0.0
        %2907 = vmatprep.subr.mxu0 0.0
        %2908 = vmatpush1.msra.mxu0 0.0
        %2909 = vmatprep.subr.mxu0 0.0
        %2910 = vmatpush1.msra.mxu0 0.0
        %2911 = vmatprep.subr.mxu0 0.0
        %2912 = vmatpush1.msra.mxu0 0.0
        %2913 = vmatprep.subr.mxu0 0.0
        %2914 = vmatpush1.msra.mxu0 0.0
        %2915 = vmatprep.subr.mxu0 0.0
        %2916 = vmatpush1.msra.mxu0 0.0
        %2917 = vmatprep.subr.mxu0 0.0
        %2918 = vmatpush1.msra.mxu0 0.0
        %2919 = vmatprep.subr.mxu0 0.0
        %2920 = vmatpush1.msra.mxu0 0.0
        %2921 = vmatprep.subr.mxu0 0.0
        %2922 = vmatpush1.msra.mxu0 0.0
        %2923 = vmatprep.subr.mxu0 0.0
        %2924 = vmatpush1.msra.mxu0 0.0
        %2925 = vmatprep.subr.mxu0 0.0
        %2926 = vmatpush1.msra.mxu0 0.0
        %2927 = vmatprep.subr.mxu0 0.0
        %2928 = vmatpush1.msra.mxu0 0.0
        %2929 = vmatprep.subr.mxu0 0.0
        %2930 = vmatpush1.msra.mxu0 0.0
        %2931 = vmatprep.subr.mxu0 0.0
        %2932 = vmatpush1.msra.mxu0 0.0
        %2933 = vmatprep.subr.mxu0 0.0
        %2934 = vmatpush1.msra.mxu0 0.0
        %2935 = vmatprep.subr.mxu0 0.0
        %2936 = vmatpush1.msra.mxu0 0.0
        %2937 = vmatprep.subr.mxu0 0.0
        %2938 = vmatpush1.msra.mxu0 0.0
        %2939 = vmatprep.subr.mxu0 0.0
        %2940 = vmatpush1.msra.mxu0 0.0
        %2941 = vmatprep.subr.mxu0 0.0
        %2942 = vmatpush1.msra.mxu0 0.0
        %2943 = vmatprep.subr.mxu0 0.0
        %2944 = vmatpush1.msra.mxu0 0.0
        %2945 = vmatprep.subr.mxu0 0.0
        %2946 = vmatpush1.msra.mxu0 0.0
        %2947 = vmatprep.subr.mxu0 0.0
        %2948 = vmatpush1.msra.mxu0 0.0
        %2949 = vmatprep.subr.mxu0 0.0
        %2950 = vmatpush1.msra.mxu0 0.0
        %2951 = vmatprep.subr.mxu0 0.0
        %2952 = vmatpush1.msra.mxu0 0.0
        %2953 = vmatprep.subr.mxu0 0.0
        %2954 = vmatpush1.msra.mxu0 0.0
        %2955 = vmatprep.subr.mxu0 0.0
        %2956 = vmatpush1.msra.mxu0 0.0
        %2957 = vmatprep.mubr.f32.mxu0 0.0
        %v2958 = vand.u32 %v2655, 4294901760
        %v2959 = vsub.f32 %v2655, %v2958
        %v2960 = vand.u32 %v2959, 4294901760
        %2961 = vmatmul.mubr.f32.gmra.mrb[0].mxu0 %v2960
        %v2962 = vpop.f32.mrb[0].mxu0
        %v2963 = vadd.f32 %v2888, %v2962
        %v2964 = vpop.f32.mrb[0].mxu0
        %2965 = vdwg.mxu0
        %2966 = vmatprep.subr.mxu0 0.0
        %v2967 = vand.u32 %v2652, 4294901760
        %v2968 = vsub.f32 %v2652, %v2967
        %v2969 = vand.u32 %v2968, 4294901760
        %2970 = vmatpush1.msra.mxu0 %v2969
        %2971 = vmatprep.subr.mxu0 0.0
        %v2972 = vand.u32 %v2653, 4294901760
        %v2973 = vsub.f32 %v2653, %v2972
        %v2974 = vand.u32 %v2973, 4294901760
        %2975 = vmatpush1.msra.mxu0 %v2974
        %2976 = vmatprep.subr.mxu0 0.0
        %2977 = vmatpush1.msra.mxu0 0.0
        %2978 = vmatprep.subr.mxu0 0.0
        %2979 = vmatpush1.msra.mxu0 0.0
        %2980 = vmatprep.subr.mxu0 0.0
        %2981 = vmatpush1.msra.mxu0 0.0
        %2982 = vmatprep.subr.mxu0 0.0
        %2983 = vmatpush1.msra.mxu0 0.0
        %2984 = vmatprep.subr.mxu0 0.0
        %2985 = vmatpush1.msra.mxu0 0.0
        %2986 = vmatprep.subr.mxu0 0.0
        %2987 = vmatpush1.msra.mxu0 0.0
        %2988 = vmatprep.subr.mxu0 0.0
        %2989 = vmatpush1.msra.mxu0 0.0
        %2990 = vmatprep.subr.mxu0 0.0
        %2991 = vmatpush1.msra.mxu0 0.0
        %2992 = vmatprep.subr.mxu0 0.0
        %2993 = vmatpush1.msra.mxu0 0.0
        %2994 = vmatprep.subr.mxu0 0.0
        %2995 = vmatpush1.msra.mxu0 0.0
        %2996 = vmatprep.subr.mxu0 0.0
        %2997 = vmatpush1.msra.mxu0 0.0
        %2998 = vmatprep.subr.mxu0 0.0
        %2999 = vmatpush1.msra.mxu0 0.0
        %3000 = vmatprep.subr.mxu0 0.0
        %3001 = vmatpush1.msra.mxu0 0.0
        %3002 = vmatprep.subr.mxu0 0.0
        %3003 = vmatpush1.msra.mxu0 0.0
        %3004 = vmatprep.subr.mxu0 0.0
        %3005 = vmatpush1.msra.mxu0 0.0
        %3006 = vmatprep.subr.mxu0 0.0
        %3007 = vmatpush1.msra.mxu0 0.0
        %3008 = vmatprep.subr.mxu0 0.0
        %3009 = vmatpush1.msra.mxu0 0.0
        %3010 = vmatprep.subr.mxu0 0.0
        %3011 = vmatpush1.msra.mxu0 0.0
        %3012 = vmatprep.subr.mxu0 0.0
        %3013 = vmatpush1.msra.mxu0 0.0
        %3014 = vmatprep.subr.mxu0 0.0
        %3015 = vmatpush1.msra.mxu0 0.0
        %3016 = vmatprep.subr.mxu0 0.0
        %3017 = vmatpush1.msra.mxu0 0.0
        %3018 = vmatprep.subr.mxu0 0.0
        %3019 = vmatpush1.msra.mxu0 0.0
        %3020 = vmatprep.subr.mxu0 0.0
        %3021 = vmatpush1.msra.mxu0 0.0
        %3022 = vmatprep.subr.mxu0 0.0
        %3023 = vmatpush1.msra.mxu0 0.0
        %3024 = vmatprep.subr.mxu0 0.0
        %3025 = vmatpush1.msra.mxu0 0.0
        %3026 = vmatprep.subr.mxu0 0.0
        %3027 = vmatpush1.msra.mxu0 0.0
        %3028 = vmatprep.subr.mxu0 0.0
        %3029 = vmatpush1.msra.mxu0 0.0
        %3030 = vmatprep.subr.mxu0 0.0
        %3031 = vmatpush1.msra.mxu0 0.0
        %3032 = vmatprep.subr.mxu0 0.0
        %3033 = vmatpush1.msra.mxu0 0.0
        %3034 = vmatprep.subr.mxu0 0.0
        %3035 = vmatpush1.msra.mxu0 0.0
        %3036 = vmatprep.mubr.f32.mxu0 0.0
        %v3037 = vand.u32 %v2655, 4294901760
        %3038 = vmatmul.mubr.f32.gmra.mrb[0].mxu0 %v3037
        %v3039 = vpop.f32.mrb[0].mxu0
        %v3040 = vadd.f32 %v2963, %v3039
        %v3041 = vpop.f32.mrb[0].mxu0
        %3042 = vdwg.mxu0
        %3043 = vmatprep.subr.mxu0 0.0
        %v3044 = vand.u32 %v2652, 4294901760
        %3045 = vmatpush1.msra.mxu0 %v3044
        %3046 = vmatprep.subr.mxu0 0.0
        %v3047 = vand.u32 %v2653, 4294901760
        %3048 = vmatpush1.msra.mxu0 %v3047
        %3049 = vmatprep.subr.mxu0 0.0
        %3050 = vmatpush1.msra.mxu0 0.0
        %3051 = vmatprep.subr.mxu0 0.0
        %3052 = vmatpush1.msra.mxu0 0.0
        %3053 = vmatprep.subr.mxu0 0.0
        %3054 = vmatpush1.msra.mxu0 0.0
        %3055 = vmatprep.subr.mxu0 0.0
        %3056 = vmatpush1.msra.mxu0 0.0
        %3057 = vmatprep.subr.mxu0 0.0
        %3058 = vmatpush1.msra.mxu0 0.0
        %3059 = vmatprep.subr.mxu0 0.0
        %3060 = vmatpush1.msra.mxu0 0.0
        %3061 = vmatprep.subr.mxu0 0.0
        %3062 = vmatpush1.msra.mxu0 0.0
        %3063 = vmatprep.subr.mxu0 0.0
        %3064 = vmatpush1.msra.mxu0 0.0
        %3065 = vmatprep.subr.mxu0 0.0
        %3066 = vmatpush1.msra.mxu0 0.0
        %3067 = vmatprep.subr.mxu0 0.0
        %3068 = vmatpush1.msra.mxu0 0.0
        %3069 = vmatprep.subr.mxu0 0.0
        %3070 = vmatpush1.msra.mxu0 0.0
        %3071 = vmatprep.subr.mxu0 0.0
        %3072 = vmatpush1.msra.mxu0 0.0
        %3073 = vmatprep.subr.mxu0 0.0
        %3074 = vmatpush1.msra.mxu0 0.0
        %3075 = vmatprep.subr.mxu0 0.0
        %3076 = vmatpush1.msra.mxu0 0.0
        %3077 = vmatprep.subr.mxu0 0.0
        %3078 = vmatpush1.msra.mxu0 0.0
        %3079 = vmatprep.subr.mxu0 0.0
        %3080 = vmatpush1.msra.mxu0 0.0
        %3081 = vmatprep.subr.mxu0 0.0
        %3082 = vmatpush1.msra.mxu0 0.0
        %3083 = vmatprep.subr.mxu0 0.0
        %3084 = vmatpush1.msra.mxu0 0.0
        %3085 = vmatprep.subr.mxu0 0.0
        %3086 = vmatpush1.msra.mxu0 0.0
        %3087 = vmatprep.subr.mxu0 0.0
        %3088 = vmatpush1.msra.mxu0 0.0
        %3089 = vmatprep.subr.mxu0 0.0
        %3090 = vmatpush1.msra.mxu0 0.0
        %3091 = vmatprep.subr.mxu0 0.0
        %3092 = vmatpush1.msra.mxu0 0.0
        %3093 = vmatprep.subr.mxu0 0.0
        %3094 = vmatpush1.msra.mxu0 0.0
        %3095 = vmatprep.subr.mxu0 0.0
        %3096 = vmatpush1.msra.mxu0 0.0
        %3097 = vmatprep.subr.mxu0 0.0
        %3098 = vmatpush1.msra.mxu0 0.0
        %3099 = vmatprep.subr.mxu0 0.0
        %3100 = vmatpush1.msra.mxu0 0.0
        %3101 = vmatprep.subr.mxu0 0.0
        %3102 = vmatpush1.msra.mxu0 0.0
        %3103 = vmatprep.subr.mxu0 0.0
        %3104 = vmatpush1.msra.mxu0 0.0
        %3105 = vmatprep.subr.mxu0 0.0
        %3106 = vmatpush1.msra.mxu0 0.0
        %3107 = vmatprep.subr.mxu0 0.0
        %3108 = vmatpush1.msra.mxu0 0.0
        %3109 = vmatprep.mubr.f32.mxu0 0.0
        %v3110 = vand.u32 %v2655, 4294901760
        %3111 = vmatmul.mubr.f32.gmra.mrb[0].mxu0 %v3110
        %v3112 = vpop.f32.mrb[0].mxu0
        %v3113 = vadd.f32 %v3040, %v3112
        %v3114 = vpop.f32.mrb[0].mxu0
        %3115 = vdwg.mxu0
        %v3116 = vadd.f32 %v2197, %v3113
        %s3117 = scalar_lea.vmem [#allocation6], 12
        %v3118 = vld [vmem:[%s3117] sm:$0xf]
        %v3120 = vsel %vm370, %v3118, 0
        %3122 = vmatprep.subr.mxu0 0.0
        %v3123 = vand.u32 %v368, 4294901760
        %3124 = vmatpush1.msra.mxu0 %v3123
        %3125 = vmatprep.subr.mxu0 0.0
        %3126 = vmatpush1.msra.mxu0 0.0
        %3127 = vmatprep.subr.mxu0 0.0
        %3128 = vmatpush1.msra.mxu0 0.0
        %3129 = vmatprep.subr.mxu0 0.0
        %3130 = vmatpush1.msra.mxu0 0.0
        %3131 = vmatprep.subr.mxu0 0.0
        %3132 = vmatpush1.msra.mxu0 0.0
        %3133 = vmatprep.subr.mxu0 0.0
        %3134 = vmatpush1.msra.mxu0 0.0
        %3135 = vmatprep.subr.mxu0 0.0
        %3136 = vmatpush1.msra.mxu0 0.0
        %3137 = vmatprep.subr.mxu0 0.0
        %3138 = vmatpush1.msra.mxu0 0.0
        %3139 = vmatprep.subr.mxu0 0.0
        %3140 = vmatpush1.msra.mxu0 0.0
        %3141 = vmatprep.subr.mxu0 0.0
        %3142 = vmatpush1.msra.mxu0 0.0
        %3143 = vmatprep.subr.mxu0 0.0
        %3144 = vmatpush1.msra.mxu0 0.0
        %3145 = vmatprep.subr.mxu0 0.0
        %3146 = vmatpush1.msra.mxu0 0.0
        %3147 = vmatprep.subr.mxu0 0.0
        %3148 = vmatpush1.msra.mxu0 0.0
        %3149 = vmatprep.subr.mxu0 0.0
        %3150 = vmatpush1.msra.mxu0 0.0
        %3151 = vmatprep.subr.mxu0 0.0
        %3152 = vmatpush1.msra.mxu0 0.0
        %3153 = vmatprep.subr.mxu0 0.0
        %3154 = vmatpush1.msra.mxu0 0.0
        %3155 = vmatprep.subr.mxu0 0.0
        %3156 = vmatpush1.msra.mxu0 0.0
        %3157 = vmatprep.subr.mxu0 0.0
        %3158 = vmatpush1.msra.mxu0 0.0
        %3159 = vmatprep.subr.mxu0 0.0
        %3160 = vmatpush1.msra.mxu0 0.0
        %3161 = vmatprep.subr.mxu0 0.0
        %3162 = vmatpush1.msra.mxu0 0.0
        %3163 = vmatprep.subr.mxu0 0.0
        %3164 = vmatpush1.msra.mxu0 0.0
        %3165 = vmatprep.subr.mxu0 0.0
        %3166 = vmatpush1.msra.mxu0 0.0
        %3167 = vmatprep.subr.mxu0 0.0
        %3168 = vmatpush1.msra.mxu0 0.0
        %3169 = vmatprep.subr.mxu0 0.0
        %3170 = vmatpush1.msra.mxu0 0.0
        %3171 = vmatprep.subr.mxu0 0.0
        %3172 = vmatpush1.msra.mxu0 0.0
        %3173 = vmatprep.subr.mxu0 0.0
        %3174 = vmatpush1.msra.mxu0 0.0
        %3175 = vmatprep.subr.mxu0 0.0
        %3176 = vmatpush1.msra.mxu0 0.0
        %3177 = vmatprep.subr.mxu0 0.0
        %3178 = vmatpush1.msra.mxu0 0.0
        %3179 = vmatprep.subr.mxu0 0.0
        %3180 = vmatpush1.msra.mxu0 0.0
        %3181 = vmatprep.subr.mxu0 0.0
        %3182 = vmatpush1.msra.mxu0 0.0
        %3183 = vmatprep.subr.mxu0 0.0
        %3184 = vmatpush1.msra.mxu0 0.0
        %3185 = vmatprep.subr.mxu0 0.0
        %3186 = vmatpush1.msra.mxu0 0.0
        %3187 = vmatprep.mubr.f32.mxu0 0.0
        %v3188 = vand.u32 %v3120, 4294901760
        %v3189 = vsub.f32 %v3120, %v3188
        %v3190 = vand.u32 %v3189, 4294901760
        %v3191 = vsub.f32 %v3189, %v3190
        %v3192 = vand.u32 %v3191, 4294901760
        %3193 = vmatmul.mubr.f32.gmra.mrb[0].mxu0 %v3192
        %v3194 = vpop.f32.mrb[0].mxu0
        %v3195 = vadd.f32 0.0, %v3194
        %v3196 = vpop.f32.mrb[0].mxu0
        %3197 = vdwg.mxu0
        %3198 = vmatprep.subr.mxu0 0.0
        %v3199 = vand.u32 %v368, 4294901760
        %v3200 = vsub.f32 %v368, %v3199
        %v3201 = vand.u32 %v3200, 4294901760
        %v3202 = vsub.f32 %v3200, %v3201
        %v3203 = vand.u32 %v3202, 4294901760
        %3204 = vmatpush1.msra.mxu0 %v3203
        %3205 = vmatprep.subr.mxu0 0.0
        %3206 = vmatpush1.msra.mxu0 0.0
        %3207 = vmatprep.subr.mxu0 0.0
        %3208 = vmatpush1.msra.mxu0 0.0
        %3209 = vmatprep.subr.mxu0 0.0
        %3210 = vmatpush1.msra.mxu0 0.0
        %3211 = vmatprep.subr.mxu0 0.0
        %3212 = vmatpush1.msra.mxu0 0.0
        %3213 = vmatprep.subr.mxu0 0.0
        %3214 = vmatpush1.msra.mxu0 0.0
        %3215 = vmatprep.subr.mxu0 0.0
        %3216 = vmatpush1.msra.mxu0 0.0
        %3217 = vmatprep.subr.mxu0 0.0
        %3218 = vmatpush1.msra.mxu0 0.0
        %3219 = vmatprep.subr.mxu0 0.0
        %3220 = vmatpush1.msra.mxu0 0.0
        %3221 = vmatprep.subr.mxu0 0.0
        %3222 = vmatpush1.msra.mxu0 0.0
        %3223 = vmatprep.subr.mxu0 0.0
        %3224 = vmatpush1.msra.mxu0 0.0
        %3225 = vmatprep.subr.mxu0 0.0
        %3226 = vmatpush1.msra.mxu0 0.0
        %3227 = vmatprep.subr.mxu0 0.0
        %3228 = vmatpush1.msra.mxu0 0.0
        %3229 = vmatprep.subr.mxu0 0.0
        %3230 = vmatpush1.msra.mxu0 0.0
        %3231 = vmatprep.subr.mxu0 0.0
        %3232 = vmatpush1.msra.mxu0 0.0
        %3233 = vmatprep.subr.mxu0 0.0
        %3234 = vmatpush1.msra.mxu0 0.0
        %3235 = vmatprep.subr.mxu0 0.0
        %3236 = vmatpush1.msra.mxu0 0.0
        %3237 = vmatprep.subr.mxu0 0.0
        %3238 = vmatpush1.msra.mxu0 0.0
        %3239 = vmatprep.subr.mxu0 0.0
        %3240 = vmatpush1.msra.mxu0 0.0
        %3241 = vmatprep.subr.mxu0 0.0
        %3242 = vmatpush1.msra.mxu0 0.0
        %3243 = vmatprep.subr.mxu0 0.0
        %3244 = vmatpush1.msra.mxu0 0.0
        %3245 = vmatprep.subr.mxu0 0.0
        %3246 = vmatpush1.msra.mxu0 0.0
        %3247 = vmatprep.subr.mxu0 0.0
        %3248 = vmatpush1.msra.mxu0 0.0
        %3249 = vmatprep.subr.mxu0 0.0
        %3250 = vmatpush1.msra.mxu0 0.0
        %3251 = vmatprep.subr.mxu0 0.0
        %3252 = vmatpush1.msra.mxu0 0.0
        %3253 = vmatprep.subr.mxu0 0.0
        %3254 = vmatpush1.msra.mxu0 0.0
        %3255 = vmatprep.subr.mxu0 0.0
        %3256 = vmatpush1.msra.mxu0 0.0
        %3257 = vmatprep.subr.mxu0 0.0
        %3258 = vmatpush1.msra.mxu0 0.0
        %3259 = vmatprep.subr.mxu0 0.0
        %3260 = vmatpush1.msra.mxu0 0.0
        %3261 = vmatprep.subr.mxu0 0.0
        %3262 = vmatpush1.msra.mxu0 0.0
        %3263 = vmatprep.subr.mxu0 0.0
        %3264 = vmatpush1.msra.mxu0 0.0
        %3265 = vmatprep.subr.mxu0 0.0
        %3266 = vmatpush1.msra.mxu0 0.0
        %3267 = vmatprep.mubr.f32.mxu0 0.0
        %v3268 = vand.u32 %v3120, 4294901760
        %3269 = vmatmul.mubr.f32.gmra.mrb[0].mxu0 %v3268
        %v3270 = vpop.f32.mrb[0].mxu0
        %v3271 = vadd.f32 %v3195, %v3270
        %v3272 = vpop.f32.mrb[0].mxu0
        %3273 = vdwg.mxu0
        %3274 = vmatprep.subr.mxu0 0.0
        %v3275 = vand.u32 %v368, 4294901760
        %v3276 = vsub.f32 %v368, %v3275
        %3277 = vmatpush1.msra.mxu0 %v3276
        %3278 = vmatprep.subr.mxu0 0.0
        %3279 = vmatpush1.msra.mxu0 0.0
        %3280 = vmatprep.subr.mxu0 0.0
        %3281 = vmatpush1.msra.mxu0 0.0
        %3282 = vmatprep.subr.mxu0 0.0
        %3283 = vmatpush1.msra.mxu0 0.0
        %3284 = vmatprep.subr.mxu0 0.0
        %3285 = vmatpush1.msra.mxu0 0.0
        %3286 = vmatprep.subr.mxu0 0.0
        %3287 = vmatpush1.msra.mxu0 0.0
        %3288 = vmatprep.subr.mxu0 0.0
        %3289 = vmatpush1.msra.mxu0 0.0
        %3290 = vmatprep.subr.mxu0 0.0
        %3291 = vmatpush1.msra.mxu0 0.0
        %3292 = vmatprep.subr.mxu0 0.0
        %3293 = vmatpush1.msra.mxu0 0.0
        %3294 = vmatprep.subr.mxu0 0.0
        %3295 = vmatpush1.msra.mxu0 0.0
        %3296 = vmatprep.subr.mxu0 0.0
        %3297 = vmatpush1.msra.mxu0 0.0
        %3298 = vmatprep.subr.mxu0 0.0
        %3299 = vmatpush1.msra.mxu0 0.0
        %3300 = vmatprep.subr.mxu0 0.0
        %3301 = vmatpush1.msra.mxu0 0.0
        %3302 = vmatprep.subr.mxu0 0.0
        %3303 = vmatpush1.msra.mxu0 0.0
        %3304 = vmatprep.subr.mxu0 0.0
        %3305 = vmatpush1.msra.mxu0 0.0
        %3306 = vmatprep.subr.mxu0 0.0
        %3307 = vmatpush1.msra.mxu0 0.0
        %3308 = vmatprep.subr.mxu0 0.0
        %3309 = vmatpush1.msra.mxu0 0.0
        %3310 = vmatprep.subr.mxu0 0.0
        %3311 = vmatpush1.msra.mxu0 0.0
        %3312 = vmatprep.subr.mxu0 0.0
        %3313 = vmatpush1.msra.mxu0 0.0
        %3314 = vmatprep.subr.mxu0 0.0
        %3315 = vmatpush1.msra.mxu0 0.0
        %3316 = vmatprep.subr.mxu0 0.0
        %3317 = vmatpush1.msra.mxu0 0.0
        %3318 = vmatprep.subr.mxu0 0.0
        %3319 = vmatpush1.msra.mxu0 0.0
        %3320 = vmatprep.subr.mxu0 0.0
        %3321 = vmatpush1.msra.mxu0 0.0
        %3322 = vmatprep.subr.mxu0 0.0
        %3323 = vmatpush1.msra.mxu0 0.0
        %3324 = vmatprep.subr.mxu0 0.0
        %3325 = vmatpush1.msra.mxu0 0.0
        %3326 = vmatprep.subr.mxu0 0.0
        %3327 = vmatpush1.msra.mxu0 0.0
        %3328 = vmatprep.subr.mxu0 0.0
        %3329 = vmatpush1.msra.mxu0 0.0
        %3330 = vmatprep.subr.mxu0 0.0
        %3331 = vmatpush1.msra.mxu0 0.0
        %3332 = vmatprep.subr.mxu0 0.0
        %3333 = vmatpush1.msra.mxu0 0.0
        %3334 = vmatprep.subr.mxu0 0.0
        %3335 = vmatpush1.msra.mxu0 0.0
        %3336 = vmatprep.subr.mxu0 0.0
        %3337 = vmatpush1.msra.mxu0 0.0
        %3338 = vmatprep.subr.mxu0 0.0
        %3339 = vmatpush1.msra.mxu0 0.0
        %3340 = vmatprep.mubr.f32.mxu0 0.0
        %v3341 = vand.u32 %v3120, 4294901760
        %v3342 = vsub.f32 %v3120, %v3341
        %3343 = vmatmul.mubr.f32.gmra.mrb[0].mxu0 %v3342
        %v3344 = vpop.f32.mrb[0].mxu0
        %v3345 = vadd.f32 %v3271, %v3344
        %v3346 = vpop.f32.mrb[0].mxu0
        %3347 = vdwg.mxu0
        %3348 = vmatprep.subr.mxu0 0.0
        %v3349 = vand.u32 %v368, 4294901760
        %3350 = vmatpush1.msra.mxu0 %v3349
        %3351 = vmatprep.subr.mxu0 0.0
        %3352 = vmatpush1.msra.mxu0 0.0
        %3353 = vmatprep.subr.mxu0 0.0
        %3354 = vmatpush1.msra.mxu0 0.0
        %3355 = vmatprep.subr.mxu0 0.0
        %3356 = vmatpush1.msra.mxu0 0.0
        %3357 = vmatprep.subr.mxu0 0.0
        %3358 = vmatpush1.msra.mxu0 0.0
        %3359 = vmatprep.subr.mxu0 0.0
        %3360 = vmatpush1.msra.mxu0 0.0
        %3361 = vmatprep.subr.mxu0 0.0
        %3362 = vmatpush1.msra.mxu0 0.0
        %3363 = vmatprep.subr.mxu0 0.0
        %3364 = vmatpush1.msra.mxu0 0.0
        %3365 = vmatprep.subr.mxu0 0.0
        %3366 = vmatpush1.msra.mxu0 0.0
        %3367 = vmatprep.subr.mxu0 0.0
        %3368 = vmatpush1.msra.mxu0 0.0
        %3369 = vmatprep.subr.mxu0 0.0
        %3370 = vmatpush1.msra.mxu0 0.0
        %3371 = vmatprep.subr.mxu0 0.0
        %3372 = vmatpush1.msra.mxu0 0.0
        %3373 = vmatprep.subr.mxu0 0.0
        %3374 = vmatpush1.msra.mxu0 0.0
        %3375 = vmatprep.subr.mxu0 0.0
        %3376 = vmatpush1.msra.mxu0 0.0
        %3377 = vmatprep.subr.mxu0 0.0
        %3378 = vmatpush1.msra.mxu0 0.0
        %3379 = vmatprep.subr.mxu0 0.0
        %3380 = vmatpush1.msra.mxu0 0.0
        %3381 = vmatprep.subr.mxu0 0.0
        %3382 = vmatpush1.msra.mxu0 0.0
        %3383 = vmatprep.subr.mxu0 0.0
        %3384 = vmatpush1.msra.mxu0 0.0
        %3385 = vmatprep.subr.mxu0 0.0
        %3386 = vmatpush1.msra.mxu0 0.0
        %3387 = vmatprep.subr.mxu0 0.0
        %3388 = vmatpush1.msra.mxu0 0.0
        %3389 = vmatprep.subr.mxu0 0.0
        %3390 = vmatpush1.msra.mxu0 0.0
        %3391 = vmatprep.subr.mxu0 0.0
        %3392 = vmatpush1.msra.mxu0 0.0
        %3393 = vmatprep.subr.mxu0 0.0
        %3394 = vmatpush1.msra.mxu0 0.0
        %3395 = vmatprep.subr.mxu0 0.0
        %3396 = vmatpush1.msra.mxu0 0.0
        %3397 = vmatprep.subr.mxu0 0.0
        %3398 = vmatpush1.msra.mxu0 0.0
        %3399 = vmatprep.subr.mxu0 0.0
        %3400 = vmatpush1.msra.mxu0 0.0
        %3401 = vmatprep.subr.mxu0 0.0
        %3402 = vmatpush1.msra.mxu0 0.0
        %3403 = vmatprep.subr.mxu0 0.0
        %3404 = vmatpush1.msra.mxu0 0.0
        %3405 = vmatprep.subr.mxu0 0.0
        %3406 = vmatpush1.msra.mxu0 0.0
        %3407 = vmatprep.subr.mxu0 0.0
        %3408 = vmatpush1.msra.mxu0 0.0
        %3409 = vmatprep.subr.mxu0 0.0
        %3410 = vmatpush1.msra.mxu0 0.0
        %3411 = vmatprep.subr.mxu0 0.0
        %3412 = vmatpush1.msra.mxu0 0.0
        %3413 = vmatprep.mubr.f32.mxu0 0.0
        %v3414 = vand.u32 %v3120, 4294901760
        %v3415 = vsub.f32 %v3120, %v3414
        %v3416 = vand.u32 %v3415, 4294901760
        %3417 = vmatmul.mubr.f32.gmra.mrb[0].mxu0 %v3416
        %v3418 = vpop.f32.mrb[0].mxu0
        %v3419 = vadd.f32 %v3345, %v3418
        %v3420 = vpop.f32.mrb[0].mxu0
        %3421 = vdwg.mxu0
        %3422 = vmatprep.subr.mxu0 0.0
        %v3423 = vand.u32 %v368, 4294901760
        %v3424 = vsub.f32 %v368, %v3423
        %v3425 = vand.u32 %v3424, 4294901760
        %3426 = vmatpush1.msra.mxu0 %v3425
        %3427 = vmatprep.subr.mxu0 0.0
        %3428 = vmatpush1.msra.mxu0 0.0
        %3429 = vmatprep.subr.mxu0 0.0
        %3430 = vmatpush1.msra.mxu0 0.0
        %3431 = vmatprep.subr.mxu0 0.0
        %3432 = vmatpush1.msra.mxu0 0.0
        %3433 = vmatprep.subr.mxu0 0.0
        %3434 = vmatpush1.msra.mxu0 0.0
        %3435 = vmatprep.subr.mxu0 0.0
        %3436 = vmatpush1.msra.mxu0 0.0
        %3437 = vmatprep.subr.mxu0 0.0
        %3438 = vmatpush1.msra.mxu0 0.0
        %3439 = vmatprep.subr.mxu0 0.0
        %3440 = vmatpush1.msra.mxu0 0.0
        %3441 = vmatprep.subr.mxu0 0.0
        %3442 = vmatpush1.msra.mxu0 0.0
        %3443 = vmatprep.subr.mxu0 0.0
        %3444 = vmatpush1.msra.mxu0 0.0
        %3445 = vmatprep.subr.mxu0 0.0
        %3446 = vmatpush1.msra.mxu0 0.0
        %3447 = vmatprep.subr.mxu0 0.0
        %3448 = vmatpush1.msra.mxu0 0.0
        %3449 = vmatprep.subr.mxu0 0.0
        %3450 = vmatpush1.msra.mxu0 0.0
        %3451 = vmatprep.subr.mxu0 0.0
        %3452 = vmatpush1.msra.mxu0 0.0
        %3453 = vmatprep.subr.mxu0 0.0
        %3454 = vmatpush1.msra.mxu0 0.0
        %3455 = vmatprep.subr.mxu0 0.0
        %3456 = vmatpush1.msra.mxu0 0.0
        %3457 = vmatprep.subr.mxu0 0.0
        %3458 = vmatpush1.msra.mxu0 0.0
        %3459 = vmatprep.subr.mxu0 0.0
        %3460 = vmatpush1.msra.mxu0 0.0
        %3461 = vmatprep.subr.mxu0 0.0
        %3462 = vmatpush1.msra.mxu0 0.0
        %3463 = vmatprep.subr.mxu0 0.0
        %3464 = vmatpush1.msra.mxu0 0.0
        %3465 = vmatprep.subr.mxu0 0.0
        %3466 = vmatpush1.msra.mxu0 0.0
        %3467 = vmatprep.subr.mxu0 0.0
        %3468 = vmatpush1.msra.mxu0 0.0
        %3469 = vmatprep.subr.mxu0 0.0
        %3470 = vmatpush1.msra.mxu0 0.0
        %3471 = vmatprep.subr.mxu0 0.0
        %3472 = vmatpush1.msra.mxu0 0.0
        %3473 = vmatprep.subr.mxu0 0.0
        %3474 = vmatpush1.msra.mxu0 0.0
        %3475 = vmatprep.subr.mxu0 0.0
        %3476 = vmatpush1.msra.mxu0 0.0
        %3477 = vmatprep.subr.mxu0 0.0
        %3478 = vmatpush1.msra.mxu0 0.0
        %3479 = vmatprep.subr.mxu0 0.0
        %3480 = vmatpush1.msra.mxu0 0.0
        %3481 = vmatprep.subr.mxu0 0.0
        %3482 = vmatpush1.msra.mxu0 0.0
        %3483 = vmatprep.subr.mxu0 0.0
        %3484 = vmatpush1.msra.mxu0 0.0
        %3485 = vmatprep.subr.mxu0 0.0
        %3486 = vmatpush1.msra.mxu0 0.0
        %3487 = vmatprep.subr.mxu0 0.0
        %3488 = vmatpush1.msra.mxu0 0.0
        %3489 = vmatprep.mubr.f32.mxu0 0.0
        %v3490 = vand.u32 %v3120, 4294901760
        %3491 = vmatmul.mubr.f32.gmra.mrb[0].mxu0 %v3490
        %v3492 = vpop.f32.mrb[0].mxu0
        %v3493 = vadd.f32 %v3419, %v3492
        %v3494 = vpop.f32.mrb[0].mxu0
        %3495 = vdwg.mxu0
        %3496 = vmatprep.subr.mxu0 0.0
        %v3497 = vand.u32 %v368, 4294901760
        %3498 = vmatpush1.msra.mxu0 %v3497
        %3499 = vmatprep.subr.mxu0 0.0
        %3500 = vmatpush1.msra.mxu0 0.0
        %3501 = vmatprep.subr.mxu0 0.0
        %3502 = vmatpush1.msra.mxu0 0.0
        %3503 = vmatprep.subr.mxu0 0.0
        %3504 = vmatpush1.msra.mxu0 0.0
        %3505 = vmatprep.subr.mxu0 0.0
        %3506 = vmatpush1.msra.mxu0 0.0
        %3507 = vmatprep.subr.mxu0 0.0
        %3508 = vmatpush1.msra.mxu0 0.0
        %3509 = vmatprep.subr.mxu0 0.0
        %3510 = vmatpush1.msra.mxu0 0.0
        %3511 = vmatprep.subr.mxu0 0.0
        %3512 = vmatpush1.msra.mxu0 0.0
        %3513 = vmatprep.subr.mxu0 0.0
        %3514 = vmatpush1.msra.mxu0 0.0
        %3515 = vmatprep.subr.mxu0 0.0
        %3516 = vmatpush1.msra.mxu0 0.0
        %3517 = vmatprep.subr.mxu0 0.0
        %3518 = vmatpush1.msra.mxu0 0.0
        %3519 = vmatprep.subr.mxu0 0.0
        %3520 = vmatpush1.msra.mxu0 0.0
        %3521 = vmatprep.subr.mxu0 0.0
        %3522 = vmatpush1.msra.mxu0 0.0
        %3523 = vmatprep.subr.mxu0 0.0
        %3524 = vmatpush1.msra.mxu0 0.0
        %3525 = vmatprep.subr.mxu0 0.0
        %3526 = vmatpush1.msra.mxu0 0.0
        %3527 = vmatprep.subr.mxu0 0.0
        %3528 = vmatpush1.msra.mxu0 0.0
        %3529 = vmatprep.subr.mxu0 0.0
        %3530 = vmatpush1.msra.mxu0 0.0
        %3531 = vmatprep.subr.mxu0 0.0
        %3532 = vmatpush1.msra.mxu0 0.0
        %3533 = vmatprep.subr.mxu0 0.0
        %3534 = vmatpush1.msra.mxu0 0.0
        %3535 = vmatprep.subr.mxu0 0.0
        %3536 = vmatpush1.msra.mxu0 0.0
        %3537 = vmatprep.subr.mxu0 0.0
        %3538 = vmatpush1.msra.mxu0 0.0
        %3539 = vmatprep.subr.mxu0 0.0
        %3540 = vmatpush1.msra.mxu0 0.0
        %3541 = vmatprep.subr.mxu0 0.0
        %3542 = vmatpush1.msra.mxu0 0.0
        %3543 = vmatprep.subr.mxu0 0.0
        %3544 = vmatpush1.msra.mxu0 0.0
        %3545 = vmatprep.subr.mxu0 0.0
        %3546 = vmatpush1.msra.mxu0 0.0
        %3547 = vmatprep.subr.mxu0 0.0
        %3548 = vmatpush1.msra.mxu0 0.0
        %3549 = vmatprep.subr.mxu0 0.0
        %3550 = vmatpush1.msra.mxu0 0.0
        %3551 = vmatprep.subr.mxu0 0.0
        %3552 = vmatpush1.msra.mxu0 0.0
        %3553 = vmatprep.subr.mxu0 0.0
        %3554 = vmatpush1.msra.mxu0 0.0
        %3555 = vmatprep.subr.mxu0 0.0
        %3556 = vmatpush1.msra.mxu0 0.0
        %3557 = vmatprep.subr.mxu0 0.0
        %3558 = vmatpush1.msra.mxu0 0.0
        %3559 = vmatprep.subr.mxu0 0.0
        %3560 = vmatpush1.msra.mxu0 0.0
        %3561 = vmatprep.mubr.f32.mxu0 0.0
        %v3562 = vand.u32 %v3120, 4294901760
        %3563 = vmatmul.mubr.f32.gmra.mrb[0].mxu0 %v3562
        %v3564 = vpop.f32.mrb[0].mxu0
        %v3565 = vadd.f32 %v3493, %v3564
        %v3566 = vpop.f32.mrb[0].mxu0
        %3567 = vdwg.mxu0
        %s3568 = scalar_lea.vmem [#allocation8], 48
        %v3569 = vld [vmem:[%s3568] sm:$0xff]
        %v3570 = vld [vmem:[%s3568 + $0x8] sm:$0xff]
        %v3572 = vsel %vm267, %v3565, 0
        %3574 = vmatprep.subr.mxu0 0.0
        %v3575 = vand.u32 %v3569, 4294901760
        %3576 = vmatpush1.msra.mxu0 %v3575
        %3577 = vmatprep.subr.mxu0 0.0
        %v3578 = vand.u32 %v3570, 4294901760
        %3579 = vmatpush1.msra.mxu0 %v3578
        %3580 = vmatprep.subr.mxu0 0.0
        %3581 = vmatpush1.msra.mxu0 0.0
        %3582 = vmatprep.subr.mxu0 0.0
        %3583 = vmatpush1.msra.mxu0 0.0
        %3584 = vmatprep.subr.mxu0 0.0
        %3585 = vmatpush1.msra.mxu0 0.0
        %3586 = vmatprep.subr.mxu0 0.0
        %3587 = vmatpush1.msra.mxu0 0.0
        %3588 = vmatprep.subr.mxu0 0.0
        %3589 = vmatpush1.msra.mxu0 0.0
        %3590 = vmatprep.subr.mxu0 0.0
        %3591 = vmatpush1.msra.mxu0 0.0
        %3592 = vmatprep.subr.mxu0 0.0
        %3593 = vmatpush1.msra.mxu0 0.0
        %3594 = vmatprep.subr.mxu0 0.0
        %3595 = vmatpush1.msra.mxu0 0.0
        %3596 = vmatprep.subr.mxu0 0.0
        %3597 = vmatpush1.msra.mxu0 0.0
        %3598 = vmatprep.subr.mxu0 0.0
        %3599 = vmatpush1.msra.mxu0 0.0
        %3600 = vmatprep.subr.mxu0 0.0
        %3601 = vmatpush1.msra.mxu0 0.0
        %3602 = vmatprep.subr.mxu0 0.0
        %3603 = vmatpush1.msra.mxu0 0.0
        %3604 = vmatprep.subr.mxu0 0.0
        %3605 = vmatpush1.msra.mxu0 0.0
        %3606 = vmatprep.subr.mxu0 0.0
        %3607 = vmatpush1.msra.mxu0 0.0
        %3608 = vmatprep.subr.mxu0 0.0
        %3609 = vmatpush1.msra.mxu0 0.0
        %3610 = vmatprep.subr.mxu0 0.0
        %3611 = vmatpush1.msra.mxu0 0.0
        %3612 = vmatprep.subr.mxu0 0.0
        %3613 = vmatpush1.msra.mxu0 0.0
        %3614 = vmatprep.subr.mxu0 0.0
        %3615 = vmatpush1.msra.mxu0 0.0
        %3616 = vmatprep.subr.mxu0 0.0
        %3617 = vmatpush1.msra.mxu0 0.0
        %3618 = vmatprep.subr.mxu0 0.0
        %3619 = vmatpush1.msra.mxu0 0.0
        %3620 = vmatprep.subr.mxu0 0.0
        %3621 = vmatpush1.msra.mxu0 0.0
        %3622 = vmatprep.subr.mxu0 0.0
        %3623 = vmatpush1.msra.mxu0 0.0
        %3624 = vmatprep.subr.mxu0 0.0
        %3625 = vmatpush1.msra.mxu0 0.0
        %3626 = vmatprep.subr.mxu0 0.0
        %3627 = vmatpush1.msra.mxu0 0.0
        %3628 = vmatprep.subr.mxu0 0.0
        %3629 = vmatpush1.msra.mxu0 0.0
        %3630 = vmatprep.subr.mxu0 0.0
        %3631 = vmatpush1.msra.mxu0 0.0
        %3632 = vmatprep.subr.mxu0 0.0
        %3633 = vmatpush1.msra.mxu0 0.0
        %3634 = vmatprep.subr.mxu0 0.0
        %3635 = vmatpush1.msra.mxu0 0.0
        %3636 = vmatprep.subr.mxu0 0.0
        %3637 = vmatpush1.msra.mxu0 0.0
        %3638 = vmatprep.subr.mxu0 0.0
        %3639 = vmatpush1.msra.mxu0 0.0
        %3640 = vmatprep.mubr.f32.mxu0 0.0
        %v3641 = vand.u32 %v3572, 4294901760
        %v3642 = vsub.f32 %v3572, %v3641
        %v3643 = vand.u32 %v3642, 4294901760
        %v3644 = vsub.f32 %v3642, %v3643
        %v3645 = vand.u32 %v3644, 4294901760
        %3646 = vmatmul.mubr.f32.gmra.mrb[0].mxu0 %v3645
        %v3647 = vpop.f32.mrb[0].mxu0
        %v3648 = vadd.f32 0.0, %v3647
        %v3649 = vpop.f32.mrb[0].mxu0
        %3650 = vdwg.mxu0
        %3651 = vmatprep.subr.mxu0 0.0
        %v3652 = vand.u32 %v3569, 4294901760
        %v3653 = vsub.f32 %v3569, %v3652
        %v3654 = vand.u32 %v3653, 4294901760
        %v3655 = vsub.f32 %v3653, %v3654
        %v3656 = vand.u32 %v3655, 4294901760
        %3657 = vmatpush1.msra.mxu0 %v3656
        %3658 = vmatprep.subr.mxu0 0.0
        %v3659 = vand.u32 %v3570, 4294901760
        %v3660 = vsub.f32 %v3570, %v3659
        %v3661 = vand.u32 %v3660, 4294901760
        %v3662 = vsub.f32 %v3660, %v3661
        %v3663 = vand.u32 %v3662, 4294901760
        %3664 = vmatpush1.msra.mxu0 %v3663
        %3665 = vmatprep.subr.mxu0 0.0
        %3666 = vmatpush1.msra.mxu0 0.0
        %3667 = vmatprep.subr.mxu0 0.0
        %3668 = vmatpush1.msra.mxu0 0.0
        %3669 = vmatprep.subr.mxu0 0.0
        %3670 = vmatpush1.msra.mxu0 0.0
        %3671 = vmatprep.subr.mxu0 0.0
        %3672 = vmatpush1.msra.mxu0 0.0
        %3673 = vmatprep.subr.mxu0 0.0
        %3674 = vmatpush1.msra.mxu0 0.0
        %3675 = vmatprep.subr.mxu0 0.0
        %3676 = vmatpush1.msra.mxu0 0.0
        %3677 = vmatprep.subr.mxu0 0.0
        %3678 = vmatpush1.msra.mxu0 0.0
        %3679 = vmatprep.subr.mxu0 0.0
        %3680 = vmatpush1.msra.mxu0 0.0
        %3681 = vmatprep.subr.mxu0 0.0
        %3682 = vmatpush1.msra.mxu0 0.0
        %3683 = vmatprep.subr.mxu0 0.0
        %3684 = vmatpush1.msra.mxu0 0.0
        %3685 = vmatprep.subr.mxu0 0.0
        %3686 = vmatpush1.msra.mxu0 0.0
        %3687 = vmatprep.subr.mxu0 0.0
        %3688 = vmatpush1.msra.mxu0 0.0
        %3689 = vmatprep.subr.mxu0 0.0
        %3690 = vmatpush1.msra.mxu0 0.0
        %3691 = vmatprep.subr.mxu0 0.0
        %3692 = vmatpush1.msra.mxu0 0.0
        %3693 = vmatprep.subr.mxu0 0.0
        %3694 = vmatpush1.msra.mxu0 0.0
        %3695 = vmatprep.subr.mxu0 0.0
        %3696 = vmatpush1.msra.mxu0 0.0
        %3697 = vmatprep.subr.mxu0 0.0
        %3698 = vmatpush1.msra.mxu0 0.0
        %3699 = vmatprep.subr.mxu0 0.0
        %3700 = vmatpush1.msra.mxu0 0.0
        %3701 = vmatprep.subr.mxu0 0.0
        %3702 = vmatpush1.msra.mxu0 0.0
        %3703 = vmatprep.subr.mxu0 0.0
        %3704 = vmatpush1.msra.mxu0 0.0
        %3705 = vmatprep.subr.mxu0 0.0
        %3706 = vmatpush1.msra.mxu0 0.0
        %3707 = vmatprep.subr.mxu0 0.0
        %3708 = vmatpush1.msra.mxu0 0.0
        %3709 = vmatprep.subr.mxu0 0.0
        %3710 = vmatpush1.msra.mxu0 0.0
        %3711 = vmatprep.subr.mxu0 0.0
        %3712 = vmatpush1.msra.mxu0 0.0
        %3713 = vmatprep.subr.mxu0 0.0
        %3714 = vmatpush1.msra.mxu0 0.0
        %3715 = vmatprep.subr.mxu0 0.0
        %3716 = vmatpush1.msra.mxu0 0.0
        %3717 = vmatprep.subr.mxu0 0.0
        %3718 = vmatpush1.msra.mxu0 0.0
        %3719 = vmatprep.subr.mxu0 0.0
        %3720 = vmatpush1.msra.mxu0 0.0
        %3721 = vmatprep.subr.mxu0 0.0
        %3722 = vmatpush1.msra.mxu0 0.0
        %3723 = vmatprep.subr.mxu0 0.0
        %3724 = vmatpush1.msra.mxu0 0.0
        %3725 = vmatprep.mubr.f32.mxu0 0.0
        %v3726 = vand.u32 %v3572, 4294901760
        %3727 = vmatmul.mubr.f32.gmra.mrb[0].mxu0 %v3726
        %v3728 = vpop.f32.mrb[0].mxu0
        %v3729 = vadd.f32 %v3648, %v3728
        %v3730 = vpop.f32.mrb[0].mxu0
        %3731 = vdwg.mxu0
        %3732 = vmatprep.subr.mxu0 0.0
        %v3733 = vand.u32 %v3569, 4294901760
        %v3734 = vsub.f32 %v3569, %v3733
        %3735 = vmatpush1.msra.mxu0 %v3734
        %3736 = vmatprep.subr.mxu0 0.0
        %v3737 = vand.u32 %v3570, 4294901760
        %v3738 = vsub.f32 %v3570, %v3737
        %3739 = vmatpush1.msra.mxu0 %v3738
        %3740 = vmatprep.subr.mxu0 0.0
        %3741 = vmatpush1.msra.mxu0 0.0
        %3742 = vmatprep.subr.mxu0 0.0
        %3743 = vmatpush1.msra.mxu0 0.0
        %3744 = vmatprep.subr.mxu0 0.0
        %3745 = vmatpush1.msra.mxu0 0.0
        %3746 = vmatprep.subr.mxu0 0.0
        %3747 = vmatpush1.msra.mxu0 0.0
        %3748 = vmatprep.subr.mxu0 0.0
        %3749 = vmatpush1.msra.mxu0 0.0
        %3750 = vmatprep.subr.mxu0 0.0
        %3751 = vmatpush1.msra.mxu0 0.0
        %3752 = vmatprep.subr.mxu0 0.0
        %3753 = vmatpush1.msra.mxu0 0.0
        %3754 = vmatprep.subr.mxu0 0.0
        %3755 = vmatpush1.msra.mxu0 0.0
        %3756 = vmatprep.subr.mxu0 0.0
        %3757 = vmatpush1.msra.mxu0 0.0
        %3758 = vmatprep.subr.mxu0 0.0
        %3759 = vmatpush1.msra.mxu0 0.0
        %3760 = vmatprep.subr.mxu0 0.0
        %3761 = vmatpush1.msra.mxu0 0.0
        %3762 = vmatprep.subr.mxu0 0.0
        %3763 = vmatpush1.msra.mxu0 0.0
        %3764 = vmatprep.subr.mxu0 0.0
        %3765 = vmatpush1.msra.mxu0 0.0
        %3766 = vmatprep.subr.mxu0 0.0
        %3767 = vmatpush1.msra.mxu0 0.0
        %3768 = vmatprep.subr.mxu0 0.0
        %3769 = vmatpush1.msra.mxu0 0.0
        %3770 = vmatprep.subr.mxu0 0.0
        %3771 = vmatpush1.msra.mxu0 0.0
        %3772 = vmatprep.subr.mxu0 0.0
        %3773 = vmatpush1.msra.mxu0 0.0
        %3774 = vmatprep.subr.mxu0 0.0
        %3775 = vmatpush1.msra.mxu0 0.0
        %3776 = vmatprep.subr.mxu0 0.0
        %3777 = vmatpush1.msra.mxu0 0.0
        %3778 = vmatprep.subr.mxu0 0.0
        %3779 = vmatpush1.msra.mxu0 0.0
        %3780 = vmatprep.subr.mxu0 0.0
        %3781 = vmatpush1.msra.mxu0 0.0
        %3782 = vmatprep.subr.mxu0 0.0
        %3783 = vmatpush1.msra.mxu0 0.0
        %3784 = vmatprep.subr.mxu0 0.0
        %3785 = vmatpush1.msra.mxu0 0.0
        %3786 = vmatprep.subr.mxu0 0.0
        %3787 = vmatpush1.msra.mxu0 0.0
        %3788 = vmatprep.subr.mxu0 0.0
        %3789 = vmatpush1.msra.mxu0 0.0
        %3790 = vmatprep.subr.mxu0 0.0
        %3791 = vmatpush1.msra.mxu0 0.0
        %3792 = vmatprep.subr.mxu0 0.0
        %3793 = vmatpush1.msra.mxu0 0.0
        %3794 = vmatprep.subr.mxu0 0.0
        %3795 = vmatpush1.msra.mxu0 0.0
        %3796 = vmatprep.subr.mxu0 0.0
        %3797 = vmatpush1.msra.mxu0 0.0
        %3798 = vmatprep.subr.mxu0 0.0
        %3799 = vmatpush1.msra.mxu0 0.0
        %3800 = vmatprep.mubr.f32.mxu0 0.0
        %v3801 = vand.u32 %v3572, 4294901760
        %v3802 = vsub.f32 %v3572, %v3801
        %3803 = vmatmul.mubr.f32.gmra.mrb[0].mxu0 %v3802
        %v3804 = vpop.f32.mrb[0].mxu0
        %v3805 = vadd.f32 %v3729, %v3804
        %v3806 = vpop.f32.mrb[0].mxu0
        %3807 = vdwg.mxu0
        %3808 = vmatprep.subr.mxu0 0.0
        %v3809 = vand.u32 %v3569, 4294901760
        %3810 = vmatpush1.msra.mxu0 %v3809
        %3811 = vmatprep.subr.mxu0 0.0
        %v3812 = vand.u32 %v3570, 4294901760
        %3813 = vmatpush1.msra.mxu0 %v3812
        %3814 = vmatprep.subr.mxu0 0.0
        %3815 = vmatpush1.msra.mxu0 0.0
        %3816 = vmatprep.subr.mxu0 0.0
        %3817 = vmatpush1.msra.mxu0 0.0
        %3818 = vmatprep.subr.mxu0 0.0
        %3819 = vmatpush1.msra.mxu0 0.0
        %3820 = vmatprep.subr.mxu0 0.0
        %3821 = vmatpush1.msra.mxu0 0.0
        %3822 = vmatprep.subr.mxu0 0.0
        %3823 = vmatpush1.msra.mxu0 0.0
        %3824 = vmatprep.subr.mxu0 0.0
        %3825 = vmatpush1.msra.mxu0 0.0
        %3826 = vmatprep.subr.mxu0 0.0
        %3827 = vmatpush1.msra.mxu0 0.0
        %3828 = vmatprep.subr.mxu0 0.0
        %3829 = vmatpush1.msra.mxu0 0.0
        %3830 = vmatprep.subr.mxu0 0.0
        %3831 = vmatpush1.msra.mxu0 0.0
        %3832 = vmatprep.subr.mxu0 0.0
        %3833 = vmatpush1.msra.mxu0 0.0
        %3834 = vmatprep.subr.mxu0 0.0
        %3835 = vmatpush1.msra.mxu0 0.0
        %3836 = vmatprep.subr.mxu0 0.0
        %3837 = vmatpush1.msra.mxu0 0.0
        %3838 = vmatprep.subr.mxu0 0.0
        %3839 = vmatpush1.msra.mxu0 0.0
        %3840 = vmatprep.subr.mxu0 0.0
        %3841 = vmatpush1.msra.mxu0 0.0
        %3842 = vmatprep.subr.mxu0 0.0
        %3843 = vmatpush1.msra.mxu0 0.0
        %3844 = vmatprep.subr.mxu0 0.0
        %3845 = vmatpush1.msra.mxu0 0.0
        %3846 = vmatprep.subr.mxu0 0.0
        %3847 = vmatpush1.msra.mxu0 0.0
        %3848 = vmatprep.subr.mxu0 0.0
        %3849 = vmatpush1.msra.mxu0 0.0
        %3850 = vmatprep.subr.mxu0 0.0
        %3851 = vmatpush1.msra.mxu0 0.0
        %3852 = vmatprep.subr.mxu0 0.0
        %3853 = vmatpush1.msra.mxu0 0.0
        %3854 = vmatprep.subr.mxu0 0.0
        %3855 = vmatpush1.msra.mxu0 0.0
        %3856 = vmatprep.subr.mxu0 0.0
        %3857 = vmatpush1.msra.mxu0 0.0
        %3858 = vmatprep.subr.mxu0 0.0
        %3859 = vmatpush1.msra.mxu0 0.0
        %3860 = vmatprep.subr.mxu0 0.0
        %3861 = vmatpush1.msra.mxu0 0.0
        %3862 = vmatprep.subr.mxu0 0.0
        %3863 = vmatpush1.msra.mxu0 0.0
        %3864 = vmatprep.subr.mxu0 0.0
        %3865 = vmatpush1.msra.mxu0 0.0
        %3866 = vmatprep.subr.mxu0 0.0
        %3867 = vmatpush1.msra.mxu0 0.0
        %3868 = vmatprep.subr.mxu0 0.0
        %3869 = vmatpush1.msra.mxu0 0.0
        %3870 = vmatprep.subr.mxu0 0.0
        %3871 = vmatpush1.msra.mxu0 0.0
        %3872 = vmatprep.subr.mxu0 0.0
        %3873 = vmatpush1.msra.mxu0 0.0
        %3874 = vmatprep.mubr.f32.mxu0 0.0
        %v3875 = vand.u32 %v3572, 4294901760
        %v3876 = vsub.f32 %v3572, %v3875
        %v3877 = vand.u32 %v3876, 4294901760
        %3878 = vmatmul.mubr.f32.gmra.mrb[0].mxu0 %v3877
        %v3879 = vpop.f32.mrb[0].mxu0
        %v3880 = vadd.f32 %v3805, %v3879
        %v3881 = vpop.f32.mrb[0].mxu0
        %3882 = vdwg.mxu0
        %3883 = vmatprep.subr.mxu0 0.0
        %v3884 = vand.u32 %v3569, 4294901760
        %v3885 = vsub.f32 %v3569, %v3884
        %v3886 = vand.u32 %v3885, 4294901760
        %3887 = vmatpush1.msra.mxu0 %v3886
        %3888 = vmatprep.subr.mxu0 0.0
        %v3889 = vand.u32 %v3570, 4294901760
        %v3890 = vsub.f32 %v3570, %v3889
        %v3891 = vand.u32 %v3890, 4294901760
        %3892 = vmatpush1.msra.mxu0 %v3891
        %3893 = vmatprep.subr.mxu0 0.0
        %3894 = vmatpush1.msra.mxu0 0.0
        %3895 = vmatprep.subr.mxu0 0.0
        %3896 = vmatpush1.msra.mxu0 0.0
        %3897 = vmatprep.subr.mxu0 0.0
        %3898 = vmatpush1.msra.mxu0 0.0
        %3899 = vmatprep.subr.mxu0 0.0
        %3900 = vmatpush1.msra.mxu0 0.0
        %3901 = vmatprep.subr.mxu0 0.0
        %3902 = vmatpush1.msra.mxu0 0.0
        %3903 = vmatprep.subr.mxu0 0.0
        %3904 = vmatpush1.msra.mxu0 0.0
        %3905 = vmatprep.subr.mxu0 0.0
        %3906 = vmatpush1.msra.mxu0 0.0
        %3907 = vmatprep.subr.mxu0 0.0
        %3908 = vmatpush1.msra.mxu0 0.0
        %3909 = vmatprep.subr.mxu0 0.0
        %3910 = vmatpush1.msra.mxu0 0.0
        %3911 = vmatprep.subr.mxu0 0.0
        %3912 = vmatpush1.msra.mxu0 0.0
        %3913 = vmatprep.subr.mxu0 0.0
        %3914 = vmatpush1.msra.mxu0 0.0
        %3915 = vmatprep.subr.mxu0 0.0
        %3916 = vmatpush1.msra.mxu0 0.0
        %3917 = vmatprep.subr.mxu0 0.0
        %3918 = vmatpush1.msra.mxu0 0.0
        %3919 = vmatprep.subr.mxu0 0.0
        %3920 = vmatpush1.msra.mxu0 0.0
        %3921 = vmatprep.subr.mxu0 0.0
        %3922 = vmatpush1.msra.mxu0 0.0
        %3923 = vmatprep.subr.mxu0 0.0
        %3924 = vmatpush1.msra.mxu0 0.0
        %3925 = vmatprep.subr.mxu0 0.0
        %3926 = vmatpush1.msra.mxu0 0.0
        %3927 = vmatprep.subr.mxu0 0.0
        %3928 = vmatpush1.msra.mxu0 0.0
        %3929 = vmatprep.subr.mxu0 0.0
        %3930 = vmatpush1.msra.mxu0 0.0
        %3931 = vmatprep.subr.mxu0 0.0
        %3932 = vmatpush1.msra.mxu0 0.0
        %3933 = vmatprep.subr.mxu0 0.0
        %3934 = vmatpush1.msra.mxu0 0.0
        %3935 = vmatprep.subr.mxu0 0.0
        %3936 = vmatpush1.msra.mxu0 0.0
        %3937 = vmatprep.subr.mxu0 0.0
        %3938 = vmatpush1.msra.mxu0 0.0
        %3939 = vmatprep.subr.mxu0 0.0
        %3940 = vmatpush1.msra.mxu0 0.0
        %3941 = vmatprep.subr.mxu0 0.0
        %3942 = vmatpush1.msra.mxu0 0.0
        %3943 = vmatprep.subr.mxu0 0.0
        %3944 = vmatpush1.msra.mxu0 0.0
        %3945 = vmatprep.subr.mxu0 0.0
        %3946 = vmatpush1.msra.mxu0 0.0
        %3947 = vmatprep.subr.mxu0 0.0
        %3948 = vmatpush1.msra.mxu0 0.0
        %3949 = vmatprep.subr.mxu0 0.0
        %3950 = vmatpush1.msra.mxu0 0.0
        %3951 = vmatprep.subr.mxu0 0.0
        %3952 = vmatpush1.msra.mxu0 0.0
        %3953 = vmatprep.mubr.f32.mxu0 0.0
        %v3954 = vand.u32 %v3572, 4294901760
        %3955 = vmatmul.mubr.f32.gmra.mrb[0].mxu0 %v3954
        %v3956 = vpop.f32.mrb[0].mxu0
        %v3957 = vadd.f32 %v3880, %v3956
        %v3958 = vpop.f32.mrb[0].mxu0
        %3959 = vdwg.mxu0
        %3960 = vmatprep.subr.mxu0 0.0
        %v3961 = vand.u32 %v3569, 4294901760
        %3962 = vmatpush1.msra.mxu0 %v3961
        %3963 = vmatprep.subr.mxu0 0.0
        %v3964 = vand.u32 %v3570, 4294901760
        %3965 = vmatpush1.msra.mxu0 %v3964
        %3966 = vmatprep.subr.mxu0 0.0
        %3967 = vmatpush1.msra.mxu0 0.0
        %3968 = vmatprep.subr.mxu0 0.0
        %3969 = vmatpush1.msra.mxu0 0.0
        %3970 = vmatprep.subr.mxu0 0.0
        %3971 = vmatpush1.msra.mxu0 0.0
        %3972 = vmatprep.subr.mxu0 0.0
        %3973 = vmatpush1.msra.mxu0 0.0
        %3974 = vmatprep.subr.mxu0 0.0
        %3975 = vmatpush1.msra.mxu0 0.0
        %3976 = vmatprep.subr.mxu0 0.0
        %3977 = vmatpush1.msra.mxu0 0.0
        %3978 = vmatprep.subr.mxu0 0.0
        %3979 = vmatpush1.msra.mxu0 0.0
        %3980 = vmatprep.subr.mxu0 0.0
        %3981 = vmatpush1.msra.mxu0 0.0
        %3982 = vmatprep.subr.mxu0 0.0
        %3983 = vmatpush1.msra.mxu0 0.0
        %3984 = vmatprep.subr.mxu0 0.0
        %3985 = vmatpush1.msra.mxu0 0.0
        %3986 = vmatprep.subr.mxu0 0.0
        %3987 = vmatpush1.msra.mxu0 0.0
        %3988 = vmatprep.subr.mxu0 0.0
        %3989 = vmatpush1.msra.mxu0 0.0
        %3990 = vmatprep.subr.mxu0 0.0
        %3991 = vmatpush1.msra.mxu0 0.0
        %3992 = vmatprep.subr.mxu0 0.0
        %3993 = vmatpush1.msra.mxu0 0.0
        %3994 = vmatprep.subr.mxu0 0.0
        %3995 = vmatpush1.msra.mxu0 0.0
        %3996 = vmatprep.subr.mxu0 0.0
        %3997 = vmatpush1.msra.mxu0 0.0
        %3998 = vmatprep.subr.mxu0 0.0
        %3999 = vmatpush1.msra.mxu0 0.0
        %4000 = vmatprep.subr.mxu0 0.0
        %4001 = vmatpush1.msra.mxu0 0.0
        %4002 = vmatprep.subr.mxu0 0.0
        %4003 = vmatpush1.msra.mxu0 0.0
        %4004 = vmatprep.subr.mxu0 0.0
        %4005 = vmatpush1.msra.mxu0 0.0
        %4006 = vmatprep.subr.mxu0 0.0
        %4007 = vmatpush1.msra.mxu0 0.0
        %4008 = vmatprep.subr.mxu0 0.0
        %4009 = vmatpush1.msra.mxu0 0.0
        %4010 = vmatprep.subr.mxu0 0.0
        %4011 = vmatpush1.msra.mxu0 0.0
        %4012 = vmatprep.subr.mxu0 0.0
        %4013 = vmatpush1.msra.mxu0 0.0
        %4014 = vmatprep.subr.mxu0 0.0
        %4015 = vmatpush1.msra.mxu0 0.0
        %4016 = vmatprep.subr.mxu0 0.0
        %4017 = vmatpush1.msra.mxu0 0.0
        %4018 = vmatprep.subr.mxu0 0.0
        %4019 = vmatpush1.msra.mxu0 0.0
        %4020 = vmatprep.subr.mxu0 0.0
        %4021 = vmatpush1.msra.mxu0 0.0
        %4022 = vmatprep.subr.mxu0 0.0
        %4023 = vmatpush1.msra.mxu0 0.0
        %4024 = vmatprep.subr.mxu0 0.0
        %4025 = vmatpush1.msra.mxu0 0.0
        %4026 = vmatprep.mubr.f32.mxu0 0.0
        %v4027 = vand.u32 %v3572, 4294901760
        %4028 = vmatmul.mubr.f32.gmra.mrb[0].mxu0 %v4027
        %v4029 = vpop.f32.mrb[0].mxu0
        %v4030 = vadd.f32 %v3957, %v4029
        %v4031 = vpop.f32.mrb[0].mxu0
        %4032 = vdwg.mxu0
        %v4033 = vadd.f32 %v3116, %v4030
        %s4034 = scalar_lea.vmem [#allocation6], 16
        %v4035 = vld [vmem:[%s4034] sm:$0xf]
        %v4037 = vsel %vm370, %v4035, 0
        %4039 = vmatprep.subr.mxu0 0.0
        %v4040 = vand.u32 %v368, 4294901760
        %4041 = vmatpush1.msra.mxu0 %v4040
        %4042 = vmatprep.subr.mxu0 0.0
        %4043 = vmatpush1.msra.mxu0 0.0
        %4044 = vmatprep.subr.mxu0 0.0
        %4045 = vmatpush1.msra.mxu0 0.0
        %4046 = vmatprep.subr.mxu0 0.0
        %4047 = vmatpush1.msra.mxu0 0.0
        %4048 = vmatprep.subr.mxu0 0.0
        %4049 = vmatpush1.msra.mxu0 0.0
        %4050 = vmatprep.subr.mxu0 0.0
        %4051 = vmatpush1.msra.mxu0 0.0
        %4052 = vmatprep.subr.mxu0 0.0
        %4053 = vmatpush1.msra.mxu0 0.0
        %4054 = vmatprep.subr.mxu0 0.0
        %4055 = vmatpush1.msra.mxu0 0.0
        %4056 = vmatprep.subr.mxu0 0.0
        %4057 = vmatpush1.msra.mxu0 0.0
        %4058 = vmatprep.subr.mxu0 0.0
        %4059 = vmatpush1.msra.mxu0 0.0
        %4060 = vmatprep.subr.mxu0 0.0
        %4061 = vmatpush1.msra.mxu0 0.0
        %4062 = vmatprep.subr.mxu0 0.0
        %4063 = vmatpush1.msra.mxu0 0.0
        %4064 = vmatprep.subr.mxu0 0.0
        %4065 = vmatpush1.msra.mxu0 0.0
        %4066 = vmatprep.subr.mxu0 0.0
        %4067 = vmatpush1.msra.mxu0 0.0
        %4068 = vmatprep.subr.mxu0 0.0
        %4069 = vmatpush1.msra.mxu0 0.0
        %4070 = vmatprep.subr.mxu0 0.0
        %4071 = vmatpush1.msra.mxu0 0.0
        %4072 = vmatprep.subr.mxu0 0.0
        %4073 = vmatpush1.msra.mxu0 0.0
        %4074 = vmatprep.subr.mxu0 0.0
        %4075 = vmatpush1.msra.mxu0 0.0
        %4076 = vmatprep.subr.mxu0 0.0
        %4077 = vmatpush1.msra.mxu0 0.0
        %4078 = vmatprep.subr.mxu0 0.0
        %4079 = vmatpush1.msra.mxu0 0.0
        %4080 = vmatprep.subr.mxu0 0.0
        %4081 = vmatpush1.msra.mxu0 0.0
        %4082 = vmatprep.subr.mxu0 0.0
        %4083 = vmatpush1.msra.mxu0 0.0
        %4084 = vmatprep.subr.mxu0 0.0
        %4085 = vmatpush1.msra.mxu0 0.0
        %4086 = vmatprep.subr.mxu0 0.0
        %4087 = vmatpush1.msra.mxu0 0.0
        %4088 = vmatprep.subr.mxu0 0.0
        %4089 = vmatpush1.msra.mxu0 0.0
        %4090 = vmatprep.subr.mxu0 0.0
        %4091 = vmatpush1.msra.mxu0 0.0
        %4092 = vmatprep.subr.mxu0 0.0
        %4093 = vmatpush1.msra.mxu0 0.0
        %4094 = vmatprep.subr.mxu0 0.0
        %4095 = vmatpush1.msra.mxu0 0.0
        %4096 = vmatprep.subr.mxu0 0.0
        %4097 = vmatpush1.msra.mxu0 0.0
        %4098 = vmatprep.subr.mxu0 0.0
        %4099 = vmatpush1.msra.mxu0 0.0
        %4100 = vmatprep.subr.mxu0 0.0
        %4101 = vmatpush1.msra.mxu0 0.0
        %4102 = vmatprep.subr.mxu0 0.0
        %4103 = vmatpush1.msra.mxu0 0.0
        %4104 = vmatprep.mubr.f32.mxu0 0.0
        %v4105 = vand.u32 %v4037, 4294901760
        %v4106 = vsub.f32 %v4037, %v4105
        %v4107 = vand.u32 %v4106, 4294901760
        %v4108 = vsub.f32 %v4106, %v4107
        %v4109 = vand.u32 %v4108, 4294901760
        %4110 = vmatmul.mubr.f32.gmra.mrb[0].mxu0 %v4109
        %v4111 = vpop.f32.mrb[0].mxu0
        %v4112 = vadd.f32 0.0, %v4111
        %v4113 = vpop.f32.mrb[0].mxu0
        %4114 = vdwg.mxu0
        %4115 = vmatprep.subr.mxu0 0.0
        %v4116 = vand.u32 %v368, 4294901760
        %v4117 = vsub.f32 %v368, %v4116
        %v4118 = vand.u32 %v4117, 4294901760
        %v4119 = vsub.f32 %v4117, %v4118
        %v4120 = vand.u32 %v4119, 4294901760
        %4121 = vmatpush1.msra.mxu0 %v4120
        %4122 = vmatprep.subr.mxu0 0.0
        %4123 = vmatpush1.msra.mxu0 0.0
        %4124 = vmatprep.subr.mxu0 0.0
        %4125 = vmatpush1.msra.mxu0 0.0
        %4126 = vmatprep.subr.mxu0 0.0
        %4127 = vmatpush1.msra.mxu0 0.0
        %4128 = vmatprep.subr.mxu0 0.0
        %4129 = vmatpush1.msra.mxu0 0.0
        %4130 = vmatprep.subr.mxu0 0.0
        %4131 = vmatpush1.msra.mxu0 0.0
        %4132 = vmatprep.subr.mxu0 0.0
        %4133 = vmatpush1.msra.mxu0 0.0
        %4134 = vmatprep.subr.mxu0 0.0
        %4135 = vmatpush1.msra.mxu0 0.0
        %4136 = vmatprep.subr.mxu0 0.0
        %4137 = vmatpush1.msra.mxu0 0.0
        %4138 = vmatprep.subr.mxu0 0.0
        %4139 = vmatpush1.msra.mxu0 0.0
        %4140 = vmatprep.subr.mxu0 0.0
        %4141 = vmatpush1.msra.mxu0 0.0
        %4142 = vmatprep.subr.mxu0 0.0
        %4143 = vmatpush1.msra.mxu0 0.0
        %4144 = vmatprep.subr.mxu0 0.0
        %4145 = vmatpush1.msra.mxu0 0.0
        %4146 = vmatprep.subr.mxu0 0.0
        %4147 = vmatpush1.msra.mxu0 0.0
        %4148 = vmatprep.subr.mxu0 0.0
        %4149 = vmatpush1.msra.mxu0 0.0
        %4150 = vmatprep.subr.mxu0 0.0
        %4151 = vmatpush1.msra.mxu0 0.0
        %4152 = vmatprep.subr.mxu0 0.0
        %4153 = vmatpush1.msra.mxu0 0.0
        %4154 = vmatprep.subr.mxu0 0.0
        %4155 = vmatpush1.msra.mxu0 0.0
        %4156 = vmatprep.subr.mxu0 0.0
        %4157 = vmatpush1.msra.mxu0 0.0
        %4158 = vmatprep.subr.mxu0 0.0
        %4159 = vmatpush1.msra.mxu0 0.0
        %4160 = vmatprep.subr.mxu0 0.0
        %4161 = vmatpush1.msra.mxu0 0.0
        %4162 = vmatprep.subr.mxu0 0.0
        %4163 = vmatpush1.msra.mxu0 0.0
        %4164 = vmatprep.subr.mxu0 0.0
        %4165 = vmatpush1.msra.mxu0 0.0
        %4166 = vmatprep.subr.mxu0 0.0
        %4167 = vmatpush1.msra.mxu0 0.0
        %4168 = vmatprep.subr.mxu0 0.0
        %4169 = vmatpush1.msra.mxu0 0.0
        %4170 = vmatprep.subr.mxu0 0.0
        %4171 = vmatpush1.msra.mxu0 0.0
        %4172 = vmatprep.subr.mxu0 0.0
        %4173 = vmatpush1.msra.mxu0 0.0
        %4174 = vmatprep.subr.mxu0 0.0
        %4175 = vmatpush1.msra.mxu0 0.0
        %4176 = vmatprep.subr.mxu0 0.0
        %4177 = vmatpush1.msra.mxu0 0.0
        %4178 = vmatprep.subr.mxu0 0.0
        %4179 = vmatpush1.msra.mxu0 0.0
        %4180 = vmatprep.subr.mxu0 0.0
        %4181 = vmatpush1.msra.mxu0 0.0
        %4182 = vmatprep.subr.mxu0 0.0
        %4183 = vmatpush1.msra.mxu0 0.0
        %4184 = vmatprep.mubr.f32.mxu0 0.0
        %v4185 = vand.u32 %v4037, 4294901760
        %4186 = vmatmul.mubr.f32.gmra.mrb[0].mxu0 %v4185
        %v4187 = vpop.f32.mrb[0].mxu0
        %v4188 = vadd.f32 %v4112, %v4187
        %v4189 = vpop.f32.mrb[0].mxu0
        %4190 = vdwg.mxu0
        %4191 = vmatprep.subr.mxu0 0.0
        %v4192 = vand.u32 %v368, 4294901760
        %v4193 = vsub.f32 %v368, %v4192
        %4194 = vmatpush1.msra.mxu0 %v4193
        %4195 = vmatprep.subr.mxu0 0.0
        %4196 = vmatpush1.msra.mxu0 0.0
        %4197 = vmatprep.subr.mxu0 0.0
        %4198 = vmatpush1.msra.mxu0 0.0
        %4199 = vmatprep.subr.mxu0 0.0
        %4200 = vmatpush1.msra.mxu0 0.0
        %4201 = vmatprep.subr.mxu0 0.0
        %4202 = vmatpush1.msra.mxu0 0.0
        %4203 = vmatprep.subr.mxu0 0.0
        %4204 = vmatpush1.msra.mxu0 0.0
        %4205 = vmatprep.subr.mxu0 0.0
        %4206 = vmatpush1.msra.mxu0 0.0
        %4207 = vmatprep.subr.mxu0 0.0
        %4208 = vmatpush1.msra.mxu0 0.0
        %4209 = vmatprep.subr.mxu0 0.0
        %4210 = vmatpush1.msra.mxu0 0.0
        %4211 = vmatprep.subr.mxu0 0.0
        %4212 = vmatpush1.msra.mxu0 0.0
        %4213 = vmatprep.subr.mxu0 0.0
        %4214 = vmatpush1.msra.mxu0 0.0
        %4215 = vmatprep.subr.mxu0 0.0
        %4216 = vmatpush1.msra.mxu0 0.0
        %4217 = vmatprep.subr.mxu0 0.0
        %4218 = vmatpush1.msra.mxu0 0.0
        %4219 = vmatprep.subr.mxu0 0.0
        %4220 = vmatpush1.msra.mxu0 0.0
        %4221 = vmatprep.subr.mxu0 0.0
        %4222 = vmatpush1.msra.mxu0 0.0
        %4223 = vmatprep.subr.mxu0 0.0
        %4224 = vmatpush1.msra.mxu0 0.0
        %4225 = vmatprep.subr.mxu0 0.0
        %4226 = vmatpush1.msra.mxu0 0.0
        %4227 = vmatprep.subr.mxu0 0.0
        %4228 = vmatpush1.msra.mxu0 0.0
        %4229 = vmatprep.subr.mxu0 0.0
        %4230 = vmatpush1.msra.mxu0 0.0
        %4231 = vmatprep.subr.mxu0 0.0
        %4232 = vmatpush1.msra.mxu0 0.0
        %4233 = vmatprep.subr.mxu0 0.0
        %4234 = vmatpush1.msra.mxu0 0.0
        %4235 = vmatprep.subr.mxu0 0.0
        %4236 = vmatpush1.msra.mxu0 0.0
        %4237 = vmatprep.subr.mxu0 0.0
        %4238 = vmatpush1.msra.mxu0 0.0
        %4239 = vmatprep.subr.mxu0 0.0
        %4240 = vmatpush1.msra.mxu0 0.0
        %4241 = vmatprep.subr.mxu0 0.0
        %4242 = vmatpush1.msra.mxu0 0.0
        %4243 = vmatprep.subr.mxu0 0.0
        %4244 = vmatpush1.msra.mxu0 0.0
        %4245 = vmatprep.subr.mxu0 0.0
        %4246 = vmatpush1.msra.mxu0 0.0
        %4247 = vmatprep.subr.mxu0 0.0
        %4248 = vmatpush1.msra.mxu0 0.0
        %4249 = vmatprep.subr.mxu0 0.0
        %4250 = vmatpush1.msra.mxu0 0.0
        %4251 = vmatprep.subr.mxu0 0.0
        %4252 = vmatpush1.msra.mxu0 0.0
        %4253 = vmatprep.subr.mxu0 0.0
        %4254 = vmatpush1.msra.mxu0 0.0
        %4255 = vmatprep.subr.mxu0 0.0
        %4256 = vmatpush1.msra.mxu0 0.0
        %4257 = vmatprep.mubr.f32.mxu0 0.0
        %v4258 = vand.u32 %v4037, 4294901760
        %v4259 = vsub.f32 %v4037, %v4258
        %4260 = vmatmul.mubr.f32.gmra.mrb[0].mxu0 %v4259
        %v4261 = vpop.f32.mrb[0].mxu0
        %v4262 = vadd.f32 %v4188, %v4261
        %v4263 = vpop.f32.mrb[0].mxu0
        %4264 = vdwg.mxu0
        %4265 = vmatprep.subr.mxu0 0.0
        %v4266 = vand.u32 %v368, 4294901760
        %4267 = vmatpush1.msra.mxu0 %v4266
        %4268 = vmatprep.subr.mxu0 0.0
        %4269 = vmatpush1.msra.mxu0 0.0
        %4270 = vmatprep.subr.mxu0 0.0
        %4271 = vmatpush1.msra.mxu0 0.0
        %4272 = vmatprep.subr.mxu0 0.0
        %4273 = vmatpush1.msra.mxu0 0.0
        %4274 = vmatprep.subr.mxu0 0.0
        %4275 = vmatpush1.msra.mxu0 0.0
        %4276 = vmatprep.subr.mxu0 0.0
        %4277 = vmatpush1.msra.mxu0 0.0
        %4278 = vmatprep.subr.mxu0 0.0
        %4279 = vmatpush1.msra.mxu0 0.0
        %4280 = vmatprep.subr.mxu0 0.0
        %4281 = vmatpush1.msra.mxu0 0.0
        %4282 = vmatprep.subr.mxu0 0.0
        %4283 = vmatpush1.msra.mxu0 0.0
        %4284 = vmatprep.subr.mxu0 0.0
        %4285 = vmatpush1.msra.mxu0 0.0
        %4286 = vmatprep.subr.mxu0 0.0
        %4287 = vmatpush1.msra.mxu0 0.0
        %4288 = vmatprep.subr.mxu0 0.0
        %4289 = vmatpush1.msra.mxu0 0.0
        %4290 = vmatprep.subr.mxu0 0.0
        %4291 = vmatpush1.msra.mxu0 0.0
        %4292 = vmatprep.subr.mxu0 0.0
        %4293 = vmatpush1.msra.mxu0 0.0
        %4294 = vmatprep.subr.mxu0 0.0
        %4295 = vmatpush1.msra.mxu0 0.0
        %4296 = vmatprep.subr.mxu0 0.0
        %4297 = vmatpush1.msra.mxu0 0.0
        %4298 = vmatprep.subr.mxu0 0.0
        %4299 = vmatpush1.msra.mxu0 0.0
        %4300 = vmatprep.subr.mxu0 0.0
        %4301 = vmatpush1.msra.mxu0 0.0
        %4302 = vmatprep.subr.mxu0 0.0
        %4303 = vmatpush1.msra.mxu0 0.0
        %4304 = vmatprep.subr.mxu0 0.0
        %4305 = vmatpush1.msra.mxu0 0.0
        %4306 = vmatprep.subr.mxu0 0.0
        %4307 = vmatpush1.msra.mxu0 0.0
        %4308 = vmatprep.subr.mxu0 0.0
        %4309 = vmatpush1.msra.mxu0 0.0
        %4310 = vmatprep.subr.mxu0 0.0
        %4311 = vmatpush1.msra.mxu0 0.0
        %4312 = vmatprep.subr.mxu0 0.0
        %4313 = vmatpush1.msra.mxu0 0.0
        %4314 = vmatprep.subr.mxu0 0.0
        %4315 = vmatpush1.msra.mxu0 0.0
        %4316 = vmatprep.subr.mxu0 0.0
        %4317 = vmatpush1.msra.mxu0 0.0
        %4318 = vmatprep.subr.mxu0 0.0
        %4319 = vmatpush1.msra.mxu0 0.0
        %4320 = vmatprep.subr.mxu0 0.0
        %4321 = vmatpush1.msra.mxu0 0.0
        %4322 = vmatprep.subr.mxu0 0.0
        %4323 = vmatpush1.msra.mxu0 0.0
        %4324 = vmatprep.subr.mxu0 0.0
        %4325 = vmatpush1.msra.mxu0 0.0
        %4326 = vmatprep.subr.mxu0 0.0
        %4327 = vmatpush1.msra.mxu0 0.0
        %4328 = vmatprep.subr.mxu0 0.0
        %4329 = vmatpush1.msra.mxu0 0.0
        %4330 = vmatprep.mubr.f32.mxu0 0.0
        %v4331 = vand.u32 %v4037, 4294901760
        %v4332 = vsub.f32 %v4037, %v4331
        %v4333 = vand.u32 %v4332, 4294901760
        %4334 = vmatmul.mubr.f32.gmra.mrb[0].mxu0 %v4333
        %v4335 = vpop.f32.mrb[0].mxu0
        %v4336 = vadd.f32 %v4262, %v4335
        %v4337 = vpop.f32.mrb[0].mxu0
        %4338 = vdwg.mxu0
        %4339 = vmatprep.subr.mxu0 0.0
        %v4340 = vand.u32 %v368, 4294901760
        %v4341 = vsub.f32 %v368, %v4340
        %v4342 = vand.u32 %v4341, 4294901760
        %4343 = vmatpush1.msra.mxu0 %v4342
        %4344 = vmatprep.subr.mxu0 0.0
        %4345 = vmatpush1.msra.mxu0 0.0
        %4346 = vmatprep.subr.mxu0 0.0
        %4347 = vmatpush1.msra.mxu0 0.0
        %4348 = vmatprep.subr.mxu0 0.0
        %4349 = vmatpush1.msra.mxu0 0.0
        %4350 = vmatprep.subr.mxu0 0.0
        %4351 = vmatpush1.msra.mxu0 0.0
        %4352 = vmatprep.subr.mxu0 0.0
        %4353 = vmatpush1.msra.mxu0 0.0
        %4354 = vmatprep.subr.mxu0 0.0
        %4355 = vmatpush1.msra.mxu0 0.0
        %4356 = vmatprep.subr.mxu0 0.0
        %4357 = vmatpush1.msra.mxu0 0.0
        %4358 = vmatprep.subr.mxu0 0.0
        %4359 = vmatpush1.msra.mxu0 0.0
        %4360 = vmatprep.subr.mxu0 0.0
        %4361 = vmatpush1.msra.mxu0 0.0
        %4362 = vmatprep.subr.mxu0 0.0
        %4363 = vmatpush1.msra.mxu0 0.0
        %4364 = vmatprep.subr.mxu0 0.0
        %4365 = vmatpush1.msra.mxu0 0.0
        %4366 = vmatprep.subr.mxu0 0.0
        %4367 = vmatpush1.msra.mxu0 0.0
        %4368 = vmatprep.subr.mxu0 0.0
        %4369 = vmatpush1.msra.mxu0 0.0
        %4370 = vmatprep.subr.mxu0 0.0
        %4371 = vmatpush1.msra.mxu0 0.0
        %4372 = vmatprep.subr.mxu0 0.0
        %4373 = vmatpush1.msra.mxu0 0.0
        %4374 = vmatprep.subr.mxu0 0.0
        %4375 = vmatpush1.msra.mxu0 0.0
        %4376 = vmatprep.subr.mxu0 0.0
        %4377 = vmatpush1.msra.mxu0 0.0
        %4378 = vmatprep.subr.mxu0 0.0
        %4379 = vmatpush1.msra.mxu0 0.0
        %4380 = vmatprep.subr.mxu0 0.0
        %4381 = vmatpush1.msra.mxu0 0.0
        %4382 = vmatprep.subr.mxu0 0.0
        %4383 = vmatpush1.msra.mxu0 0.0
        %4384 = vmatprep.subr.mxu0 0.0
        %4385 = vmatpush1.msra.mxu0 0.0
        %4386 = vmatprep.subr.mxu0 0.0
        %4387 = vmatpush1.msra.mxu0 0.0
        %4388 = vmatprep.subr.mxu0 0.0
        %4389 = vmatpush1.msra.mxu0 0.0
        %4390 = vmatprep.subr.mxu0 0.0
        %4391 = vmatpush1.msra.mxu0 0.0
        %4392 = vmatprep.subr.mxu0 0.0
        %4393 = vmatpush1.msra.mxu0 0.0
        %4394 = vmatprep.subr.mxu0 0.0
        %4395 = vmatpush1.msra.mxu0 0.0
        %4396 = vmatprep.subr.mxu0 0.0
        %4397 = vmatpush1.msra.mxu0 0.0
        %4398 = vmatprep.subr.mxu0 0.0
        %4399 = vmatpush1.msra.mxu0 0.0
        %4400 = vmatprep.subr.mxu0 0.0
        %4401 = vmatpush1.msra.mxu0 0.0
        %4402 = vmatprep.subr.mxu0 0.0
        %4403 = vmatpush1.msra.mxu0 0.0
        %4404 = vmatprep.subr.mxu0 0.0
        %4405 = vmatpush1.msra.mxu0 0.0
        %4406 = vmatprep.mubr.f32.mxu0 0.0
        %v4407 = vand.u32 %v4037, 4294901760
        %4408 = vmatmul.mubr.f32.gmra.mrb[0].mxu0 %v4407
        %v4409 = vpop.f32.mrb[0].mxu0
        %v4410 = vadd.f32 %v4336, %v4409
        %v4411 = vpop.f32.mrb[0].mxu0
        %4412 = vdwg.mxu0
        %4413 = vmatprep.subr.mxu0 0.0
        %v4414 = vand.u32 %v368, 4294901760
        %4415 = vmatpush1.msra.mxu0 %v4414
        %4416 = vmatprep.subr.mxu0 0.0
        %4417 = vmatpush1.msra.mxu0 0.0
        %4418 = vmatprep.subr.mxu0 0.0
        %4419 = vmatpush1.msra.mxu0 0.0
        %4420 = vmatprep.subr.mxu0 0.0
        %4421 = vmatpush1.msra.mxu0 0.0
        %4422 = vmatprep.subr.mxu0 0.0
        %4423 = vmatpush1.msra.mxu0 0.0
        %4424 = vmatprep.subr.mxu0 0.0
        %4425 = vmatpush1.msra.mxu0 0.0
        %4426 = vmatprep.subr.mxu0 0.0
        %4427 = vmatpush1.msra.mxu0 0.0
        %4428 = vmatprep.subr.mxu0 0.0
        %4429 = vmatpush1.msra.mxu0 0.0
        %4430 = vmatprep.subr.mxu0 0.0
        %4431 = vmatpush1.msra.mxu0 0.0
        %4432 = vmatprep.subr.mxu0 0.0
        %4433 = vmatpush1.msra.mxu0 0.0
        %4434 = vmatprep.subr.mxu0 0.0
        %4435 = vmatpush1.msra.mxu0 0.0
        %4436 = vmatprep.subr.mxu0 0.0
        %4437 = vmatpush1.msra.mxu0 0.0
        %4438 = vmatprep.subr.mxu0 0.0
        %4439 = vmatpush1.msra.mxu0 0.0
        %4440 = vmatprep.subr.mxu0 0.0
        %4441 = vmatpush1.msra.mxu0 0.0
        %4442 = vmatprep.subr.mxu0 0.0
        %4443 = vmatpush1.msra.mxu0 0.0
        %4444 = vmatprep.subr.mxu0 0.0
        %4445 = vmatpush1.msra.mxu0 0.0
        %4446 = vmatprep.subr.mxu0 0.0
        %4447 = vmatpush1.msra.mxu0 0.0
        %4448 = vmatprep.subr.mxu0 0.0
        %4449 = vmatpush1.msra.mxu0 0.0
        %4450 = vmatprep.subr.mxu0 0.0
        %4451 = vmatpush1.msra.mxu0 0.0
        %4452 = vmatprep.subr.mxu0 0.0
        %4453 = vmatpush1.msra.mxu0 0.0
        %4454 = vmatprep.subr.mxu0 0.0
        %4455 = vmatpush1.msra.mxu0 0.0
        %4456 = vmatprep.subr.mxu0 0.0
        %4457 = vmatpush1.msra.mxu0 0.0
        %4458 = vmatprep.subr.mxu0 0.0
        %4459 = vmatpush1.msra.mxu0 0.0
        %4460 = vmatprep.subr.mxu0 0.0
        %4461 = vmatpush1.msra.mxu0 0.0
        %4462 = vmatprep.subr.mxu0 0.0
        %4463 = vmatpush1.msra.mxu0 0.0
        %4464 = vmatprep.subr.mxu0 0.0
        %4465 = vmatpush1.msra.mxu0 0.0
        %4466 = vmatprep.subr.mxu0 0.0
        %4467 = vmatpush1.msra.mxu0 0.0
        %4468 = vmatprep.subr.mxu0 0.0
        %4469 = vmatpush1.msra.mxu0 0.0
        %4470 = vmatprep.subr.mxu0 0.0
        %4471 = vmatpush1.msra.mxu0 0.0
        %4472 = vmatprep.subr.mxu0 0.0
        %4473 = vmatpush1.msra.mxu0 0.0
        %4474 = vmatprep.subr.mxu0 0.0
        %4475 = vmatpush1.msra.mxu0 0.0
        %4476 = vmatprep.subr.mxu0 0.0
        %4477 = vmatpush1.msra.mxu0 0.0
        %4478 = vmatprep.mubr.f32.mxu0 0.0
        %v4479 = vand.u32 %v4037, 4294901760
        %4480 = vmatmul.mubr.f32.gmra.mrb[0].mxu0 %v4479
        %v4481 = vpop.f32.mrb[0].mxu0
        %v4482 = vadd.f32 %v4410, %v4481
        %v4483 = vpop.f32.mrb[0].mxu0
        %4484 = vdwg.mxu0
        %s4485 = scalar_lea.vmem [#allocation8], 64
        %v4486 = vld [vmem:[%s4485] sm:$0xff]
        %v4487 = vld [vmem:[%s4485 + $0x8] sm:$0xff]
        %v4489 = vsel %vm267, %v4482, 0
        %4491 = vmatprep.subr.mxu0 0.0
        %v4492 = vand.u32 %v4486, 4294901760
        %4493 = vmatpush1.msra.mxu0 %v4492
        %4494 = vmatprep.subr.mxu0 0.0
        %v4495 = vand.u32 %v4487, 4294901760
        %4496 = vmatpush1.msra.mxu0 %v4495
        %4497 = vmatprep.subr.mxu0 0.0
        %4498 = vmatpush1.msra.mxu0 0.0
        %4499 = vmatprep.subr.mxu0 0.0
        %4500 = vmatpush1.msra.mxu0 0.0
        %4501 = vmatprep.subr.mxu0 0.0
        %4502 = vmatpush1.msra.mxu0 0.0
        %4503 = vmatprep.subr.mxu0 0.0
        %4504 = vmatpush1.msra.mxu0 0.0
        %4505 = vmatprep.subr.mxu0 0.0
        %4506 = vmatpush1.msra.mxu0 0.0
        %4507 = vmatprep.subr.mxu0 0.0
        %4508 = vmatpush1.msra.mxu0 0.0
        %4509 = vmatprep.subr.mxu0 0.0
        %4510 = vmatpush1.msra.mxu0 0.0
        %4511 = vmatprep.subr.mxu0 0.0
        %4512 = vmatpush1.msra.mxu0 0.0
        %4513 = vmatprep.subr.mxu0 0.0
        %4514 = vmatpush1.msra.mxu0 0.0
        %4515 = vmatprep.subr.mxu0 0.0
        %4516 = vmatpush1.msra.mxu0 0.0
        %4517 = vmatprep.subr.mxu0 0.0
        %4518 = vmatpush1.msra.mxu0 0.0
        %4519 = vmatprep.subr.mxu0 0.0
        %4520 = vmatpush1.msra.mxu0 0.0
        %4521 = vmatprep.subr.mxu0 0.0
        %4522 = vmatpush1.msra.mxu0 0.0
        %4523 = vmatprep.subr.mxu0 0.0
        %4524 = vmatpush1.msra.mxu0 0.0
        %4525 = vmatprep.subr.mxu0 0.0
        %4526 = vmatpush1.msra.mxu0 0.0
        %4527 = vmatprep.subr.mxu0 0.0
        %4528 = vmatpush1.msra.mxu0 0.0
        %4529 = vmatprep.subr.mxu0 0.0
        %4530 = vmatpush1.msra.mxu0 0.0
        %4531 = vmatprep.subr.mxu0 0.0
        %4532 = vmatpush1.msra.mxu0 0.0
        %4533 = vmatprep.subr.mxu0 0.0
        %4534 = vmatpush1.msra.mxu0 0.0
        %4535 = vmatprep.subr.mxu0 0.0
        %4536 = vmatpush1.msra.mxu0 0.0
        %4537 = vmatprep.subr.mxu0 0.0
        %4538 = vmatpush1.msra.mxu0 0.0
        %4539 = vmatprep.subr.mxu0 0.0
        %4540 = vmatpush1.msra.mxu0 0.0
        %4541 = vmatprep.subr.mxu0 0.0
        %4542 = vmatpush1.msra.mxu0 0.0
        %4543 = vmatprep.subr.mxu0 0.0
        %4544 = vmatpush1.msra.mxu0 0.0
        %4545 = vmatprep.subr.mxu0 0.0
        %4546 = vmatpush1.msra.mxu0 0.0
        %4547 = vmatprep.subr.mxu0 0.0
        %4548 = vmatpush1.msra.mxu0 0.0
        %4549 = vmatprep.subr.mxu0 0.0
        %4550 = vmatpush1.msra.mxu0 0.0
        %4551 = vmatprep.subr.mxu0 0.0
        %4552 = vmatpush1.msra.mxu0 0.0
        %4553 = vmatprep.subr.mxu0 0.0
        %4554 = vmatpush1.msra.mxu0 0.0
        %4555 = vmatprep.subr.mxu0 0.0
        %4556 = vmatpush1.msra.mxu0 0.0
        %4557 = vmatprep.mubr.f32.mxu0 0.0
        %v4558 = vand.u32 %v4489, 4294901760
        %v4559 = vsub.f32 %v4489, %v4558
        %v4560 = vand.u32 %v4559, 4294901760
        %v4561 = vsub.f32 %v4559, %v4560
        %v4562 = vand.u32 %v4561, 4294901760
        %4563 = vmatmul.mubr.f32.gmra.mrb[0].mxu0 %v4562
        %v4564 = vpop.f32.mrb[0].mxu0
        %v4565 = vadd.f32 0.0, %v4564
        %v4566 = vpop.f32.mrb[0].mxu0
        %4567 = vdwg.mxu0
        %4568 = vmatprep.subr.mxu0 0.0
        %v4569 = vand.u32 %v4486, 4294901760
        %v4570 = vsub.f32 %v4486, %v4569
        %v4571 = vand.u32 %v4570, 4294901760
        %v4572 = vsub.f32 %v4570, %v4571
        %v4573 = vand.u32 %v4572, 4294901760
        %4574 = vmatpush1.msra.mxu0 %v4573
        %4575 = vmatprep.subr.mxu0 0.0
        %v4576 = vand.u32 %v4487, 4294901760
        %v4577 = vsub.f32 %v4487, %v4576
        %v4578 = vand.u32 %v4577, 4294901760
        %v4579 = vsub.f32 %v4577, %v4578
        %v4580 = vand.u32 %v4579, 4294901760
        %4581 = vmatpush1.msra.mxu0 %v4580
        %4582 = vmatprep.subr.mxu0 0.0
        %4583 = vmatpush1.msra.mxu0 0.0
        %4584 = vmatprep.subr.mxu0 0.0
        %4585 = vmatpush1.msra.mxu0 0.0
        %4586 = vmatprep.subr.mxu0 0.0
        %4587 = vmatpush1.msra.mxu0 0.0
        %4588 = vmatprep.subr.mxu0 0.0
        %4589 = vmatpush1.msra.mxu0 0.0
        %4590 = vmatprep.subr.mxu0 0.0
        %4591 = vmatpush1.msra.mxu0 0.0
        %4592 = vmatprep.subr.mxu0 0.0
        %4593 = vmatpush1.msra.mxu0 0.0
        %4594 = vmatprep.subr.mxu0 0.0
        %4595 = vmatpush1.msra.mxu0 0.0
        %4596 = vmatprep.subr.mxu0 0.0
        %4597 = vmatpush1.msra.mxu0 0.0
        %4598 = vmatprep.subr.mxu0 0.0
        %4599 = vmatpush1.msra.mxu0 0.0
        %4600 = vmatprep.subr.mxu0 0.0
        %4601 = vmatpush1.msra.mxu0 0.0
        %4602 = vmatprep.subr.mxu0 0.0
        %4603 = vmatpush1.msra.mxu0 0.0
        %4604 = vmatprep.subr.mxu0 0.0
        %4605 = vmatpush1.msra.mxu0 0.0
        %4606 = vmatprep.subr.mxu0 0.0
        %4607 = vmatpush1.msra.mxu0 0.0
        %4608 = vmatprep.subr.mxu0 0.0
        %4609 = vmatpush1.msra.mxu0 0.0
        %4610 = vmatprep.subr.mxu0 0.0
        %4611 = vmatpush1.msra.mxu0 0.0
        %4612 = vmatprep.subr.mxu0 0.0
        %4613 = vmatpush1.msra.mxu0 0.0
        %4614 = vmatprep.subr.mxu0 0.0
        %4615 = vmatpush1.msra.mxu0 0.0
        %4616 = vmatprep.subr.mxu0 0.0
        %4617 = vmatpush1.msra.mxu0 0.0
        %4618 = vmatprep.subr.mxu0 0.0
        %4619 = vmatpush1.msra.mxu0 0.0
        %4620 = vmatprep.subr.mxu0 0.0
        %4621 = vmatpush1.msra.mxu0 0.0
        %4622 = vmatprep.subr.mxu0 0.0
        %4623 = vmatpush1.msra.mxu0 0.0
        %4624 = vmatprep.subr.mxu0 0.0
        %4625 = vmatpush1.msra.mxu0 0.0
        %4626 = vmatprep.subr.mxu0 0.0
        %4627 = vmatpush1.msra.mxu0 0.0
        %4628 = vmatprep.subr.mxu0 0.0
        %4629 = vmatpush1.msra.mxu0 0.0
        %4630 = vmatprep.subr.mxu0 0.0
        %4631 = vmatpush1.msra.mxu0 0.0
        %4632 = vmatprep.subr.mxu0 0.0
        %4633 = vmatpush1.msra.mxu0 0.0
        %4634 = vmatprep.subr.mxu0 0.0
        %4635 = vmatpush1.msra.mxu0 0.0
        %4636 = vmatprep.subr.mxu0 0.0
        %4637 = vmatpush1.msra.mxu0 0.0
        %4638 = vmatprep.subr.mxu0 0.0
        %4639 = vmatpush1.msra.mxu0 0.0
        %4640 = vmatprep.subr.mxu0 0.0
        %4641 = vmatpush1.msra.mxu0 0.0
        %4642 = vmatprep.mubr.f32.mxu0 0.0
        %v4643 = vand.u32 %v4489, 4294901760
        %4644 = vmatmul.mubr.f32.gmra.mrb[0].mxu0 %v4643
        %v4645 = vpop.f32.mrb[0].mxu0
        %v4646 = vadd.f32 %v4565, %v4645
        %v4647 = vpop.f32.mrb[0].mxu0
        %4648 = vdwg.mxu0
        %4649 = vmatprep.subr.mxu0 0.0
        %v4650 = vand.u32 %v4486, 4294901760
        %v4651 = vsub.f32 %v4486, %v4650
        %4652 = vmatpush1.msra.mxu0 %v4651
        %4653 = vmatprep.subr.mxu0 0.0
        %v4654 = vand.u32 %v4487, 4294901760
        %v4655 = vsub.f32 %v4487, %v4654
        %4656 = vmatpush1.msra.mxu0 %v4655
        %4657 = vmatprep.subr.mxu0 0.0
        %4658 = vmatpush1.msra.mxu0 0.0
        %4659 = vmatprep.subr.mxu0 0.0
        %4660 = vmatpush1.msra.mxu0 0.0
        %4661 = vmatprep.subr.mxu0 0.0
        %4662 = vmatpush1.msra.mxu0 0.0
        %4663 = vmatprep.subr.mxu0 0.0
        %4664 = vmatpush1.msra.mxu0 0.0
        %4665 = vmatprep.subr.mxu0 0.0
        %4666 = vmatpush1.msra.mxu0 0.0
        %4667 = vmatprep.subr.mxu0 0.0
        %4668 = vmatpush1.msra.mxu0 0.0
        %4669 = vmatprep.subr.mxu0 0.0
        %4670 = vmatpush1.msra.mxu0 0.0
        %4671 = vmatprep.subr.mxu0 0.0
        %4672 = vmatpush1.msra.mxu0 0.0
        %4673 = vmatprep.subr.mxu0 0.0
        %4674 = vmatpush1.msra.mxu0 0.0
        %4675 = vmatprep.subr.mxu0 0.0
        %4676 = vmatpush1.msra.mxu0 0.0
        %4677 = vmatprep.subr.mxu0 0.0
        %4678 = vmatpush1.msra.mxu0 0.0
        %4679 = vmatprep.subr.mxu0 0.0
        %4680 = vmatpush1.msra.mxu0 0.0
        %4681 = vmatprep.subr.mxu0 0.0
        %4682 = vmatpush1.msra.mxu0 0.0
        %4683 = vmatprep.subr.mxu0 0.0
        %4684 = vmatpush1.msra.mxu0 0.0
        %4685 = vmatprep.subr.mxu0 0.0
        %4686 = vmatpush1.msra.mxu0 0.0
        %4687 = vmatprep.subr.mxu0 0.0
        %4688 = vmatpush1.msra.mxu0 0.0
        %4689 = vmatprep.subr.mxu0 0.0
        %4690 = vmatpush1.msra.mxu0 0.0
        %4691 = vmatprep.subr.mxu0 0.0
        %4692 = vmatpush1.msra.mxu0 0.0
        %4693 = vmatprep.subr.mxu0 0.0
        %4694 = vmatpush1.msra.mxu0 0.0
        %4695 = vmatprep.subr.mxu0 0.0
        %4696 = vmatpush1.msra.mxu0 0.0
        %4697 = vmatprep.subr.mxu0 0.0
        %4698 = vmatpush1.msra.mxu0 0.0
        %4699 = vmatprep.subr.mxu0 0.0
        %4700 = vmatpush1.msra.mxu0 0.0
        %4701 = vmatprep.subr.mxu0 0.0
        %4702 = vmatpush1.msra.mxu0 0.0
        %4703 = vmatprep.subr.mxu0 0.0
        %4704 = vmatpush1.msra.mxu0 0.0
        %4705 = vmatprep.subr.mxu0 0.0
        %4706 = vmatpush1.msra.mxu0 0.0
        %4707 = vmatprep.subr.mxu0 0.0
        %4708 = vmatpush1.msra.mxu0 0.0
        %4709 = vmatprep.subr.mxu0 0.0
        %4710 = vmatpush1.msra.mxu0 0.0
        %4711 = vmatprep.subr.mxu0 0.0
        %4712 = vmatpush1.msra.mxu0 0.0
        %4713 = vmatprep.subr.mxu0 0.0
        %4714 = vmatpush1.msra.mxu0 0.0
        %4715 = vmatprep.subr.mxu0 0.0
        %4716 = vmatpush1.msra.mxu0 0.0
        %4717 = vmatprep.mubr.f32.mxu0 0.0
        %v4718 = vand.u32 %v4489, 4294901760
        %v4719 = vsub.f32 %v4489, %v4718
        %4720 = vmatmul.mubr.f32.gmra.mrb[0].mxu0 %v4719
        %v4721 = vpop.f32.mrb[0].mxu0
        %v4722 = vadd.f32 %v4646, %v4721
        %v4723 = vpop.f32.mrb[0].mxu0
        %4724 = vdwg.mxu0
        %4725 = vmatprep.subr.mxu0 0.0
        %v4726 = vand.u32 %v4486, 4294901760
        %4727 = vmatpush1.msra.mxu0 %v4726
        %4728 = vmatprep.subr.mxu0 0.0
        %v4729 = vand.u32 %v4487, 4294901760
        %4730 = vmatpush1.msra.mxu0 %v4729
        %4731 = vmatprep.subr.mxu0 0.0
        %4732 = vmatpush1.msra.mxu0 0.0
        %4733 = vmatprep.subr.mxu0 0.0
        %4734 = vmatpush1.msra.mxu0 0.0
        %4735 = vmatprep.subr.mxu0 0.0
        %4736 = vmatpush1.msra.mxu0 0.0
        %4737 = vmatprep.subr.mxu0 0.0
        %4738 = vmatpush1.msra.mxu0 0.0
        %4739 = vmatprep.subr.mxu0 0.0
        %4740 = vmatpush1.msra.mxu0 0.0
        %4741 = vmatprep.subr.mxu0 0.0
        %4742 = vmatpush1.msra.mxu0 0.0
        %4743 = vmatprep.subr.mxu0 0.0
        %4744 = vmatpush1.msra.mxu0 0.0
        %4745 = vmatprep.subr.mxu0 0.0
        %4746 = vmatpush1.msra.mxu0 0.0
        %4747 = vmatprep.subr.mxu0 0.0
        %4748 = vmatpush1.msra.mxu0 0.0
        %4749 = vmatprep.subr.mxu0 0.0
        %4750 = vmatpush1.msra.mxu0 0.0
        %4751 = vmatprep.subr.mxu0 0.0
        %4752 = vmatpush1.msra.mxu0 0.0
        %4753 = vmatprep.subr.mxu0 0.0
        %4754 = vmatpush1.msra.mxu0 0.0
        %4755 = vmatprep.subr.mxu0 0.0
        %4756 = vmatpush1.msra.mxu0 0.0
        %4757 = vmatprep.subr.mxu0 0.0
        %4758 = vmatpush1.msra.mxu0 0.0
        %4759 = vmatprep.subr.mxu0 0.0
        %4760 = vmatpush1.msra.mxu0 0.0
        %4761 = vmatprep.subr.mxu0 0.0
        %4762 = vmatpush1.msra.mxu0 0.0
        %4763 = vmatprep.subr.mxu0 0.0
        %4764 = vmatpush1.msra.mxu0 0.0
        %4765 = vmatprep.subr.mxu0 0.0
        %4766 = vmatpush1.msra.mxu0 0.0
        %4767 = vmatprep.subr.mxu0 0.0
        %4768 = vmatpush1.msra.mxu0 0.0
        %4769 = vmatprep.subr.mxu0 0.0
        %4770 = vmatpush1.msra.mxu0 0.0
        %4771 = vmatprep.subr.mxu0 0.0
        %4772 = vmatpush1.msra.mxu0 0.0
        %4773 = vmatprep.subr.mxu0 0.0
        %4774 = vmatpush1.msra.mxu0 0.0
        %4775 = vmatprep.subr.mxu0 0.0
        %4776 = vmatpush1.msra.mxu0 0.0
        %4777 = vmatprep.subr.mxu0 0.0
        %4778 = vmatpush1.msra.mxu0 0.0
        %4779 = vmatprep.subr.mxu0 0.0
        %4780 = vmatpush1.msra.mxu0 0.0
        %4781 = vmatprep.subr.mxu0 0.0
        %4782 = vmatpush1.msra.mxu0 0.0
        %4783 = vmatprep.subr.mxu0 0.0
        %4784 = vmatpush1.msra.mxu0 0.0
        %4785 = vmatprep.subr.mxu0 0.0
        %4786 = vmatpush1.msra.mxu0 0.0
        %4787 = vmatprep.subr.mxu0 0.0
        %4788 = vmatpush1.msra.mxu0 0.0
        %4789 = vmatprep.subr.mxu0 0.0
        %4790 = vmatpush1.msra.mxu0 0.0
        %4791 = vmatprep.mubr.f32.mxu0 0.0
        %v4792 = vand.u32 %v4489, 4294901760
        %v4793 = vsub.f32 %v4489, %v4792
        %v4794 = vand.u32 %v4793, 4294901760
        %4795 = vmatmul.mubr.f32.gmra.mrb[0].mxu0 %v4794
        %v4796 = vpop.f32.mrb[0].mxu0
        %v4797 = vadd.f32 %v4722, %v4796
        %v4798 = vpop.f32.mrb[0].mxu0
        %4799 = vdwg.mxu0
        %4800 = vmatprep.subr.mxu0 0.0
        %v4801 = vand.u32 %v4486, 4294901760
        %v4802 = vsub.f32 %v4486, %v4801
        %v4803 = vand.u32 %v4802, 4294901760
        %4804 = vmatpush1.msra.mxu0 %v4803
        %4805 = vmatprep.subr.mxu0 0.0
        %v4806 = vand.u32 %v4487, 4294901760
        %v4807 = vsub.f32 %v4487, %v4806
        %v4808 = vand.u32 %v4807, 4294901760
        %4809 = vmatpush1.msra.mxu0 %v4808
        %4810 = vmatprep.subr.mxu0 0.0
        %4811 = vmatpush1.msra.mxu0 0.0
        %4812 = vmatprep.subr.mxu0 0.0
        %4813 = vmatpush1.msra.mxu0 0.0
        %4814 = vmatprep.subr.mxu0 0.0
        %4815 = vmatpush1.msra.mxu0 0.0
        %4816 = vmatprep.subr.mxu0 0.0
        %4817 = vmatpush1.msra.mxu0 0.0
        %4818 = vmatprep.subr.mxu0 0.0
        %4819 = vmatpush1.msra.mxu0 0.0
        %4820 = vmatprep.subr.mxu0 0.0
        %4821 = vmatpush1.msra.mxu0 0.0
        %4822 = vmatprep.subr.mxu0 0.0
        %4823 = vmatpush1.msra.mxu0 0.0
        %4824 = vmatprep.subr.mxu0 0.0
        %4825 = vmatpush1.msra.mxu0 0.0
        %4826 = vmatprep.subr.mxu0 0.0
        %4827 = vmatpush1.msra.mxu0 0.0
        %4828 = vmatprep.subr.mxu0 0.0
        %4829 = vmatpush1.msra.mxu0 0.0
        %4830 = vmatprep.subr.mxu0 0.0
        %4831 = vmatpush1.msra.mxu0 0.0
        %4832 = vmatprep.subr.mxu0 0.0
        %4833 = vmatpush1.msra.mxu0 0.0
        %4834 = vmatprep.subr.mxu0 0.0
        %4835 = vmatpush1.msra.mxu0 0.0
        %4836 = vmatprep.subr.mxu0 0.0
        %4837 = vmatpush1.msra.mxu0 0.0
        %4838 = vmatprep.subr.mxu0 0.0
        %4839 = vmatpush1.msra.mxu0 0.0
        %4840 = vmatprep.subr.mxu0 0.0
        %4841 = vmatpush1.msra.mxu0 0.0
        %4842 = vmatprep.subr.mxu0 0.0
        %4843 = vmatpush1.msra.mxu0 0.0
        %4844 = vmatprep.subr.mxu0 0.0
        %4845 = vmatpush1.msra.mxu0 0.0
        %4846 = vmatprep.subr.mxu0 0.0
        %4847 = vmatpush1.msra.mxu0 0.0
        %4848 = vmatprep.subr.mxu0 0.0
        %4849 = vmatpush1.msra.mxu0 0.0
        %4850 = vmatprep.subr.mxu0 0.0
        %4851 = vmatpush1.msra.mxu0 0.0
        %4852 = vmatprep.subr.mxu0 0.0
        %4853 = vmatpush1.msra.mxu0 0.0
        %4854 = vmatprep.subr.mxu0 0.0
        %4855 = vmatpush1.msra.mxu0 0.0
        %4856 = vmatprep.subr.mxu0 0.0
        %4857 = vmatpush1.msra.mxu0 0.0
        %4858 = vmatprep.subr.mxu0 0.0
        %4859 = vmatpush1.msra.mxu0 0.0
        %4860 = vmatprep.subr.mxu0 0.0
        %4861 = vmatpush1.msra.mxu0 0.0
        %4862 = vmatprep.subr.mxu0 0.0
        %4863 = vmatpush1.msra.mxu0 0.0
        %4864 = vmatprep.subr.mxu0 0.0
        %4865 = vmatpush1.msra.mxu0 0.0
        %4866 = vmatprep.subr.mxu0 0.0
        %4867 = vmatpush1.msra.mxu0 0.0
        %4868 = vmatprep.subr.mxu0 0.0
        %4869 = vmatpush1.msra.mxu0 0.0
        %4870 = vmatprep.mubr.f32.mxu0 0.0
        %v4871 = vand.u32 %v4489, 4294901760
        %4872 = vmatmul.mubr.f32.gmra.mrb[0].mxu0 %v4871
        %v4873 = vpop.f32.mrb[0].mxu0
        %v4874 = vadd.f32 %v4797, %v4873
        %v4875 = vpop.f32.mrb[0].mxu0
        %4876 = vdwg.mxu0
        %4877 = vmatprep.subr.mxu0 0.0
        %v4878 = vand.u32 %v4486, 4294901760
        %4879 = vmatpush1.msra.mxu0 %v4878
        %4880 = vmatprep.subr.mxu0 0.0
        %v4881 = vand.u32 %v4487, 4294901760
        %4882 = vmatpush1.msra.mxu0 %v4881
        %4883 = vmatprep.subr.mxu0 0.0
        %4884 = vmatpush1.msra.mxu0 0.0
        %4885 = vmatprep.subr.mxu0 0.0
        %4886 = vmatpush1.msra.mxu0 0.0
        %4887 = vmatprep.subr.mxu0 0.0
        %4888 = vmatpush1.msra.mxu0 0.0
        %4889 = vmatprep.subr.mxu0 0.0
        %4890 = vmatpush1.msra.mxu0 0.0
        %4891 = vmatprep.subr.mxu0 0.0
        %4892 = vmatpush1.msra.mxu0 0.0
        %4893 = vmatprep.subr.mxu0 0.0
        %4894 = vmatpush1.msra.mxu0 0.0
        %4895 = vmatprep.subr.mxu0 0.0
        %4896 = vmatpush1.msra.mxu0 0.0
        %4897 = vmatprep.subr.mxu0 0.0
        %4898 = vmatpush1.msra.mxu0 0.0
        %4899 = vmatprep.subr.mxu0 0.0
        %4900 = vmatpush1.msra.mxu0 0.0
        %4901 = vmatprep.subr.mxu0 0.0
        %4902 = vmatpush1.msra.mxu0 0.0
        %4903 = vmatprep.subr.mxu0 0.0
        %4904 = vmatpush1.msra.mxu0 0.0
        %4905 = vmatprep.subr.mxu0 0.0
        %4906 = vmatpush1.msra.mxu0 0.0
        %4907 = vmatprep.subr.mxu0 0.0
        %4908 = vmatpush1.msra.mxu0 0.0
        %4909 = vmatprep.subr.mxu0 0.0
        %4910 = vmatpush1.msra.mxu0 0.0
        %4911 = vmatprep.subr.mxu0 0.0
        %4912 = vmatpush1.msra.mxu0 0.0
        %4913 = vmatprep.subr.mxu0 0.0
        %4914 = vmatpush1.msra.mxu0 0.0
        %4915 = vmatprep.subr.mxu0 0.0
        %4916 = vmatpush1.msra.mxu0 0.0
        %4917 = vmatprep.subr.mxu0 0.0
        %4918 = vmatpush1.msra.mxu0 0.0
        %4919 = vmatprep.subr.mxu0 0.0
        %4920 = vmatpush1.msra.mxu0 0.0
        %4921 = vmatprep.subr.mxu0 0.0
        %4922 = vmatpush1.msra.mxu0 0.0
        %4923 = vmatprep.subr.mxu0 0.0
        %4924 = vmatpush1.msra.mxu0 0.0
        %4925 = vmatprep.subr.mxu0 0.0
        %4926 = vmatpush1.msra.mxu0 0.0
        %4927 = vmatprep.subr.mxu0 0.0
        %4928 = vmatpush1.msra.mxu0 0.0
        %4929 = vmatprep.subr.mxu0 0.0
        %4930 = vmatpush1.msra.mxu0 0.0
        %4931 = vmatprep.subr.mxu0 0.0
        %4932 = vmatpush1.msra.mxu0 0.0
        %4933 = vmatprep.subr.mxu0 0.0
        %4934 = vmatpush1.msra.mxu0 0.0
        %4935 = vmatprep.subr.mxu0 0.0
        %4936 = vmatpush1.msra.mxu0 0.0
        %4937 = vmatprep.subr.mxu0 0.0
        %4938 = vmatpush1.msra.mxu0 0.0
        %4939 = vmatprep.subr.mxu0 0.0
        %4940 = vmatpush1.msra.mxu0 0.0
        %4941 = vmatprep.subr.mxu0 0.0
        %4942 = vmatpush1.msra.mxu0 0.0
        %4943 = vmatprep.mubr.f32.mxu0 0.0
        %v4944 = vand.u32 %v4489, 4294901760
        %4945 = vmatmul.mubr.f32.gmra.mrb[0].mxu0 %v4944
        %v4946 = vpop.f32.mrb[0].mxu0
        %v4947 = vadd.f32 %v4874, %v4946
        %v4948 = vpop.f32.mrb[0].mxu0
        %4949 = vdwg.mxu0
        %v4950 = vadd.f32 %v4033, %v4947
        %s4951 = scalar_lea.vmem [#allocation6], 20
        %v4952 = vld [vmem:[%s4951] sm:$0xf]
        %v4954 = vsel %vm370, %v4952, 0
        %4956 = vmatprep.subr.mxu0 0.0
        %v4957 = vand.u32 %v368, 4294901760
        %4958 = vmatpush1.msra.mxu0 %v4957
        %4959 = vmatprep.subr.mxu0 0.0
        %4960 = vmatpush1.msra.mxu0 0.0
        %4961 = vmatprep.subr.mxu0 0.0
        %4962 = vmatpush1.msra.mxu0 0.0
        %4963 = vmatprep.subr.mxu0 0.0
        %4964 = vmatpush1.msra.mxu0 0.0
        %4965 = vmatprep.subr.mxu0 0.0
        %4966 = vmatpush1.msra.mxu0 0.0
        %4967 = vmatprep.subr.mxu0 0.0
        %4968 = vmatpush1.msra.mxu0 0.0
        %4969 = vmatprep.subr.mxu0 0.0
        %4970 = vmatpush1.msra.mxu0 0.0
        %4971 = vmatprep.subr.mxu0 0.0
        %4972 = vmatpush1.msra.mxu0 0.0
        %4973 = vmatprep.subr.mxu0 0.0
        %4974 = vmatpush1.msra.mxu0 0.0
        %4975 = vmatprep.subr.mxu0 0.0
        %4976 = vmatpush1.msra.mxu0 0.0
        %4977 = vmatprep.subr.mxu0 0.0
        %4978 = vmatpush1.msra.mxu0 0.0
        %4979 = vmatprep.subr.mxu0 0.0
        %4980 = vmatpush1.msra.mxu0 0.0
        %4981 = vmatprep.subr.mxu0 0.0
        %4982 = vmatpush1.msra.mxu0 0.0
        %4983 = vmatprep.subr.mxu0 0.0
        %4984 = vmatpush1.msra.mxu0 0.0
        %4985 = vmatprep.subr.mxu0 0.0
        %4986 = vmatpush1.msra.mxu0 0.0
        %4987 = vmatprep.subr.mxu0 0.0
        %4988 = vmatpush1.msra.mxu0 0.0
        %4989 = vmatprep.subr.mxu0 0.0
        %4990 = vmatpush1.msra.mxu0 0.0
        %4991 = vmatprep.subr.mxu0 0.0
        %4992 = vmatpush1.msra.mxu0 0.0
        %4993 = vmatprep.subr.mxu0 0.0
        %4994 = vmatpush1.msra.mxu0 0.0
        %4995 = vmatprep.subr.mxu0 0.0
        %4996 = vmatpush1.msra.mxu0 0.0
        %4997 = vmatprep.subr.mxu0 0.0
        %4998 = vmatpush1.msra.mxu0 0.0
        %4999 = vmatprep.subr.mxu0 0.0
        %5000 = vmatpush1.msra.mxu0 0.0
        %5001 = vmatprep.subr.mxu0 0.0
        %5002 = vmatpush1.msra.mxu0 0.0
        %5003 = vmatprep.subr.mxu0 0.0
        %5004 = vmatpush1.msra.mxu0 0.0
        %5005 = vmatprep.subr.mxu0 0.0
        %5006 = vmatpush1.msra.mxu0 0.0
        %5007 = vmatprep.subr.mxu0 0.0
        %5008 = vmatpush1.msra.mxu0 0.0
        %5009 = vmatprep.subr.mxu0 0.0
        %5010 = vmatpush1.msra.mxu0 0.0
        %5011 = vmatprep.subr.mxu0 0.0
        %5012 = vmatpush1.msra.mxu0 0.0
        %5013 = vmatprep.subr.mxu0 0.0
        %5014 = vmatpush1.msra.mxu0 0.0
        %5015 = vmatprep.subr.mxu0 0.0
        %5016 = vmatpush1.msra.mxu0 0.0
        %5017 = vmatprep.subr.mxu0 0.0
        %5018 = vmatpush1.msra.mxu0 0.0
        %5019 = vmatprep.subr.mxu0 0.0
        %5020 = vmatpush1.msra.mxu0 0.0
        %5021 = vmatprep.mubr.f32.mxu0 0.0
        %v5022 = vand.u32 %v4954, 4294901760
        %v5023 = vsub.f32 %v4954, %v5022
        %v5024 = vand.u32 %v5023, 4294901760
        %v5025 = vsub.f32 %v5023, %v5024
        %v5026 = vand.u32 %v5025, 4294901760
        %5027 = vmatmul.mubr.f32.gmra.mrb[0].mxu0 %v5026
        %v5028 = vpop.f32.mrb[0].mxu0
        %v5029 = vadd.f32 0.0, %v5028
        %v5030 = vpop.f32.mrb[0].mxu0
        %5031 = vdwg.mxu0
        %5032 = vmatprep.subr.mxu0 0.0
        %v5033 = vand.u32 %v368, 4294901760
        %v5034 = vsub.f32 %v368, %v5033
        %v5035 = vand.u32 %v5034, 4294901760
        %v5036 = vsub.f32 %v5034, %v5035
        %v5037 = vand.u32 %v5036, 4294901760
        %5038 = vmatpush1.msra.mxu0 %v5037
        %5039 = vmatprep.subr.mxu0 0.0
        %5040 = vmatpush1.msra.mxu0 0.0
        %5041 = vmatprep.subr.mxu0 0.0
        %5042 = vmatpush1.msra.mxu0 0.0
        %5043 = vmatprep.subr.mxu0 0.0
        %5044 = vmatpush1.msra.mxu0 0.0
        %5045 = vmatprep.subr.mxu0 0.0
        %5046 = vmatpush1.msra.mxu0 0.0
        %5047 = vmatprep.subr.mxu0 0.0
        %5048 = vmatpush1.msra.mxu0 0.0
        %5049 = vmatprep.subr.mxu0 0.0
        %5050 = vmatpush1.msra.mxu0 0.0
        %5051 = vmatprep.subr.mxu0 0.0
        %5052 = vmatpush1.msra.mxu0 0.0
        %5053 = vmatprep.subr.mxu0 0.0
        %5054 = vmatpush1.msra.mxu0 0.0
        %5055 = vmatprep.subr.mxu0 0.0
        %5056 = vmatpush1.msra.mxu0 0.0
        %5057 = vmatprep.subr.mxu0 0.0
        %5058 = vmatpush1.msra.mxu0 0.0
        %5059 = vmatprep.subr.mxu0 0.0
        %5060 = vmatpush1.msra.mxu0 0.0
        %5061 = vmatprep.subr.mxu0 0.0
        %5062 = vmatpush1.msra.mxu0 0.0
        %5063 = vmatprep.subr.mxu0 0.0
        %5064 = vmatpush1.msra.mxu0 0.0
        %5065 = vmatprep.subr.mxu0 0.0
        %5066 = vmatpush1.msra.mxu0 0.0
        %5067 = vmatprep.subr.mxu0 0.0
        %5068 = vmatpush1.msra.mxu0 0.0
        %5069 = vmatprep.subr.mxu0 0.0
        %5070 = vmatpush1.msra.mxu0 0.0
        %5071 = vmatprep.subr.mxu0 0.0
        %5072 = vmatpush1.msra.mxu0 0.0
        %5073 = vmatprep.subr.mxu0 0.0
        %5074 = vmatpush1.msra.mxu0 0.0
        %5075 = vmatprep.subr.mxu0 0.0
        %5076 = vmatpush1.msra.mxu0 0.0
        %5077 = vmatprep.subr.mxu0 0.0
        %5078 = vmatpush1.msra.mxu0 0.0
        %5079 = vmatprep.subr.mxu0 0.0
        %5080 = vmatpush1.msra.mxu0 0.0
        %5081 = vmatprep.subr.mxu0 0.0
        %5082 = vmatpush1.msra.mxu0 0.0
        %5083 = vmatprep.subr.mxu0 0.0
        %5084 = vmatpush1.msra.mxu0 0.0
        %5085 = vmatprep.subr.mxu0 0.0
        %5086 = vmatpush1.msra.mxu0 0.0
        %5087 = vmatprep.subr.mxu0 0.0
        %5088 = vmatpush1.msra.mxu0 0.0
        %5089 = vmatprep.subr.mxu0 0.0
        %5090 = vmatpush1.msra.mxu0 0.0
        %5091 = vmatprep.subr.mxu0 0.0
        %5092 = vmatpush1.msra.mxu0 0.0
        %5093 = vmatprep.subr.mxu0 0.0
        %5094 = vmatpush1.msra.mxu0 0.0
        %5095 = vmatprep.subr.mxu0 0.0
        %5096 = vmatpush1.msra.mxu0 0.0
        %5097 = vmatprep.subr.mxu0 0.0
        %5098 = vmatpush1.msra.mxu0 0.0
        %5099 = vmatprep.subr.mxu0 0.0
        %5100 = vmatpush1.msra.mxu0 0.0
        %5101 = vmatprep.mubr.f32.mxu0 0.0
        %v5102 = vand.u32 %v4954, 4294901760
        %5103 = vmatmul.mubr.f32.gmra.mrb[0].mxu0 %v5102
        %v5104 = vpop.f32.mrb[0].mxu0
        %v5105 = vadd.f32 %v5029, %v5104
        %v5106 = vpop.f32.mrb[0].mxu0
        %5107 = vdwg.mxu0
        %5108 = vmatprep.subr.mxu0 0.0
        %v5109 = vand.u32 %v368, 4294901760
        %v5110 = vsub.f32 %v368, %v5109
        %5111 = vmatpush1.msra.mxu0 %v5110
        %5112 = vmatprep.subr.mxu0 0.0
        %5113 = vmatpush1.msra.mxu0 0.0
        %5114 = vmatprep.subr.mxu0 0.0
        %5115 = vmatpush1.msra.mxu0 0.0
        %5116 = vmatprep.subr.mxu0 0.0
        %5117 = vmatpush1.msra.mxu0 0.0
        %5118 = vmatprep.subr.mxu0 0.0
        %5119 = vmatpush1.msra.mxu0 0.0
        %5120 = vmatprep.subr.mxu0 0.0
        %5121 = vmatpush1.msra.mxu0 0.0
        %5122 = vmatprep.subr.mxu0 0.0
        %5123 = vmatpush1.msra.mxu0 0.0
        %5124 = vmatprep.subr.mxu0 0.0
        %5125 = vmatpush1.msra.mxu0 0.0
        %5126 = vmatprep.subr.mxu0 0.0
        %5127 = vmatpush1.msra.mxu0 0.0
        %5128 = vmatprep.subr.mxu0 0.0
        %5129 = vmatpush1.msra.mxu0 0.0
        %5130 = vmatprep.subr.mxu0 0.0
        %5131 = vmatpush1.msra.mxu0 0.0
        %5132 = vmatprep.subr.mxu0 0.0
        %5133 = vmatpush1.msra.mxu0 0.0
        %5134 = vmatprep.subr.mxu0 0.0
        %5135 = vmatpush1.msra.mxu0 0.0
        %5136 = vmatprep.subr.mxu0 0.0
        %5137 = vmatpush1.msra.mxu0 0.0
        %5138 = vmatprep.subr.mxu0 0.0
        %5139 = vmatpush1.msra.mxu0 0.0
        %5140 = vmatprep.subr.mxu0 0.0
        %5141 = vmatpush1.msra.mxu0 0.0
        %5142 = vmatprep.subr.mxu0 0.0
        %5143 = vmatpush1.msra.mxu0 0.0
        %5144 = vmatprep.subr.mxu0 0.0
        %5145 = vmatpush1.msra.mxu0 0.0
        %5146 = vmatprep.subr.mxu0 0.0
        %5147 = vmatpush1.msra.mxu0 0.0
        %5148 = vmatprep.subr.mxu0 0.0
        %5149 = vmatpush1.msra.mxu0 0.0
        %5150 = vmatprep.subr.mxu0 0.0
        %5151 = vmatpush1.msra.mxu0 0.0
        %5152 = vmatprep.subr.mxu0 0.0
        %5153 = vmatpush1.msra.mxu0 0.0
        %5154 = vmatprep.subr.mxu0 0.0
        %5155 = vmatpush1.msra.mxu0 0.0
        %5156 = vmatprep.subr.mxu0 0.0
        %5157 = vmatpush1.msra.mxu0 0.0
        %5158 = vmatprep.subr.mxu0 0.0
        %5159 = vmatpush1.msra.mxu0 0.0
        %5160 = vmatprep.subr.mxu0 0.0
        %5161 = vmatpush1.msra.mxu0 0.0
        %5162 = vmatprep.subr.mxu0 0.0
        %5163 = vmatpush1.msra.mxu0 0.0
        %5164 = vmatprep.subr.mxu0 0.0
        %5165 = vmatpush1.msra.mxu0 0.0
        %5166 = vmatprep.subr.mxu0 0.0
        %5167 = vmatpush1.msra.mxu0 0.0
        %5168 = vmatprep.subr.mxu0 0.0
        %5169 = vmatpush1.msra.mxu0 0.0
        %5170 = vmatprep.subr.mxu0 0.0
        %5171 = vmatpush1.msra.mxu0 0.0
        %5172 = vmatprep.subr.mxu0 0.0
        %5173 = vmatpush1.msra.mxu0 0.0
        %5174 = vmatprep.mubr.f32.mxu0 0.0
        %v5175 = vand.u32 %v4954, 4294901760
        %v5176 = vsub.f32 %v4954, %v5175
        %5177 = vmatmul.mubr.f32.gmra.mrb[0].mxu0 %v5176
        %v5178 = vpop.f32.mrb[0].mxu0
        %v5179 = vadd.f32 %v5105, %v5178
        %v5180 = vpop.f32.mrb[0].mxu0
        %5181 = vdwg.mxu0
        %5182 = vmatprep.subr.mxu0 0.0
        %v5183 = vand.u32 %v368, 4294901760
        %5184 = vmatpush1.msra.mxu0 %v5183
        %5185 = vmatprep.subr.mxu0 0.0
        %5186 = vmatpush1.msra.mxu0 0.0
        %5187 = vmatprep.subr.mxu0 0.0
        %5188 = vmatpush1.msra.mxu0 0.0
        %5189 = vmatprep.subr.mxu0 0.0
        %5190 = vmatpush1.msra.mxu0 0.0
        %5191 = vmatprep.subr.mxu0 0.0
        %5192 = vmatpush1.msra.mxu0 0.0
        %5193 = vmatprep.subr.mxu0 0.0
        %5194 = vmatpush1.msra.mxu0 0.0
        %5195 = vmatprep.subr.mxu0 0.0
        %5196 = vmatpush1.msra.mxu0 0.0
        %5197 = vmatprep.subr.mxu0 0.0
        %5198 = vmatpush1.msra.mxu0 0.0
        %5199 = vmatprep.subr.mxu0 0.0
        %5200 = vmatpush1.msra.mxu0 0.0
        %5201 = vmatprep.subr.mxu0 0.0
        %5202 = vmatpush1.msra.mxu0 0.0
        %5203 = vmatprep.subr.mxu0 0.0
        %5204 = vmatpush1.msra.mxu0 0.0
        %5205 = vmatprep.subr.mxu0 0.0
        %5206 = vmatpush1.msra.mxu0 0.0
        %5207 = vmatprep.subr.mxu0 0.0
        %5208 = vmatpush1.msra.mxu0 0.0
        %5209 = vmatprep.subr.mxu0 0.0
        %5210 = vmatpush1.msra.mxu0 0.0
        %5211 = vmatprep.subr.mxu0 0.0
        %5212 = vmatpush1.msra.mxu0 0.0
        %5213 = vmatprep.subr.mxu0 0.0
        %5214 = vmatpush1.msra.mxu0 0.0
        %5215 = vmatprep.subr.mxu0 0.0
        %5216 = vmatpush1.msra.mxu0 0.0
        %5217 = vmatprep.subr.mxu0 0.0
        %5218 = vmatpush1.msra.mxu0 0.0
        %5219 = vmatprep.subr.mxu0 0.0
        %5220 = vmatpush1.msra.mxu0 0.0
        %5221 = vmatprep.subr.mxu0 0.0
        %5222 = vmatpush1.msra.mxu0 0.0
        %5223 = vmatprep.subr.mxu0 0.0
        %5224 = vmatpush1.msra.mxu0 0.0
        %5225 = vmatprep.subr.mxu0 0.0
        %5226 = vmatpush1.msra.mxu0 0.0
        %5227 = vmatprep.subr.mxu0 0.0
        %5228 = vmatpush1.msra.mxu0 0.0
        %5229 = vmatprep.subr.mxu0 0.0
        %5230 = vmatpush1.msra.mxu0 0.0
        %5231 = vmatprep.subr.mxu0 0.0
        %5232 = vmatpush1.msra.mxu0 0.0
        %5233 = vmatprep.subr.mxu0 0.0
        %5234 = vmatpush1.msra.mxu0 0.0
        %5235 = vmatprep.subr.mxu0 0.0
        %5236 = vmatpush1.msra.mxu0 0.0
        %5237 = vmatprep.subr.mxu0 0.0
        %5238 = vmatpush1.msra.mxu0 0.0
        %5239 = vmatprep.subr.mxu0 0.0
        %5240 = vmatpush1.msra.mxu0 0.0
        %5241 = vmatprep.subr.mxu0 0.0
        %5242 = vmatpush1.msra.mxu0 0.0
        %5243 = vmatprep.subr.mxu0 0.0
        %5244 = vmatpush1.msra.mxu0 0.0
        %5245 = vmatprep.subr.mxu0 0.0
        %5246 = vmatpush1.msra.mxu0 0.0
        %5247 = vmatprep.mubr.f32.mxu0 0.0
        %v5248 = vand.u32 %v4954, 4294901760
        %v5249 = vsub.f32 %v4954, %v5248
        %v5250 = vand.u32 %v5249, 4294901760
        %5251 = vmatmul.mubr.f32.gmra.mrb[0].mxu0 %v5250
        %v5252 = vpop.f32.mrb[0].mxu0
        %v5253 = vadd.f32 %v5179, %v5252
        %v5254 = vpop.f32.mrb[0].mxu0
        %5255 = vdwg.mxu0
        %5256 = vmatprep.subr.mxu0 0.0
        %v5257 = vand.u32 %v368, 4294901760
        %v5258 = vsub.f32 %v368, %v5257
        %v5259 = vand.u32 %v5258, 4294901760
        %5260 = vmatpush1.msra.mxu0 %v5259
        %5261 = vmatprep.subr.mxu0 0.0
        %5262 = vmatpush1.msra.mxu0 0.0
        %5263 = vmatprep.subr.mxu0 0.0
        %5264 = vmatpush1.msra.mxu0 0.0
        %5265 = vmatprep.subr.mxu0 0.0
        %5266 = vmatpush1.msra.mxu0 0.0
        %5267 = vmatprep.subr.mxu0 0.0
        %5268 = vmatpush1.msra.mxu0 0.0
        %5269 = vmatprep.subr.mxu0 0.0
        %5270 = vmatpush1.msra.mxu0 0.0
        %5271 = vmatprep.subr.mxu0 0.0
        %5272 = vmatpush1.msra.mxu0 0.0
        %5273 = vmatprep.subr.mxu0 0.0
        %5274 = vmatpush1.msra.mxu0 0.0
        %5275 = vmatprep.subr.mxu0 0.0
        %5276 = vmatpush1.msra.mxu0 0.0
        %5277 = vmatprep.subr.mxu0 0.0
        %5278 = vmatpush1.msra.mxu0 0.0
        %5279 = vmatprep.subr.mxu0 0.0
        %5280 = vmatpush1.msra.mxu0 0.0
        %5281 = vmatprep.subr.mxu0 0.0
        %5282 = vmatpush1.msra.mxu0 0.0
        %5283 = vmatprep.subr.mxu0 0.0
        %5284 = vmatpush1.msra.mxu0 0.0
        %5285 = vmatprep.subr.mxu0 0.0
        %5286 = vmatpush1.msra.mxu0 0.0
        %5287 = vmatprep.subr.mxu0 0.0
        %5288 = vmatpush1.msra.mxu0 0.0
        %5289 = vmatprep.subr.mxu0 0.0
        %5290 = vmatpush1.msra.mxu0 0.0
        %5291 = vmatprep.subr.mxu0 0.0
        %5292 = vmatpush1.msra.mxu0 0.0
        %5293 = vmatprep.subr.mxu0 0.0
        %5294 = vmatpush1.msra.mxu0 0.0
        %5295 = vmatprep.subr.mxu0 0.0
        %5296 = vmatpush1.msra.mxu0 0.0
        %5297 = vmatprep.subr.mxu0 0.0
        %5298 = vmatpush1.msra.mxu0 0.0
        %5299 = vmatprep.subr.mxu0 0.0
        %5300 = vmatpush1.msra.mxu0 0.0
        %5301 = vmatprep.subr.mxu0 0.0
        %5302 = vmatpush1.msra.mxu0 0.0
        %5303 = vmatprep.subr.mxu0 0.0
        %5304 = vmatpush1.msra.mxu0 0.0
        %5305 = vmatprep.subr.mxu0 0.0
        %5306 = vmatpush1.msra.mxu0 0.0
        %5307 = vmatprep.subr.mxu0 0.0
        %5308 = vmatpush1.msra.mxu0 0.0
        %5309 = vmatprep.subr.mxu0 0.0
        %5310 = vmatpush1.msra.mxu0 0.0
        %5311 = vmatprep.subr.mxu0 0.0
        %5312 = vmatpush1.msra.mxu0 0.0
        %5313 = vmatprep.subr.mxu0 0.0
        %5314 = vmatpush1.msra.mxu0 0.0
        %5315 = vmatprep.subr.mxu0 0.0
        %5316 = vmatpush1.msra.mxu0 0.0
        %5317 = vmatprep.subr.mxu0 0.0
        %5318 = vmatpush1.msra.mxu0 0.0
        %5319 = vmatprep.subr.mxu0 0.0
        %5320 = vmatpush1.msra.mxu0 0.0
        %5321 = vmatprep.subr.mxu0 0.0
        %5322 = vmatpush1.msra.mxu0 0.0
        %5323 = vmatprep.mubr.f32.mxu0 0.0
        %v5324 = vand.u32 %v4954, 4294901760
        %5325 = vmatmul.mubr.f32.gmra.mrb[0].mxu0 %v5324
        %v5326 = vpop.f32.mrb[0].mxu0
        %v5327 = vadd.f32 %v5253, %v5326
        %v5328 = vpop.f32.mrb[0].mxu0
        %5329 = vdwg.mxu0
        %5330 = vmatprep.subr.mxu0 0.0
        %v5331 = vand.u32 %v368, 4294901760
        %5332 = vmatpush1.msra.mxu0 %v5331
        %5333 = vmatprep.subr.mxu0 0.0
        %5334 = vmatpush1.msra.mxu0 0.0
        %5335 = vmatprep.subr.mxu0 0.0
        %5336 = vmatpush1.msra.mxu0 0.0
        %5337 = vmatprep.subr.mxu0 0.0
        %5338 = vmatpush1.msra.mxu0 0.0
        %5339 = vmatprep.subr.mxu0 0.0
        %5340 = vmatpush1.msra.mxu0 0.0
        %5341 = vmatprep.subr.mxu0 0.0
        %5342 = vmatpush1.msra.mxu0 0.0
        %5343 = vmatprep.subr.mxu0 0.0
        %5344 = vmatpush1.msra.mxu0 0.0
        %5345 = vmatprep.subr.mxu0 0.0
        %5346 = vmatpush1.msra.mxu0 0.0
        %5347 = vmatprep.subr.mxu0 0.0
        %5348 = vmatpush1.msra.mxu0 0.0
        %5349 = vmatprep.subr.mxu0 0.0
        %5350 = vmatpush1.msra.mxu0 0.0
        %5351 = vmatprep.subr.mxu0 0.0
        %5352 = vmatpush1.msra.mxu0 0.0
        %5353 = vmatprep.subr.mxu0 0.0
        %5354 = vmatpush1.msra.mxu0 0.0
        %5355 = vmatprep.subr.mxu0 0.0
        %5356 = vmatpush1.msra.mxu0 0.0
        %5357 = vmatprep.subr.mxu0 0.0
        %5358 = vmatpush1.msra.mxu0 0.0
        %5359 = vmatprep.subr.mxu0 0.0
        %5360 = vmatpush1.msra.mxu0 0.0
        %5361 = vmatprep.subr.mxu0 0.0
        %5362 = vmatpush1.msra.mxu0 0.0
        %5363 = vmatprep.subr.mxu0 0.0
        %5364 = vmatpush1.msra.mxu0 0.0
        %5365 = vmatprep.subr.mxu0 0.0
        %5366 = vmatpush1.msra.mxu0 0.0
        %5367 = vmatprep.subr.mxu0 0.0
        %5368 = vmatpush1.msra.mxu0 0.0
        %5369 = vmatprep.subr.mxu0 0.0
        %5370 = vmatpush1.msra.mxu0 0.0
        %5371 = vmatprep.subr.mxu0 0.0
        %5372 = vmatpush1.msra.mxu0 0.0
        %5373 = vmatprep.subr.mxu0 0.0
        %5374 = vmatpush1.msra.mxu0 0.0
        %5375 = vmatprep.subr.mxu0 0.0
        %5376 = vmatpush1.msra.mxu0 0.0
        %5377 = vmatprep.subr.mxu0 0.0
        %5378 = vmatpush1.msra.mxu0 0.0
        %5379 = vmatprep.subr.mxu0 0.0
        %5380 = vmatpush1.msra.mxu0 0.0
        %5381 = vmatprep.subr.mxu0 0.0
        %5382 = vmatpush1.msra.mxu0 0.0
        %5383 = vmatprep.subr.mxu0 0.0
        %5384 = vmatpush1.msra.mxu0 0.0
        %5385 = vmatprep.subr.mxu0 0.0
        %5386 = vmatpush1.msra.mxu0 0.0
        %5387 = vmatprep.subr.mxu0 0.0
        %5388 = vmatpush1.msra.mxu0 0.0
        %5389 = vmatprep.subr.mxu0 0.0
        %5390 = vmatpush1.msra.mxu0 0.0
        %5391 = vmatprep.subr.mxu0 0.0
        %5392 = vmatpush1.msra.mxu0 0.0
        %5393 = vmatprep.subr.mxu0 0.0
        %5394 = vmatpush1.msra.mxu0 0.0
        %5395 = vmatprep.mubr.f32.mxu0 0.0
        %v5396 = vand.u32 %v4954, 4294901760
        %5397 = vmatmul.mubr.f32.gmra.mrb[0].mxu0 %v5396
        %v5398 = vpop.f32.mrb[0].mxu0
        %v5399 = vadd.f32 %v5327, %v5398
        %v5400 = vpop.f32.mrb[0].mxu0
        %5401 = vdwg.mxu0
        %s5402 = scalar_lea.vmem [#allocation8], 80
        %v5403 = vld [vmem:[%s5402] sm:$0xff]
        %v5404 = vld [vmem:[%s5402 + $0x8] sm:$0xff]
        %v5406 = vsel %vm267, %v5399, 0
        %5408 = vmatprep.subr.mxu0 0.0
        %v5409 = vand.u32 %v5403, 4294901760
        %5410 = vmatpush1.msra.mxu0 %v5409
        %5411 = vmatprep.subr.mxu0 0.0
        %v5412 = vand.u32 %v5404, 4294901760
        %5413 = vmatpush1.msra.mxu0 %v5412
        %5414 = vmatprep.subr.mxu0 0.0
        %5415 = vmatpush1.msra.mxu0 0.0
        %5416 = vmatprep.subr.mxu0 0.0
        %5417 = vmatpush1.msra.mxu0 0.0
        %5418 = vmatprep.subr.mxu0 0.0
        %5419 = vmatpush1.msra.mxu0 0.0
        %5420 = vmatprep.subr.mxu0 0.0
        %5421 = vmatpush1.msra.mxu0 0.0
        %5422 = vmatprep.subr.mxu0 0.0
        %5423 = vmatpush1.msra.mxu0 0.0
        %5424 = vmatprep.subr.mxu0 0.0
        %5425 = vmatpush1.msra.mxu0 0.0
        %5426 = vmatprep.subr.mxu0 0.0
        %5427 = vmatpush1.msra.mxu0 0.0
        %5428 = vmatprep.subr.mxu0 0.0
        %5429 = vmatpush1.msra.mxu0 0.0
        %5430 = vmatprep.subr.mxu0 0.0
        %5431 = vmatpush1.msra.mxu0 0.0
        %5432 = vmatprep.subr.mxu0 0.0
        %5433 = vmatpush1.msra.mxu0 0.0
        %5434 = vmatprep.subr.mxu0 0.0
        %5435 = vmatpush1.msra.mxu0 0.0
        %5436 = vmatprep.subr.mxu0 0.0
        %5437 = vmatpush1.msra.mxu0 0.0
        %5438 = vmatprep.subr.mxu0 0.0
        %5439 = vmatpush1.msra.mxu0 0.0
        %5440 = vmatprep.subr.mxu0 0.0
        %5441 = vmatpush1.msra.mxu0 0.0
        %5442 = vmatprep.subr.mxu0 0.0
        %5443 = vmatpush1.msra.mxu0 0.0
        %5444 = vmatprep.subr.mxu0 0.0
        %5445 = vmatpush1.msra.mxu0 0.0
        %5446 = vmatprep.subr.mxu0 0.0
        %5447 = vmatpush1.msra.mxu0 0.0
        %5448 = vmatprep.subr.mxu0 0.0
        %5449 = vmatpush1.msra.mxu0 0.0
        %5450 = vmatprep.subr.mxu0 0.0
        %5451 = vmatpush1.msra.mxu0 0.0
        %5452 = vmatprep.subr.mxu0 0.0
        %5453 = vmatpush1.msra.mxu0 0.0
        %5454 = vmatprep.subr.mxu0 0.0
        %5455 = vmatpush1.msra.mxu0 0.0
        %5456 = vmatprep.subr.mxu0 0.0
        %5457 = vmatpush1.msra.mxu0 0.0
        %5458 = vmatprep.subr.mxu0 0.0
        %5459 = vmatpush1.msra.mxu0 0.0
        %5460 = vmatprep.subr.mxu0 0.0
        %5461 = vmatpush1.msra.mxu0 0.0
        %5462 = vmatprep.subr.mxu0 0.0
        %5463 = vmatpush1.msra.mxu0 0.0
        %5464 = vmatprep.subr.mxu0 0.0
        %5465 = vmatpush1.msra.mxu0 0.0
        %5466 = vmatprep.subr.mxu0 0.0
        %5467 = vmatpush1.msra.mxu0 0.0
        %5468 = vmatprep.subr.mxu0 0.0
        %5469 = vmatpush1.msra.mxu0 0.0
        %5470 = vmatprep.subr.mxu0 0.0
        %5471 = vmatpush1.msra.mxu0 0.0
        %5472 = vmatprep.subr.mxu0 0.0
        %5473 = vmatpush1.msra.mxu0 0.0
        %5474 = vmatprep.mubr.f32.mxu0 0.0
        %v5475 = vand.u32 %v5406, 4294901760
        %v5476 = vsub.f32 %v5406, %v5475
        %v5477 = vand.u32 %v5476, 4294901760
        %v5478 = vsub.f32 %v5476, %v5477
        %v5479 = vand.u32 %v5478, 4294901760
        %5480 = vmatmul.mubr.f32.gmra.mrb[0].mxu0 %v5479
        %v5481 = vpop.f32.mrb[0].mxu0
        %v5482 = vadd.f32 0.0, %v5481
        %v5483 = vpop.f32.mrb[0].mxu0
        %5484 = vdwg.mxu0
        %5485 = vmatprep.subr.mxu0 0.0
        %v5486 = vand.u32 %v5403, 4294901760
        %v5487 = vsub.f32 %v5403, %v5486
        %v5488 = vand.u32 %v5487, 4294901760
        %v5489 = vsub.f32 %v5487, %v5488
        %v5490 = vand.u32 %v5489, 4294901760
        %5491 = vmatpush1.msra.mxu0 %v5490
        %5492 = vmatprep.subr.mxu0 0.0
        %v5493 = vand.u32 %v5404, 4294901760
        %v5494 = vsub.f32 %v5404, %v5493
        %v5495 = vand.u32 %v5494, 4294901760
        %v5496 = vsub.f32 %v5494, %v5495
        %v5497 = vand.u32 %v5496, 4294901760
        %5498 = vmatpush1.msra.mxu0 %v5497
        %5499 = vmatprep.subr.mxu0 0.0
        %5500 = vmatpush1.msra.mxu0 0.0
        %5501 = vmatprep.subr.mxu0 0.0
        %5502 = vmatpush1.msra.mxu0 0.0
        %5503 = vmatprep.subr.mxu0 0.0
        %5504 = vmatpush1.msra.mxu0 0.0
        %5505 = vmatprep.subr.mxu0 0.0
        %5506 = vmatpush1.msra.mxu0 0.0
        %5507 = vmatprep.subr.mxu0 0.0
        %5508 = vmatpush1.msra.mxu0 0.0
        %5509 = vmatprep.subr.mxu0 0.0
        %5510 = vmatpush1.msra.mxu0 0.0
        %5511 = vmatprep.subr.mxu0 0.0
        %5512 = vmatpush1.msra.mxu0 0.0
        %5513 = vmatprep.subr.mxu0 0.0
        %5514 = vmatpush1.msra.mxu0 0.0
        %5515 = vmatprep.subr.mxu0 0.0
        %5516 = vmatpush1.msra.mxu0 0.0
        %5517 = vmatprep.subr.mxu0 0.0
        %5518 = vmatpush1.msra.mxu0 0.0
        %5519 = vmatprep.subr.mxu0 0.0
        %5520 = vmatpush1.msra.mxu0 0.0
        %5521 = vmatprep.subr.mxu0 0.0
        %5522 = vmatpush1.msra.mxu0 0.0
        %5523 = vmatprep.subr.mxu0 0.0
        %5524 = vmatpush1.msra.mxu0 0.0
        %5525 = vmatprep.subr.mxu0 0.0
        %5526 = vmatpush1.msra.mxu0 0.0
        %5527 = vmatprep.subr.mxu0 0.0
        %5528 = vmatpush1.msra.mxu0 0.0
        %5529 = vmatprep.subr.mxu0 0.0
        %5530 = vmatpush1.msra.mxu0 0.0
        %5531 = vmatprep.subr.mxu0 0.0
        %5532 = vmatpush1.msra.mxu0 0.0
        %5533 = vmatprep.subr.mxu0 0.0
        %5534 = vmatpush1.msra.mxu0 0.0
        %5535 = vmatprep.subr.mxu0 0.0
        %5536 = vmatpush1.msra.mxu0 0.0
        %5537 = vmatprep.subr.mxu0 0.0
        %5538 = vmatpush1.msra.mxu0 0.0
        %5539 = vmatprep.subr.mxu0 0.0
        %5540 = vmatpush1.msra.mxu0 0.0
        %5541 = vmatprep.subr.mxu0 0.0
        %5542 = vmatpush1.msra.mxu0 0.0
        %5543 = vmatprep.subr.mxu0 0.0
        %5544 = vmatpush1.msra.mxu0 0.0
        %5545 = vmatprep.subr.mxu0 0.0
        %5546 = vmatpush1.msra.mxu0 0.0
        %5547 = vmatprep.subr.mxu0 0.0
        %5548 = vmatpush1.msra.mxu0 0.0
        %5549 = vmatprep.subr.mxu0 0.0
        %5550 = vmatpush1.msra.mxu0 0.0
        %5551 = vmatprep.subr.mxu0 0.0
        %5552 = vmatpush1.msra.mxu0 0.0
        %5553 = vmatprep.subr.mxu0 0.0
        %5554 = vmatpush1.msra.mxu0 0.0
        %5555 = vmatprep.subr.mxu0 0.0
        %5556 = vmatpush1.msra.mxu0 0.0
        %5557 = vmatprep.subr.mxu0 0.0
        %5558 = vmatpush1.msra.mxu0 0.0
        %5559 = vmatprep.mubr.f32.mxu0 0.0
        %v5560 = vand.u32 %v5406, 4294901760
        %5561 = vmatmul.mubr.f32.gmra.mrb[0].mxu0 %v5560
        %v5562 = vpop.f32.mrb[0].mxu0
        %v5563 = vadd.f32 %v5482, %v5562
        %v5564 = vpop.f32.mrb[0].mxu0
        %5565 = vdwg.mxu0
        %5566 = vmatprep.subr.mxu0 0.0
        %v5567 = vand.u32 %v5403, 4294901760
        %v5568 = vsub.f32 %v5403, %v5567
        %5569 = vmatpush1.msra.mxu0 %v5568
        %5570 = vmatprep.subr.mxu0 0.0
        %v5571 = vand.u32 %v5404, 4294901760
        %v5572 = vsub.f32 %v5404, %v5571
        %5573 = vmatpush1.msra.mxu0 %v5572
        %5574 = vmatprep.subr.mxu0 0.0
        %5575 = vmatpush1.msra.mxu0 0.0
        %5576 = vmatprep.subr.mxu0 0.0
        %5577 = vmatpush1.msra.mxu0 0.0
        %5578 = vmatprep.subr.mxu0 0.0
        %5579 = vmatpush1.msra.mxu0 0.0
        %5580 = vmatprep.subr.mxu0 0.0
        %5581 = vmatpush1.msra.mxu0 0.0
        %5582 = vmatprep.subr.mxu0 0.0
        %5583 = vmatpush1.msra.mxu0 0.0
        %5584 = vmatprep.subr.mxu0 0.0
        %5585 = vmatpush1.msra.mxu0 0.0
        %5586 = vmatprep.subr.mxu0 0.0
        %5587 = vmatpush1.msra.mxu0 0.0
        %5588 = vmatprep.subr.mxu0 0.0
        %5589 = vmatpush1.msra.mxu0 0.0
        %5590 = vmatprep.subr.mxu0 0.0
        %5591 = vmatpush1.msra.mxu0 0.0
        %5592 = vmatprep.subr.mxu0 0.0
        %5593 = vmatpush1.msra.mxu0 0.0
        %5594 = vmatprep.subr.mxu0 0.0
        %5595 = vmatpush1.msra.mxu0 0.0
        %5596 = vmatprep.subr.mxu0 0.0
        %5597 = vmatpush1.msra.mxu0 0.0
        %5598 = vmatprep.subr.mxu0 0.0
        %5599 = vmatpush1.msra.mxu0 0.0
        %5600 = vmatprep.subr.mxu0 0.0
        %5601 = vmatpush1.msra.mxu0 0.0
        %5602 = vmatprep.subr.mxu0 0.0
        %5603 = vmatpush1.msra.mxu0 0.0
        %5604 = vmatprep.subr.mxu0 0.0
        %5605 = vmatpush1.msra.mxu0 0.0
        %5606 = vmatprep.subr.mxu0 0.0
        %5607 = vmatpush1.msra.mxu0 0.0
        %5608 = vmatprep.subr.mxu0 0.0
        %5609 = vmatpush1.msra.mxu0 0.0
        %5610 = vmatprep.subr.mxu0 0.0
        %5611 = vmatpush1.msra.mxu0 0.0
        %5612 = vmatprep.subr.mxu0 0.0
        %5613 = vmatpush1.msra.mxu0 0.0
        %5614 = vmatprep.subr.mxu0 0.0
        %5615 = vmatpush1.msra.mxu0 0.0
        %5616 = vmatprep.subr.mxu0 0.0
        %5617 = vmatpush1.msra.mxu0 0.0
        %5618 = vmatprep.subr.mxu0 0.0
        %5619 = vmatpush1.msra.mxu0 0.0
        %5620 = vmatprep.subr.mxu0 0.0
        %5621 = vmatpush1.msra.mxu0 0.0
        %5622 = vmatprep.subr.mxu0 0.0
        %5623 = vmatpush1.msra.mxu0 0.0
        %5624 = vmatprep.subr.mxu0 0.0
        %5625 = vmatpush1.msra.mxu0 0.0
        %5626 = vmatprep.subr.mxu0 0.0
        %5627 = vmatpush1.msra.mxu0 0.0
        %5628 = vmatprep.subr.mxu0 0.0
        %5629 = vmatpush1.msra.mxu0 0.0
        %5630 = vmatprep.subr.mxu0 0.0
        %5631 = vmatpush1.msra.mxu0 0.0
        %5632 = vmatprep.subr.mxu0 0.0
        %5633 = vmatpush1.msra.mxu0 0.0
        %5634 = vmatprep.mubr.f32.mxu0 0.0
        %v5635 = vand.u32 %v5406, 4294901760
        %v5636 = vsub.f32 %v5406, %v5635
        %5637 = vmatmul.mubr.f32.gmra.mrb[0].mxu0 %v5636
        %v5638 = vpop.f32.mrb[0].mxu0
        %v5639 = vadd.f32 %v5563, %v5638
        %v5640 = vpop.f32.mrb[0].mxu0
        %5641 = vdwg.mxu0
        %5642 = vmatprep.subr.mxu0 0.0
        %v5643 = vand.u32 %v5403, 4294901760
        %5644 = vmatpush1.msra.mxu0 %v5643
        %5645 = vmatprep.subr.mxu0 0.0
        %v5646 = vand.u32 %v5404, 4294901760
        %5647 = vmatpush1.msra.mxu0 %v5646
        %5648 = vmatprep.subr.mxu0 0.0
        %5649 = vmatpush1.msra.mxu0 0.0
        %5650 = vmatprep.subr.mxu0 0.0
        %5651 = vmatpush1.msra.mxu0 0.0
        %5652 = vmatprep.subr.mxu0 0.0
        %5653 = vmatpush1.msra.mxu0 0.0
        %5654 = vmatprep.subr.mxu0 0.0
        %5655 = vmatpush1.msra.mxu0 0.0
        %5656 = vmatprep.subr.mxu0 0.0
        %5657 = vmatpush1.msra.mxu0 0.0
        %5658 = vmatprep.subr.mxu0 0.0
        %5659 = vmatpush1.msra.mxu0 0.0
        %5660 = vmatprep.subr.mxu0 0.0
        %5661 = vmatpush1.msra.mxu0 0.0
        %5662 = vmatprep.subr.mxu0 0.0
        %5663 = vmatpush1.msra.mxu0 0.0
        %5664 = vmatprep.subr.mxu0 0.0
        %5665 = vmatpush1.msra.mxu0 0.0
        %5666 = vmatprep.subr.mxu0 0.0
        %5667 = vmatpush1.msra.mxu0 0.0
        %5668 = vmatprep.subr.mxu0 0.0
        %5669 = vmatpush1.msra.mxu0 0.0
        %5670 = vmatprep.subr.mxu0 0.0
        %5671 = vmatpush1.msra.mxu0 0.0
        %5672 = vmatprep.subr.mxu0 0.0
        %5673 = vmatpush1.msra.mxu0 0.0
        %5674 = vmatprep.subr.mxu0 0.0
        %5675 = vmatpush1.msra.mxu0 0.0
        %5676 = vmatprep.subr.mxu0 0.0
        %5677 = vmatpush1.msra.mxu0 0.0
        %5678 = vmatprep.subr.mxu0 0.0
        %5679 = vmatpush1.msra.mxu0 0.0
        %5680 = vmatprep.subr.mxu0 0.0
        %5681 = vmatpush1.msra.mxu0 0.0
        %5682 = vmatprep.subr.mxu0 0.0
        %5683 = vmatpush1.msra.mxu0 0.0
        %5684 = vmatprep.subr.mxu0 0.0
        %5685 = vmatpush1.msra.mxu0 0.0
        %5686 = vmatprep.subr.mxu0 0.0
        %5687 = vmatpush1.msra.mxu0 0.0
        %5688 = vmatprep.subr.mxu0 0.0
        %5689 = vmatpush1.msra.mxu0 0.0
        %5690 = vmatprep.subr.mxu0 0.0
        %5691 = vmatpush1.msra.mxu0 0.0
        %5692 = vmatprep.subr.mxu0 0.0
        %5693 = vmatpush1.msra.mxu0 0.0
        %5694 = vmatprep.subr.mxu0 0.0
        %5695 = vmatpush1.msra.mxu0 0.0
        %5696 = vmatprep.subr.mxu0 0.0
        %5697 = vmatpush1.msra.mxu0 0.0
        %5698 = vmatprep.subr.mxu0 0.0
        %5699 = vmatpush1.msra.mxu0 0.0
        %5700 = vmatprep.subr.mxu0 0.0
        %5701 = vmatpush1.msra.mxu0 0.0
        %5702 = vmatprep.subr.mxu0 0.0
        %5703 = vmatpush1.msra.mxu0 0.0
        %5704 = vmatprep.subr.mxu0 0.0
        %5705 = vmatpush1.msra.mxu0 0.0
        %5706 = vmatprep.subr.mxu0 0.0
        %5707 = vmatpush1.msra.mxu0 0.0
        %5708 = vmatprep.mubr.f32.mxu0 0.0
        %v5709 = vand.u32 %v5406, 4294901760
        %v5710 = vsub.f32 %v5406, %v5709
        %v5711 = vand.u32 %v5710, 4294901760
        %5712 = vmatmul.mubr.f32.gmra.mrb[0].mxu0 %v5711
        %v5713 = vpop.f32.mrb[0].mxu0
        %v5714 = vadd.f32 %v5639, %v5713
        %v5715 = vpop.f32.mrb[0].mxu0
        %5716 = vdwg.mxu0
        %5717 = vmatprep.subr.mxu0 0.0
        %v5718 = vand.u32 %v5403, 4294901760
        %v5719 = vsub.f32 %v5403, %v5718
        %v5720 = vand.u32 %v5719, 4294901760
        %5721 = vmatpush1.msra.mxu0 %v5720
        %5722 = vmatprep.subr.mxu0 0.0
        %v5723 = vand.u32 %v5404, 4294901760
        %v5724 = vsub.f32 %v5404, %v5723
        %v5725 = vand.u32 %v5724, 4294901760
        %5726 = vmatpush1.msra.mxu0 %v5725
        %5727 = vmatprep.subr.mxu0 0.0
        %5728 = vmatpush1.msra.mxu0 0.0
        %5729 = vmatprep.subr.mxu0 0.0
        %5730 = vmatpush1.msra.mxu0 0.0
        %5731 = vmatprep.subr.mxu0 0.0
        %5732 = vmatpush1.msra.mxu0 0.0
        %5733 = vmatprep.subr.mxu0 0.0
        %5734 = vmatpush1.msra.mxu0 0.0
        %5735 = vmatprep.subr.mxu0 0.0
        %5736 = vmatpush1.msra.mxu0 0.0
        %5737 = vmatprep.subr.mxu0 0.0
        %5738 = vmatpush1.msra.mxu0 0.0
        %5739 = vmatprep.subr.mxu0 0.0
        %5740 = vmatpush1.msra.mxu0 0.0
        %5741 = vmatprep.subr.mxu0 0.0
        %5742 = vmatpush1.msra.mxu0 0.0
        %5743 = vmatprep.subr.mxu0 0.0
        %5744 = vmatpush1.msra.mxu0 0.0
        %5745 = vmatprep.subr.mxu0 0.0
        %5746 = vmatpush1.msra.mxu0 0.0
        %5747 = vmatprep.subr.mxu0 0.0
        %5748 = vmatpush1.msra.mxu0 0.0
        %5749 = vmatprep.subr.mxu0 0.0
        %5750 = vmatpush1.msra.mxu0 0.0
        %5751 = vmatprep.subr.mxu0 0.0
        %5752 = vmatpush1.msra.mxu0 0.0
        %5753 = vmatprep.subr.mxu0 0.0
        %5754 = vmatpush1.msra.mxu0 0.0
        %5755 = vmatprep.subr.mxu0 0.0
        %5756 = vmatpush1.msra.mxu0 0.0
        %5757 = vmatprep.subr.mxu0 0.0
        %5758 = vmatpush1.msra.mxu0 0.0
        %5759 = vmatprep.subr.mxu0 0.0
        %5760 = vmatpush1.msra.mxu0 0.0
        %5761 = vmatprep.subr.mxu0 0.0
        %5762 = vmatpush1.msra.mxu0 0.0
        %5763 = vmatprep.subr.mxu0 0.0
        %5764 = vmatpush1.msra.mxu0 0.0
        %5765 = vmatprep.subr.mxu0 0.0
        %5766 = vmatpush1.msra.mxu0 0.0
        %5767 = vmatprep.subr.mxu0 0.0
        %5768 = vmatpush1.msra.mxu0 0.0
        %5769 = vmatprep.subr.mxu0 0.0
        %5770 = vmatpush1.msra.mxu0 0.0
        %5771 = vmatprep.subr.mxu0 0.0
        %5772 = vmatpush1.msra.mxu0 0.0
        %5773 = vmatprep.subr.mxu0 0.0
        %5774 = vmatpush1.msra.mxu0 0.0
        %5775 = vmatprep.subr.mxu0 0.0
        %5776 = vmatpush1.msra.mxu0 0.0
        %5777 = vmatprep.subr.mxu0 0.0
        %5778 = vmatpush1.msra.mxu0 0.0
        %5779 = vmatprep.subr.mxu0 0.0
        %5780 = vmatpush1.msra.mxu0 0.0
        %5781 = vmatprep.subr.mxu0 0.0
        %5782 = vmatpush1.msra.mxu0 0.0
        %5783 = vmatprep.subr.mxu0 0.0
        %5784 = vmatpush1.msra.mxu0 0.0
        %5785 = vmatprep.subr.mxu0 0.0
        %5786 = vmatpush1.msra.mxu0 0.0
        %5787 = vmatprep.mubr.f32.mxu0 0.0
        %v5788 = vand.u32 %v5406, 4294901760
        %5789 = vmatmul.mubr.f32.gmra.mrb[0].mxu0 %v5788
        %v5790 = vpop.f32.mrb[0].mxu0
        %v5791 = vadd.f32 %v5714, %v5790
        %v5792 = vpop.f32.mrb[0].mxu0
        %5793 = vdwg.mxu0
        %5794 = vmatprep.subr.mxu0 0.0
        %v5795 = vand.u32 %v5403, 4294901760
        %5796 = vmatpush1.msra.mxu0 %v5795
        %5797 = vmatprep.subr.mxu0 0.0
        %v5798 = vand.u32 %v5404, 4294901760
        %5799 = vmatpush1.msra.mxu0 %v5798
        %5800 = vmatprep.subr.mxu0 0.0
        %5801 = vmatpush1.msra.mxu0 0.0
        %5802 = vmatprep.subr.mxu0 0.0
        %5803 = vmatpush1.msra.mxu0 0.0
        %5804 = vmatprep.subr.mxu0 0.0
        %5805 = vmatpush1.msra.mxu0 0.0
        %5806 = vmatprep.subr.mxu0 0.0
        %5807 = vmatpush1.msra.mxu0 0.0
        %5808 = vmatprep.subr.mxu0 0.0
        %5809 = vmatpush1.msra.mxu0 0.0
        %5810 = vmatprep.subr.mxu0 0.0
        %5811 = vmatpush1.msra.mxu0 0.0
        %5812 = vmatprep.subr.mxu0 0.0
        %5813 = vmatpush1.msra.mxu0 0.0
        %5814 = vmatprep.subr.mxu0 0.0
        %5815 = vmatpush1.msra.mxu0 0.0
        %5816 = vmatprep.subr.mxu0 0.0
        %5817 = vmatpush1.msra.mxu0 0.0
        %5818 = vmatprep.subr.mxu0 0.0
        %5819 = vmatpush1.msra.mxu0 0.0
        %5820 = vmatprep.subr.mxu0 0.0
        %5821 = vmatpush1.msra.mxu0 0.0
        %5822 = vmatprep.subr.mxu0 0.0
        %5823 = vmatpush1.msra.mxu0 0.0
        %5824 = vmatprep.subr.mxu0 0.0
        %5825 = vmatpush1.msra.mxu0 0.0
        %5826 = vmatprep.subr.mxu0 0.0
        %5827 = vmatpush1.msra.mxu0 0.0
        %5828 = vmatprep.subr.mxu0 0.0
        %5829 = vmatpush1.msra.mxu0 0.0
        %5830 = vmatprep.subr.mxu0 0.0
        %5831 = vmatpush1.msra.mxu0 0.0
        %5832 = vmatprep.subr.mxu0 0.0
        %5833 = vmatpush1.msra.mxu0 0.0
        %5834 = vmatprep.subr.mxu0 0.0
        %5835 = vmatpush1.msra.mxu0 0.0
        %5836 = vmatprep.subr.mxu0 0.0
        %5837 = vmatpush1.msra.mxu0 0.0
        %5838 = vmatprep.subr.mxu0 0.0
        %5839 = vmatpush1.msra.mxu0 0.0
        %5840 = vmatprep.subr.mxu0 0.0
        %5841 = vmatpush1.msra.mxu0 0.0
        %5842 = vmatprep.subr.mxu0 0.0
        %5843 = vmatpush1.msra.mxu0 0.0
        %5844 = vmatprep.subr.mxu0 0.0
        %5845 = vmatpush1.msra.mxu0 0.0
        %5846 = vmatprep.subr.mxu0 0.0
        %5847 = vmatpush1.msra.mxu0 0.0
        %5848 = vmatprep.subr.mxu0 0.0
        %5849 = vmatpush1.msra.mxu0 0.0
        %5850 = vmatprep.subr.mxu0 0.0
        %5851 = vmatpush1.msra.mxu0 0.0
        %5852 = vmatprep.subr.mxu0 0.0
        %5853 = vmatpush1.msra.mxu0 0.0
        %5854 = vmatprep.subr.mxu0 0.0
        %5855 = vmatpush1.msra.mxu0 0.0
        %5856 = vmatprep.subr.mxu0 0.0
        %5857 = vmatpush1.msra.mxu0 0.0
        %5858 = vmatprep.subr.mxu0 0.0
        %5859 = vmatpush1.msra.mxu0 0.0
        %5860 = vmatprep.mubr.f32.mxu0 0.0
        %v5861 = vand.u32 %v5406, 4294901760
        %5862 = vmatmul.mubr.f32.gmra.mrb[0].mxu0 %v5861
        %v5863 = vpop.f32.mrb[0].mxu0
        %v5864 = vadd.f32 %v5791, %v5863
        %v5865 = vpop.f32.mrb[0].mxu0
        %5866 = vdwg.mxu0
        %v5867 = vadd.f32 %v4950, %v5864
        %s5868 = scalar_lea.vmem [#allocation6], 24
        %v5869 = vld [vmem:[%s5868] sm:$0xf]
        %v5871 = vsel %vm370, %v5869, 0
        %5873 = vmatprep.subr.mxu0 0.0
        %v5874 = vand.u32 %v368, 4294901760
        %5875 = vmatpush1.msra.mxu0 %v5874
        %5876 = vmatprep.subr.mxu0 0.0
        %5877 = vmatpush1.msra.mxu0 0.0
        %5878 = vmatprep.subr.mxu0 0.0
        %5879 = vmatpush1.msra.mxu0 0.0
        %5880 = vmatprep.subr.mxu0 0.0
        %5881 = vmatpush1.msra.mxu0 0.0
        %5882 = vmatprep.subr.mxu0 0.0
        %5883 = vmatpush1.msra.mxu0 0.0
        %5884 = vmatprep.subr.mxu0 0.0
        %5885 = vmatpush1.msra.mxu0 0.0
        %5886 = vmatprep.subr.mxu0 0.0
        %5887 = vmatpush1.msra.mxu0 0.0
        %5888 = vmatprep.subr.mxu0 0.0
        %5889 = vmatpush1.msra.mxu0 0.0
        %5890 = vmatprep.subr.mxu0 0.0
        %5891 = vmatpush1.msra.mxu0 0.0
        %5892 = vmatprep.subr.mxu0 0.0
        %5893 = vmatpush1.msra.mxu0 0.0
        %5894 = vmatprep.subr.mxu0 0.0
        %5895 = vmatpush1.msra.mxu0 0.0
        %5896 = vmatprep.subr.mxu0 0.0
        %5897 = vmatpush1.msra.mxu0 0.0
        %5898 = vmatprep.subr.mxu0 0.0
        %5899 = vmatpush1.msra.mxu0 0.0
        %5900 = vmatprep.subr.mxu0 0.0
        %5901 = vmatpush1.msra.mxu0 0.0
        %5902 = vmatprep.subr.mxu0 0.0
        %5903 = vmatpush1.msra.mxu0 0.0
        %5904 = vmatprep.subr.mxu0 0.0
        %5905 = vmatpush1.msra.mxu0 0.0
        %5906 = vmatprep.subr.mxu0 0.0
        %5907 = vmatpush1.msra.mxu0 0.0
        %5908 = vmatprep.subr.mxu0 0.0
        %5909 = vmatpush1.msra.mxu0 0.0
        %5910 = vmatprep.subr.mxu0 0.0
        %5911 = vmatpush1.msra.mxu0 0.0
        %5912 = vmatprep.subr.mxu0 0.0
        %5913 = vmatpush1.msra.mxu0 0.0
        %5914 = vmatprep.subr.mxu0 0.0
        %5915 = vmatpush1.msra.mxu0 0.0
        %5916 = vmatprep.subr.mxu0 0.0
        %5917 = vmatpush1.msra.mxu0 0.0
        %5918 = vmatprep.subr.mxu0 0.0
        %5919 = vmatpush1.msra.mxu0 0.0
        %5920 = vmatprep.subr.mxu0 0.0
        %5921 = vmatpush1.msra.mxu0 0.0
        %5922 = vmatprep.subr.mxu0 0.0
        %5923 = vmatpush1.msra.mxu0 0.0
        %5924 = vmatprep.subr.mxu0 0.0
        %5925 = vmatpush1.msra.mxu0 0.0
        %5926 = vmatprep.subr.mxu0 0.0
        %5927 = vmatpush1.msra.mxu0 0.0
        %5928 = vmatprep.subr.mxu0 0.0
        %5929 = vmatpush1.msra.mxu0 0.0
        %5930 = vmatprep.subr.mxu0 0.0
        %5931 = vmatpush1.msra.mxu0 0.0
        %5932 = vmatprep.subr.mxu0 0.0
        %5933 = vmatpush1.msra.mxu0 0.0
        %5934 = vmatprep.subr.mxu0 0.0
        %5935 = vmatpush1.msra.mxu0 0.0
        %5936 = vmatprep.subr.mxu0 0.0
        %5937 = vmatpush1.msra.mxu0 0.0
        %5938 = vmatprep.mubr.f32.mxu0 0.0
        %v5939 = vand.u32 %v5871, 4294901760
        %v5940 = vsub.f32 %v5871, %v5939
        %v5941 = vand.u32 %v5940, 4294901760
        %v5942 = vsub.f32 %v5940, %v5941
        %v5943 = vand.u32 %v5942, 4294901760
        %5944 = vmatmul.mubr.f32.gmra.mrb[0].mxu0 %v5943
        %v5945 = vpop.f32.mrb[0].mxu0
        %v5946 = vadd.f32 0.0, %v5945
        %v5947 = vpop.f32.mrb[0].mxu0
        %5948 = vdwg.mxu0
        %5949 = vmatprep.subr.mxu0 0.0
        %v5950 = vand.u32 %v368, 4294901760
        %v5951 = vsub.f32 %v368, %v5950
        %v5952 = vand.u32 %v5951, 4294901760
        %v5953 = vsub.f32 %v5951, %v5952
        %v5954 = vand.u32 %v5953, 4294901760
        %5955 = vmatpush1.msra.mxu0 %v5954
        %5956 = vmatprep.subr.mxu0 0.0
        %5957 = vmatpush1.msra.mxu0 0.0
        %5958 = vmatprep.subr.mxu0 0.0
        %5959 = vmatpush1.msra.mxu0 0.0
        %5960 = vmatprep.subr.mxu0 0.0
        %5961 = vmatpush1.msra.mxu0 0.0
        %5962 = vmatprep.subr.mxu0 0.0
        %5963 = vmatpush1.msra.mxu0 0.0
        %5964 = vmatprep.subr.mxu0 0.0
        %5965 = vmatpush1.msra.mxu0 0.0
        %5966 = vmatprep.subr.mxu0 0.0
        %5967 = vmatpush1.msra.mxu0 0.0
        %5968 = vmatprep.subr.mxu0 0.0
        %5969 = vmatpush1.msra.mxu0 0.0
        %5970 = vmatprep.subr.mxu0 0.0
        %5971 = vmatpush1.msra.mxu0 0.0
        %5972 = vmatprep.subr.mxu0 0.0
        %5973 = vmatpush1.msra.mxu0 0.0
        %5974 = vmatprep.subr.mxu0 0.0
        %5975 = vmatpush1.msra.mxu0 0.0
        %5976 = vmatprep.subr.mxu0 0.0
        %5977 = vmatpush1.msra.mxu0 0.0
        %5978 = vmatprep.subr.mxu0 0.0
        %5979 = vmatpush1.msra.mxu0 0.0
        %5980 = vmatprep.subr.mxu0 0.0
        %5981 = vmatpush1.msra.mxu0 0.0
        %5982 = vmatprep.subr.mxu0 0.0
        %5983 = vmatpush1.msra.mxu0 0.0
        %5984 = vmatprep.subr.mxu0 0.0
        %5985 = vmatpush1.msra.mxu0 0.0
        %5986 = vmatprep.subr.mxu0 0.0
        %5987 = vmatpush1.msra.mxu0 0.0
        %5988 = vmatprep.subr.mxu0 0.0
        %5989 = vmatpush1.msra.mxu0 0.0
        %5990 = vmatprep.subr.mxu0 0.0
        %5991 = vmatpush1.msra.mxu0 0.0
        %5992 = vmatprep.subr.mxu0 0.0
        %5993 = vmatpush1.msra.mxu0 0.0
        %5994 = vmatprep.subr.mxu0 0.0
        %5995 = vmatpush1.msra.mxu0 0.0
        %5996 = vmatprep.subr.mxu0 0.0
        %5997 = vmatpush1.msra.mxu0 0.0
        %5998 = vmatprep.subr.mxu0 0.0
        %5999 = vmatpush1.msra.mxu0 0.0
        %6000 = vmatprep.subr.mxu0 0.0
        %6001 = vmatpush1.msra.mxu0 0.0
        %6002 = vmatprep.subr.mxu0 0.0
        %6003 = vmatpush1.msra.mxu0 0.0
        %6004 = vmatprep.subr.mxu0 0.0
        %6005 = vmatpush1.msra.mxu0 0.0
        %6006 = vmatprep.subr.mxu0 0.0
        %6007 = vmatpush1.msra.mxu0 0.0
        %6008 = vmatprep.subr.mxu0 0.0
        %6009 = vmatpush1.msra.mxu0 0.0
        %6010 = vmatprep.subr.mxu0 0.0
        %6011 = vmatpush1.msra.mxu0 0.0
        %6012 = vmatprep.subr.mxu0 0.0
        %6013 = vmatpush1.msra.mxu0 0.0
        %6014 = vmatprep.subr.mxu0 0.0
        %6015 = vmatpush1.msra.mxu0 0.0
        %6016 = vmatprep.subr.mxu0 0.0
        %6017 = vmatpush1.msra.mxu0 0.0
        %6018 = vmatprep.mubr.f32.mxu0 0.0
        %v6019 = vand.u32 %v5871, 4294901760
        %6020 = vmatmul.mubr.f32.gmra.mrb[0].mxu0 %v6019
        %v6021 = vpop.f32.mrb[0].mxu0
        %v6022 = vadd.f32 %v5946, %v6021
        %v6023 = vpop.f32.mrb[0].mxu0
        %6024 = vdwg.mxu0
        %6025 = vmatprep.subr.mxu0 0.0
        %v6026 = vand.u32 %v368, 4294901760
        %v6027 = vsub.f32 %v368, %v6026
        %6028 = vmatpush1.msra.mxu0 %v6027
        %6029 = vmatprep.subr.mxu0 0.0
        %6030 = vmatpush1.msra.mxu0 0.0
        %6031 = vmatprep.subr.mxu0 0.0
        %6032 = vmatpush1.msra.mxu0 0.0
        %6033 = vmatprep.subr.mxu0 0.0
        %6034 = vmatpush1.msra.mxu0 0.0
        %6035 = vmatprep.subr.mxu0 0.0
        %6036 = vmatpush1.msra.mxu0 0.0
        %6037 = vmatprep.subr.mxu0 0.0
        %6038 = vmatpush1.msra.mxu0 0.0
        %6039 = vmatprep.subr.mxu0 0.0
        %6040 = vmatpush1.msra.mxu0 0.0
        %6041 = vmatprep.subr.mxu0 0.0
        %6042 = vmatpush1.msra.mxu0 0.0
        %6043 = vmatprep.subr.mxu0 0.0
        %6044 = vmatpush1.msra.mxu0 0.0
        %6045 = vmatprep.subr.mxu0 0.0
        %6046 = vmatpush1.msra.mxu0 0.0
        %6047 = vmatprep.subr.mxu0 0.0
        %6048 = vmatpush1.msra.mxu0 0.0
        %6049 = vmatprep.subr.mxu0 0.0
        %6050 = vmatpush1.msra.mxu0 0.0
        %6051 = vmatprep.subr.mxu0 0.0
        %6052 = vmatpush1.msra.mxu0 0.0
        %6053 = vmatprep.subr.mxu0 0.0
        %6054 = vmatpush1.msra.mxu0 0.0
        %6055 = vmatprep.subr.mxu0 0.0
        %6056 = vmatpush1.msra.mxu0 0.0
        %6057 = vmatprep.subr.mxu0 0.0
        %6058 = vmatpush1.msra.mxu0 0.0
        %6059 = vmatprep.subr.mxu0 0.0
        %6060 = vmatpush1.msra.mxu0 0.0
        %6061 = vmatprep.subr.mxu0 0.0
        %6062 = vmatpush1.msra.mxu0 0.0
        %6063 = vmatprep.subr.mxu0 0.0
        %6064 = vmatpush1.msra.mxu0 0.0
        %6065 = vmatprep.subr.mxu0 0.0
        %6066 = vmatpush1.msra.mxu0 0.0
        %6067 = vmatprep.subr.mxu0 0.0
        %6068 = vmatpush1.msra.mxu0 0.0
        %6069 = vmatprep.subr.mxu0 0.0
        %6070 = vmatpush1.msra.mxu0 0.0
        %6071 = vmatprep.subr.mxu0 0.0
        %6072 = vmatpush1.msra.mxu0 0.0
        %6073 = vmatprep.subr.mxu0 0.0
        %6074 = vmatpush1.msra.mxu0 0.0
        %6075 = vmatprep.subr.mxu0 0.0
        %6076 = vmatpush1.msra.mxu0 0.0
        %6077 = vmatprep.subr.mxu0 0.0
        %6078 = vmatpush1.msra.mxu0 0.0
        %6079 = vmatprep.subr.mxu0 0.0
        %6080 = vmatpush1.msra.mxu0 0.0
        %6081 = vmatprep.subr.mxu0 0.0
        %6082 = vmatpush1.msra.mxu0 0.0
        %6083 = vmatprep.subr.mxu0 0.0
        %6084 = vmatpush1.msra.mxu0 0.0
        %6085 = vmatprep.subr.mxu0 0.0
        %6086 = vmatpush1.msra.mxu0 0.0
        %6087 = vmatprep.subr.mxu0 0.0
        %6088 = vmatpush1.msra.mxu0 0.0
        %6089 = vmatprep.subr.mxu0 0.0
        %6090 = vmatpush1.msra.mxu0 0.0
        %6091 = vmatprep.mubr.f32.mxu0 0.0
        %v6092 = vand.u32 %v5871, 4294901760
        %v6093 = vsub.f32 %v5871, %v6092
        %6094 = vmatmul.mubr.f32.gmra.mrb[0].mxu0 %v6093
        %v6095 = vpop.f32.mrb[0].mxu0
        %v6096 = vadd.f32 %v6022, %v6095
        %v6097 = vpop.f32.mrb[0].mxu0
        %6098 = vdwg.mxu0
        %6099 = vmatprep.subr.mxu0 0.0
        %v6100 = vand.u32 %v368, 4294901760
        %6101 = vmatpush1.msra.mxu0 %v6100
        %6102 = vmatprep.subr.mxu0 0.0
        %6103 = vmatpush1.msra.mxu0 0.0
        %6104 = vmatprep.subr.mxu0 0.0
        %6105 = vmatpush1.msra.mxu0 0.0
        %6106 = vmatprep.subr.mxu0 0.0
        %6107 = vmatpush1.msra.mxu0 0.0
        %6108 = vmatprep.subr.mxu0 0.0
        %6109 = vmatpush1.msra.mxu0 0.0
        %6110 = vmatprep.subr.mxu0 0.0
        %6111 = vmatpush1.msra.mxu0 0.0
        %6112 = vmatprep.subr.mxu0 0.0
        %6113 = vmatpush1.msra.mxu0 0.0
        %6114 = vmatprep.subr.mxu0 0.0
        %6115 = vmatpush1.msra.mxu0 0.0
        %6116 = vmatprep.subr.mxu0 0.0
        %6117 = vmatpush1.msra.mxu0 0.0
        %6118 = vmatprep.subr.mxu0 0.0
        %6119 = vmatpush1.msra.mxu0 0.0
        %6120 = vmatprep.subr.mxu0 0.0
        %6121 = vmatpush1.msra.mxu0 0.0
        %6122 = vmatprep.subr.mxu0 0.0
        %6123 = vmatpush1.msra.mxu0 0.0
        %6124 = vmatprep.subr.mxu0 0.0
        %6125 = vmatpush1.msra.mxu0 0.0
        %6126 = vmatprep.subr.mxu0 0.0
        %6127 = vmatpush1.msra.mxu0 0.0
        %6128 = vmatprep.subr.mxu0 0.0
        %6129 = vmatpush1.msra.mxu0 0.0
        %6130 = vmatprep.subr.mxu0 0.0
        %6131 = vmatpush1.msra.mxu0 0.0
        %6132 = vmatprep.subr.mxu0 0.0
        %6133 = vmatpush1.msra.mxu0 0.0
        %6134 = vmatprep.subr.mxu0 0.0
        %6135 = vmatpush1.msra.mxu0 0.0
        %6136 = vmatprep.subr.mxu0 0.0
        %6137 = vmatpush1.msra.mxu0 0.0
        %6138 = vmatprep.subr.mxu0 0.0
        %6139 = vmatpush1.msra.mxu0 0.0
        %6140 = vmatprep.subr.mxu0 0.0
        %6141 = vmatpush1.msra.mxu0 0.0
        %6142 = vmatprep.subr.mxu0 0.0
        %6143 = vmatpush1.msra.mxu0 0.0
        %6144 = vmatprep.subr.mxu0 0.0
        %6145 = vmatpush1.msra.mxu0 0.0
        %6146 = vmatprep.subr.mxu0 0.0
        %6147 = vmatpush1.msra.mxu0 0.0
        %6148 = vmatprep.subr.mxu0 0.0
        %6149 = vmatpush1.msra.mxu0 0.0
        %6150 = vmatprep.subr.mxu0 0.0
        %6151 = vmatpush1.msra.mxu0 0.0
        %6152 = vmatprep.subr.mxu0 0.0
        %6153 = vmatpush1.msra.mxu0 0.0
        %6154 = vmatprep.subr.mxu0 0.0
        %6155 = vmatpush1.msra.mxu0 0.0
        %6156 = vmatprep.subr.mxu0 0.0
        %6157 = vmatpush1.msra.mxu0 0.0
        %6158 = vmatprep.subr.mxu0 0.0
        %6159 = vmatpush1.msra.mxu0 0.0
        %6160 = vmatprep.subr.mxu0 0.0
        %6161 = vmatpush1.msra.mxu0 0.0
        %6162 = vmatprep.subr.mxu0 0.0
        %6163 = vmatpush1.msra.mxu0 0.0
        %6164 = vmatprep.mubr.f32.mxu0 0.0
        %v6165 = vand.u32 %v5871, 4294901760
        %v6166 = vsub.f32 %v5871, %v6165
        %v6167 = vand.u32 %v6166, 4294901760
        %6168 = vmatmul.mubr.f32.gmra.mrb[0].mxu0 %v6167
        %v6169 = vpop.f32.mrb[0].mxu0
        %v6170 = vadd.f32 %v6096, %v6169
        %v6171 = vpop.f32.mrb[0].mxu0
        %6172 = vdwg.mxu0
        %6173 = vmatprep.subr.mxu0 0.0
        %v6174 = vand.u32 %v368, 4294901760
        %v6175 = vsub.f32 %v368, %v6174
        %v6176 = vand.u32 %v6175, 4294901760
        %6177 = vmatpush1.msra.mxu0 %v6176
        %6178 = vmatprep.subr.mxu0 0.0
        %6179 = vmatpush1.msra.mxu0 0.0
        %6180 = vmatprep.subr.mxu0 0.0
        %6181 = vmatpush1.msra.mxu0 0.0
        %6182 = vmatprep.subr.mxu0 0.0
        %6183 = vmatpush1.msra.mxu0 0.0
        %6184 = vmatprep.subr.mxu0 0.0
        %6185 = vmatpush1.msra.mxu0 0.0
        %6186 = vmatprep.subr.mxu0 0.0
        %6187 = vmatpush1.msra.mxu0 0.0
        %6188 = vmatprep.subr.mxu0 0.0
        %6189 = vmatpush1.msra.mxu0 0.0
        %6190 = vmatprep.subr.mxu0 0.0
        %6191 = vmatpush1.msra.mxu0 0.0
        %6192 = vmatprep.subr.mxu0 0.0
        %6193 = vmatpush1.msra.mxu0 0.0
        %6194 = vmatprep.subr.mxu0 0.0
        %6195 = vmatpush1.msra.mxu0 0.0
        %6196 = vmatprep.subr.mxu0 0.0
        %6197 = vmatpush1.msra.mxu0 0.0
        %6198 = vmatprep.subr.mxu0 0.0
        %6199 = vmatpush1.msra.mxu0 0.0
        %6200 = vmatprep.subr.mxu0 0.0
        %6201 = vmatpush1.msra.mxu0 0.0
        %6202 = vmatprep.subr.mxu0 0.0
        %6203 = vmatpush1.msra.mxu0 0.0
        %6204 = vmatprep.subr.mxu0 0.0
        %6205 = vmatpush1.msra.mxu0 0.0
        %6206 = vmatprep.subr.mxu0 0.0
        %6207 = vmatpush1.msra.mxu0 0.0
        %6208 = vmatprep.subr.mxu0 0.0
        %6209 = vmatpush1.msra.mxu0 0.0
        %6210 = vmatprep.subr.mxu0 0.0
        %6211 = vmatpush1.msra.mxu0 0.0
        %6212 = vmatprep.subr.mxu0 0.0
        %6213 = vmatpush1.msra.mxu0 0.0
        %6214 = vmatprep.subr.mxu0 0.0
        %6215 = vmatpush1.msra.mxu0 0.0
        %6216 = vmatprep.subr.mxu0 0.0
        %6217 = vmatpush1.msra.mxu0 0.0
        %6218 = vmatprep.subr.mxu0 0.0
        %6219 = vmatpush1.msra.mxu0 0.0
        %6220 = vmatprep.subr.mxu0 0.0
        %6221 = vmatpush1.msra.mxu0 0.0
        %6222 = vmatprep.subr.mxu0 0.0
        %6223 = vmatpush1.msra.mxu0 0.0
        %6224 = vmatprep.subr.mxu0 0.0
        %6225 = vmatpush1.msra.mxu0 0.0
        %6226 = vmatprep.subr.mxu0 0.0
        %6227 = vmatpush1.msra.mxu0 0.0
        %6228 = vmatprep.subr.mxu0 0.0
        %6229 = vmatpush1.msra.mxu0 0.0
        %6230 = vmatprep.subr.mxu0 0.0
        %6231 = vmatpush1.msra.mxu0 0.0
        %6232 = vmatprep.subr.mxu0 0.0
        %6233 = vmatpush1.msra.mxu0 0.0
        %6234 = vmatprep.subr.mxu0 0.0
        %6235 = vmatpush1.msra.mxu0 0.0
        %6236 = vmatprep.subr.mxu0 0.0
        %6237 = vmatpush1.msra.mxu0 0.0
        %6238 = vmatprep.subr.mxu0 0.0
        %6239 = vmatpush1.msra.mxu0 0.0
        %6240 = vmatprep.mubr.f32.mxu0 0.0
        %v6241 = vand.u32 %v5871, 4294901760
        %6242 = vmatmul.mubr.f32.gmra.mrb[0].mxu0 %v6241
        %v6243 = vpop.f32.mrb[0].mxu0
        %v6244 = vadd.f32 %v6170, %v6243
        %v6245 = vpop.f32.mrb[0].mxu0
        %6246 = vdwg.mxu0
        %6247 = vmatprep.subr.mxu0 0.0
        %v6248 = vand.u32 %v368, 4294901760
        %6249 = vmatpush1.msra.mxu0 %v6248
        %6250 = vmatprep.subr.mxu0 0.0
        %6251 = vmatpush1.msra.mxu0 0.0
        %6252 = vmatprep.subr.mxu0 0.0
        %6253 = vmatpush1.msra.mxu0 0.0
        %6254 = vmatprep.subr.mxu0 0.0
        %6255 = vmatpush1.msra.mxu0 0.0
        %6256 = vmatprep.subr.mxu0 0.0
        %6257 = vmatpush1.msra.mxu0 0.0
        %6258 = vmatprep.subr.mxu0 0.0
        %6259 = vmatpush1.msra.mxu0 0.0
        %6260 = vmatprep.subr.mxu0 0.0
        %6261 = vmatpush1.msra.mxu0 0.0
        %6262 = vmatprep.subr.mxu0 0.0
        %6263 = vmatpush1.msra.mxu0 0.0
        %6264 = vmatprep.subr.mxu0 0.0
        %6265 = vmatpush1.msra.mxu0 0.0
        %6266 = vmatprep.subr.mxu0 0.0
        %6267 = vmatpush1.msra.mxu0 0.0
        %6268 = vmatprep.subr.mxu0 0.0
        %6269 = vmatpush1.msra.mxu0 0.0
        %6270 = vmatprep.subr.mxu0 0.0
        %6271 = vmatpush1.msra.mxu0 0.0
        %6272 = vmatprep.subr.mxu0 0.0
        %6273 = vmatpush1.msra.mxu0 0.0
        %6274 = vmatprep.subr.mxu0 0.0
        %6275 = vmatpush1.msra.mxu0 0.0
        %6276 = vmatprep.subr.mxu0 0.0
        %6277 = vmatpush1.msra.mxu0 0.0
        %6278 = vmatprep.subr.mxu0 0.0
        %6279 = vmatpush1.msra.mxu0 0.0
        %6280 = vmatprep.subr.mxu0 0.0
        %6281 = vmatpush1.msra.mxu0 0.0
        %6282 = vmatprep.subr.mxu0 0.0
        %6283 = vmatpush1.msra.mxu0 0.0
        %6284 = vmatprep.subr.mxu0 0.0
        %6285 = vmatpush1.msra.mxu0 0.0
        %6286 = vmatprep.subr.mxu0 0.0
        %6287 = vmatpush1.msra.mxu0 0.0
        %6288 = vmatprep.subr.mxu0 0.0
        %6289 = vmatpush1.msra.mxu0 0.0
        %6290 = vmatprep.subr.mxu0 0.0
        %6291 = vmatpush1.msra.mxu0 0.0
        %6292 = vmatprep.subr.mxu0 0.0
        %6293 = vmatpush1.msra.mxu0 0.0
        %6294 = vmatprep.subr.mxu0 0.0
        %6295 = vmatpush1.msra.mxu0 0.0
        %6296 = vmatprep.subr.mxu0 0.0
        %6297 = vmatpush1.msra.mxu0 0.0
        %6298 = vmatprep.subr.mxu0 0.0
        %6299 = vmatpush1.msra.mxu0 0.0
        %6300 = vmatprep.subr.mxu0 0.0
        %6301 = vmatpush1.msra.mxu0 0.0
        %6302 = vmatprep.subr.mxu0 0.0
        %6303 = vmatpush1.msra.mxu0 0.0
        %6304 = vmatprep.subr.mxu0 0.0
        %6305 = vmatpush1.msra.mxu0 0.0
        %6306 = vmatprep.subr.mxu0 0.0
        %6307 = vmatpush1.msra.mxu0 0.0
        %6308 = vmatprep.subr.mxu0 0.0
        %6309 = vmatpush1.msra.mxu0 0.0
        %6310 = vmatprep.subr.mxu0 0.0
        %6311 = vmatpush1.msra.mxu0 0.0
        %6312 = vmatprep.mubr.f32.mxu0 0.0
        %v6313 = vand.u32 %v5871, 4294901760
        %6314 = vmatmul.mubr.f32.gmra.mrb[0].mxu0 %v6313
        %v6315 = vpop.f32.mrb[0].mxu0
        %v6316 = vadd.f32 %v6244, %v6315
        %v6317 = vpop.f32.mrb[0].mxu0
        %6318 = vdwg.mxu0
        %s6319 = scalar_lea.vmem [#allocation8], 96
        %v6320 = vld [vmem:[%s6319] sm:$0xff]
        %v6321 = vld [vmem:[%s6319 + $0x8] sm:$0xff]
        %v6323 = vsel %vm267, %v6316, 0
        %6325 = vmatprep.subr.mxu0 0.0
        %v6326 = vand.u32 %v6320, 4294901760
        %6327 = vmatpush1.msra.mxu0 %v6326
        %6328 = vmatprep.subr.mxu0 0.0
        %v6329 = vand.u32 %v6321, 4294901760
        %6330 = vmatpush1.msra.mxu0 %v6329
        %6331 = vmatprep.subr.mxu0 0.0
        %6332 = vmatpush1.msra.mxu0 0.0
        %6333 = vmatprep.subr.mxu0 0.0
        %6334 = vmatpush1.msra.mxu0 0.0
        %6335 = vmatprep.subr.mxu0 0.0
        %6336 = vmatpush1.msra.mxu0 0.0
        %6337 = vmatprep.subr.mxu0 0.0
        %6338 = vmatpush1.msra.mxu0 0.0
        %6339 = vmatprep.subr.mxu0 0.0
        %6340 = vmatpush1.msra.mxu0 0.0
        %6341 = vmatprep.subr.mxu0 0.0
        %6342 = vmatpush1.msra.mxu0 0.0
        %6343 = vmatprep.subr.mxu0 0.0
        %6344 = vmatpush1.msra.mxu0 0.0
        %6345 = vmatprep.subr.mxu0 0.0
        %6346 = vmatpush1.msra.mxu0 0.0
        %6347 = vmatprep.subr.mxu0 0.0
        %6348 = vmatpush1.msra.mxu0 0.0
        %6349 = vmatprep.subr.mxu0 0.0
        %6350 = vmatpush1.msra.mxu0 0.0
        %6351 = vmatprep.subr.mxu0 0.0
        %6352 = vmatpush1.msra.mxu0 0.0
        %6353 = vmatprep.subr.mxu0 0.0
        %6354 = vmatpush1.msra.mxu0 0.0
        %6355 = vmatprep.subr.mxu0 0.0
        %6356 = vmatpush1.msra.mxu0 0.0
        %6357 = vmatprep.subr.mxu0 0.0
        %6358 = vmatpush1.msra.mxu0 0.0
        %6359 = vmatprep.subr.mxu0 0.0
        %6360 = vmatpush1.msra.mxu0 0.0
        %6361 = vmatprep.subr.mxu0 0.0
        %6362 = vmatpush1.msra.mxu0 0.0
        %6363 = vmatprep.subr.mxu0 0.0
        %6364 = vmatpush1.msra.mxu0 0.0
        %6365 = vmatprep.subr.mxu0 0.0
        %6366 = vmatpush1.msra.mxu0 0.0
        %6367 = vmatprep.subr.mxu0 0.0
        %6368 = vmatpush1.msra.mxu0 0.0
        %6369 = vmatprep.subr.mxu0 0.0
        %6370 = vmatpush1.msra.mxu0 0.0
        %6371 = vmatprep.subr.mxu0 0.0
        %6372 = vmatpush1.msra.mxu0 0.0
        %6373 = vmatprep.subr.mxu0 0.0
        %6374 = vmatpush1.msra.mxu0 0.0
        %6375 = vmatprep.subr.mxu0 0.0
        %6376 = vmatpush1.msra.mxu0 0.0
        %6377 = vmatprep.subr.mxu0 0.0
        %6378 = vmatpush1.msra.mxu0 0.0
        %6379 = vmatprep.subr.mxu0 0.0
        %6380 = vmatpush1.msra.mxu0 0.0
        %6381 = vmatprep.subr.mxu0 0.0
        %6382 = vmatpush1.msra.mxu0 0.0
        %6383 = vmatprep.subr.mxu0 0.0
        %6384 = vmatpush1.msra.mxu0 0.0
        %6385 = vmatprep.subr.mxu0 0.0
        %6386 = vmatpush1.msra.mxu0 0.0
        %6387 = vmatprep.subr.mxu0 0.0
        %6388 = vmatpush1.msra.mxu0 0.0
        %6389 = vmatprep.subr.mxu0 0.0
        %6390 = vmatpush1.msra.mxu0 0.0
        %6391 = vmatprep.mubr.f32.mxu0 0.0
        %v6392 = vand.u32 %v6323, 4294901760
        %v6393 = vsub.f32 %v6323, %v6392
        %v6394 = vand.u32 %v6393, 4294901760
        %v6395 = vsub.f32 %v6393, %v6394
        %v6396 = vand.u32 %v6395, 4294901760
        %6397 = vmatmul.mubr.f32.gmra.mrb[0].mxu0 %v6396
        %v6398 = vpop.f32.mrb[0].mxu0
        %v6399 = vadd.f32 0.0, %v6398
        %v6400 = vpop.f32.mrb[0].mxu0
        %6401 = vdwg.mxu0
        %6402 = vmatprep.subr.mxu0 0.0
        %v6403 = vand.u32 %v6320, 4294901760
        %v6404 = vsub.f32 %v6320, %v6403
        %v6405 = vand.u32 %v6404, 4294901760
        %v6406 = vsub.f32 %v6404, %v6405
        %v6407 = vand.u32 %v6406, 4294901760
        %6408 = vmatpush1.msra.mxu0 %v6407
        %6409 = vmatprep.subr.mxu0 0.0
        %v6410 = vand.u32 %v6321, 4294901760
        %v6411 = vsub.f32 %v6321, %v6410
        %v6412 = vand.u32 %v6411, 4294901760
        %v6413 = vsub.f32 %v6411, %v6412
        %v6414 = vand.u32 %v6413, 4294901760
        %6415 = vmatpush1.msra.mxu0 %v6414
        %6416 = vmatprep.subr.mxu0 0.0
        %6417 = vmatpush1.msra.mxu0 0.0
        %6418 = vmatprep.subr.mxu0 0.0
        %6419 = vmatpush1.msra.mxu0 0.0
        %6420 = vmatprep.subr.mxu0 0.0
        %6421 = vmatpush1.msra.mxu0 0.0
        %6422 = vmatprep.subr.mxu0 0.0
        %6423 = vmatpush1.msra.mxu0 0.0
        %6424 = vmatprep.subr.mxu0 0.0
        %6425 = vmatpush1.msra.mxu0 0.0
        %6426 = vmatprep.subr.mxu0 0.0
        %6427 = vmatpush1.msra.mxu0 0.0
        %6428 = vmatprep.subr.mxu0 0.0
        %6429 = vmatpush1.msra.mxu0 0.0
        %6430 = vmatprep.subr.mxu0 0.0
        %6431 = vmatpush1.msra.mxu0 0.0
        %6432 = vmatprep.subr.mxu0 0.0
        %6433 = vmatpush1.msra.mxu0 0.0
        %6434 = vmatprep.subr.mxu0 0.0
        %6435 = vmatpush1.msra.mxu0 0.0
        %6436 = vmatprep.subr.mxu0 0.0
        %6437 = vmatpush1.msra.mxu0 0.0
        %6438 = vmatprep.subr.mxu0 0.0
        %6439 = vmatpush1.msra.mxu0 0.0
        %6440 = vmatprep.subr.mxu0 0.0
        %6441 = vmatpush1.msra.mxu0 0.0
        %6442 = vmatprep.subr.mxu0 0.0
        %6443 = vmatpush1.msra.mxu0 0.0
        %6444 = vmatprep.subr.mxu0 0.0
        %6445 = vmatpush1.msra.mxu0 0.0
        %6446 = vmatprep.subr.mxu0 0.0
        %6447 = vmatpush1.msra.mxu0 0.0
        %6448 = vmatprep.subr.mxu0 0.0
        %6449 = vmatpush1.msra.mxu0 0.0
        %6450 = vmatprep.subr.mxu0 0.0
        %6451 = vmatpush1.msra.mxu0 0.0
        %6452 = vmatprep.subr.mxu0 0.0
        %6453 = vmatpush1.msra.mxu0 0.0
        %6454 = vmatprep.subr.mxu0 0.0
        %6455 = vmatpush1.msra.mxu0 0.0
        %6456 = vmatprep.subr.mxu0 0.0
        %6457 = vmatpush1.msra.mxu0 0.0
        %6458 = vmatprep.subr.mxu0 0.0
        %6459 = vmatpush1.msra.mxu0 0.0
        %6460 = vmatprep.subr.mxu0 0.0
        %6461 = vmatpush1.msra.mxu0 0.0
        %6462 = vmatprep.subr.mxu0 0.0
        %6463 = vmatpush1.msra.mxu0 0.0
        %6464 = vmatprep.subr.mxu0 0.0
        %6465 = vmatpush1.msra.mxu0 0.0
        %6466 = vmatprep.subr.mxu0 0.0
        %6467 = vmatpush1.msra.mxu0 0.0
        %6468 = vmatprep.subr.mxu0 0.0
        %6469 = vmatpush1.msra.mxu0 0.0
        %6470 = vmatprep.subr.mxu0 0.0
        %6471 = vmatpush1.msra.mxu0 0.0
        %6472 = vmatprep.subr.mxu0 0.0
        %6473 = vmatpush1.msra.mxu0 0.0
        %6474 = vmatprep.subr.mxu0 0.0
        %6475 = vmatpush1.msra.mxu0 0.0
        %6476 = vmatprep.mubr.f32.mxu0 0.0
        %v6477 = vand.u32 %v6323, 4294901760
        %6478 = vmatmul.mubr.f32.gmra.mrb[0].mxu0 %v6477
        %v6479 = vpop.f32.mrb[0].mxu0
        %v6480 = vadd.f32 %v6399, %v6479
        %v6481 = vpop.f32.mrb[0].mxu0
        %6482 = vdwg.mxu0
        %6483 = vmatprep.subr.mxu0 0.0
        %v6484 = vand.u32 %v6320, 4294901760
        %v6485 = vsub.f32 %v6320, %v6484
        %6486 = vmatpush1.msra.mxu0 %v6485
        %6487 = vmatprep.subr.mxu0 0.0
        %v6488 = vand.u32 %v6321, 4294901760
        %v6489 = vsub.f32 %v6321, %v6488
        %6490 = vmatpush1.msra.mxu0 %v6489
        %6491 = vmatprep.subr.mxu0 0.0
        %6492 = vmatpush1.msra.mxu0 0.0
        %6493 = vmatprep.subr.mxu0 0.0
        %6494 = vmatpush1.msra.mxu0 0.0
        %6495 = vmatprep.subr.mxu0 0.0
        %6496 = vmatpush1.msra.mxu0 0.0
        %6497 = vmatprep.subr.mxu0 0.0
        %6498 = vmatpush1.msra.mxu0 0.0
        %6499 = vmatprep.subr.mxu0 0.0
        %6500 = vmatpush1.msra.mxu0 0.0
        %6501 = vmatprep.subr.mxu0 0.0
        %6502 = vmatpush1.msra.mxu0 0.0
        %6503 = vmatprep.subr.mxu0 0.0
        %6504 = vmatpush1.msra.mxu0 0.0
        %6505 = vmatprep.subr.mxu0 0.0
        %6506 = vmatpush1.msra.mxu0 0.0
        %6507 = vmatprep.subr.mxu0 0.0
        %6508 = vmatpush1.msra.mxu0 0.0
        %6509 = vmatprep.subr.mxu0 0.0
        %6510 = vmatpush1.msra.mxu0 0.0
        %6511 = vmatprep.subr.mxu0 0.0
        %6512 = vmatpush1.msra.mxu0 0.0
        %6513 = vmatprep.subr.mxu0 0.0
        %6514 = vmatpush1.msra.mxu0 0.0
        %6515 = vmatprep.subr.mxu0 0.0
        %6516 = vmatpush1.msra.mxu0 0.0
        %6517 = vmatprep.subr.mxu0 0.0
        %6518 = vmatpush1.msra.mxu0 0.0
        %6519 = vmatprep.subr.mxu0 0.0
        %6520 = vmatpush1.msra.mxu0 0.0
        %6521 = vmatprep.subr.mxu0 0.0
        %6522 = vmatpush1.msra.mxu0 0.0
        %6523 = vmatprep.subr.mxu0 0.0
        %6524 = vmatpush1.msra.mxu0 0.0
        %6525 = vmatprep.subr.mxu0 0.0
        %6526 = vmatpush1.msra.mxu0 0.0
        %6527 = vmatprep.subr.mxu0 0.0
        %6528 = vmatpush1.msra.mxu0 0.0
        %6529 = vmatprep.subr.mxu0 0.0
        %6530 = vmatpush1.msra.mxu0 0.0
        %6531 = vmatprep.subr.mxu0 0.0
        %6532 = vmatpush1.msra.mxu0 0.0
        %6533 = vmatprep.subr.mxu0 0.0
        %6534 = vmatpush1.msra.mxu0 0.0
        %6535 = vmatprep.subr.mxu0 0.0
        %6536 = vmatpush1.msra.mxu0 0.0
        %6537 = vmatprep.subr.mxu0 0.0
        %6538 = vmatpush1.msra.mxu0 0.0
        %6539 = vmatprep.subr.mxu0 0.0
        %6540 = vmatpush1.msra.mxu0 0.0
        %6541 = vmatprep.subr.mxu0 0.0
        %6542 = vmatpush1.msra.mxu0 0.0
        %6543 = vmatprep.subr.mxu0 0.0
        %6544 = vmatpush1.msra.mxu0 0.0
        %6545 = vmatprep.subr.mxu0 0.0
        %6546 = vmatpush1.msra.mxu0 0.0
        %6547 = vmatprep.subr.mxu0 0.0
        %6548 = vmatpush1.msra.mxu0 0.0
        %6549 = vmatprep.subr.mxu0 0.0
        %6550 = vmatpush1.msra.mxu0 0.0
        %6551 = vmatprep.mubr.f32.mxu0 0.0
        %v6552 = vand.u32 %v6323, 4294901760
        %v6553 = vsub.f32 %v6323, %v6552
        %6554 = vmatmul.mubr.f32.gmra.mrb[0].mxu0 %v6553
        %v6555 = vpop.f32.mrb[0].mxu0
        %v6556 = vadd.f32 %v6480, %v6555
        %v6557 = vpop.f32.mrb[0].mxu0
        %6558 = vdwg.mxu0
        %6559 = vmatprep.subr.mxu0 0.0
        %v6560 = vand.u32 %v6320, 4294901760
        %6561 = vmatpush1.msra.mxu0 %v6560
        %6562 = vmatprep.subr.mxu0 0.0
        %v6563 = vand.u32 %v6321, 4294901760
        %6564 = vmatpush1.msra.mxu0 %v6563
        %6565 = vmatprep.subr.mxu0 0.0
        %6566 = vmatpush1.msra.mxu0 0.0
        %6567 = vmatprep.subr.mxu0 0.0
        %6568 = vmatpush1.msra.mxu0 0.0
        %6569 = vmatprep.subr.mxu0 0.0
        %6570 = vmatpush1.msra.mxu0 0.0
        %6571 = vmatprep.subr.mxu0 0.0
        %6572 = vmatpush1.msra.mxu0 0.0
        %6573 = vmatprep.subr.mxu0 0.0
        %6574 = vmatpush1.msra.mxu0 0.0
        %6575 = vmatprep.subr.mxu0 0.0
        %6576 = vmatpush1.msra.mxu0 0.0
        %6577 = vmatprep.subr.mxu0 0.0
        %6578 = vmatpush1.msra.mxu0 0.0
        %6579 = vmatprep.subr.mxu0 0.0
        %6580 = vmatpush1.msra.mxu0 0.0
        %6581 = vmatprep.subr.mxu0 0.0
        %6582 = vmatpush1.msra.mxu0 0.0
        %6583 = vmatprep.subr.mxu0 0.0
        %6584 = vmatpush1.msra.mxu0 0.0
        %6585 = vmatprep.subr.mxu0 0.0
        %6586 = vmatpush1.msra.mxu0 0.0
        %6587 = vmatprep.subr.mxu0 0.0
        %6588 = vmatpush1.msra.mxu0 0.0
        %6589 = vmatprep.subr.mxu0 0.0
        %6590 = vmatpush1.msra.mxu0 0.0
        %6591 = vmatprep.subr.mxu0 0.0
        %6592 = vmatpush1.msra.mxu0 0.0
        %6593 = vmatprep.subr.mxu0 0.0
        %6594 = vmatpush1.msra.mxu0 0.0
        %6595 = vmatprep.subr.mxu0 0.0
        %6596 = vmatpush1.msra.mxu0 0.0
        %6597 = vmatprep.subr.mxu0 0.0
        %6598 = vmatpush1.msra.mxu0 0.0
        %6599 = vmatprep.subr.mxu0 0.0
        %6600 = vmatpush1.msra.mxu0 0.0
        %6601 = vmatprep.subr.mxu0 0.0
        %6602 = vmatpush1.msra.mxu0 0.0
        %6603 = vmatprep.subr.mxu0 0.0
        %6604 = vmatpush1.msra.mxu0 0.0
        %6605 = vmatprep.subr.mxu0 0.0
        %6606 = vmatpush1.msra.mxu0 0.0
        %6607 = vmatprep.subr.mxu0 0.0
        %6608 = vmatpush1.msra.mxu0 0.0
        %6609 = vmatprep.subr.mxu0 0.0
        %6610 = vmatpush1.msra.mxu0 0.0
        %6611 = vmatprep.subr.mxu0 0.0
        %6612 = vmatpush1.msra.mxu0 0.0
        %6613 = vmatprep.subr.mxu0 0.0
        %6614 = vmatpush1.msra.mxu0 0.0
        %6615 = vmatprep.subr.mxu0 0.0
        %6616 = vmatpush1.msra.mxu0 0.0
        %6617 = vmatprep.subr.mxu0 0.0
        %6618 = vmatpush1.msra.mxu0 0.0
        %6619 = vmatprep.subr.mxu0 0.0
        %6620 = vmatpush1.msra.mxu0 0.0
        %6621 = vmatprep.subr.mxu0 0.0
        %6622 = vmatpush1.msra.mxu0 0.0
        %6623 = vmatprep.subr.mxu0 0.0
        %6624 = vmatpush1.msra.mxu0 0.0
        %6625 = vmatprep.mubr.f32.mxu0 0.0
        %v6626 = vand.u32 %v6323, 4294901760
        %v6627 = vsub.f32 %v6323, %v6626
        %v6628 = vand.u32 %v6627, 4294901760
        %6629 = vmatmul.mubr.f32.gmra.mrb[0].mxu0 %v6628
        %v6630 = vpop.f32.mrb[0].mxu0
        %v6631 = vadd.f32 %v6556, %v6630
        %v6632 = vpop.f32.mrb[0].mxu0
        %6633 = vdwg.mxu0
        %6634 = vmatprep.subr.mxu0 0.0
        %v6635 = vand.u32 %v6320, 4294901760
        %v6636 = vsub.f32 %v6320, %v6635
        %v6637 = vand.u32 %v6636, 4294901760
        %6638 = vmatpush1.msra.mxu0 %v6637
        %6639 = vmatprep.subr.mxu0 0.0
        %v6640 = vand.u32 %v6321, 4294901760
        %v6641 = vsub.f32 %v6321, %v6640
        %v6642 = vand.u32 %v6641, 4294901760
        %6643 = vmatpush1.msra.mxu0 %v6642
        %6644 = vmatprep.subr.mxu0 0.0
        %6645 = vmatpush1.msra.mxu0 0.0
        %6646 = vmatprep.subr.mxu0 0.0
        %6647 = vmatpush1.msra.mxu0 0.0
        %6648 = vmatprep.subr.mxu0 0.0
        %6649 = vmatpush1.msra.mxu0 0.0
        %6650 = vmatprep.subr.mxu0 0.0
        %6651 = vmatpush1.msra.mxu0 0.0
        %6652 = vmatprep.subr.mxu0 0.0
        %6653 = vmatpush1.msra.mxu0 0.0
        %6654 = vmatprep.subr.mxu0 0.0
        %6655 = vmatpush1.msra.mxu0 0.0
        %6656 = vmatprep.subr.mxu0 0.0
        %6657 = vmatpush1.msra.mxu0 0.0
        %6658 = vmatprep.subr.mxu0 0.0
        %6659 = vmatpush1.msra.mxu0 0.0
        %6660 = vmatprep.subr.mxu0 0.0
        %6661 = vmatpush1.msra.mxu0 0.0
        %6662 = vmatprep.subr.mxu0 0.0
        %6663 = vmatpush1.msra.mxu0 0.0
        %6664 = vmatprep.subr.mxu0 0.0
        %6665 = vmatpush1.msra.mxu0 0.0
        %6666 = vmatprep.subr.mxu0 0.0
        %6667 = vmatpush1.msra.mxu0 0.0
        %6668 = vmatprep.subr.mxu0 0.0
        %6669 = vmatpush1.msra.mxu0 0.0
        %6670 = vmatprep.subr.mxu0 0.0
        %6671 = vmatpush1.msra.mxu0 0.0
        %6672 = vmatprep.subr.mxu0 0.0
        %6673 = vmatpush1.msra.mxu0 0.0
        %6674 = vmatprep.subr.mxu0 0.0
        %6675 = vmatpush1.msra.mxu0 0.0
        %6676 = vmatprep.subr.mxu0 0.0
        %6677 = vmatpush1.msra.mxu0 0.0
        %6678 = vmatprep.subr.mxu0 0.0
        %6679 = vmatpush1.msra.mxu0 0.0
        %6680 = vmatprep.subr.mxu0 0.0
        %6681 = vmatpush1.msra.mxu0 0.0
        %6682 = vmatprep.subr.mxu0 0.0
        %6683 = vmatpush1.msra.mxu0 0.0
        %6684 = vmatprep.subr.mxu0 0.0
        %6685 = vmatpush1.msra.mxu0 0.0
        %6686 = vmatprep.subr.mxu0 0.0
        %6687 = vmatpush1.msra.mxu0 0.0
        %6688 = vmatprep.subr.mxu0 0.0
        %6689 = vmatpush1.msra.mxu0 0.0
        %6690 = vmatprep.subr.mxu0 0.0
        %6691 = vmatpush1.msra.mxu0 0.0
        %6692 = vmatprep.subr.mxu0 0.0
        %6693 = vmatpush1.msra.mxu0 0.0
        %6694 = vmatprep.subr.mxu0 0.0
        %6695 = vmatpush1.msra.mxu0 0.0
        %6696 = vmatprep.subr.mxu0 0.0
        %6697 = vmatpush1.msra.mxu0 0.0
        %6698 = vmatprep.subr.mxu0 0.0
        %6699 = vmatpush1.msra.mxu0 0.0
        %6700 = vmatprep.subr.mxu0 0.0
        %6701 = vmatpush1.msra.mxu0 0.0
        %6702 = vmatprep.subr.mxu0 0.0
        %6703 = vmatpush1.msra.mxu0 0.0
        %6704 = vmatprep.mubr.f32.mxu0 0.0
        %v6705 = vand.u32 %v6323, 4294901760
        %6706 = vmatmul.mubr.f32.gmra.mrb[0].mxu0 %v6705
        %v6707 = vpop.f32.mrb[0].mxu0
        %v6708 = vadd.f32 %v6631, %v6707
        %v6709 = vpop.f32.mrb[0].mxu0
        %6710 = vdwg.mxu0
        %6711 = vmatprep.subr.mxu0 0.0
        %v6712 = vand.u32 %v6320, 4294901760
        %6713 = vmatpush1.msra.mxu0 %v6712
        %6714 = vmatprep.subr.mxu0 0.0
        %v6715 = vand.u32 %v6321, 4294901760
        %6716 = vmatpush1.msra.mxu0 %v6715
        %6717 = vmatprep.subr.mxu0 0.0
        %6718 = vmatpush1.msra.mxu0 0.0
        %6719 = vmatprep.subr.mxu0 0.0
        %6720 = vmatpush1.msra.mxu0 0.0
        %6721 = vmatprep.subr.mxu0 0.0
        %6722 = vmatpush1.msra.mxu0 0.0
        %6723 = vmatprep.subr.mxu0 0.0
        %6724 = vmatpush1.msra.mxu0 0.0
        %6725 = vmatprep.subr.mxu0 0.0
        %6726 = vmatpush1.msra.mxu0 0.0
        %6727 = vmatprep.subr.mxu0 0.0
        %6728 = vmatpush1.msra.mxu0 0.0
        %6729 = vmatprep.subr.mxu0 0.0
        %6730 = vmatpush1.msra.mxu0 0.0
        %6731 = vmatprep.subr.mxu0 0.0
        %6732 = vmatpush1.msra.mxu0 0.0
        %6733 = vmatprep.subr.mxu0 0.0
        %6734 = vmatpush1.msra.mxu0 0.0
        %6735 = vmatprep.subr.mxu0 0.0
        %6736 = vmatpush1.msra.mxu0 0.0
        %6737 = vmatprep.subr.mxu0 0.0
        %6738 = vmatpush1.msra.mxu0 0.0
        %6739 = vmatprep.subr.mxu0 0.0
        %6740 = vmatpush1.msra.mxu0 0.0
        %6741 = vmatprep.subr.mxu0 0.0
        %6742 = vmatpush1.msra.mxu0 0.0
        %6743 = vmatprep.subr.mxu0 0.0
        %6744 = vmatpush1.msra.mxu0 0.0
        %6745 = vmatprep.subr.mxu0 0.0
        %6746 = vmatpush1.msra.mxu0 0.0
        %6747 = vmatprep.subr.mxu0 0.0
        %6748 = vmatpush1.msra.mxu0 0.0
        %6749 = vmatprep.subr.mxu0 0.0
        %6750 = vmatpush1.msra.mxu0 0.0
        %6751 = vmatprep.subr.mxu0 0.0
        %6752 = vmatpush1.msra.mxu0 0.0
        %6753 = vmatprep.subr.mxu0 0.0
        %6754 = vmatpush1.msra.mxu0 0.0
        %6755 = vmatprep.subr.mxu0 0.0
        %6756 = vmatpush1.msra.mxu0 0.0
        %6757 = vmatprep.subr.mxu0 0.0
        %6758 = vmatpush1.msra.mxu0 0.0
        %6759 = vmatprep.subr.mxu0 0.0
        %6760 = vmatpush1.msra.mxu0 0.0
        %6761 = vmatprep.subr.mxu0 0.0
        %6762 = vmatpush1.msra.mxu0 0.0
        %6763 = vmatprep.subr.mxu0 0.0
        %6764 = vmatpush1.msra.mxu0 0.0
        %6765 = vmatprep.subr.mxu0 0.0
        %6766 = vmatpush1.msra.mxu0 0.0
        %6767 = vmatprep.subr.mxu0 0.0
        %6768 = vmatpush1.msra.mxu0 0.0
        %6769 = vmatprep.subr.mxu0 0.0
        %6770 = vmatpush1.msra.mxu0 0.0
        %6771 = vmatprep.subr.mxu0 0.0
        %6772 = vmatpush1.msra.mxu0 0.0
        %6773 = vmatprep.subr.mxu0 0.0
        %6774 = vmatpush1.msra.mxu0 0.0
        %6775 = vmatprep.subr.mxu0 0.0
        %6776 = vmatpush1.msra.mxu0 0.0
        %6777 = vmatprep.mubr.f32.mxu0 0.0
        %v6778 = vand.u32 %v6323, 4294901760
        %6779 = vmatmul.mubr.f32.gmra.mrb[0].mxu0 %v6778
        %v6780 = vpop.f32.mrb[0].mxu0
        %v6781 = vadd.f32 %v6708, %v6780
        %v6782 = vpop.f32.mrb[0].mxu0
        %6783 = vdwg.mxu0
        %v6784 = vadd.f32 %v5867, %v6781
        %s6785 = sld [smem:[#allocation9]]
        %v6786 = vstv %s6785
        %v6787 = vmul.f32 %v6784, %v6786
        %s6788 = sld [smem:[#allocation9 + $0x1]]
        %v6789 = vstv %s6788
        %v6790 = vadd.f32 %v6787, %v6789
        %v6791 = vsub.f32 0.0, %v6790
        %v6792 = vmul.f32 %v6791, 1.442695
        %v6793 = vpow.pop %v6792
        %v6794 = vadd.f32 %v6793, 1.0
        %v6795 = vrcp.pop %v6794
        %v6796 = vmul.f32 1.0, %v6795
        %v6799 = vunpack.c.l.s4 1966171168
        %v6800 = vunpack.c.0.s8 %v6799
        %v6801 = vlaneseq
        %v6802 = vshrl.u32 %v6801, 7
        %v6803 = vsub.s32 %v6800, %v6802
        %v6804 = vrot.slane %v6796, %v6803
        %v6805 = vcombine.high %v6804, %v6804
        %v6807 = vunpack.c.l.s4 1966171168
        %v6808 = vunpack.c.0.s8 %v6807
        %v6809 = vlaneseq
        %v6810 = vshrl.u32 %v6809, 7
        %v6811 = vsub.s32 %v6808, %v6810
        %v6812 = vrot.slane %v6804, %v6811
        %v6814 = vunpack.c.l.s4 1966171168
        %v6815 = vunpack.c.0.s8 %v6814
        %v6816 = vlaneseq
        %v6817 = vshrl.u32 %v6816, 7
        %v6818 = vsub.s32 %v6815, %v6817
        %v6819 = vrot.slane %v6805, %v6818
        %v6820 = vcombine.high %v6812, %v6812
        %v6821 = vcombine.high %v6819, %v6819
        %v6822 = vlaneseq
        %v6823 = vshrl.u32 %v6822, 7
        %v6824 = vsub.s32 0, %v6823
        %v6825 = vrot.slane %v6812, %v6824
        %v6826 = vlaneseq
        %v6827 = vshrl.u32 %v6826, 7
        %v6828 = vsub.s32 0, %v6827
        %v6829 = vrot.slane %v6819, %v6828
        %v6830 = vlaneseq
        %v6831 = vshrl.u32 %v6830, 7
        %v6832 = vsub.s32 0, %v6831
        %v6833 = vrot.slane %v6820, %v6832
        %v6834 = vlaneseq
        %v6835 = vshrl.u32 %v6834, 7
        %v6836 = vsub.s32 0, %v6835
        %v6837 = vrot.slane %v6821, %v6836
        %v6842 = vmul.f32 %v259, %v6825
        %v6843 = vmul.f32 %v260, %v6825
        %v6844 = vmul.f32 %v261, %v6829
        %v6845 = vmul.f32 %v262, %v6829
        %v6846 = vmul.f32 %v263, %v6833
        %v6847 = vmul.f32 %v264, %v6833
        %v6848 = vmul.f32 %v265, %v6837
        %v6849 = vmul.f32 %v266, %v6837
        %6850 = vst.msk [vmem:[%s258] sm:$0xff] %vm267, %v6842
        %6851 = vst.msk [vmem:[%s258 + $0x8] sm:$0xff] %vm267, %v6843
        %6852 = vst.msk [vmem:[%s258 + $0x10] sm:$0xff] %vm267, %v6844
        %6853 = vst.msk [vmem:[%s258 + $0x18] sm:$0xff] %vm267, %v6845
        %6854 = vst.msk [vmem:[%s258 + $0x20] sm:$0xff] %vm267, %v6846
        %6855 = vst.msk [vmem:[%s258 + $0x28] sm:$0xff] %vm267, %v6847
        %6856 = vst.msk [vmem:[%s258 + $0x30] sm:$0xff] %vm267, %v6848
        %6857 = vst.msk [vmem:[%s258 + $0x38] sm:$0xff] %vm267, %v6849
        %s6858 = sand.u32 %s120, 1
        %s6859 = scalar_lea.sflag [#allocation4], %s6858
        %s6860 = sand.u32 %s120, 1
        %s6861 = smul.addr %s6860, 64
        %s6862 = scalar_lea.vmem [#allocation10], %s6861
        // Predicated region
        $region53: #{tpu_custom_call.1} parent=35 // pred_check
          %p6863 = pneg %p130
        $region54: #{tpu_custom_call.1} parent=35 // pred_check_branch
          %6865 = sbr.rel (%p6863) target = $region56
        $region55: #{tpu_custom_call.1} parent=35 // pred_region
          %s6867 = ssub.s32 1024, 1024
          %6868 = vsyncadd %s6859, %s6867
          %s6869 = smul.addr %s23, 8
          %s6870 = smul.addr %s6869, 128
          %s6871 = scalar_lea.hbm %s4, %s6870
          %s6872 = sshll.u32 %s6862, 4
          %s6873 = int_to_ptr.vmem [resolvable:$true] %s6872
          %6878 = dma.vmem_to_hbm [thread:$0]  %s6873, 1024, %s6871, %s6859, 128, 128, 8
        $region56: #{tpu_custom_call.1} parent=35 // pred_fallthru
          _
      $region36: #{tpu_custom_call.1} parent=5 // pred_fallthru
        _
      %p6879 = scmp.le.s32.totalorder 2, %s18
      // Predicated region
      $region57: #{tpu_custom_call.1} parent=5 // pred_check
        %p6880 = pneg %p6879
      $region58: #{tpu_custom_call.1} parent=5 // pred_check_branch
        %6882 = sbr.rel (%p6880) target = $region60
      $region59: #{tpu_custom_call.1} parent=5 // pred_region
        %s6883 = ssub.s32 %s18, 2
        // Predicated region
        $region61: #{tpu_custom_call.1} parent=59 // pred_check
          %p6884 = pneg %p136
        $region62: #{tpu_custom_call.1} parent=59 // pred_check_branch
          %6886 = sbr.rel (%p6884) target = $region64
        $region63: #{tpu_custom_call.1} parent=59 // pred_region
          %s6887 = sand.u32 %s121, 1
          %s6888 = scalar_lea.sflag [#allocation4], %s6887
          %s6889 = sand.u32 %s121, 1
          %s6890 = smul.addr %s6889, 64
          %s6891 = scalar_lea.vmem [#allocation10], %s6890
          %6892 = dma.done %s6888, 1024
        $region64: #{tpu_custom_call.1} parent=59 // pred_fallthru
          _
      $region60: #{tpu_custom_call.1} parent=5 // pred_fallthru
        _
    $region6: #{tpu_custom_call.1} parent=1 // loop_footer
      %s22 = sadd.s32 1, %s18
    $region7: #{tpu_custom_call.1} parent=1 // loop_footer_branch
      %17 = sbr.rel target = $region3
    $region8: #{tpu_custom_call.1} parent=1 // loop_exit
      _
    %6893 = vsyncpa [#allocation3], 1
    %s6894 = scalar_lea.sflag [#allocation3], 1
    %6895 = vsyncpa %s6894, 1
    %6896 = vsyncpa [#allocation7], 1
    %6897 = vsyncpa [#allocation4], 1
    %s6898 = scalar_lea.sflag [#allocation4], 1
    %6899 = vsyncpa %s6898, 1
    %6900 = vsyncpa [#allocation5], 1
    %s6901 = scalar_lea.sflag [#allocation5], 1
    %6902 = vsyncpa %s6901, 1

</llo_original>
